<compile_context>
chip_gen: v7x
topology: tpu7x:2x2x1
jax: 0.10.0
libtpu: 0.0.40
codegen_flags: <defaults>
</compile_context>

<pallas_src>
import functools

import jax
import jax.numpy as jnp
from jax.experimental import pallas as pl
from jax.experimental.pallas import tpu as pltpu


def _round_up(x, m):
    return (x + m - 1) // m * m


def _pick_row_tile(M, cap):
    """Pick a row tile that divides M exactly (M = N*H*W is highly composite), avoiding
    jnp.pad / slice copies of the large matrices.  Full-dim blocks when M is small."""
    if M <= cap:
        return M, M                       # full-dim block: exempt from (8,128) alignment
    for step in (16, 8):                  # prefer bf16-native sublane multiples
        d = (cap // step) * step
        while d >= step:
            if M % d == 0:
                return d, M
            d -= step
    t = min(cap, 512)
    return t, _round_up(M, t)             # rare fallback: pad


def _vmem_budget(nbytes):
    # explicit scoped-VMEM limit: generous headroom, but always below v7x's 64 MiB.
    return int(min(max(nbytes + (8 << 20), 24 << 20), 60 << 20))


# ---------------------------------------------------------------------------
# Pallas matmul kernels: bf16 MXU inputs, f32 math, fused bias + activation
# (+ optionally fused per-tile BatchNorm partial statistics)
# ---------------------------------------------------------------------------

def _matmul_k1_kernel(a_ref, b_ref, bias_ref, o_ref, *stat_refs,
                      activation, compute_stats):
    """K fully resident (single k step): y = act(a @ b + bias); optional per-tile
    per-channel sum / sumsq emitted for the following BatchNorm (pre-activation)."""
    y = jnp.dot(a_ref[...], b_ref[...], preferred_element_type=jnp.float32)
    y = y + bias_ref[...]
    if compute_stats:
        sum_ref, sq_ref = stat_refs
        sum_ref[...] = jnp.sum(y, axis=0, keepdims=True)[None]
        sq_ref[...] = jnp.sum(y * y, axis=0, keepdims=True)[None]
    if activation == "tanh":
        y = jnp.tanh(y)
    elif activation == "relu":
        y = jnp.maximum(y, 0.0)
    o_ref[...] = y.astype(o_ref.dtype)


def _matmul_acc_kernel(a_ref, b_ref, bias_ref, o_ref, acc_ref, *, activation):
    """General K-tiled fallback (K > 4096): f32 VMEM accumulator across the k grid axis."""
    @pl.when(pl.program_id(2) == 0)
    def _():
        acc_ref[...] = jnp.zeros_like(acc_ref)

    acc_ref[...] += jnp.dot(a_ref[...], b_ref[...],
                            preferred_element_type=jnp.float32)

    @pl.when(pl.program_id(2) == pl.num_programs(2) - 1)
    def _():
        y = acc_ref[...] + bias_ref[...]
        if activation == "tanh":
            y = jnp.tanh(y)
        elif activation == "relu":
            y = jnp.maximum(y, 0.0)
        o_ref[...] = y.astype(o_ref.dtype)


def matmul_bias(a, b, bias, activation="none", out_dtype=jnp.bfloat16,
                compute_stats=False):
    """(M,K) @ (K,N) + bias[N] (+ optional tanh/relu), bf16 MXU inputs, f32 math.
    Returns (out, stats) where stats is (sums(1,N), sumsq(1,N)) or None."""
    M, K = a.shape
    K2, N = b.shape
    assert K == K2
    out_bytes = jnp.dtype(out_dtype).itemsize

    # N tile: whole output-channel dim when <=256 (full-dim blocks need no 128 alignment).
    if N <= 256:
        tn, Np = N, N
    else:
        tn = 256 if N % 256 == 0 else 128
        Np = _round_up(N, tn)
    # K: keep the whole reduction dim resident when reasonable -> no K padding, no k loop.
    if K <= 4096:
        tk, Kp = K, K
    else:
        tk, Kp = 512, _round_up(K, 512)
    # M tile: as large as VMEM comfortably allows (sized against v7x's 64 MiB VMEM).
    cap = 1024
    while cap > 128 and (2 * (cap * tk * 2 + cap * tn * out_bytes)
                         + 2 * tk * tn * 2) > (40 << 20):
        cap //= 2
    tm, Mp = _pick_row_tile(M, cap)

    a = a.astype(jnp.bfloat16)
    b = b.astype(jnp.bfloat16)
    if (Mp, Kp) != (M, K):
        a = jnp.pad(a, ((0, Mp - M), (0, Kp - K)))
    if (Kp, Np) != (K, N):
        b = jnp.pad(b, ((0, Kp - K), (0, Np - N)))
    bias2 = bias.astype(jnp.float32).reshape(1, N)
    if Np != N:
        bias2 = jnp.pad(bias2, ((0, 0), (0, Np - N)))

    gi, gj, gk = Mp // tm, Np // tn, Kp // tk
    vmem = _vmem_budget(2 * (tm * tk * 2 + tk * tn * 2 + tm * tn * out_bytes + tn * 4)
                        + (tm * tn * 4 if gk > 1 else 0))

    if gk == 1:
        fuse_stats = compute_stats and Mp == M   # padded rows would pollute the stats
        if fuse_stats:
            out_shape = (jax.ShapeDtypeStruct((Mp, Np), out_dtype),
                         jax.ShapeDtypeStruct((gi, 1, Np), jnp.float32),
                         jax.ShapeDtypeStruct((gi, 1, Np), jnp.float32))
            out_specs = [pl.BlockSpec((tm, tn), lambda i, j: (i, j)),
                         pl.BlockSpec((1, 1, tn), lambda i, j: (i, 0, j)),
                         pl.BlockSpec((1, 1, tn), lambda i, j: (i, 0, j))]
        else:
            out_shape = jax.ShapeDtypeStruct((Mp, Np), out_dtype)
            out_specs = pl.BlockSpec((tm, tn), lambda i, j: (i, j))

        res = pl.pallas_call(
            functools.partial(_matmul_k1_kernel, activation=activation,
                              compute_stats=fuse_stats),
            out_shape=out_shape,
            grid_spec=pltpu.PrefetchScalarGridSpec(
                num_scalar_prefetch=0,
                grid=(gi, gj),
                in_specs=[pl.BlockSpec((tm, tk), lambda i, j: (i, 0)),
                          pl.BlockSpec((tk, tn), lambda i, j: (0, j)),
                          pl.BlockSpec((1, tn), lambda i, j: (0, j))],
                out_specs=out_specs),
            compiler_params=pltpu.CompilerParams(
                dimension_semantics=("parallel", "parallel"),
                vmem_limit_bytes=vmem),
        )(a, b, bias2)

        if fuse_stats:
            out, s, q = res
            stats = (jnp.sum(s, axis=0)[:, :N], jnp.sum(q, axis=0)[:, :N])
        else:
            out, stats = res, None
    else:
        out = pl.pallas_call(
            functools.partial(_matmul_acc_kernel, activation=activation),
            out_shape=jax.ShapeDtypeStruct((Mp, Np), out_dtype),
            grid_spec=pltpu.PrefetchScalarGridSpec(
                num_scalar_prefetch=0,
                grid=(gi, gj, gk),
                in_specs=[pl.BlockSpec((tm, tk), lambda i, j, k: (i, k)),
                          pl.BlockSpec((tk, tn), lambda i, j, k: (k, j)),
                          pl.BlockSpec((1, tn), lambda i, j, k: (0, j))],
                out_specs=pl.BlockSpec((tm, tn), lambda i, j, k: (i, j)),
                scratch_shapes=[pltpu.VMEM((tm, tn), jnp.float32)]),
            compiler_params=pltpu.CompilerParams(
                dimension_semantics=("parallel", "parallel", "arbitrary"),
                vmem_limit_bytes=vmem),
        )(a, b, bias2)
        stats = None

    if (Mp, Np) != (M, N):
        out = out[:M, :N]
    return out, stats


# ---------------------------------------------------------------------------
# BatchNorm2d (training-mode batch statistics)
# ---------------------------------------------------------------------------

def _bn_stats_kernel(x_ref, sum_ref, sq_ref, acc_s, acc_q):
    @pl.when(pl.program_id(0) == 0)
    def _():
        acc_s[...] = jnp.zeros_like(acc_s)
        acc_q[...] = jnp.zeros_like(acc_q)

    x = x_ref[...].astype(jnp.float32)
    acc_s[...] += jnp.sum(x, axis=0, keepdims=True)
    acc_q[...] += jnp.sum(x * x, axis=0, keepdims=True)

    @pl.when(pl.program_id(0) == pl.num_programs(0) - 1)
    def _():
        sum_ref[...] = acc_s[...]
        sq_ref[...] = acc_q[...]


def _bn_apply_kernel(x_ref, scale_ref, shift_ref, o_ref, *, relu):
    y = x_ref[...].astype(jnp.float32) * scale_ref[...] + shift_ref[...]
    if relu:
        y = jnp.maximum(y, 0.0)
    o_ref[...] = y.astype(o_ref.dtype)


def _bn_apply_res_kernel(x_ref, res_ref, scale_ref, shift_ref, o_ref, *, relu):
    y = x_ref[...].astype(jnp.float32) * scale_ref[...] + shift_ref[...]
    y = y + res_ref[...].astype(jnp.float32)
    if relu:
        y = jnp.maximum(y, 0.0)
    o_ref[...] = y.astype(o_ref.dtype)


def _lane_fold(m, c):
    """Fold factor f: view (m, c) as (m/f, f*c) (free reshape) so narrow-channel layers
    get lane-dense vector loads/stores instead of masked partial stores."""
    f = 1
    while c * f * 2 <= 256 and m % (f * 2) == 0 and f < 32:
        f *= 2
    return f


def _bn_stats_2d(x2):
    """Fallback tiled per-column sum / sumsq (used only when stats were not fused into the
    producing matmul, e.g. a padded-M shape)."""
    m, c = x2.shape
    f = _lane_fold(m, c)
    xf = x2.reshape(m // f, f * c)
    mf, cf = xf.shape
    rb, mp = _pick_row_tile(mf, 1024)
    if mp != mf:
        xf = jnp.pad(xf, ((0, mp - mf), (0, 0)))      # zero rows: safe for sum/sumsq
    vmem = _vmem_budget(2 * rb * cf * xf.dtype.itemsize + 8 * cf * 4)

    sums, sqs = pl.pallas_call(
        _bn_stats_kernel,
        out_shape=(jax.ShapeDtypeStruct((1, cf), jnp.float32),
                   jax.ShapeDtypeStruct((1, cf), jnp.float32)),
        grid_spec=pltpu.PrefetchScalarGridSpec(
            num_scalar_prefetch=0,
            grid=(mp // rb,),
            in_specs=[pl.BlockSpec((rb, cf), lambda i: (i, 0))],
            out_specs=[pl.BlockSpec((1, cf), lambda i: (0, 0)),
                       pl.BlockSpec((1, cf), lambda i: (0, 0))],
            scratch_shapes=[pltpu.VMEM((1, cf), jnp.float32),
                            pltpu.VMEM((1, cf), jnp.float32)]),
        compiler_params=pltpu.CompilerParams(dimension_semantics=("arbitrary",),
                                             vmem_limit_bytes=vmem),
    )(xf)
    if f > 1:
        sums = jnp.sum(sums.reshape(f, c), axis=0, keepdims=True)
        sqs = jnp.sum(sqs.reshape(f, c), axis=0, keepdims=True)
    return sums, sqs


def _bn_scale_shift(sums, sqs, count, gamma, beta, eps=1e-5):
    # tiny (1,C) math stays in JAX
    c = gamma.shape[0]
    mean = sums / count
    # TODO(synk): E[x^2]-E[x]^2 is cancellation-prone vs PyTorch's centered variance.
    var = jnp.maximum(sqs / count - mean * mean, 0.0)
    scale = gamma.reshape(1, c).astype(jnp.float32) * jax.lax.rsqrt(var + eps)
    shift = beta.reshape(1, c).astype(jnp.float32) - mean * scale
    return scale, shift


def _bn_apply_2d(x2, scale, shift, relu, residual2=None, out_dtype=jnp.bfloat16):
    """Normalize + affine (+ optional fused residual add / ReLU) on a 2D (rows, cols)
    view; lane-dense folding for narrow column counts."""
    m, c = x2.shape
    f = _lane_fold(m, c)
    if f > 1:
        x2 = x2.reshape(m // f, f * c)
        scale = jnp.tile(scale, (1, f))
        shift = jnp.tile(shift, (1, f))
        if residual2 is not None:
            residual2 = residual2.reshape(m // f, f * c)
    mf, cf = x2.shape
    rb, mp = _pick_row_tile(mf, 1024)
    if mp != mf:
        x2 = jnp.pad(x2, ((0, mp - mf), (0, 0)))
        if residual2 is not None:
            residual2 = jnp.pad(residual2, ((0, mp - mf), (0, 0)))

    out_bytes = jnp.dtype(out_dtype).itemsize
    n_in = 1 + (residual2 is not None)
    vmem = _vmem_budget(2 * (n_in * rb * cf * 2 + rb * cf * out_bytes + 2 * cf * 4))
    common = dict(
        out_shape=jax.ShapeDtypeStruct((mp, cf), out_dtype),
        grid=(mp // rb,),
        out_specs=pl.BlockSpec((rb, cf), lambda i: (i, 0)),
        compiler_params=pltpu.CompilerParams(dimension_semantics=("parallel",),
                                             vmem_limit_bytes=vmem),
    )
    if residual2 is None:
        out = pl.pallas_call(
            functools.partial(_bn_apply_kernel, relu=relu),
            in_specs=[pl.BlockSpec((rb, cf), lambda i: (i, 0)),
                      pl.BlockSpec((1, cf), lambda i: (0, 0)),
                      pl.BlockSpec((1, cf), lambda i: (0, 0))],
            **common,
        )(x2, scale, shift)
    else:
        out = pl.pallas_call(
            functools.partial(_bn_apply_res_kernel, relu=relu),
            in_specs=[pl.BlockSpec((rb, cf), lambda i: (i, 0)),
                      pl.BlockSpec((rb, cf), lambda i: (i, 0)),
                      pl.BlockSpec((1, cf), lambda i: (0, 0)),
                      pl.BlockSpec((1, cf), lambda i: (0, 0))],
            **common,
        )(x2, residual2, scale, shift)

    if mp != mf:
        out = out[:mf]
    return out.reshape(m, c)


def batchnorm2d(x_nhwc, gamma, beta, relu, residual=None, stats=None, eps=1e-5,
                out_dtype=jnp.bfloat16):
    """Training-mode BatchNorm2d over (N,H,W) per channel.  `stats` are the partial
    sum/sumsq fused into the producing conv; residual add (ResNet skip) optionally fused."""
    n, h, w, c = x_nhwc.shape
    m = n * h * w
    x2 = x_nhwc.reshape(m, c)
    r2 = residual.reshape(m, c) if residual is not None else None
    if stats is None:
        sums, sqs = _bn_stats_2d(x2)
    else:
        sums, sqs = stats
    scale, shift = _bn_scale_shift(sums, sqs, m, gamma, beta, eps)
    out = _bn_apply_2d(x2, scale, shift, relu, r2, out_dtype)
    return out.reshape(n, h, w, c)


# ---------------------------------------------------------------------------
# Convolution glue (bf16 im2col + Pallas matmul)
# ---------------------------------------------------------------------------

def reflect_pad(x_nhwc, p):
    return jnp.pad(x_nhwc, ((0, 0), (p, p), (p, p), (0, 0)), mode="reflect")


def _extract_patches(x, kh, kw, stride):
    n, h, w, c = x.shape
    oh = (h - kh) // stride + 1
    ow = (w - kw) // stride + 1
    cols = []
    for di in range(kh):
        for dj in range(kw):
            cols.append(x[:, di:di + (oh - 1) * stride + 1:stride,
                            dj:dj + (ow - 1) * stride + 1:stride, :])
    p = jnp.stack(cols, axis=3)                       # (n, oh, ow, kh*kw, c)
    return p.reshape(n * oh * ow, kh * kw * c), (n, oh, ow)


# TODO(synk): the im2col patch matrix is still materialized in HBM (kh*kw x blowup); a
# direct-conv kernel (pl.ANY input + manually DMA'd halo'd row strips) would remove this
# remaining glue copy but is left out here to keep the version robust.
def conv2d(x_nhwc, w_mat, bias, kh, kw, stride=1, padding=0, activation="none",
           out_dtype=jnp.bfloat16, want_stats=False):
    if padding > 0:
        x_nhwc = jnp.pad(x_nhwc, ((0, 0), (padding, padding),
                                  (padding, padding), (0, 0)))
    patches, (n, oh, ow) = _extract_patches(x_nhwc, kh, kw, stride)
    out, stats = matmul_bias(patches, w_mat, bias, activation=activation,
                             out_dtype=out_dtype, compute_stats=want_stats)
    return out.reshape(n, oh, ow, w_mat.shape[1]), stats


# ---------------------------------------------------------------------------
# Fused 4-phase ConvTranspose2d(k=3, s=2, p=1, op=1)
# ---------------------------------------------------------------------------

def _upsample4_kernel(t00_ref, t01_ref, t10_ref, t11_ref,
                      wa_ref, wb_ref, wc_ref, wd_ref, bias_ref,
                      o_ref, *stat_refs, compute_stats):
    """All 4 output stride-phases in one kernel: y(tm, 4*oc) = sum_taps t @ W_tap + bias,
    with BN partial sum/sumsq fused into the epilogue."""
    y = jnp.dot(t00_ref[...], wa_ref[...], preferred_element_type=jnp.float32)
    y = y + jnp.dot(t01_ref[...], wb_ref[...], preferred_element_type=jnp.float32)
    y = y + jnp.dot(t10_ref[...], wc_ref[...], preferred_element_type=jnp.float32)
    y = y + jnp.dot(t11_ref[...], wd_ref[...], preferred_element_type=jnp.float32)
    y = y + bias_ref[...]
    if compute_stats:
        sum_ref, sq_ref = stat_refs
        sum_ref[...] = jnp.sum(y, axis=0, keepdims=True)[None]
        sq_ref[...] = jnp.sum(y * y, axis=0, keepdims=True)[None]
    o_ref[...] = y.astype(o_ref.dtype)


def conv_transpose2d_s2_phases(x_nhwc, wa, wb, wc, wd, bias, want_stats=True):
    """Returns the phase-layout output (M, 4*oc) = [p(0,0)|p(0,1)|p(1,0)|p(1,1)] per input
    pixel, plus fused BN partial statistics (or None)."""
    n, h, w, c = x_nhwc.shape
    noc4 = wa.shape[1]
    xp = jnp.pad(x_nhwc, ((0, 0), (0, 1), (0, 1), (0, 0)))   # zero row/col at bottom/right

    def tap(a, b):
        return xp[:, a:a + h, b:b + w, :].reshape(n * h * w, c).astype(jnp.bfloat16)

    taps = (tap(0, 0), tap(0, 1), tap(1, 0), tap(1, 1))
    M = n * h * w
    tm, Mp = _pick_row_tile(M, 1024)
    if Mp != M:
        taps = tuple(jnp.pad(t, ((0, Mp - M), (0, 0))) for t in taps)
    bias4 = jnp.tile(bias.astype(jnp.float32).reshape(1, -1), (1, 4))

    gi = Mp // tm
    fuse = want_stats and Mp == M
    out_shape = [jax.ShapeDtypeStruct((Mp, noc4), jnp.bfloat16)]
    out_specs = [pl.BlockSpec((tm, noc4), lambda i: (i, 0))]
    if fuse:
        out_shape += [jax.ShapeDtypeStruct((gi, 1, noc4), jnp.float32)] * 2
        out_specs += [pl.BlockSpec((1, 1, noc4), lambda i: (i, 0, 0))] * 2

    vmem = _vmem_budget(2 * (4 * tm * c * 2 + 4 * c * noc4 * 2
                             + tm * noc4 * 2 + noc4 * 4))
    res = pl.pallas_call(
        functools.partial(_upsample4_kernel, compute_stats=fuse),
        out_shape=tuple(out_shape),
        grid_spec=pltpu.PrefetchScalarGridSpec(
            num_scalar_prefetch=0,
            grid=(gi,),
            in_specs=[pl.BlockSpec((tm, c), lambda i: (i, 0))] * 4
                     + [pl.BlockSpec((c, noc4), lambda i: (0, 0))] * 4
                     + [pl.BlockSpec((1, noc4), lambda i: (0, 0))],
            out_specs=out_specs),
        compiler_params=pltpu.CompilerParams(dimension_semantics=("parallel",),
                                             vmem_limit_bytes=vmem),
    )(*taps, wa, wb, wc, wd, bias4)

    if fuse:
        phases, s, q = res
        sums = jnp.sum(s, axis=0)     # (1, 4*oc)
        sqs = jnp.sum(q, axis=0)
    else:
        phases = res[0] if isinstance(res, (tuple, list)) else res
        sums = sqs = None
    if Mp != M:
        phases = phases[:M]
    return phases, sums, sqs, (n, h, w)


def upsample_block(x_nhwc, wa, wb, wc, wd, bias, gamma, beta):
    """ConvTranspose(s=2) + BatchNorm + ReLU.  BN runs on the pre-interleave (M, 4*oc)
    layout (stats folded over the 4 phases); the 2Hx2W interleave happens once, after."""
    phases, sums4, sqs4, (n, h, w) = conv_transpose2d_s2_phases(
        x_nhwc, wa, wb, wc, wd, bias)
    oc = gamma.shape[0]
    if sums4 is None:
        sums4, sqs4 = _bn_stats_2d(phases)
    sums = jnp.sum(sums4.reshape(4, oc), axis=0, keepdims=True)
    sqs = jnp.sum(sqs4.reshape(4, oc), axis=0, keepdims=True)
    scale, shift = _bn_scale_shift(sums, sqs, 4 * n * h * w, gamma, beta)
    y = _bn_apply_2d(phases, jnp.tile(scale, (1, 4)), jnp.tile(shift, (1, 4)),
                     relu=True)
    y = y.reshape(n, h, w, 2, 2, oc)
    return jnp.transpose(y, (0, 1, 3, 2, 4, 5)).reshape(n, 2 * h, 2 * w, oc)


# ---------------------------------------------------------------------------
# ResnetGenerator: parameters, one-time weight re-layout, forward
# ---------------------------------------------------------------------------

def init_params(key, input_nc, output_nc, ngf, n_blocks):
    # norm_layer=BatchNorm2d -> use_bias=False for all convs except the final one.
    keys = iter(jax.random.split(key, 128))

    def conv_w(oc, ic, k):
        return jax.random.normal(next(keys), (oc, ic, k, k), jnp.float32) * 0.02

    p = {}
    p["c0_w"] = conv_w(ngf, input_nc, 7)
    p["c0_b"] = jnp.zeros((ngf,), jnp.float32)
    p["bn0_g"], p["bn0_b"] = jnp.ones((ngf,), jnp.float32), jnp.zeros((ngf,), jnp.float32)

    for i in range(2):                       # downsampling
        mult = 2 ** i
        inc, outc = ngf * mult, ngf * mult * 2
        p[f"d{i}_w"] = conv_w(outc, inc, 3)
        p[f"d{i}_b"] = jnp.zeros((outc,), jnp.float32)
        p[f"d{i}_g"], p[f"d{i}_beta"] = jnp.ones((outc,), jnp.float32), jnp.zeros((outc,), jnp.float32)

    dim = ngf * 4
    for i in range(n_blocks):                # resnet blocks
        for s in ("1", "2"):
            p[f"r{i}_w{s}"] = conv_w(dim, dim, 3)
            p[f"r{i}_b{s}"] = jnp.zeros((dim,), jnp.float32)
            p[f"r{i}_g{s}"] = jnp.ones((dim,), jnp.float32)
            p[f"r{i}_beta{s}"] = jnp.zeros((dim,), jnp.float32)

    for i in range(2):                       # upsampling (ConvTranspose2d weights are (in, out, kh, kw))
        mult = 2 ** (2 - i)
        inc, outc = ngf * mult, ngf * mult // 2
        p[f"u{i}_w"] = jax.random.normal(next(keys), (inc, outc, 3, 3), jnp.float32) * 0.02
        p[f"u{i}_b"] = jnp.zeros((outc,), jnp.float32)
        p[f"u{i}_g"], p[f"u{i}_beta"] = jnp.ones((outc,), jnp.float32), jnp.zeros((outc,), jnp.float32)

    p["cf_w"] = conv_w(output_nc, ngf, 7)
    p["cf_b"] = jax.random.normal(next(keys), (output_nc,), jnp.float32) * 0.02  # final conv has bias
    return p


def prepare_params(p, n_blocks):
    """One-time weight re-layout (outside the forward pass): im2col (K, OC) bf16 matmul
    matrices, and per-tap (C, 4*OC) conv-transpose phase matrices."""
    q = {}

    def conv_mat(w):  # (oc, ic, kh, kw) -> (kh*kw*ic, oc) bf16
        oc, ic, kh, kw = w.shape
        return jnp.transpose(w, (2, 3, 1, 0)).reshape(kh * kw * ic, oc).astype(jnp.bfloat16)

    q["c0_w"], q["c0_b"] = conv_mat(p["c0_w"]), p["c0_b"]
    q["bn0_g"], q["bn0_b"] = p["bn0_g"], p["bn0_b"]

    for i in range(2):
        q[f"d{i}_w"], q[f"d{i}_b"] = conv_mat(p[f"d{i}_w"]), p[f"d{i}_b"]
        q[f"d{i}_g"], q[f"d{i}_beta"] = p[f"d{i}_g"], p[f"d{i}_beta"]

    for i in range(n_blocks):
        for s in ("1", "2"):
            q[f"r{i}_w{s}"] = conv_mat(p[f"r{i}_w{s}"])
            q[f"r{i}_b{s}"] = p[f"r{i}_b{s}"]
            q[f"r{i}_g{s}"] = p[f"r{i}_g{s}"]
            q[f"r{i}_beta{s}"] = p[f"r{i}_beta{s}"]

    for i in range(2):
        w = p[f"u{i}_w"]                      # PyTorch ConvTranspose2d layout (in, out, kh, kw)
        ic, oc = w.shape[0], w.shape[1]
        z = jnp.zeros((ic, oc), jnp.float32)

        def m(a, b, w=w):
            return w[:, :, a, b]              # (ic, oc)

        # columns = [phase(0,0) | phase(0,1) | phase(1,0) | phase(1,1)]; one matrix per tap.
        q[f"u{i}_wa"] = jnp.concatenate([m(1, 1), m(1, 2), m(2, 1), m(2, 2)], 1).astype(jnp.bfloat16)  # x[m,  n  ]
        q[f"u{i}_wb"] = jnp.concatenate([z,       m(1, 0), z,       m(2, 0)], 1).astype(jnp.bfloat16)  # x[m,  n+1]
        q[f"u{i}_wc"] = jnp.concatenate([z,       z,       m(0, 1), m(0, 2)], 1).astype(jnp.bfloat16)  # x[m+1,n  ]
        q[f"u{i}_wd"] = jnp.concatenate([z,       z,       z,       m(0, 0)], 1).astype(jnp.bfloat16)  # x[m+1,n+1]
        q[f"u{i}_b"] = p[f"u{i}_b"]
        q[f"u{i}_g"], q[f"u{i}_beta"] = p[f"u{i}_g"], p[f"u{i}_beta"]

    q["cf_w"], q["cf_b"] = conv_mat(p["cf_w"]), p["cf_b"]
    return q


def resnet_generator_forward(x_nchw, params, n_blocks):
    x = jnp.transpose(x_nchw, (0, 2, 3, 1)).astype(jnp.bfloat16)   # NCHW -> NHWC, bf16 acts

    # ReflectionPad2d(3) + Conv7x7 + BN + ReLU (BN partial stats fused into the conv)
    x = reflect_pad(x, 3)
    y, st = conv2d(x, params["c0_w"], params["c0_b"], 7, 7, want_stats=True)
    x = batchnorm2d(y, params["bn0_g"], params["bn0_b"], relu=True, stats=st)

    # 2x downsampling: Conv3x3 s2 p1 + BN + ReLU
    for i in range(2):
        y, st = conv2d(x, params[f"d{i}_w"], params[f"d{i}_b"], 3, 3, stride=2, padding=1,
                       want_stats=True)
        x = batchnorm2d(y, params[f"d{i}_g"], params[f"d{i}_beta"], relu=True, stats=st)

    # ResNet blocks (padding_type='reflect', use_dropout=False); skip-add fused into BN2.
    # TODO(synk): Dropout(0.5) path (use_dropout=True) not implemented; default config disables it.
    for i in range(n_blocks):
        y = reflect_pad(x, 1)
        y, st = conv2d(y, params[f"r{i}_w1"], params[f"r{i}_b1"], 3, 3, want_stats=True)
        y = batchnorm2d(y, params[f"r{i}_g1"], params[f"r{i}_beta1"], relu=True, stats=st)
        y = reflect_pad(y, 1)
        y, st = conv2d(y, params[f"r{i}_w2"], params[f"r{i}_b2"], 3, 3, want_stats=True)
        x = batchnorm2d(y, params[f"r{i}_g2"], params[f"r{i}_beta2"], relu=False,
                        residual=x, stats=st)

    # 2x upsampling: fused 4-phase ConvTranspose3x3 s2 p1 op1 + BN + ReLU
    for i in range(2):
        x = upsample_block(x, params[f"u{i}_wa"], params[f"u{i}_wb"], params[f"u{i}_wc"],
                           params[f"u{i}_wd"], params[f"u{i}_b"],
                           params[f"u{i}_g"], params[f"u{i}_beta"])

    # ReflectionPad2d(3) + Conv7x7 + Tanh (tanh fused into the matmul epilogue, f32 out)
    x = reflect_pad(x, 3)
    y, _ = conv2d(x, params["cf_w"], params["cf_b"], 7, 7, activation="tanh",
                  out_dtype=jnp.float32)
    return jnp.transpose(y, (0, 3, 1, 2))                          # back to NCHW


if __name__ == "__main__":
    key = jax.random.PRNGKey(0)
    k_x, k_p = jax.random.split(key)

    input_nc, output_nc, ngf, n_blocks = 3, 3, 8, 2
    batch, spatial = 2, 16

    x = jax.random.normal(k_x, (batch, input_nc, spatial, spatial), jnp.float32)
    params = prepare_params(init_params(k_p, input_nc, output_nc, ngf, n_blocks), n_blocks)

    fwd = jax.jit(functools.partial(resnet_generator_forward, n_blocks=n_blocks))
    out = fwd(x, params)
    jax.block_until_ready(out)

    assert out.shape == (batch, output_nc, spatial, spatial), out.shape
    assert bool(jnp.all(jnp.isfinite(out)))
    print("KERNEL_OK")
</pallas_src>

<mosaic_0001>
module attributes {stable_mosaic.version = 11 : i64} {
  func.func @_matmul_k1_kernel(%arg0: i32, %arg1: i32, %arg2: memref<512x147xbf16, #tpu.memory_space<vmem>>, %arg3: memref<147x8xbf16, #tpu.memory_space<vmem>>, %arg4: memref<1x8xf32, #tpu.memory_space<vmem>>, %arg5: memref<512x8xbf16, #tpu.memory_space<vmem>>, %arg6: memref<1x1x8xf32, #tpu.memory_space<vmem>>, %arg7: memref<1x1x8xf32, #tpu.memory_space<vmem>>) attributes {dimension_semantics = [#tpu.dimension_semantics<parallel>, #tpu.dimension_semantics<parallel>], iteration_bounds = array<i64: 1, 1>, scalar_prefetch = 0 : i64, scratch_operands = 0 : i64, tpu.core_type = #tpu.core_type<tc>, window_params = [{transform_indices = @transform_0, window_bounds = array<i64: 512, 147>}, {transform_indices = @transform_1, window_bounds = array<i64: 147, 8>}, {transform_indices = @transform_2, window_bounds = array<i64: 1, 8>}, {transform_indices = @transform_3, window_bounds = array<i64: 512, 8>}, {transform_indices = @transform_4, window_bounds = array<i64: 1, 1, 8>}, {transform_indices = @transform_5, window_bounds = array<i64: 1, 1, 8>}]} {
    %c0 = arith.constant 0 : index
    %c0_0 = arith.constant 0 : index
    %0 = vector.load %arg2[%c0, %c0_0] : memref<512x147xbf16, #tpu.memory_space<vmem>>, vector<512x147xbf16>
    %c0_1 = arith.constant 0 : index
    %c0_2 = arith.constant 0 : index
    %1 = vector.load %arg3[%c0_1, %c0_2] : memref<147x8xbf16, #tpu.memory_space<vmem>>, vector<147x8xbf16>
    %cst = arith.constant dense<0.000000e+00> : vector<512x8xf32>
    %2 = tpu.matmul %0, %1, %cst {dimension_numbers = #tpu.dot_dimension_numbers<[1], [0], [0], [1], [0, 0, 1, 1], [], []>} : vector<512x147xbf16>, vector<147x8xbf16>, vector<512x8xf32> -> vector<512x8xf32>
    %c0_3 = arith.constant 0 : index
    %c0_4 = arith.constant 0 : index
    %3 = vector.load %arg4[%c0_3, %c0_4] : memref<1x8xf32, #tpu.memory_space<vmem>>, vector<1x8xf32>
    %4 = vector.broadcast %3 : vector<1x8xf32> to vector<512x8xf32>
    %5 = arith.addf %2, %4 : vector<512x8xf32>
    %cst_5 = arith.constant dense<0.000000e+00> : vector<8xf32>
    %6 = vector.multi_reduction <add>, %5, %cst_5 [0] : vector<512x8xf32> to vector<8xf32>
    %7 = vector.shape_cast %6 : vector<8xf32> to vector<1x8xf32>
    %8 = vector.shape_cast %7 : vector<1x8xf32> to vector<1x1x8xf32>
    %c0_6 = arith.constant 0 : index
    %c0_7 = arith.constant 0 : index
    %c0_8 = arith.constant 0 : index
    %9 = vector.load %arg6[%c0_6, %c0_7, %c0_8] : memref<1x1x8xf32, #tpu.memory_space<vmem>>, vector<1x1x8xf32>
    tpu.vector_store %arg6[%c0_6, %c0_7, %c0_8], %8 {strides = array<i32>} : memref<1x1x8xf32, #tpu.memory_space<vmem>>, vector<1x1x8xf32>,
    %10 = arith.mulf %5, %5 : vector<512x8xf32>
    %cst_9 = arith.constant dense<0.000000e+00> : vector<8xf32>
    %11 = vector.multi_reduction <add>, %10, %cst_9 [0] : vector<512x8xf32> to vector<8xf32>
    %12 = vector.shape_cast %11 : vector<8xf32> to vector<1x8xf32>
    %13 = vector.shape_cast %12 : vector<1x8xf32> to vector<1x1x8xf32>
    %c0_10 = arith.constant 0 : index
    %c0_11 = arith.constant 0 : index
    %c0_12 = arith.constant 0 : index
    %14 = vector.load %arg7[%c0_10, %c0_11, %c0_12] : memref<1x1x8xf32, #tpu.memory_space<vmem>>, vector<1x1x8xf32>
    tpu.vector_store %arg7[%c0_10, %c0_11, %c0_12], %13 {strides = array<i32>} : memref<1x1x8xf32, #tpu.memory_space<vmem>>, vector<1x1x8xf32>,
    %15 = arith.truncf %5 : vector<512x8xf32> to vector<512x8xbf16>
    %c0_13 = arith.constant 0 : index
    %c0_14 = arith.constant 0 : index
    %16 = vector.load %arg5[%c0_13, %c0_14] : memref<512x8xbf16, #tpu.memory_space<vmem>>, vector<512x8xbf16>
    tpu.vector_store %arg5[%c0_13, %c0_14], %15 {strides = array<i32>} : memref<512x8xbf16, #tpu.memory_space<vmem>>, vector<512x8xbf16>,
    return
  }
  func.func @transform_0(%arg0: i32, %arg1: i32) -> (i32, i32) {
    %c0_i32 = arith.constant 0 : i32
    %c0_i32_0 = arith.constant 0 : i32
    return %arg0, %c0_i32 : i32, i32
  }
  func.func @transform_1(%arg0: i32, %arg1: i32) -> (i32, i32) {
    %c0_i32 = arith.constant 0 : i32
    %c0_i32_0 = arith.constant 0 : i32
    return %c0_i32, %arg1 : i32, i32
  }
  func.func @transform_2(%arg0: i32, %arg1: i32) -> (i32, i32) {
    %c0_i32 = arith.constant 0 : i32
    %c0_i32_0 = arith.constant 0 : i32
    return %c0_i32, %arg1 : i32, i32
  }
  func.func @transform_3(%arg0: i32, %arg1: i32) -> (i32, i32) {
    %c0_i32 = arith.constant 0 : i32
    return %arg0, %arg1 : i32, i32
  }
  func.func @transform_4(%arg0: i32, %arg1: i32) -> (i32, i32, i32) {
    %c0_i32 = arith.constant 0 : i32
    %c0_i32_0 = arith.constant 0 : i32
    return %arg0, %c0_i32, %arg1 : i32, i32, i32
  }
  func.func @transform_5(%arg0: i32, %arg1: i32) -> (i32, i32, i32) {
    %c0_i32 = arith.constant 0 : i32
    %c0_i32_0 = arith.constant 0 : i32
    return %arg0, %c0_i32, %arg1 : i32, i32, i32
  }
}

module attributes {stable_mosaic.version = 11 : i64} {
  func.func @_bn_apply_kernel(%arg0: i32, %arg1: memref<16x256xbf16, #tpu.memory_space<vmem>>, %arg2: memref<1x256xf32, #tpu.memory_space<vmem>>, %arg3: memref<1x256xf32, #tpu.memory_space<vmem>>, %arg4: memref<16x256xbf16, #tpu.memory_space<vmem>>) attributes {dimension_semantics = [#tpu.dimension_semantics<parallel>], iteration_bounds = array<i64: 1>, scalar_prefetch = 0 : i64, scratch_operands = 0 : i64, tpu.core_type = #tpu.core_type<tc>, window_params = [{transform_indices = @transform_0, window_bounds = array<i64: 16, 256>}, {pipeline_mode = #tpu.pipeline_mode<synchronous>, transform_indices = @transform_1, window_bounds = array<i64: 1, 256>}, {pipeline_mode = #tpu.pipeline_mode<synchronous>, transform_indices = @transform_2, window_bounds = array<i64: 1, 256>}, {transform_indices = @transform_3, window_bounds = array<i64: 16, 256>}]} {
    %c0 = arith.constant 0 : index
    %c0_0 = arith.constant 0 : index
    %0 = vector.load %arg1[%c0, %c0_0] : memref<16x256xbf16, #tpu.memory_space<vmem>>, vector<16x256xbf16>
    %1 = arith.extf %0 : vector<16x256xbf16> to vector<16x256xf32>
    %c0_1 = arith.constant 0 : index
    %c0_2 = arith.constant 0 : index
    %2 = vector.load %arg2[%c0_1, %c0_2] : memref<1x256xf32, #tpu.memory_space<vmem>>, vector<1x256xf32>
    %3 = vector.broadcast %2 : vector<1x256xf32> to vector<16x256xf32>
    %4 = arith.mulf %1, %3 : vector<16x256xf32>
    %c0_3 = arith.constant 0 : index
    %c0_4 = arith.constant 0 : index
    %5 = vector.load %arg3[%c0_3, %c0_4] : memref<1x256xf32, #tpu.memory_space<vmem>>, vector<1x256xf32>
    %6 = vector.broadcast %5 : vector<1x256xf32> to vector<16x256xf32>
    %7 = arith.addf %4, %6 : vector<16x256xf32>
    %cst = arith.constant 0.000000e+00 : f32
    %8 = vector.broadcast %cst : f32 to vector<16x256xf32>
    %9 = arith.maximumf %7, %8 : vector<16x256xf32>
    %10 = arith.truncf %9 : vector<16x256xf32> to vector<16x256xbf16>
    %c0_5 = arith.constant 0 : index
    %c0_6 = arith.constant 0 : index
    %11 = vector.load %arg4[%c0_5, %c0_6] : memref<16x256xbf16, #tpu.memory_space<vmem>>, vector<16x256xbf16>
    tpu.vector_store %arg4[%c0_5, %c0_6], %10 {strides = array<i32>} : memref<16x256xbf16, #tpu.memory_space<vmem>>, vector<16x256xbf16>,
    return
  }
  func.func @transform_0(%arg0: i32) -> (i32, i32) {
    %c0_i32 = arith.constant 0 : i32
    %c0_i32_0 = arith.constant 0 : i32
    return %arg0, %c0_i32 : i32, i32
  }
  func.func @transform_1(%arg0: i32) -> (i32, i32) {
    %c0_i32 = arith.constant 0 : i32
    %c0_i32_0 = arith.constant 0 : i32
    %c0_i32_1 = arith.constant 0 : i32
    return %c0_i32, %c0_i32_0 : i32, i32
  }
  func.func @transform_2(%arg0: i32) -> (i32, i32) {
    %c0_i32 = arith.constant 0 : i32
    %c0_i32_0 = arith.constant 0 : i32
    %c0_i32_1 = arith.constant 0 : i32
    return %c0_i32, %c0_i32_0 : i32, i32
  }
  func.func @transform_3(%arg0: i32) -> (i32, i32) {
    %c0_i32 = arith.constant 0 : i32
    %c0_i32_0 = arith.constant 0 : i32
    return %arg0, %c0_i32 : i32, i32
  }
}

module attributes {stable_mosaic.version = 11 : i64} {
  func.func @_matmul_k1_kernel(%arg0: i32, %arg1: i32, %arg2: memref<128x72xbf16, #tpu.memory_space<vmem>>, %arg3: memref<72x16xbf16, #tpu.memory_space<vmem>>, %arg4: memref<1x16xf32, #tpu.memory_space<vmem>>, %arg5: memref<128x16xbf16, #tpu.memory_space<vmem>>, %arg6: memref<1x1x16xf32, #tpu.memory_space<vmem>>, %arg7: memref<1x1x16xf32, #tpu.memory_space<vmem>>) attributes {dimension_semantics = [#tpu.dimension_semantics<parallel>, #tpu.dimension_semantics<parallel>], iteration_bounds = array<i64: 1, 1>, scalar_prefetch = 0 : i64, scratch_operands = 0 : i64, tpu.core_type = #tpu.core_type<tc>, window_params = [{transform_indices = @transform_0, window_bounds = array<i64: 128, 72>}, {transform_indices = @transform_1, window_bounds = array<i64: 72, 16>}, {transform_indices = @transform_2, window_bounds = array<i64: 1, 16>}, {transform_indices = @transform_3, window_bounds = array<i64: 128, 16>}, {transform_indices = @transform_4, window_bounds = array<i64: 1, 1, 16>}, {transform_indices = @transform_5, window_bounds = array<i64: 1, 1, 16>}]} {
    %c0 = arith.constant 0 : index
    %c0_0 = arith.constant 0 : index
    %0 = vector.load %arg2[%c0, %c0_0] : memref<128x72xbf16, #tpu.memory_space<vmem>>, vector<128x72xbf16>
    %c0_1 = arith.constant 0 : index
    %c0_2 = arith.constant 0 : index
    %1 = vector.load %arg3[%c0_1, %c0_2] : memref<72x16xbf16, #tpu.memory_space<vmem>>, vector<72x16xbf16>
    %cst = arith.constant dense<0.000000e+00> : vector<128x16xf32>
    %2 = tpu.matmul %0, %1, %cst {dimension_numbers = #tpu.dot_dimension_numbers<[1], [0], [0], [1], [0, 0, 1, 1], [], []>} : vector<128x72xbf16>, vector<72x16xbf16>, vector<128x16xf32> -> vector<128x16xf32>
    %c0_3 = arith.constant 0 : index
    %c0_4 = arith.constant 0 : index
    %3 = vector.load %arg4[%c0_3, %c0_4] : memref<1x16xf32, #tpu.memory_space<vmem>>, vector<1x16xf32>
    %4 = vector.broadcast %3 : vector<1x16xf32> to vector<128x16xf32>
    %5 = arith.addf %2, %4 : vector<128x16xf32>
    %cst_5 = arith.constant dense<0.000000e+00> : vector<16xf32>
    %6 = vector.multi_reduction <add>, %5, %cst_5 [0] : vector<128x16xf32> to vector<16xf32>
    %7 = vector.shape_cast %6 : vector<16xf32> to vector<1x16xf32>
    %8 = vector.shape_cast %7 : vector<1x16xf32> to vector<1x1x16xf32>
    %c0_6 = arith.constant 0 : index
    %c0_7 = arith.constant 0 : index
    %c0_8 = arith.constant 0 : index
    %9 = vector.load %arg6[%c0_6, %c0_7, %c0_8] : memref<1x1x16xf32, #tpu.memory_space<vmem>>, vector<1x1x16xf32>
    tpu.vector_store %arg6[%c0_6, %c0_7, %c0_8], %8 {strides = array<i32>} : memref<1x1x16xf32, #tpu.memory_space<vmem>>, vector<1x1x16xf32>,
    %10 = arith.mulf %5, %5 : vector<128x16xf32>
    %cst_9 = arith.constant dense<0.000000e+00> : vector<16xf32>
    %11 = vector.multi_reduction <add>, %10, %cst_9 [0] : vector<128x16xf32> to vector<16xf32>
    %12 = vector.shape_cast %11 : vector<16xf32> to vector<1x16xf32>
    %13 = vector.shape_cast %12 : vector<1x16xf32> to vector<1x1x16xf32>
    %c0_10 = arith.constant 0 : index
    %c0_11 = arith.constant 0 : index
    %c0_12 = arith.constant 0 : index
    %14 = vector.load %arg7[%c0_10, %c0_11, %c0_12] : memref<1x1x16xf32, #tpu.memory_space<vmem>>, vector<1x1x16xf32>
    tpu.vector_store %arg7[%c0_10, %c0_11, %c0_12], %13 {strides = array<i32>} : memref<1x1x16xf32, #tpu.memory_space<vmem>>, vector<1x1x16xf32>,
    %15 = arith.truncf %5 : vector<128x16xf32> to vector<128x16xbf16>
    %c0_13 = arith.constant 0 : index
    %c0_14 = arith.constant 0 : index
    %16 = vector.load %arg5[%c0_13, %c0_14] : memref<128x16xbf16, #tpu.memory_space<vmem>>, vector<128x16xbf16>
    tpu.vector_store %arg5[%c0_13, %c0_14], %15 {strides = array<i32>} : memref<128x16xbf16, #tpu.memory_space<vmem>>, vector<128x16xbf16>,
    return
  }
  func.func @transform_0(%arg0: i32, %arg1: i32) -> (i32, i32) {
    %c0_i32 = arith.constant 0 : i32
    %c0_i32_0 = arith.constant 0 : i32
    return %arg0, %c0_i32 : i32, i32
  }
  func.func @transform_1(%arg0: i32, %arg1: i32) -> (i32, i32) {
    %c0_i32 = arith.constant 0 : i32
    %c0_i32_0 = arith.constant 0 : i32
    return %c0_i32, %arg1 : i32, i32
  }
  func.func @transform_2(%arg0: i32, %arg1: i32) -> (i32, i32) {
    %c0_i32 = arith.constant 0 : i32
    %c0_i32_0 = arith.constant 0 : i32
    return %c0_i32, %arg1 : i32, i32
  }
  func.func @transform_3(%arg0: i32, %arg1: i32) -> (i32, i32) {
    %c0_i32 = arith.constant 0 : i32
    return %arg0, %arg1 : i32, i32
  }
  func.func @transform_4(%arg0: i32, %arg1: i32) -> (i32, i32, i32) {
    %c0_i32 = arith.constant 0 : i32
    %c0_i32_0 = arith.constant 0 : i32
    return %arg0, %c0_i32, %arg1 : i32, i32, i32
  }
  func.func @transform_5(%arg0: i32, %arg1: i32) -> (i32, i32, i32) {
    %c0_i32 = arith.constant 0 : i32
    %c0_i32_0 = arith.constant 0 : i32
    return %arg0, %c0_i32, %arg1 : i32, i32, i32
  }
}

module attributes {stable_mosaic.version = 11 : i64} {
  func.func @_bn_apply_kernel(%arg0: i32, %arg1: memref<8x256xbf16, #tpu.memory_space<vmem>>, %arg2: memref<1x256xf32, #tpu.memory_space<vmem>>, %arg3: memref<1x256xf32, #tpu.memory_space<vmem>>, %arg4: memref<8x256xbf16, #tpu.memory_space<vmem>>) attributes {dimension_semantics = [#tpu.dimension_semantics<parallel>], iteration_bounds = array<i64: 1>, scalar_prefetch = 0 : i64, scratch_operands = 0 : i64, tpu.core_type = #tpu.core_type<tc>, window_params = [{transform_indices = @transform_0, window_bounds = array<i64: 8, 256>}, {pipeline_mode = #tpu.pipeline_mode<synchronous>, transform_indices = @transform_1, window_bounds = array<i64: 1, 256>}, {pipeline_mode = #tpu.pipeline_mode<synchronous>, transform_indices = @transform_2, window_bounds = array<i64: 1, 256>}, {transform_indices = @transform_3, window_bounds = array<i64: 8, 256>}]} {
    %c0 = arith.constant 0 : index
    %c0_0 = arith.constant 0 : index
    %0 = vector.load %arg1[%c0, %c0_0] : memref<8x256xbf16, #tpu.memory_space<vmem>>, vector<8x256xbf16>
    %1 = arith.extf %0 : vector<8x256xbf16> to vector<8x256xf32>
    %c0_1 = arith.constant 0 : index
    %c0_2 = arith.constant 0 : index
    %2 = vector.load %arg2[%c0_1, %c0_2] : memref<1x256xf32, #tpu.memory_space<vmem>>, vector<1x256xf32>
    %3 = vector.broadcast %2 : vector<1x256xf32> to vector<8x256xf32>
    %4 = arith.mulf %1, %3 : vector<8x256xf32>
    %c0_3 = arith.constant 0 : index
    %c0_4 = arith.constant 0 : index
    %5 = vector.load %arg3[%c0_3, %c0_4] : memref<1x256xf32, #tpu.memory_space<vmem>>, vector<1x256xf32>
    %6 = vector.broadcast %5 : vector<1x256xf32> to vector<8x256xf32>
    %7 = arith.addf %4, %6 : vector<8x256xf32>
    %cst = arith.constant 0.000000e+00 : f32
    %8 = vector.broadcast %cst : f32 to vector<8x256xf32>
    %9 = arith.maximumf %7, %8 : vector<8x256xf32>
    %10 = arith.truncf %9 : vector<8x256xf32> to vector<8x256xbf16>
    %c0_5 = arith.constant 0 : index
    %c0_6 = arith.constant 0 : index
    %11 = vector.load %arg4[%c0_5, %c0_6] : memref<8x256xbf16, #tpu.memory_space<vmem>>, vector<8x256xbf16>
    tpu.vector_store %arg4[%c0_5, %c0_6], %10 {strides = array<i32>} : memref<8x256xbf16, #tpu.memory_space<vmem>>, vector<8x256xbf16>,
    return
  }
  func.func @transform_0(%arg0: i32) -> (i32, i32) {
    %c0_i32 = arith.constant 0 : i32
    %c0_i32_0 = arith.constant 0 : i32
    return %arg0, %c0_i32 : i32, i32
  }
  func.func @transform_1(%arg0: i32) -> (i32, i32) {
    %c0_i32 = arith.constant 0 : i32
    %c0_i32_0 = arith.constant 0 : i32
    %c0_i32_1 = arith.constant 0 : i32
    return %c0_i32, %c0_i32_0 : i32, i32
  }
  func.func @transform_2(%arg0: i32) -> (i32, i32) {
    %c0_i32 = arith.constant 0 : i32
    %c0_i32_0 = arith.constant 0 : i32
    %c0_i32_1 = arith.constant 0 : i32
    return %c0_i32, %c0_i32_0 : i32, i32
  }
  func.func @transform_3(%arg0: i32) -> (i32, i32) {
    %c0_i32 = arith.constant 0 : i32
    %c0_i32_0 = arith.constant 0 : i32
    return %arg0, %c0_i32 : i32, i32
  }
}

module attributes {stable_mosaic.version = 11 : i64} {
  func.func @_matmul_k1_kernel(%arg0: i32, %arg1: i32, %arg2: memref<32x144xbf16, #tpu.memory_space<vmem>>, %arg3: memref<144x32xbf16, #tpu.memory_space<vmem>>, %arg4: memref<1x32xf32, #tpu.memory_space<vmem>>, %arg5: memref<32x32xbf16, #tpu.memory_space<vmem>>, %arg6: memref<1x1x32xf32, #tpu.memory_space<vmem>>, %arg7: memref<1x1x32xf32, #tpu.memory_space<vmem>>) attributes {dimension_semantics = [#tpu.dimension_semantics<parallel>, #tpu.dimension_semantics<parallel>], iteration_bounds = array<i64: 1, 1>, scalar_prefetch = 0 : i64, scratch_operands = 0 : i64, tpu.core_type = #tpu.core_type<tc>, window_params = [{transform_indices = @transform_0, window_bounds = array<i64: 32, 144>}, {transform_indices = @transform_1, window_bounds = array<i64: 144, 32>}, {transform_indices = @transform_2, window_bounds = array<i64: 1, 32>}, {transform_indices = @transform_3, window_bounds = array<i64: 32, 32>}, {transform_indices = @transform_4, window_bounds = array<i64: 1, 1, 32>}, {transform_indices = @transform_5, window_bounds = array<i64: 1, 1, 32>}]} {
    %c0 = arith.constant 0 : index
    %c0_0 = arith.constant 0 : index
    %0 = vector.load %arg2[%c0, %c0_0] : memref<32x144xbf16, #tpu.memory_space<vmem>>, vector<32x144xbf16>
    %c0_1 = arith.constant 0 : index
    %c0_2 = arith.constant 0 : index
    %1 = vector.load %arg3[%c0_1, %c0_2] : memref<144x32xbf16, #tpu.memory_space<vmem>>, vector<144x32xbf16>
    %cst = arith.constant dense<0.000000e+00> : vector<32x32xf32>
    %2 = tpu.matmul %0, %1, %cst {dimension_numbers = #tpu.dot_dimension_numbers<[1], [0], [0], [1], [0, 0, 1, 1], [], []>} : vector<32x144xbf16>, vector<144x32xbf16>, vector<32x32xf32> -> vector<32x32xf32>
    %c0_3 = arith.constant 0 : index
    %c0_4 = arith.constant 0 : index
    %3 = vector.load %arg4[%c0_3, %c0_4] : memref<1x32xf32, #tpu.memory_space<vmem>>, vector<1x32xf32>
    %4 = vector.broadcast %3 : vector<1x32xf32> to vector<32x32xf32>
    %5 = arith.addf %2, %4 : vector<32x32xf32>
    %cst_5 = arith.constant dense<0.000000e+00> : vector<32xf32>
    %6 = vector.multi_reduction <add>, %5, %cst_5 [0] : vector<32x32xf32> to vector<32xf32>
    %7 = vector.shape_cast %6 : vector<32xf32> to vector<1x32xf32>
    %8 = vector.shape_cast %7 : vector<1x32xf32> to vector<1x1x32xf32>
    %c0_6 = arith.constant 0 : index
    %c0_7 = arith.constant 0 : index
    %c0_8 = arith.constant 0 : index
    %9 = vector.load %arg6[%c0_6, %c0_7, %c0_8] : memref<1x1x32xf32, #tpu.memory_space<vmem>>, vector<1x1x32xf32>
    tpu.vector_store %arg6[%c0_6, %c0_7, %c0_8], %8 {strides = array<i32>} : memref<1x1x32xf32, #tpu.memory_space<vmem>>, vector<1x1x32xf32>,
    %10 = arith.mulf %5, %5 : vector<32x32xf32>
    %cst_9 = arith.constant dense<0.000000e+00> : vector<32xf32>
    %11 = vector.multi_reduction <add>, %10, %cst_9 [0] : vector<32x32xf32> to vector<32xf32>
    %12 = vector.shape_cast %11 : vector<32xf32> to vector<1x32xf32>
    %13 = vector.shape_cast %12 : vector<1x32xf32> to vector<1x1x32xf32>
    %c0_10 = arith.constant 0 : index
    %c0_11 = arith.constant 0 : index
    %c0_12 = arith.constant 0 : index
    %14 = vector.load %arg7[%c0_10, %c0_11, %c0_12] : memref<1x1x32xf32, #tpu.memory_space<vmem>>, vector<1x1x32xf32>
    tpu.vector_store %arg7[%c0_10, %c0_11, %c0_12], %13 {strides = array<i32>} : memref<1x1x32xf32, #tpu.memory_space<vmem>>, vector<1x1x32xf32>,
    %15 = arith.truncf %5 : vector<32x32xf32> to vector<32x32xbf16>
    %c0_13 = arith.constant 0 : index
    %c0_14 = arith.constant 0 : index
    %16 = vector.load %arg5[%c0_13, %c0_14] : memref<32x32xbf16, #tpu.memory_space<vmem>>, vector<32x32xbf16>
    tpu.vector_store %arg5[%c0_13, %c0_14], %15 {strides = array<i32>} : memref<32x32xbf16, #tpu.memory_space<vmem>>, vector<32x32xbf16>,
    return
  }
  func.func @transform_0(%arg0: i32, %arg1: i32) -> (i32, i32) {
    %c0_i32 = arith.constant 0 : i32
    %c0_i32_0 = arith.constant 0 : i32
    return %arg0, %c0_i32 : i32, i32
  }
  func.func @transform_1(%arg0: i32, %arg1: i32) -> (i32, i32) {
    %c0_i32 = arith.constant 0 : i32
    %c0_i32_0 = arith.constant 0 : i32
    return %c0_i32, %arg1 : i32, i32
  }
  func.func @transform_2(%arg0: i32, %arg1: i32) -> (i32, i32) {
    %c0_i32 = arith.constant 0 : i32
    %c0_i32_0 = arith.constant 0 : i32
    return %c0_i32, %arg1 : i32, i32
  }
  func.func @transform_3(%arg0: i32, %arg1: i32) -> (i32, i32) {
    %c0_i32 = arith.constant 0 : i32
    return %arg0, %arg1 : i32, i32
  }
  func.func @transform_4(%arg0: i32, %arg1: i32) -> (i32, i32, i32) {
    %c0_i32 = arith.constant 0 : i32
    %c0_i32_0 = arith.constant 0 : i32
    return %arg0, %c0_i32, %arg1 : i32, i32, i32
  }
  func.func @transform_5(%arg0: i32, %arg1: i32) -> (i32, i32, i32) {
    %c0_i32 = arith.constant 0 : i32
    %c0_i32_0 = arith.constant 0 : i32
    return %arg0, %c0_i32, %arg1 : i32, i32, i32
  }
}

module attributes {stable_mosaic.version = 11 : i64} {
  func.func @_bn_apply_kernel(%arg0: i32, %arg1: memref<4x256xbf16, #tpu.memory_space<vmem>>, %arg2: memref<1x256xf32, #tpu.memory_space<vmem>>, %arg3: memref<1x256xf32, #tpu.memory_space<vmem>>, %arg4: memref<4x256xbf16, #tpu.memory_space<vmem>>) attributes {dimension_semantics = [#tpu.dimension_semantics<parallel>], iteration_bounds = array<i64: 1>, scalar_prefetch = 0 : i64, scratch_operands = 0 : i64, tpu.core_type = #tpu.core_type<tc>, window_params = [{transform_indices = @transform_0, window_bounds = array<i64: 4, 256>}, {pipeline_mode = #tpu.pipeline_mode<synchronous>, transform_indices = @transform_1, window_bounds = array<i64: 1, 256>}, {pipeline_mode = #tpu.pipeline_mode<synchronous>, transform_indices = @transform_2, window_bounds = array<i64: 1, 256>}, {transform_indices = @transform_3, window_bounds = array<i64: 4, 256>}]} {
    %c0 = arith.constant 0 : index
    %c0_0 = arith.constant 0 : index
    %0 = vector.load %arg1[%c0, %c0_0] : memref<4x256xbf16, #tpu.memory_space<vmem>>, vector<4x256xbf16>
    %1 = arith.extf %0 : vector<4x256xbf16> to vector<4x256xf32>
    %c0_1 = arith.constant 0 : index
    %c0_2 = arith.constant 0 : index
    %2 = vector.load %arg2[%c0_1, %c0_2] : memref<1x256xf32, #tpu.memory_space<vmem>>, vector<1x256xf32>
    %3 = vector.broadcast %2 : vector<1x256xf32> to vector<4x256xf32>
    %4 = arith.mulf %1, %3 : vector<4x256xf32>
    %c0_3 = arith.constant 0 : index
    %c0_4 = arith.constant 0 : index
    %5 = vector.load %arg3[%c0_3, %c0_4] : memref<1x256xf32, #tpu.memory_space<vmem>>, vector<1x256xf32>
    %6 = vector.broadcast %5 : vector<1x256xf32> to vector<4x256xf32>
    %7 = arith.addf %4, %6 : vector<4x256xf32>
    %cst = arith.constant 0.000000e+00 : f32
    %8 = vector.broadcast %cst : f32 to vector<4x256xf32>
    %9 = arith.maximumf %7, %8 : vector<4x256xf32>
    %10 = arith.truncf %9 : vector<4x256xf32> to vector<4x256xbf16>
    %c0_5 = arith.constant 0 : index
    %c0_6 = arith.constant 0 : index
    %11 = vector.load %arg4[%c0_5, %c0_6] : memref<4x256xbf16, #tpu.memory_space<vmem>>, vector<4x256xbf16>
    tpu.vector_store %arg4[%c0_5, %c0_6], %10 {strides = array<i32>} : memref<4x256xbf16, #tpu.memory_space<vmem>>, vector<4x256xbf16>,
    return
  }
  func.func @transform_0(%arg0: i32) -> (i32, i32) {
    %c0_i32 = arith.constant 0 : i32
    %c0_i32_0 = arith.constant 0 : i32
    return %arg0, %c0_i32 : i32, i32
  }
  func.func @transform_1(%arg0: i32) -> (i32, i32) {
    %c0_i32 = arith.constant 0 : i32
    %c0_i32_0 = arith.constant 0 : i32
    %c0_i32_1 = arith.constant 0 : i32
    return %c0_i32, %c0_i32_0 : i32, i32
  }
  func.func @transform_2(%arg0: i32) -> (i32, i32) {
    %c0_i32 = arith.constant 0 : i32
    %c0_i32_0 = arith.constant 0 : i32
    %c0_i32_1 = arith.constant 0 : i32
    return %c0_i32, %c0_i32_0 : i32, i32
  }
  func.func @transform_3(%arg0: i32) -> (i32, i32) {
    %c0_i32 = arith.constant 0 : i32
    %c0_i32_0 = arith.constant 0 : i32
    return %arg0, %c0_i32 : i32, i32
  }
}

module attributes {stable_mosaic.version = 11 : i64} {
  func.func @_matmul_k1_kernel(%arg0: i32, %arg1: i32, %arg2: memref<32x288xbf16, #tpu.memory_space<vmem>>, %arg3: memref<288x32xbf16, #tpu.memory_space<vmem>>, %arg4: memref<1x32xf32, #tpu.memory_space<vmem>>, %arg5: memref<32x32xbf16, #tpu.memory_space<vmem>>, %arg6: memref<1x1x32xf32, #tpu.memory_space<vmem>>, %arg7: memref<1x1x32xf32, #tpu.memory_space<vmem>>) attributes {dimension_semantics = [#tpu.dimension_semantics<parallel>, #tpu.dimension_semantics<parallel>], iteration_bounds = array<i64: 1, 1>, scalar_prefetch = 0 : i64, scratch_operands = 0 : i64, tpu.core_type = #tpu.core_type<tc>, window_params = [{transform_indices = @transform_0, window_bounds = array<i64: 32, 288>}, {transform_indices = @transform_1, window_bounds = array<i64: 288, 32>}, {transform_indices = @transform_2, window_bounds = array<i64: 1, 32>}, {transform_indices = @transform_3, window_bounds = array<i64: 32, 32>}, {transform_indices = @transform_4, window_bounds = array<i64: 1, 1, 32>}, {transform_indices = @transform_5, window_bounds = array<i64: 1, 1, 32>}]} {
    %c0 = arith.constant 0 : index
    %c0_0 = arith.constant 0 : index
    %0 = vector.load %arg2[%c0, %c0_0] : memref<32x288xbf16, #tpu.memory_space<vmem>>, vector<32x288xbf16>
    %c0_1 = arith.constant 0 : index
    %c0_2 = arith.constant 0 : index
    %1 = vector.load %arg3[%c0_1, %c0_2] : memref<288x32xbf16, #tpu.memory_space<vmem>>, vector<288x32xbf16>
    %cst = arith.constant dense<0.000000e+00> : vector<32x32xf32>
    %2 = tpu.matmul %0, %1, %cst {dimension_numbers = #tpu.dot_dimension_numbers<[1], [0], [0], [1], [0, 0, 1, 1], [], []>} : vector<32x288xbf16>, vector<288x32xbf16>, vector<32x32xf32> -> vector<32x32xf32>
    %c0_3 = arith.constant 0 : index
    %c0_4 = arith.constant 0 : index
    %3 = vector.load %arg4[%c0_3, %c0_4] : memref<1x32xf32, #tpu.memory_space<vmem>>, vector<1x32xf32>
    %4 = vector.broadcast %3 : vector<1x32xf32> to vector<32x32xf32>
    %5 = arith.addf %2, %4 : vector<32x32xf32>
    %cst_5 = arith.constant dense<0.000000e+00> : vector<32xf32>
    %6 = vector.multi_reduction <add>, %5, %cst_5 [0] : vector<32x32xf32> to vector<32xf32>
    %7 = vector.shape_cast %6 : vector<32xf32> to vector<1x32xf32>
    %8 = vector.shape_cast %7 : vector<1x32xf32> to vector<1x1x32xf32>
    %c0_6 = arith.constant 0 : index
    %c0_7 = arith.constant 0 : index
    %c0_8 = arith.constant 0 : index
    %9 = vector.load %arg6[%c0_6, %c0_7, %c0_8] : memref<1x1x32xf32, #tpu.memory_space<vmem>>, vector<1x1x32xf32>
    tpu.vector_store %arg6[%c0_6, %c0_7, %c0_8], %8 {strides = array<i32>} : memref<1x1x32xf32, #tpu.memory_space<vmem>>, vector<1x1x32xf32>,
    %10 = arith.mulf %5, %5 : vector<32x32xf32>
    %cst_9 = arith.constant dense<0.000000e+00> : vector<32xf32>
    %11 = vector.multi_reduction <add>, %10, %cst_9 [0] : vector<32x32xf32> to vector<32xf32>
    %12 = vector.shape_cast %11 : vector<32xf32> to vector<1x32xf32>
    %13 = vector.shape_cast %12 : vector<1x32xf32> to vector<1x1x32xf32>
    %c0_10 = arith.constant 0 : index
    %c0_11 = arith.constant 0 : index
    %c0_12 = arith.constant 0 : index
    %14 = vector.load %arg7[%c0_10, %c0_11, %c0_12] : memref<1x1x32xf32, #tpu.memory_space<vmem>>, vector<1x1x32xf32>
    tpu.vector_store %arg7[%c0_10, %c0_11, %c0_12], %13 {strides = array<i32>} : memref<1x1x32xf32, #tpu.memory_space<vmem>>, vector<1x1x32xf32>,
    %15 = arith.truncf %5 : vector<32x32xf32> to vector<32x32xbf16>
    %c0_13 = arith.constant 0 : index
    %c0_14 = arith.constant 0 : index
    %16 = vector.load %arg5[%c0_13, %c0_14] : memref<32x32xbf16, #tpu.memory_space<vmem>>, vector<32x32xbf16>
    tpu.vector_store %arg5[%c0_13, %c0_14], %15 {strides = array<i32>} : memref<32x32xbf16, #tpu.memory_space<vmem>>, vector<32x32xbf16>,
    return
  }
  func.func @transform_0(%arg0: i32, %arg1: i32) -> (i32, i32) {
    %c0_i32 = arith.constant 0 : i32
    %c0_i32_0 = arith.constant 0 : i32
    return %arg0, %c0_i32 : i32, i32
  }
  func.func @transform_1(%arg0: i32, %arg1: i32) -> (i32, i32) {
    %c0_i32 = arith.constant 0 : i32
    %c0_i32_0 = arith.constant 0 : i32
    return %c0_i32, %arg1 : i32, i32
  }
  func.func @transform_2(%arg0: i32, %arg1: i32) -> (i32, i32) {
    %c0_i32 = arith.constant 0 : i32
    %c0_i32_0 = arith.constant 0 : i32
    return %c0_i32, %arg1 : i32, i32
  }
  func.func @transform_3(%arg0: i32, %arg1: i32) -> (i32, i32) {
    %c0_i32 = arith.constant 0 : i32
    return %arg0, %arg1 : i32, i32
  }
  func.func @transform_4(%arg0: i32, %arg1: i32) -> (i32, i32, i32) {
    %c0_i32 = arith.constant 0 : i32
    %c0_i32_0 = arith.constant 0 : i32
    return %arg0, %c0_i32, %arg1 : i32, i32, i32
  }
  func.func @transform_5(%arg0: i32, %arg1: i32) -> (i32, i32, i32) {
    %c0_i32 = arith.constant 0 : i32
    %c0_i32_0 = arith.constant 0 : i32
    return %arg0, %c0_i32, %arg1 : i32, i32, i32
  }
}

module attributes {stable_mosaic.version = 11 : i64} {
  func.func @_bn_apply_res_kernel(%arg0: i32, %arg1: memref<4x256xbf16, #tpu.memory_space<vmem>>, %arg2: memref<4x256xbf16, #tpu.memory_space<vmem>>, %arg3: memref<1x256xf32, #tpu.memory_space<vmem>>, %arg4: memref<1x256xf32, #tpu.memory_space<vmem>>, %arg5: memref<4x256xbf16, #tpu.memory_space<vmem>>) attributes {dimension_semantics = [#tpu.dimension_semantics<parallel>], iteration_bounds = array<i64: 1>, scalar_prefetch = 0 : i64, scratch_operands = 0 : i64, tpu.core_type = #tpu.core_type<tc>, window_params = [{transform_indices = @transform_0, window_bounds = array<i64: 4, 256>}, {transform_indices = @transform_1, window_bounds = array<i64: 4, 256>}, {pipeline_mode = #tpu.pipeline_mode<synchronous>, transform_indices = @transform_2, window_bounds = array<i64: 1, 256>}, {pipeline_mode = #tpu.pipeline_mode<synchronous>, transform_indices = @transform_3, window_bounds = array<i64: 1, 256>}, {transform_indices = @transform_4, window_bounds = array<i64: 4, 256>}]} {
    %c0 = arith.constant 0 : index
    %c0_0 = arith.constant 0 : index
    %0 = vector.load %arg1[%c0, %c0_0] : memref<4x256xbf16, #tpu.memory_space<vmem>>, vector<4x256xbf16>
    %1 = arith.extf %0 : vector<4x256xbf16> to vector<4x256xf32>
    %c0_1 = arith.constant 0 : index
    %c0_2 = arith.constant 0 : index
    %2 = vector.load %arg3[%c0_1, %c0_2] : memref<1x256xf32, #tpu.memory_space<vmem>>, vector<1x256xf32>
    %3 = vector.broadcast %2 : vector<1x256xf32> to vector<4x256xf32>
    %4 = arith.mulf %1, %3 : vector<4x256xf32>
    %c0_3 = arith.constant 0 : index
    %c0_4 = arith.constant 0 : index
    %5 = vector.load %arg4[%c0_3, %c0_4] : memref<1x256xf32, #tpu.memory_space<vmem>>, vector<1x256xf32>
    %6 = vector.broadcast %5 : vector<1x256xf32> to vector<4x256xf32>
    %7 = arith.addf %4, %6 : vector<4x256xf32>
    %c0_5 = arith.constant 0 : index
    %c0_6 = arith.constant 0 : index
    %8 = vector.load %arg2[%c0_5, %c0_6] : memref<4x256xbf16, #tpu.memory_space<vmem>>, vector<4x256xbf16>
    %9 = arith.extf %8 : vector<4x256xbf16> to vector<4x256xf32>
    %10 = arith.addf %7, %9 : vector<4x256xf32>
    %11 = arith.truncf %10 : vector<4x256xf32> to vector<4x256xbf16>
    %c0_7 = arith.constant 0 : index
    %c0_8 = arith.constant 0 : index
    %12 = vector.load %arg5[%c0_7, %c0_8] : memref<4x256xbf16, #tpu.memory_space<vmem>>, vector<4x256xbf16>
    tpu.vector_store %arg5[%c0_7, %c0_8], %11 {strides = array<i32>} : memref<4x256xbf16, #tpu.memory_space<vmem>>, vector<4x256xbf16>,
    return
  }
  func.func @transform_0(%arg0: i32) -> (i32, i32) {
    %c0_i32 = arith.constant 0 : i32
    %c0_i32_0 = arith.constant 0 : i32
    return %arg0, %c0_i32 : i32, i32
  }
  func.func @transform_1(%arg0: i32) -> (i32, i32) {
    %c0_i32 = arith.constant 0 : i32
    %c0_i32_0 = arith.constant 0 : i32
    return %arg0, %c0_i32 : i32, i32
  }
  func.func @transform_2(%arg0: i32) -> (i32, i32) {
    %c0_i32 = arith.constant 0 : i32
    %c0_i32_0 = arith.constant 0 : i32
    %c0_i32_1 = arith.constant 0 : i32
    return %c0_i32, %c0_i32_0 : i32, i32
  }
  func.func @transform_3(%arg0: i32) -> (i32, i32) {
    %c0_i32 = arith.constant 0 : i32
    %c0_i32_0 = arith.constant 0 : i32
    %c0_i32_1 = arith.constant 0 : i32
    return %c0_i32, %c0_i32_0 : i32, i32
  }
  func.func @transform_4(%arg0: i32) -> (i32, i32) {
    %c0_i32 = arith.constant 0 : i32
    %c0_i32_0 = arith.constant 0 : i32
    return %arg0, %c0_i32 : i32, i32
  }
}

module attributes {stable_mosaic.version = 11 : i64} {
  func.func @_upsample4_kernel(%arg0: i32, %arg1: memref<32x32xbf16, #tpu.memory_space<vmem>>, %arg2: memref<32x32xbf16, #tpu.memory_space<vmem>>, %arg3: memref<32x32xbf16, #tpu.memory_space<vmem>>, %arg4: memref<32x32xbf16, #tpu.memory_space<vmem>>, %arg5: memref<32x64xbf16, #tpu.memory_space<vmem>>, %arg6: memref<32x64xbf16, #tpu.memory_space<vmem>>, %arg7: memref<32x64xbf16, #tpu.memory_space<vmem>>, %arg8: memref<32x64xbf16, #tpu.memory_space<vmem>>, %arg9: memref<1x64xf32, #tpu.memory_space<vmem>>, %arg10: memref<32x64xbf16, #tpu.memory_space<vmem>>, %arg11: memref<1x1x64xf32, #tpu.memory_space<vmem>>, %arg12: memref<1x1x64xf32, #tpu.memory_space<vmem>>) attributes {dimension_semantics = [#tpu.dimension_semantics<parallel>], iteration_bounds = array<i64: 1>, scalar_prefetch = 0 : i64, scratch_operands = 0 : i64, tpu.core_type = #tpu.core_type<tc>, window_params = [{transform_indices = @transform_0, window_bounds = array<i64: 32, 32>}, {transform_indices = @transform_1, window_bounds = array<i64: 32, 32>}, {transform_indices = @transform_2, window_bounds = array<i64: 32, 32>}, {transform_indices = @transform_3, window_bounds = array<i64: 32, 32>}, {pipeline_mode = #tpu.pipeline_mode<synchronous>, transform_indices = @transform_4, window_bounds = array<i64: 32, 64>}, {pipeline_mode = #tpu.pipeline_mode<synchronous>, transform_indices = @transform_5, window_bounds = array<i64: 32, 64>}, {pipeline_mode = #tpu.pipeline_mode<synchronous>, transform_indices = @transform_6, window_bounds = array<i64: 32, 64>}, {pipeline_mode = #tpu.pipeline_mode<synchronous>, transform_indices = @transform_7, window_bounds = array<i64: 32, 64>}, {pipeline_mode = #tpu.pipeline_mode<synchronous>, transform_indices = @transform_8, window_bounds = array<i64: 1, 64>}, {transform_indices = @transform_9, window_bounds = array<i64: 32, 64>}, {transform_indices = @transform_10, window_bounds = array<i64: 1, 1, 64>}, {transform_indices = @transform_11, window_bounds = array<i64: 1, 1, 64>}]} {
    %c0 = arith.constant 0 : index
    %c0_0 = arith.constant 0 : index
    %0 = vector.load %arg1[%c0, %c0_0] : memref<32x32xbf16, #tpu.memory_space<vmem>>, vector<32x32xbf16>
    %c0_1 = arith.constant 0 : index
    %c0_2 = arith.constant 0 : index
    %1 = vector.load %arg5[%c0_1, %c0_2] : memref<32x64xbf16, #tpu.memory_space<vmem>>, vector<32x64xbf16>
    %cst = arith.constant dense<0.000000e+00> : vector<32x64xf32>
    %2 = tpu.matmul %0, %1, %cst {dimension_numbers = #tpu.dot_dimension_numbers<[1], [0], [0], [1], [0, 0, 1, 1], [], []>} : vector<32x32xbf16>, vector<32x64xbf16>, vector<32x64xf32> -> vector<32x64xf32>
    %c0_3 = arith.constant 0 : index
    %c0_4 = arith.constant 0 : index
    %3 = vector.load %arg2[%c0_3, %c0_4] : memref<32x32xbf16, #tpu.memory_space<vmem>>, vector<32x32xbf16>
    %c0_5 = arith.constant 0 : index
    %c0_6 = arith.constant 0 : index
    %4 = vector.load %arg6[%c0_5, %c0_6] : memref<32x64xbf16, #tpu.memory_space<vmem>>, vector<32x64xbf16>
    %cst_7 = arith.constant dense<0.000000e+00> : vector<32x64xf32>
    %5 = tpu.matmul %3, %4, %cst_7 {dimension_numbers = #tpu.dot_dimension_numbers<[1], [0], [0], [1], [0, 0, 1, 1], [], []>} : vector<32x32xbf16>, vector<32x64xbf16>, vector<32x64xf32> -> vector<32x64xf32>
    %6 = arith.addf %2, %5 : vector<32x64xf32>
    %c0_8 = arith.constant 0 : index
    %c0_9 = arith.constant 0 : index
    %7 = vector.load %arg3[%c0_8, %c0_9] : memref<32x32xbf16, #tpu.memory_space<vmem>>, vector<32x32xbf16>
    %c0_10 = arith.constant 0 : index
    %c0_11 = arith.constant 0 : index
    %8 = vector.load %arg7[%c0_10, %c0_11] : memref<32x64xbf16, #tpu.memory_space<vmem>>, vector<32x64xbf16>
    %cst_12 = arith.constant dense<0.000000e+00> : vector<32x64xf32>
    %9 = tpu.matmul %7, %8, %cst_12 {dimension_numbers = #tpu.dot_dimension_numbers<[1], [0], [0], [1], [0, 0, 1, 1], [], []>} : vector<32x32xbf16>, vector<32x64xbf16>, vector<32x64xf32> -> vector<32x64xf32>
    %10 = arith.addf %6, %9 : vector<32x64xf32>
    %c0_13 = arith.constant 0 : index
    %c0_14 = arith.constant 0 : index
    %11 = vector.load %arg4[%c0_13, %c0_14] : memref<32x32xbf16, #tpu.memory_space<vmem>>, vector<32x32xbf16>
    %c0_15 = arith.constant 0 : index
    %c0_16 = arith.constant 0 : index
    %12 = vector.load %arg8[%c0_15, %c0_16] : memref<32x64xbf16, #tpu.memory_space<vmem>>, vector<32x64xbf16>
    %cst_17 = arith.constant dense<0.000000e+00> : vector<32x64xf32>
    %13 = tpu.matmul %11, %12, %cst_17 {dimension_numbers = #tpu.dot_dimension_numbers<[1], [0], [0], [1], [0, 0, 1, 1], [], []>} : vector<32x32xbf16>, vector<32x64xbf16>, vector<32x64xf32> -> vector<32x64xf32>
    %14 = arith.addf %10, %13 : vector<32x64xf32>
    %c0_18 = arith.constant 0 : index
    %c0_19 = arith.constant 0 : index
    %15 = vector.load %arg9[%c0_18, %c0_19] : memref<1x64xf32, #tpu.memory_space<vmem>>, vector<1x64xf32>
    %16 = vector.broadcast %15 : vector<1x64xf32> to vector<32x64xf32>
    %17 = arith.addf %14, %16 : vector<32x64xf32>
    %cst_20 = arith.constant dense<0.000000e+00> : vector<64xf32>
    %18 = vector.multi_reduction <add>, %17, %cst_20 [0] : vector<32x64xf32> to vector<64xf32>
    %19 = vector.shape_cast %18 : vector<64xf32> to vector<1x64xf32>
    %20 = vector.shape_cast %19 : vector<1x64xf32> to vector<1x1x64xf32>
    %c0_21 = arith.constant 0 : index
    %c0_22 = arith.constant 0 : index
    %c0_23 = arith.constant 0 : index
    %21 = vector.load %arg11[%c0_21, %c0_22, %c0_23] : memref<1x1x64xf32, #tpu.memory_space<vmem>>, vector<1x1x64xf32>
    tpu.vector_store %arg11[%c0_21, %c0_22, %c0_23], %20 {strides = array<i32>} : memref<1x1x64xf32, #tpu.memory_space<vmem>>, vector<1x1x64xf32>,
    %22 = arith.mulf %17, %17 : vector<32x64xf32>
    %cst_24 = arith.constant dense<0.000000e+00> : vector<64xf32>
    %23 = vector.multi_reduction <add>, %22, %cst_24 [0] : vector<32x64xf32> to vector<64xf32>
    %24 = vector.shape_cast %23 : vector<64xf32> to vector<1x64xf32>
    %25 = vector.shape_cast %24 : vector<1x64xf32> to vector<1x1x64xf32>
    %c0_25 = arith.constant 0 : index
    %c0_26 = arith.constant 0 : index
    %c0_27 = arith.constant 0 : index
    %26 = vector.load %arg12[%c0_25, %c0_26, %c0_27] : memref<1x1x64xf32, #tpu.memory_space<vmem>>, vector<1x1x64xf32>
    tpu.vector_store %arg12[%c0_25, %c0_26, %c0_27], %25 {strides = array<i32>} : memref<1x1x64xf32, #tpu.memory_space<vmem>>, vector<1x1x64xf32>,
    %27 = arith.truncf %17 : vector<32x64xf32> to vector<32x64xbf16>
    %c0_28 = arith.constant 0 : index
    %c0_29 = arith.constant 0 : index
    %28 = vector.load %arg10[%c0_28, %c0_29] : memref<32x64xbf16, #tpu.memory_space<vmem>>, vector<32x64xbf16>
    tpu.vector_store %arg10[%c0_28, %c0_29], %27 {strides = array<i32>} : memref<32x64xbf16, #tpu.memory_space<vmem>>, vector<32x64xbf16>,
    return
  }
  func.func @transform_0(%arg0: i32) -> (i32, i32) {
    %c0_i32 = arith.constant 0 : i32
    %c0_i32_0 = arith.constant 0 : i32
    return %arg0, %c0_i32 : i32, i32
  }
  func.func @transform_1(%arg0: i32) -> (i32, i32) {
    %c0_i32 = arith.constant 0 : i32
    %c0_i32_0 = arith.constant 0 : i32
    return %arg0, %c0_i32 : i32, i32
  }
  func.func @transform_2(%arg0: i32) -> (i32, i32) {
    %c0_i32 = arith.constant 0 : i32
    %c0_i32_0 = arith.constant 0 : i32
    return %arg0, %c0_i32 : i32, i32
  }
  func.func @transform_3(%arg0: i32) -> (i32, i32) {
    %c0_i32 = arith.constant 0 : i32
    %c0_i32_0 = arith.constant 0 : i32
    return %arg0, %c0_i32 : i32, i32
  }
  func.func @transform_4(%arg0: i32) -> (i32, i32) {
    %c0_i32 = arith.constant 0 : i32
    %c0_i32_0 = arith.constant 0 : i32
    %c0_i32_1 = arith.constant 0 : i32
    return %c0_i32, %c0_i32_0 : i32, i32
  }
  func.func @transform_5(%arg0: i32) -> (i32, i32) {
    %c0_i32 = arith.constant 0 : i32
    %c0_i32_0 = arith.constant 0 : i32
    %c0_i32_1 = arith.constant 0 : i32
    return %c0_i32, %c0_i32_0 : i32, i32
  }
  func.func @transform_6(%arg0: i32) -> (i32, i32) {
    %c0_i32 = arith.constant 0 : i32
    %c0_i32_0 = arith.constant 0 : i32
    %c0_i32_1 = arith.constant 0 : i32
    return %c0_i32, %c0_i32_0 : i32, i32
  }
  func.func @transform_7(%arg0: i32) -> (i32, i32) {
    %c0_i32 = arith.constant 0 : i32
    %c0_i32_0 = arith.constant 0 : i32
    %c0_i32_1 = arith.constant 0 : i32
    return %c0_i32, %c0_i32_0 : i32, i32
  }
  func.func @transform_8(%arg0: i32) -> (i32, i32) {
    %c0_i32 = arith.constant 0 : i32
    %c0_i32_0 = arith.constant 0 : i32
    %c0_i32_1 = arith.constant 0 : i32
    return %c0_i32, %c0_i32_0 : i32, i32
  }
  func.func @transform_9(%arg0: i32) -> (i32, i32) {
    %c0_i32 = arith.constant 0 : i32
    %c0_i32_0 = arith.constant 0 : i32
    return %arg0, %c0_i32 : i32, i32
  }
  func.func @transform_10(%arg0: i32) -> (i32, i32, i32) {
    %c0_i32 = arith.constant 0 : i32
    %c0_i32_0 = arith.constant 0 : i32
    %c0_i32_1 = arith.constant 0 : i32
    return %arg0, %c0_i32, %c0_i32_0 : i32, i32, i32
  }
  func.func @transform_11(%arg0: i32) -> (i32, i32, i32) {
    %c0_i32 = arith.constant 0 : i32
    %c0_i32_0 = arith.constant 0 : i32
    %c0_i32_1 = arith.constant 0 : i32
    return %arg0, %c0_i32, %c0_i32_0 : i32, i32, i32
  }
}

module attributes {stable_mosaic.version = 11 : i64} {
  func.func @_upsample4_kernel(%arg0: i32, %arg1: memref<128x16xbf16, #tpu.memory_space<vmem>>, %arg2: memref<128x16xbf16, #tpu.memory_space<vmem>>, %arg3: memref<128x16xbf16, #tpu.memory_space<vmem>>, %arg4: memref<128x16xbf16, #tpu.memory_space<vmem>>, %arg5: memref<16x32xbf16, #tpu.memory_space<vmem>>, %arg6: memref<16x32xbf16, #tpu.memory_space<vmem>>, %arg7: memref<16x32xbf16, #tpu.memory_space<vmem>>, %arg8: memref<16x32xbf16, #tpu.memory_space<vmem>>, %arg9: memref<1x32xf32, #tpu.memory_space<vmem>>, %arg10: memref<128x32xbf16, #tpu.memory_space<vmem>>, %arg11: memref<1x1x32xf32, #tpu.memory_space<vmem>>, %arg12: memref<1x1x32xf32, #tpu.memory_space<vmem>>) attributes {dimension_semantics = [#tpu.dimension_semantics<parallel>], iteration_bounds = array<i64: 1>, scalar_prefetch = 0 : i64, scratch_operands = 0 : i64, tpu.core_type = #tpu.core_type<tc>, window_params = [{transform_indices = @transform_0, window_bounds = array<i64: 128, 16>}, {transform_indices = @transform_1, window_bounds = array<i64: 128, 16>}, {transform_indices = @transform_2, window_bounds = array<i64: 128, 16>}, {transform_indices = @transform_3, window_bounds = array<i64: 128, 16>}, {pipeline_mode = #tpu.pipeline_mode<synchronous>, transform_indices = @transform_4, window_bounds = array<i64: 16, 32>}, {pipeline_mode = #tpu.pipeline_mode<synchronous>, transform_indices = @transform_5, window_bounds = array<i64: 16, 32>}, {pipeline_mode = #tpu.pipeline_mode<synchronous>, transform_indices = @transform_6, window_bounds = array<i64: 16, 32>}, {pipeline_mode = #tpu.pipeline_mode<synchronous>, transform_indices = @transform_7, window_bounds = array<i64: 16, 32>}, {pipeline_mode = #tpu.pipeline_mode<synchronous>, transform_indices = @transform_8, window_bounds = array<i64: 1, 32>}, {transform_indices = @transform_9, window_bounds = array<i64: 128, 32>}, {transform_indices = @transform_10, window_bounds = array<i64: 1, 1, 32>}, {transform_indices = @transform_11, window_bounds = array<i64: 1, 1, 32>}]} {
    %c0 = arith.constant 0 : index
    %c0_0 = arith.constant 0 : index
    %0 = vector.load %arg1[%c0, %c0_0] : memref<128x16xbf16, #tpu.memory_space<vmem>>, vector<128x16xbf16>
    %c0_1 = arith.constant 0 : index
    %c0_2 = arith.constant 0 : index
    %1 = vector.load %arg5[%c0_1, %c0_2] : memref<16x32xbf16, #tpu.memory_space<vmem>>, vector<16x32xbf16>
    %cst = arith.constant dense<0.000000e+00> : vector<128x32xf32>
    %2 = tpu.matmul %0, %1, %cst {dimension_numbers = #tpu.dot_dimension_numbers<[1], [0], [0], [1], [0, 0, 1, 1], [], []>} : vector<128x16xbf16>, vector<16x32xbf16>, vector<128x32xf32> -> vector<128x32xf32>
    %c0_3 = arith.constant 0 : index
    %c0_4 = arith.constant 0 : index
    %3 = vector.load %arg2[%c0_3, %c0_4] : memref<128x16xbf16, #tpu.memory_space<vmem>>, vector<128x16xbf16>
    %c0_5 = arith.constant 0 : index
    %c0_6 = arith.constant 0 : index
    %4 = vector.load %arg6[%c0_5, %c0_6] : memref<16x32xbf16, #tpu.memory_space<vmem>>, vector<16x32xbf16>
    %cst_7 = arith.constant dense<0.000000e+00> : vector<128x32xf32>
    %5 = tpu.matmul %3, %4, %cst_7 {dimension_numbers = #tpu.dot_dimension_numbers<[1], [0], [0], [1], [0, 0, 1, 1], [], []>} : vector<128x16xbf16>, vector<16x32xbf16>, vector<128x32xf32> -> vector<128x32xf32>
    %6 = arith.addf %2, %5 : vector<128x32xf32>
    %c0_8 = arith.constant 0 : index
    %c0_9 = arith.constant 0 : index
    %7 = vector.load %arg3[%c0_8, %c0_9] : memref<128x16xbf16, #tpu.memory_space<vmem>>, vector<128x16xbf16>
    %c0_10 = arith.constant 0 : index
    %c0_11 = arith.constant 0 : index
    %8 = vector.load %arg7[%c0_10, %c0_11] : memref<16x32xbf16, #tpu.memory_space<vmem>>, vector<16x32xbf16>
    %cst_12 = arith.constant dense<0.000000e+00> : vector<128x32xf32>
    %9 = tpu.matmul %7, %8, %cst_12 {dimension_numbers = #tpu.dot_dimension_numbers<[1], [0], [0], [1], [0, 0, 1, 1], [], []>} : vector<128x16xbf16>, vector<16x32xbf16>, vector<128x32xf32> -> vector<128x32xf32>
    %10 = arith.addf %6, %9 : vector<128x32xf32>
    %c0_13 = arith.constant 0 : index
    %c0_14 = arith.constant 0 : index
    %11 = vector.load %arg4[%c0_13, %c0_14] : memref<128x16xbf16, #tpu.memory_space<vmem>>, vector<128x16xbf16>
    %c0_15 = arith.constant 0 : index
    %c0_16 = arith.constant 0 : index
    %12 = vector.load %arg8[%c0_15, %c0_16] : memref<16x32xbf16, #tpu.memory_space<vmem>>, vector<16x32xbf16>
    %cst_17 = arith.constant dense<0.000000e+00> : vector<128x32xf32>
    %13 = tpu.matmul %11, %12, %cst_17 {dimension_numbers = #tpu.dot_dimension_numbers<[1], [0], [0], [1], [0, 0, 1, 1], [], []>} : vector<128x16xbf16>, vector<16x32xbf16>, vector<128x32xf32> -> vector<128x32xf32>
    %14 = arith.addf %10, %13 : vector<128x32xf32>
    %c0_18 = arith.constant 0 : index
    %c0_19 = arith.constant 0 : index
    %15 = vector.load %arg9[%c0_18, %c0_19] : memref<1x32xf32, #tpu.memory_space<vmem>>, vector<1x32xf32>
    %16 = vector.broadcast %15 : vector<1x32xf32> to vector<128x32xf32>
    %17 = arith.addf %14, %16 : vector<128x32xf32>
    %cst_20 = arith.constant dense<0.000000e+00> : vector<32xf32>
    %18 = vector.multi_reduction <add>, %17, %cst_20 [0] : vector<128x32xf32> to vector<32xf32>
    %19 = vector.shape_cast %18 : vector<32xf32> to vector<1x32xf32>
    %20 = vector.shape_cast %19 : vector<1x32xf32> to vector<1x1x32xf32>
    %c0_21 = arith.constant 0 : index
    %c0_22 = arith.constant 0 : index
    %c0_23 = arith.constant 0 : index
    %21 = vector.load %arg11[%c0_21, %c0_22, %c0_23] : memref<1x1x32xf32, #tpu.memory_space<vmem>>, vector<1x1x32xf32>
    tpu.vector_store %arg11[%c0_21, %c0_22, %c0_23], %20 {strides = array<i32>} : memref<1x1x32xf32, #tpu.memory_space<vmem>>, vector<1x1x32xf32>,
    %22 = arith.mulf %17, %17 : vector<128x32xf32>
    %cst_24 = arith.constant dense<0.000000e+00> : vector<32xf32>
    %23 = vector.multi_reduction <add>, %22, %cst_24 [0] : vector<128x32xf32> to vector<32xf32>
    %24 = vector.shape_cast %23 : vector<32xf32> to vector<1x32xf32>
    %25 = vector.shape_cast %24 : vector<1x32xf32> to vector<1x1x32xf32>
    %c0_25 = arith.constant 0 : index
    %c0_26 = arith.constant 0 : index
    %c0_27 = arith.constant 0 : index
    %26 = vector.load %arg12[%c0_25, %c0_26, %c0_27] : memref<1x1x32xf32, #tpu.memory_space<vmem>>, vector<1x1x32xf32>
    tpu.vector_store %arg12[%c0_25, %c0_26, %c0_27], %25 {strides = array<i32>} : memref<1x1x32xf32, #tpu.memory_space<vmem>>, vector<1x1x32xf32>,
    %27 = arith.truncf %17 : vector<128x32xf32> to vector<128x32xbf16>
    %c0_28 = arith.constant 0 : index
    %c0_29 = arith.constant 0 : index
    %28 = vector.load %arg10[%c0_28, %c0_29] : memref<128x32xbf16, #tpu.memory_space<vmem>>, vector<128x32xbf16>
    tpu.vector_store %arg10[%c0_28, %c0_29], %27 {strides = array<i32>} : memref<128x32xbf16, #tpu.memory_space<vmem>>, vector<128x32xbf16>,
    return
  }
  func.func @transform_0(%arg0: i32) -> (i32, i32) {
    %c0_i32 = arith.constant 0 : i32
    %c0_i32_0 = arith.constant 0 : i32
    return %arg0, %c0_i32 : i32, i32
  }
  func.func @transform_1(%arg0: i32) -> (i32, i32) {
    %c0_i32 = arith.constant 0 : i32
    %c0_i32_0 = arith.constant 0 : i32
    return %arg0, %c0_i32 : i32, i32
  }
  func.func @transform_2(%arg0: i32) -> (i32, i32) {
    %c0_i32 = arith.constant 0 : i32
    %c0_i32_0 = arith.constant 0 : i32
    return %arg0, %c0_i32 : i32, i32
  }
  func.func @transform_3(%arg0: i32) -> (i32, i32) {
    %c0_i32 = arith.constant 0 : i32
    %c0_i32_0 = arith.constant 0 : i32
    return %arg0, %c0_i32 : i32, i32
  }
  func.func @transform_4(%arg0: i32) -> (i32, i32) {
    %c0_i32 = arith.constant 0 : i32
    %c0_i32_0 = arith.constant 0 : i32
    %c0_i32_1 = arith.constant 0 : i32
    return %c0_i32, %c0_i32_0 : i32, i32
  }
  func.func @transform_5(%arg0: i32) -> (i32, i32) {
    %c0_i32 = arith.constant 0 : i32
    %c0_i32_0 = arith.constant 0 : i32
    %c0_i32_1 = arith.constant 0 : i32
    return %c0_i32, %c0_i32_0 : i32, i32
  }
  func.func @transform_6(%arg0: i32) -> (i32, i32) {
    %c0_i32 = arith.constant 0 : i32
    %c0_i32_0 = arith.constant 0 : i32
    %c0_i32_1 = arith.constant 0 : i32
    return %c0_i32, %c0_i32_0 : i32, i32
  }
  func.func @transform_7(%arg0: i32) -> (i32, i32) {
    %c0_i32 = arith.constant 0 : i32
    %c0_i32_0 = arith.constant 0 : i32
    %c0_i32_1 = arith.constant 0 : i32
    return %c0_i32, %c0_i32_0 : i32, i32
  }
  func.func @transform_8(%arg0: i32) -> (i32, i32) {
    %c0_i32 = arith.constant 0 : i32
    %c0_i32_0 = arith.constant 0 : i32
    %c0_i32_1 = arith.constant 0 : i32
    return %c0_i32, %c0_i32_0 : i32, i32
  }
  func.func @transform_9(%arg0: i32) -> (i32, i32) {
    %c0_i32 = arith.constant 0 : i32
    %c0_i32_0 = arith.constant 0 : i32
    return %arg0, %c0_i32 : i32, i32
  }
  func.func @transform_10(%arg0: i32) -> (i32, i32, i32) {
    %c0_i32 = arith.constant 0 : i32
    %c0_i32_0 = arith.constant 0 : i32
    %c0_i32_1 = arith.constant 0 : i32
    return %arg0, %c0_i32, %c0_i32_0 : i32, i32, i32
  }
  func.func @transform_11(%arg0: i32) -> (i32, i32, i32) {
    %c0_i32 = arith.constant 0 : i32
    %c0_i32_0 = arith.constant 0 : i32
    %c0_i32_1 = arith.constant 0 : i32
    return %arg0, %c0_i32, %c0_i32_0 : i32, i32, i32
  }
}

module attributes {stable_mosaic.version = 11 : i64} {
  func.func @_matmul_k1_kernel(%arg0: i32, %arg1: i32, %arg2: memref<512x392xbf16, #tpu.memory_space<vmem>>, %arg3: memref<392x3xbf16, #tpu.memory_space<vmem>>, %arg4: memref<1x3xf32, #tpu.memory_space<vmem>>, %arg5: memref<512x3xf32, #tpu.memory_space<vmem>>) attributes {dimension_semantics = [#tpu.dimension_semantics<parallel>, #tpu.dimension_semantics<parallel>], iteration_bounds = array<i64: 1, 1>, scalar_prefetch = 0 : i64, scratch_operands = 0 : i64, tpu.core_type = #tpu.core_type<tc>, window_params = [{transform_indices = @transform_0, window_bounds = array<i64: 512, 392>}, {transform_indices = @transform_1, window_bounds = array<i64: 392, 3>}, {transform_indices = @transform_2, window_bounds = array<i64: 1, 3>}, {transform_indices = @transform_3, window_bounds = array<i64: 512, 3>}]} {
    %c0 = arith.constant 0 : index
    %c0_0 = arith.constant 0 : index
    %0 = vector.load %arg2[%c0, %c0_0] : memref<512x392xbf16, #tpu.memory_space<vmem>>, vector<512x392xbf16>
    %c0_1 = arith.constant 0 : index
    %c0_2 = arith.constant 0 : index
    %1 = vector.load %arg3[%c0_1, %c0_2] : memref<392x3xbf16, #tpu.memory_space<vmem>>, vector<392x3xbf16>
    %cst = arith.constant dense<0.000000e+00> : vector<512x3xf32>
    %2 = tpu.matmul %0, %1, %cst {dimension_numbers = #tpu.dot_dimension_numbers<[1], [0], [0], [1], [0, 0, 1, 1], [], []>} : vector<512x392xbf16>, vector<392x3xbf16>, vector<512x3xf32> -> vector<512x3xf32>
    %c0_3 = arith.constant 0 : index
    %c0_4 = arith.constant 0 : index
    %3 = vector.load %arg4[%c0_3, %c0_4] : memref<1x3xf32, #tpu.memory_space<vmem>>, vector<1x3xf32>
    %4 = vector.broadcast %3 : vector<1x3xf32> to vector<512x3xf32>
    %5 = arith.addf %2, %4 : vector<512x3xf32>
    %6 = math.tanh %5 : vector<512x3xf32>
    %c0_5 = arith.constant 0 : index
    %c0_6 = arith.constant 0 : index
    %7 = vector.load %arg5[%c0_5, %c0_6] : memref<512x3xf32, #tpu.memory_space<vmem>>, vector<512x3xf32>
    tpu.vector_store %arg5[%c0_5, %c0_6], %6 {strides = array<i32>} : memref<512x3xf32, #tpu.memory_space<vmem>>, vector<512x3xf32>,
    return
  }
  func.func @transform_0(%arg0: i32, %arg1: i32) -> (i32, i32) {
    %c0_i32 = arith.constant 0 : i32
    %c0_i32_0 = arith.constant 0 : i32
    return %arg0, %c0_i32 : i32, i32
  }
  func.func @transform_1(%arg0: i32, %arg1: i32) -> (i32, i32) {
    %c0_i32 = arith.constant 0 : i32
    %c0_i32_0 = arith.constant 0 : i32
    return %c0_i32, %arg1 : i32, i32
  }
  func.func @transform_2(%arg0: i32, %arg1: i32) -> (i32, i32) {
    %c0_i32 = arith.constant 0 : i32
    %c0_i32_0 = arith.constant 0 : i32
    return %c0_i32, %arg1 : i32, i32
  }
  func.func @transform_3(%arg0: i32, %arg1: i32) -> (i32, i32) {
    %c0_i32 = arith.constant 0 : i32
    return %arg0, %arg1 : i32, i32
  }
}

</mosaic_0001>

<llo_original>
// kernel: resnet_generator_forward.20
$region0: #{resnet_generator_forward.20}
  #allocation0 [shape = 'u32[]', space=smem, size = 0x4, offset = 0x4, fixed_abs, tag = 'smem constant byte address 0x4 - core index']
  #allocation1 [shape = 'u32[144,128]{1,0:T(1,128)}', space=vmem, size = 0x12000, scoped, tag = 'internal scratch']
  %s0 = inlined_call_operand.vmem [shape: bf16[16,256], index: 0, kind: input, shape index: {}]
  %s1 = inlined_call_operand.vmem [shape: f32[1,256], index: 1, kind: input, shape index: {}]
  %s2 = inlined_call_operand.vmem [shape: f32[1,256], index: 2, kind: input, shape index: {}]
  %s3 = inlined_call_operand.vmem [shape: bf16[16,256], index: 3, kind: output, shape index: {}]
  %s4 = sld [smem:[#allocation0]]
  $region22: #{resnet_generator_forward.20} parent=0
    _
  %s6 = ssub.s32 1, %s4
  %s7 = scalar_select 0, %s6, %s4
  // Predicated region
  $region2: #{resnet_generator_forward.20} parent=0 // pred_check
    _
  $region3: #{resnet_generator_forward.20} parent=0 // pred_check_branch
    %9 = sbr.rel (0) target = $region5
  $region4: #{resnet_generator_forward.20} parent=0 // pred_region
    _
  $region5: #{resnet_generator_forward.20} parent=0 // pred_fallthru
    _
  // Predicated region
  $region6: #{resnet_generator_forward.20} parent=0 // pred_check
    _
  $region7: #{resnet_generator_forward.20} parent=0 // pred_check_branch
    %11 = sbr.rel (0) target = $region9
  $region8: #{resnet_generator_forward.20} parent=0 // pred_region
    _
  $region9: #{resnet_generator_forward.20} parent=0 // pred_fallthru
    _
  // Predicated region
  $region10: #{resnet_generator_forward.20} parent=0 // pred_check
    _
  $region11: #{resnet_generator_forward.20} parent=0 // pred_check_branch
    %13 = sbr.rel (0) target = $region13
  $region12: #{resnet_generator_forward.20} parent=0 // pred_region
    _
  $region13: #{resnet_generator_forward.20} parent=0 // pred_fallthru
    _
  %v14 = vld [vmem:[%s0] sm:$0xff]
  %v15 = vld [vmem:[%s0 + $0x8] sm:$0xff]
  %v16 = vunpack.c.l.bf16 %v14
  %v17 = vunpack.c.h.bf16 %v14
  %v18 = vunpack.c.l.bf16 %v15
  %v19 = vunpack.c.h.bf16 %v15
  %v20 = vld [vmem:[%s1] sm:$0x3]
  %v22 = vlaneseq
  %v23 = vshrl.u32 %v22, 7
  %v24 = vsub.s32 0, %v23
  %v25 = vrot.slane %v20, %v24
  %v26 = vlaneseq
  %v27 = vshrl.u32 %v26, 7
  %v28 = vsub.s32 1, %v27
  %v29 = vrot.slane %v20, %v28
  %v32 = vmul.f32 %v16, %v25
  %v33 = vmul.f32 %v17, %v29
  %v34 = vmul.f32 %v18, %v25
  %v35 = vmul.f32 %v19, %v29
  %v36 = vld [vmem:[%s2] sm:$0x3]
  %v38 = vlaneseq
  %v39 = vshrl.u32 %v38, 7
  %v40 = vsub.s32 0, %v39
  %v41 = vrot.slane %v36, %v40
  %v42 = vlaneseq
  %v43 = vshrl.u32 %v42, 7
  %v44 = vsub.s32 1, %v43
  %v45 = vrot.slane %v36, %v44
  %v48 = vadd.f32 %v32, %v41
  %v49 = vadd.f32 %v33, %v45
  %v50 = vadd.f32 %v34, %v41
  %v51 = vadd.f32 %v35, %v45
  %v52 = vmax.f32 %v48, 0.0
  %v53 = vmax.f32 %v49, 0.0
  %v54 = vmax.f32 %v50, 0.0
  %v55 = vmax.f32 %v51, 0.0
  %v56 = vpack.c.bf16 %v54, %v52
  %v57 = vpack.c.bf16 %v55, %v53
  %v60 = vunpack.c.l.b16 %v56
  %v61 = vunpack.c.l.b16 %v57
  %v62 = vunpack.c.h.b16 %v56
  %v63 = vunpack.c.h.b16 %v57
  %v64 = vpack.c.b16 %v61, %v60
  %v65 = vpack.c.b16 %v63, %v62
  %68 = vst [vmem:[%s3] sm:$0xff] %v64
  %69 = vst [vmem:[%s3 + $0x8] sm:$0xff] %v65
  // Predicated region
  $region14: #{resnet_generator_forward.20} parent=0 // pred_check
    _
  $region15: #{resnet_generator_forward.20} parent=0 // pred_check_branch
    %71 = sbr.rel (0) target = $region17
  $region16: #{resnet_generator_forward.20} parent=0 // pred_region
    _
  $region17: #{resnet_generator_forward.20} parent=0 // pred_fallthru
    _
  // Predicated region
  $region18: #{resnet_generator_forward.20} parent=0 // pred_check
    _
  $region19: #{resnet_generator_forward.20} parent=0 // pred_check_branch
    %73 = sbr.rel (0) target = $region21
  $region20: #{resnet_generator_forward.20} parent=0 // pred_region
    _
  $region21: #{resnet_generator_forward.20} parent=0 // pred_fallthru
    _

// kernel: resnet_generator_forward.19
$region0: #{resnet_generator_forward.19}
  #allocation0 [shape = 'u32[]', space=smem, size = 0x4, offset = 0x4, fixed_abs, tag = 'smem constant byte address 0x4 - core index']
  #allocation1 [shape = 'u32[144,128]{1,0:T(1,128)}', space=vmem, size = 0x12000, scoped, tag = 'internal scratch']
  %s0 = inlined_call_operand.vmem [shape: bf16[512,147], index: 0, kind: input, shape index: {}]
  %s1 = inlined_call_operand.vmem [shape: bf16[147,8], index: 1, kind: input, shape index: {}]
  %s2 = inlined_call_operand.vmem [shape: f32[1,8], index: 2, kind: input, shape index: {}]
  %s3 = inlined_call_operand.vmem [shape: bf16[512,8], index: 3, kind: output, shape index: {0}]
  %s4 = inlined_call_operand.vmem [shape: f32[1,1,8], index: 4, kind: output, shape index: {1}]
  %s5 = inlined_call_operand.vmem [shape: f32[1,1,8], index: 5, kind: output, shape index: {2}]
  %6 = xla_tuple %s3, %s4, %s5
  %s7 = sld [smem:[#allocation0]]
  $region38: #{resnet_generator_forward.19} parent=0
    _
  %s9 = ssub.s32 1, %s7
  %s10 = scalar_select 0, %s9, %s7
  // Predicated region
  $region2: #{resnet_generator_forward.19} parent=0 // pred_check
    _
  $region3: #{resnet_generator_forward.19} parent=0 // pred_check_branch
    %12 = sbr.rel (0) target = $region5
  $region4: #{resnet_generator_forward.19} parent=0 // pred_region
    _
  $region5: #{resnet_generator_forward.19} parent=0 // pred_fallthru
    _
  // Predicated region
  $region6: #{resnet_generator_forward.19} parent=0 // pred_check
    _
  $region7: #{resnet_generator_forward.19} parent=0 // pred_check_branch
    %14 = sbr.rel (0) target = $region9
  $region8: #{resnet_generator_forward.19} parent=0 // pred_region
    _
  $region9: #{resnet_generator_forward.19} parent=0 // pred_fallthru
    _
  // Predicated region
  $region10: #{resnet_generator_forward.19} parent=0 // pred_check
    _
  $region11: #{resnet_generator_forward.19} parent=0 // pred_check_branch
    %16 = sbr.rel (0) target = $region13
  $region12: #{resnet_generator_forward.19} parent=0 // pred_region
    _
  $region13: #{resnet_generator_forward.19} parent=0 // pred_fallthru
    _
  %v18 = vld [vmem:[%s0] sm:$0xff]
  %v19 = vld [vmem:[%s0 + $0x8] sm:$0xff]
  %v20 = vld [vmem:[%s0 + $0x10] sm:$0xff]
  %v21 = vld [vmem:[%s0 + $0x18] sm:$0xff]
  %v22 = vld [vmem:[%s0 + $0x20] sm:$0xff]
  %v23 = vld [vmem:[%s0 + $0x28] sm:$0xff]
  %v24 = vld [vmem:[%s0 + $0x30] sm:$0xff]
  %v25 = vld [vmem:[%s0 + $0x38] sm:$0xff]
  %v26 = vld [vmem:[%s0 + $0x40] sm:$0xff]
  %v27 = vld [vmem:[%s0 + $0x48] sm:$0xff]
  %v28 = vld [vmem:[%s0 + $0x50] sm:$0xff]
  %v29 = vld [vmem:[%s0 + $0x58] sm:$0xff]
  %v30 = vld [vmem:[%s0 + $0x60] sm:$0xff]
  %v31 = vld [vmem:[%s0 + $0x68] sm:$0xff]
  %v32 = vld [vmem:[%s0 + $0x70] sm:$0xff]
  %v33 = vld [vmem:[%s0 + $0x78] sm:$0xff]
  %v34 = vld [vmem:[%s0 + $0x80] sm:$0xff]
  %v35 = vld [vmem:[%s0 + $0x88] sm:$0xff]
  %v36 = vld [vmem:[%s0 + $0x90] sm:$0xff]
  %v37 = vld [vmem:[%s0 + $0x98] sm:$0xff]
  %v38 = vld [vmem:[%s0 + $0xa0] sm:$0xff]
  %v39 = vld [vmem:[%s0 + $0xa8] sm:$0xff]
  %v40 = vld [vmem:[%s0 + $0xb0] sm:$0xff]
  %v41 = vld [vmem:[%s0 + $0xb8] sm:$0xff]
  %v42 = vld [vmem:[%s0 + $0xc0] sm:$0xff]
  %v43 = vld [vmem:[%s0 + $0xc8] sm:$0xff]
  %v44 = vld [vmem:[%s0 + $0xd0] sm:$0xff]
  %v45 = vld [vmem:[%s0 + $0xd8] sm:$0xff]
  %v46 = vld [vmem:[%s0 + $0xe0] sm:$0xff]
  %v47 = vld [vmem:[%s0 + $0xe8] sm:$0xff]
  %v48 = vld [vmem:[%s0 + $0xf0] sm:$0xff]
  %v49 = vld [vmem:[%s0 + $0xf8] sm:$0xff]
  %v50 = vld [vmem:[%s0 + $0x100] sm:$0xff]
  %v51 = vld [vmem:[%s0 + $0x108] sm:$0xff]
  %v52 = vld [vmem:[%s0 + $0x110] sm:$0xff]
  %v53 = vld [vmem:[%s0 + $0x118] sm:$0xff]
  %v54 = vld [vmem:[%s0 + $0x120] sm:$0xff]
  %v55 = vld [vmem:[%s0 + $0x128] sm:$0xff]
  %v56 = vld [vmem:[%s0 + $0x130] sm:$0xff]
  %v57 = vld [vmem:[%s0 + $0x138] sm:$0xff]
  %v58 = vld [vmem:[%s0 + $0x140] sm:$0xff]
  %v59 = vld [vmem:[%s0 + $0x148] sm:$0xff]
  %v60 = vld [vmem:[%s0 + $0x150] sm:$0xff]
  %v61 = vld [vmem:[%s0 + $0x158] sm:$0xff]
  %v62 = vld [vmem:[%s0 + $0x160] sm:$0xff]
  %v63 = vld [vmem:[%s0 + $0x168] sm:$0xff]
  %v64 = vld [vmem:[%s0 + $0x170] sm:$0xff]
  %v65 = vld [vmem:[%s0 + $0x178] sm:$0xff]
  %v66 = vld [vmem:[%s0 + $0x180] sm:$0xff]
  %v67 = vld [vmem:[%s0 + $0x188] sm:$0xff]
  %v68 = vld [vmem:[%s0 + $0x190] sm:$0xff]
  %v69 = vld [vmem:[%s0 + $0x198] sm:$0xff]
  %v70 = vld [vmem:[%s0 + $0x1a0] sm:$0xff]
  %v71 = vld [vmem:[%s0 + $0x1a8] sm:$0xff]
  %v72 = vld [vmem:[%s0 + $0x1b0] sm:$0xff]
  %v73 = vld [vmem:[%s0 + $0x1b8] sm:$0xff]
  %v74 = vld [vmem:[%s0 + $0x1c0] sm:$0xff]
  %v75 = vld [vmem:[%s0 + $0x1c8] sm:$0xff]
  %v76 = vld [vmem:[%s0 + $0x1d0] sm:$0xff]
  %v77 = vld [vmem:[%s0 + $0x1d8] sm:$0xff]
  %v78 = vld [vmem:[%s0 + $0x1e0] sm:$0xff]
  %v79 = vld [vmem:[%s0 + $0x1e8] sm:$0xff]
  %v80 = vld [vmem:[%s0 + $0x1f0] sm:$0xff]
  %v81 = vld [vmem:[%s0 + $0x1f8] sm:$0xff]
  %v82 = vld [vmem:[%s1] sm:$0xf]
  %v83 = vld [vmem:[%s1 + $0x4] sm:$0xf]
  %v84 = vld [vmem:[%s1 + $0x8] sm:$0xf]
  %v85 = vld [vmem:[%s1 + $0xc] sm:$0xf]
  %v86 = vld [vmem:[%s1 + $0x10] sm:$0xf]
  %v87 = vld [vmem:[%s1 + $0x14] sm:$0xf]
  %v88 = vld [vmem:[%s1 + $0x18] sm:$0xf]
  %v89 = vld [vmem:[%s1 + $0x1c] sm:$0xf]
  %v90 = vld [vmem:[%s1 + $0x20] sm:$0xf]
  %v91 = vld [vmem:[%s1 + $0x24] sm:$0xf]
  %v92 = vld [vmem:[%s1 + $0x28] sm:$0xf]
  %v93 = vld [vmem:[%s1 + $0x2c] sm:$0xf]
  %v94 = vld [vmem:[%s1 + $0x30] sm:$0xf]
  %v95 = vld [vmem:[%s1 + $0x34] sm:$0xf]
  %v96 = vld [vmem:[%s1 + $0x38] sm:$0xf]
  %v97 = vld [vmem:[%s1 + $0x3c] sm:$0xf]
  %v98 = vld [vmem:[%s1 + $0x40] sm:$0xf]
  %v99 = vld [vmem:[%s1 + $0x44] sm:$0xf]
  %v100 = vld [vmem:[%s1 + $0x48] sm:$0x3]
  %v101 = vld [vmem:[%s2] sm:$0x1]
  %v103 = vlaneseq
  %v104 = vshrl.u32 %v103, 7
  %v105 = vsub.s32 0, %v104
  %v106 = vrot.slane %v101, %v105
  %v172 = vunpack.c.l.b16 %v18
  %v173 = vunpack.c.h.b16 %v18
  %v174 = vunpack.c.l.b16 %v19
  %v175 = vunpack.c.h.b16 %v19
  %v176 = vunpack.c.l.b16 %v20
  %v177 = vunpack.c.h.b16 %v20
  %v178 = vunpack.c.l.b16 %v21
  %v179 = vunpack.c.h.b16 %v21
  %v180 = vunpack.c.l.b16 %v22
  %v181 = vunpack.c.h.b16 %v22
  %v182 = vunpack.c.l.b16 %v23
  %v183 = vunpack.c.h.b16 %v23
  %v184 = vunpack.c.l.b16 %v24
  %v185 = vunpack.c.h.b16 %v24
  %v186 = vunpack.c.l.b16 %v25
  %v187 = vunpack.c.h.b16 %v25
  %v188 = vunpack.c.l.b16 %v26
  %v189 = vunpack.c.h.b16 %v26
  %v190 = vunpack.c.l.b16 %v27
  %v191 = vunpack.c.h.b16 %v27
  %v192 = vunpack.c.l.b16 %v28
  %v193 = vunpack.c.h.b16 %v28
  %v194 = vunpack.c.l.b16 %v29
  %v195 = vunpack.c.h.b16 %v29
  %v196 = vunpack.c.l.b16 %v30
  %v197 = vunpack.c.h.b16 %v30
  %v198 = vunpack.c.l.b16 %v31
  %v199 = vunpack.c.h.b16 %v31
  %v200 = vunpack.c.l.b16 %v32
  %v201 = vunpack.c.h.b16 %v32
  %v202 = vunpack.c.l.b16 %v33
  %v203 = vunpack.c.h.b16 %v33
  %v204 = vunpack.c.l.b16 %v34
  %v205 = vunpack.c.h.b16 %v34
  %v206 = vunpack.c.l.b16 %v35
  %v207 = vunpack.c.h.b16 %v35
  %v208 = vunpack.c.l.b16 %v36
  %v209 = vunpack.c.h.b16 %v36
  %v210 = vunpack.c.l.b16 %v37
  %v211 = vunpack.c.h.b16 %v37
  %v212 = vunpack.c.l.b16 %v38
  %v213 = vunpack.c.h.b16 %v38
  %v214 = vunpack.c.l.b16 %v39
  %v215 = vunpack.c.h.b16 %v39
  %v216 = vunpack.c.l.b16 %v40
  %v217 = vunpack.c.h.b16 %v40
  %v218 = vunpack.c.l.b16 %v41
  %v219 = vunpack.c.h.b16 %v41
  %v220 = vunpack.c.l.b16 %v42
  %v221 = vunpack.c.h.b16 %v42
  %v222 = vunpack.c.l.b16 %v43
  %v223 = vunpack.c.h.b16 %v43
  %v224 = vunpack.c.l.b16 %v44
  %v225 = vunpack.c.h.b16 %v44
  %v226 = vunpack.c.l.b16 %v45
  %v227 = vunpack.c.h.b16 %v45
  %v228 = vunpack.c.l.b16 %v46
  %v229 = vunpack.c.h.b16 %v46
  %v230 = vunpack.c.l.b16 %v47
  %v231 = vunpack.c.h.b16 %v47
  %v232 = vunpack.c.l.b16 %v48
  %v233 = vunpack.c.h.b16 %v48
  %v234 = vunpack.c.l.b16 %v49
  %v235 = vunpack.c.h.b16 %v49
  %v236 = vunpack.c.l.b16 %v50
  %v237 = vunpack.c.h.b16 %v50
  %v238 = vunpack.c.l.b16 %v51
  %v239 = vunpack.c.h.b16 %v51
  %v240 = vunpack.c.l.b16 %v52
  %v241 = vunpack.c.h.b16 %v52
  %v242 = vunpack.c.l.b16 %v53
  %v243 = vunpack.c.h.b16 %v53
  %v244 = vunpack.c.l.b16 %v54
  %v245 = vunpack.c.h.b16 %v54
  %v246 = vunpack.c.l.b16 %v55
  %v247 = vunpack.c.h.b16 %v55
  %v248 = vunpack.c.l.b16 %v56
  %v249 = vunpack.c.h.b16 %v56
  %v250 = vunpack.c.l.b16 %v57
  %v251 = vunpack.c.h.b16 %v57
  %v252 = vunpack.c.l.b16 %v58
  %v253 = vunpack.c.h.b16 %v58
  %v254 = vunpack.c.l.b16 %v59
  %v255 = vunpack.c.h.b16 %v59
  %v256 = vunpack.c.l.b16 %v60
  %v257 = vunpack.c.h.b16 %v60
  %v258 = vunpack.c.l.b16 %v61
  %v259 = vunpack.c.h.b16 %v61
  %v260 = vunpack.c.l.b16 %v62
  %v261 = vunpack.c.h.b16 %v62
  %v262 = vunpack.c.l.b16 %v63
  %v263 = vunpack.c.h.b16 %v63
  %v264 = vunpack.c.l.b16 %v64
  %v265 = vunpack.c.h.b16 %v64
  %v266 = vunpack.c.l.b16 %v65
  %v267 = vunpack.c.h.b16 %v65
  %v268 = vunpack.c.l.b16 %v66
  %v269 = vunpack.c.h.b16 %v66
  %v270 = vunpack.c.l.b16 %v67
  %v271 = vunpack.c.h.b16 %v67
  %v272 = vunpack.c.l.b16 %v68
  %v273 = vunpack.c.h.b16 %v68
  %v274 = vunpack.c.l.b16 %v69
  %v275 = vunpack.c.h.b16 %v69
  %v276 = vunpack.c.l.b16 %v70
  %v277 = vunpack.c.h.b16 %v70
  %v278 = vunpack.c.l.b16 %v71
  %v279 = vunpack.c.h.b16 %v71
  %v280 = vunpack.c.l.b16 %v72
  %v281 = vunpack.c.h.b16 %v72
  %v282 = vunpack.c.l.b16 %v73
  %v283 = vunpack.c.h.b16 %v73
  %v284 = vunpack.c.l.b16 %v74
  %v285 = vunpack.c.h.b16 %v74
  %v286 = vunpack.c.l.b16 %v75
  %v287 = vunpack.c.h.b16 %v75
  %v288 = vunpack.c.l.b16 %v76
  %v289 = vunpack.c.h.b16 %v76
  %v290 = vunpack.c.l.b16 %v77
  %v291 = vunpack.c.h.b16 %v77
  %v292 = vunpack.c.l.b16 %v78
  %v293 = vunpack.c.h.b16 %v78
  %v294 = vunpack.c.l.b16 %v79
  %v295 = vunpack.c.h.b16 %v79
  %v296 = vunpack.c.l.b16 %v80
  %v297 = vunpack.c.h.b16 %v80
  %v298 = vunpack.c.l.b16 %v81
  %v299 = vunpack.c.h.b16 %v81
  %v300 = vpack.c.b16 %v174, %v172
  %v301 = vpack.c.b16 %v175, %v173
  %v302 = vpack.c.b16 %v178, %v176
  %v303 = vpack.c.b16 %v179, %v177
  %v304 = vpack.c.b16 %v182, %v180
  %v305 = vpack.c.b16 %v183, %v181
  %v306 = vpack.c.b16 %v186, %v184
  %v307 = vpack.c.b16 %v187, %v185
  %v308 = vpack.c.b16 %v190, %v188
  %v309 = vpack.c.b16 %v191, %v189
  %v310 = vpack.c.b16 %v194, %v192
  %v311 = vpack.c.b16 %v195, %v193
  %v312 = vpack.c.b16 %v198, %v196
  %v313 = vpack.c.b16 %v199, %v197
  %v314 = vpack.c.b16 %v202, %v200
  %v315 = vpack.c.b16 %v203, %v201
  %v316 = vpack.c.b16 %v206, %v204
  %v317 = vpack.c.b16 %v207, %v205
  %v318 = vpack.c.b16 %v210, %v208
  %v319 = vpack.c.b16 %v211, %v209
  %v320 = vpack.c.b16 %v214, %v212
  %v321 = vpack.c.b16 %v215, %v213
  %v322 = vpack.c.b16 %v218, %v216
  %v323 = vpack.c.b16 %v219, %v217
  %v324 = vpack.c.b16 %v222, %v220
  %v325 = vpack.c.b16 %v223, %v221
  %v326 = vpack.c.b16 %v226, %v224
  %v327 = vpack.c.b16 %v227, %v225
  %v328 = vpack.c.b16 %v230, %v228
  %v329 = vpack.c.b16 %v231, %v229
  %v330 = vpack.c.b16 %v234, %v232
  %v331 = vpack.c.b16 %v235, %v233
  %v332 = vpack.c.b16 %v238, %v236
  %v333 = vpack.c.b16 %v239, %v237
  %v334 = vpack.c.b16 %v242, %v240
  %v335 = vpack.c.b16 %v243, %v241
  %v336 = vpack.c.b16 %v246, %v244
  %v337 = vpack.c.b16 %v247, %v245
  %v338 = vpack.c.b16 %v250, %v248
  %v339 = vpack.c.b16 %v251, %v249
  %v340 = vpack.c.b16 %v254, %v252
  %v341 = vpack.c.b16 %v255, %v253
  %v342 = vpack.c.b16 %v258, %v256
  %v343 = vpack.c.b16 %v259, %v257
  %v344 = vpack.c.b16 %v262, %v260
  %v345 = vpack.c.b16 %v263, %v261
  %v346 = vpack.c.b16 %v266, %v264
  %v347 = vpack.c.b16 %v267, %v265
  %v348 = vpack.c.b16 %v270, %v268
  %v349 = vpack.c.b16 %v271, %v269
  %v350 = vpack.c.b16 %v274, %v272
  %v351 = vpack.c.b16 %v275, %v273
  %v352 = vpack.c.b16 %v278, %v276
  %v353 = vpack.c.b16 %v279, %v277
  %v354 = vpack.c.b16 %v282, %v280
  %v355 = vpack.c.b16 %v283, %v281
  %v356 = vpack.c.b16 %v286, %v284
  %v357 = vpack.c.b16 %v287, %v285
  %v358 = vpack.c.b16 %v290, %v288
  %v359 = vpack.c.b16 %v291, %v289
  %v360 = vpack.c.b16 %v294, %v292
  %v361 = vpack.c.b16 %v295, %v293
  %v362 = vpack.c.b16 %v298, %v296
  %v363 = vpack.c.b16 %v299, %v297
  %v415 = vunpack.c.l.b16 %v82
  %v416 = vunpack.c.l.b16 %v83
  %v417 = vunpack.c.l.b16 %v84
  %v418 = vunpack.c.l.b16 %v85
  %v419 = vunpack.c.l.b16 %v86
  %v420 = vunpack.c.l.b16 %v87
  %v421 = vunpack.c.l.b16 %v88
  %v422 = vunpack.c.l.b16 %v89
  %v423 = vunpack.c.l.b16 %v90
  %v424 = vunpack.c.l.b16 %v91
  %v425 = vunpack.c.l.b16 %v92
  %v426 = vunpack.c.l.b16 %v93
  %v427 = vunpack.c.l.b16 %v94
  %v428 = vunpack.c.l.b16 %v95
  %v429 = vunpack.c.l.b16 %v96
  %v430 = vunpack.c.l.b16 %v97
  %v431 = vunpack.c.l.b16 %v98
  %v432 = vunpack.c.l.b16 %v99
  %v433 = vunpack.c.l.b16 %v100
  %v434 = vpack.c.b16 %v416, %v415
  %v435 = vpack.c.b16 %v418, %v417
  %v436 = vpack.c.b16 %v420, %v419
  %v437 = vpack.c.b16 %v422, %v421
  %v438 = vpack.c.b16 %v424, %v423
  %v439 = vpack.c.b16 %v426, %v425
  %v440 = vpack.c.b16 %v428, %v427
  %v441 = vpack.c.b16 %v430, %v429
  %v442 = vpack.c.b16 %v432, %v431
  %v443 = vpack.c.b16 %v433, %v433
  %vm453 = vcmask 154624
  %v455 = vsel %vm453, %v301, 0
  %v458 = vsel %vm453, %v303, 0
  %v461 = vsel %vm453, %v305, 0
  %v464 = vsel %vm453, %v307, 0
  %v467 = vsel %vm453, %v309, 0
  %v470 = vsel %vm453, %v311, 0
  %v473 = vsel %vm453, %v313, 0
  %v476 = vsel %vm453, %v315, 0
  %v479 = vsel %vm453, %v317, 0
  %v482 = vsel %vm453, %v319, 0
  %v485 = vsel %vm453, %v321, 0
  %v488 = vsel %vm453, %v323, 0
  %v491 = vsel %vm453, %v325, 0
  %v494 = vsel %vm453, %v327, 0
  %v497 = vsel %vm453, %v329, 0
  %v500 = vsel %vm453, %v331, 0
  %v503 = vsel %vm453, %v333, 0
  %v506 = vsel %vm453, %v335, 0
  %v509 = vsel %vm453, %v337, 0
  %v512 = vsel %vm453, %v339, 0
  %v515 = vsel %vm453, %v341, 0
  %v518 = vsel %vm453, %v343, 0
  %v521 = vsel %vm453, %v345, 0
  %v524 = vsel %vm453, %v347, 0
  %v527 = vsel %vm453, %v349, 0
  %v530 = vsel %vm453, %v351, 0
  %v533 = vsel %vm453, %v353, 0
  %v536 = vsel %vm453, %v355, 0
  %v539 = vsel %vm453, %v357, 0
  %v542 = vsel %vm453, %v359, 0
  %v545 = vsel %vm453, %v361, 0
  %v548 = vsel %vm453, %v363, 0
  %vm550 = vcmask 1040384
  %vm551 = vcmask 1041408
  %v552 = vsel %vm550, 4294967295, 65535
  %v553 = vsel %vm551, %v552, 0
  %v555 = vand.u32 %v443, %v553
  %557 = vmatprep.subr.bf16.mxu0 0
  %558 = vmatpush1.bf16.msra.mxu0 %v434
  %559 = vmatprep.subr.bf16.mxu0 0
  %560 = vmatpush1.bf16.msra.mxu0 %v435
  %561 = vmatprep.subr.bf16.mxu0 0
  %562 = vmatpush1.bf16.msra.mxu0 %v436
  %563 = vmatprep.subr.bf16.mxu0 0
  %564 = vmatpush1.bf16.msra.mxu0 %v437
  %565 = vmatprep.subr.bf16.mxu0 0
  %566 = vmatpush1.bf16.msra.mxu0 %v438
  %567 = vmatprep.subr.bf16.mxu0 0
  %568 = vmatpush1.bf16.msra.mxu0 %v439
  %569 = vmatprep.subr.bf16.mxu0 0
  %570 = vmatpush1.bf16.msra.mxu0 %v440
  %571 = vmatprep.subr.bf16.mxu0 0
  %572 = vmatpush1.bf16.msra.mxu0 %v441
  %573 = vmatprep.subr.bf16.mxu0 0
  %574 = vmatpush1.bf16.msra.mxu0 %v442
  %575 = vmatprep.subr.bf16.mxu0 0
  %576 = vmatpush1.bf16.msra.mxu0 %v555
  %577 = vmatprep.subr.bf16.mxu0 0
  %578 = vmatpush1.bf16.msra.mxu0 0
  %579 = vmatprep.subr.bf16.mxu0 0
  %580 = vmatpush1.bf16.msra.mxu0 0
  %581 = vmatprep.subr.bf16.mxu0 0
  %582 = vmatpush1.bf16.msra.mxu0 0
  %583 = vmatprep.subr.bf16.mxu0 0
  %584 = vmatpush1.bf16.msra.mxu0 0
  %585 = vmatprep.subr.bf16.mxu0 0
  %586 = vmatpush1.bf16.msra.mxu0 0
  %587 = vmatprep.subr.bf16.mxu0 0
  %588 = vmatpush1.bf16.msra.mxu0 0
  %589 = vmatprep.mubr.bf16.mxu0 %v455
  %590 = vmatmul.mubr.bf16.gmra.mrb[0].mxu0 %v300
  %v591 = vpop.f32.mrb[0].mxu0
  %v592 = vadd.f32 %v106, %v591
  %v593 = vpop.f32.mrb[0].mxu0
  %v594 = vpop.f32.mrb[0].mxu0
  %v595 = vadd.f32 %v106, %v594
  %v596 = vpop.f32.mrb[0].mxu0
  %597 = vmatprep.mubr.bf16.mxu0 %v458
  %598 = vmatmul.mubr.bf16.gmra.mrb[0].mxu0 %v302
  %v599 = vpop.f32.mrb[0].mxu0
  %v600 = vadd.f32 %v106, %v599
  %v601 = vpop.f32.mrb[0].mxu0
  %v602 = vpop.f32.mrb[0].mxu0
  %v603 = vadd.f32 %v106, %v602
  %v604 = vpop.f32.mrb[0].mxu0
  %605 = vmatprep.mubr.bf16.mxu0 %v461
  %606 = vmatmul.mubr.bf16.gmra.mrb[0].mxu0 %v304
  %v607 = vpop.f32.mrb[0].mxu0
  %v608 = vadd.f32 %v106, %v607
  %v609 = vpop.f32.mrb[0].mxu0
  %v610 = vpop.f32.mrb[0].mxu0
  %v611 = vadd.f32 %v106, %v610
  %v612 = vpop.f32.mrb[0].mxu0
  %613 = vmatprep.mubr.bf16.mxu0 %v464
  %614 = vmatmul.mubr.bf16.gmra.mrb[0].mxu0 %v306
  %v615 = vpop.f32.mrb[0].mxu0
  %v616 = vadd.f32 %v106, %v615
  %v617 = vpop.f32.mrb[0].mxu0
  %v618 = vpop.f32.mrb[0].mxu0
  %v619 = vadd.f32 %v106, %v618
  %v620 = vpop.f32.mrb[0].mxu0
  %621 = vmatprep.mubr.bf16.mxu0 %v467
  %622 = vmatmul.mubr.bf16.gmra.mrb[0].mxu0 %v308
  %v623 = vpop.f32.mrb[0].mxu0
  %v624 = vadd.f32 %v106, %v623
  %v625 = vpop.f32.mrb[0].mxu0
  %v626 = vpop.f32.mrb[0].mxu0
  %v627 = vadd.f32 %v106, %v626
  %v628 = vpop.f32.mrb[0].mxu0
  %629 = vmatprep.mubr.bf16.mxu0 %v470
  %630 = vmatmul.mubr.bf16.gmra.mrb[0].mxu0 %v310
  %v631 = vpop.f32.mrb[0].mxu0
  %v632 = vadd.f32 %v106, %v631
  %v633 = vpop.f32.mrb[0].mxu0
  %v634 = vpop.f32.mrb[0].mxu0
  %v635 = vadd.f32 %v106, %v634
  %v636 = vpop.f32.mrb[0].mxu0
  %637 = vmatprep.mubr.bf16.mxu0 %v473
  %638 = vmatmul.mubr.bf16.gmra.mrb[0].mxu0 %v312
  %v639 = vpop.f32.mrb[0].mxu0
  %v640 = vadd.f32 %v106, %v639
  %v641 = vpop.f32.mrb[0].mxu0
  %v642 = vpop.f32.mrb[0].mxu0
  %v643 = vadd.f32 %v106, %v642
  %v644 = vpop.f32.mrb[0].mxu0
  %645 = vmatprep.mubr.bf16.mxu0 %v476
  %646 = vmatmul.mubr.bf16.gmra.mrb[0].mxu0 %v314
  %v647 = vpop.f32.mrb[0].mxu0
  %v648 = vadd.f32 %v106, %v647
  %v649 = vpop.f32.mrb[0].mxu0
  %v650 = vpop.f32.mrb[0].mxu0
  %v651 = vadd.f32 %v106, %v650
  %v652 = vpop.f32.mrb[0].mxu0
  %653 = vmatprep.mubr.bf16.mxu0 %v479
  %654 = vmatmul.mubr.bf16.gmra.mrb[0].mxu0 %v316
  %v655 = vpop.f32.mrb[0].mxu0
  %v656 = vadd.f32 %v106, %v655
  %v657 = vpop.f32.mrb[0].mxu0
  %v658 = vpop.f32.mrb[0].mxu0
  %v659 = vadd.f32 %v106, %v658
  %v660 = vpop.f32.mrb[0].mxu0
  %661 = vmatprep.mubr.bf16.mxu0 %v482
  %662 = vmatmul.mubr.bf16.gmra.mrb[0].mxu0 %v318
  %v663 = vpop.f32.mrb[0].mxu0
  %v664 = vadd.f32 %v106, %v663
  %v665 = vpop.f32.mrb[0].mxu0
  %v666 = vpop.f32.mrb[0].mxu0
  %v667 = vadd.f32 %v106, %v666
  %v668 = vpop.f32.mrb[0].mxu0
  %669 = vmatprep.mubr.bf16.mxu0 %v485
  %670 = vmatmul.mubr.bf16.gmra.mrb[0].mxu0 %v320
  %v671 = vpop.f32.mrb[0].mxu0
  %v672 = vadd.f32 %v106, %v671
  %v673 = vpop.f32.mrb[0].mxu0
  %v674 = vpop.f32.mrb[0].mxu0
  %v675 = vadd.f32 %v106, %v674
  %v676 = vpop.f32.mrb[0].mxu0
  %677 = vmatprep.mubr.bf16.mxu0 %v488
  %678 = vmatmul.mubr.bf16.gmra.mrb[0].mxu0 %v322
  %v679 = vpop.f32.mrb[0].mxu0
  %v680 = vadd.f32 %v106, %v679
  %v681 = vpop.f32.mrb[0].mxu0
  %v682 = vpop.f32.mrb[0].mxu0
  %v683 = vadd.f32 %v106, %v682
  %v684 = vpop.f32.mrb[0].mxu0
  %685 = vmatprep.mubr.bf16.mxu0 %v491
  %686 = vmatmul.mubr.bf16.gmra.mrb[0].mxu0 %v324
  %v687 = vpop.f32.mrb[0].mxu0
  %v688 = vadd.f32 %v106, %v687
  %v689 = vpop.f32.mrb[0].mxu0
  %v690 = vpop.f32.mrb[0].mxu0
  %v691 = vadd.f32 %v106, %v690
  %v692 = vpop.f32.mrb[0].mxu0
  %693 = vmatprep.mubr.bf16.mxu0 %v494
  %694 = vmatmul.mubr.bf16.gmra.mrb[0].mxu0 %v326
  %v695 = vpop.f32.mrb[0].mxu0
  %v696 = vadd.f32 %v106, %v695
  %v697 = vpop.f32.mrb[0].mxu0
  %v698 = vpop.f32.mrb[0].mxu0
  %v699 = vadd.f32 %v106, %v698
  %v700 = vpop.f32.mrb[0].mxu0
  %701 = vmatprep.mubr.bf16.mxu0 %v497
  %702 = vmatmul.mubr.bf16.gmra.mrb[0].mxu0 %v328
  %v703 = vpop.f32.mrb[0].mxu0
  %v704 = vadd.f32 %v106, %v703
  %v705 = vpop.f32.mrb[0].mxu0
  %v706 = vpop.f32.mrb[0].mxu0
  %v707 = vadd.f32 %v106, %v706
  %v708 = vpop.f32.mrb[0].mxu0
  %709 = vmatprep.mubr.bf16.mxu0 %v500
  %710 = vmatmul.mubr.bf16.gmra.mrb[0].mxu0 %v330
  %v711 = vpop.f32.mrb[0].mxu0
  %v712 = vadd.f32 %v106, %v711
  %v713 = vpop.f32.mrb[0].mxu0
  %v714 = vpop.f32.mrb[0].mxu0
  %v715 = vadd.f32 %v106, %v714
  %v716 = vpop.f32.mrb[0].mxu0
  %717 = vmatprep.mubr.bf16.mxu0 %v503
  %718 = vmatmul.mubr.bf16.gmra.mrb[0].mxu0 %v332
  %v719 = vpop.f32.mrb[0].mxu0
  %v720 = vadd.f32 %v106, %v719
  %v721 = vpop.f32.mrb[0].mxu0
  %v722 = vpop.f32.mrb[0].mxu0
  %v723 = vadd.f32 %v106, %v722
  %v724 = vpop.f32.mrb[0].mxu0
  %725 = vmatprep.mubr.bf16.mxu0 %v506
  %726 = vmatmul.mubr.bf16.gmra.mrb[0].mxu0 %v334
  %v727 = vpop.f32.mrb[0].mxu0
  %v728 = vadd.f32 %v106, %v727
  %v729 = vpop.f32.mrb[0].mxu0
  %v730 = vpop.f32.mrb[0].mxu0
  %v731 = vadd.f32 %v106, %v730
  %v732 = vpop.f32.mrb[0].mxu0
  %733 = vmatprep.mubr.bf16.mxu0 %v509
  %734 = vmatmul.mubr.bf16.gmra.mrb[0].mxu0 %v336
  %v735 = vpop.f32.mrb[0].mxu0
  %v736 = vadd.f32 %v106, %v735
  %v737 = vpop.f32.mrb[0].mxu0
  %v738 = vpop.f32.mrb[0].mxu0
  %v739 = vadd.f32 %v106, %v738
  %v740 = vpop.f32.mrb[0].mxu0
  %741 = vmatprep.mubr.bf16.mxu0 %v512
  %742 = vmatmul.mubr.bf16.gmra.mrb[0].mxu0 %v338
  %v743 = vpop.f32.mrb[0].mxu0
  %v744 = vadd.f32 %v106, %v743
  %v745 = vpop.f32.mrb[0].mxu0
  %v746 = vpop.f32.mrb[0].mxu0
  %v747 = vadd.f32 %v106, %v746
  %v748 = vpop.f32.mrb[0].mxu0
  %749 = vmatprep.mubr.bf16.mxu0 %v515
  %750 = vmatmul.mubr.bf16.gmra.mrb[0].mxu0 %v340
  %v751 = vpop.f32.mrb[0].mxu0
  %v752 = vadd.f32 %v106, %v751
  %v753 = vpop.f32.mrb[0].mxu0
  %v754 = vpop.f32.mrb[0].mxu0
  %v755 = vadd.f32 %v106, %v754
  %v756 = vpop.f32.mrb[0].mxu0
  %757 = vmatprep.mubr.bf16.mxu0 %v518
  %758 = vmatmul.mubr.bf16.gmra.mrb[0].mxu0 %v342
  %v759 = vpop.f32.mrb[0].mxu0
  %v760 = vadd.f32 %v106, %v759
  %v761 = vpop.f32.mrb[0].mxu0
  %v762 = vpop.f32.mrb[0].mxu0
  %v763 = vadd.f32 %v106, %v762
  %v764 = vpop.f32.mrb[0].mxu0
  %765 = vmatprep.mubr.bf16.mxu0 %v521
  %766 = vmatmul.mubr.bf16.gmra.mrb[0].mxu0 %v344
  %v767 = vpop.f32.mrb[0].mxu0
  %v768 = vadd.f32 %v106, %v767
  %v769 = vpop.f32.mrb[0].mxu0
  %v770 = vpop.f32.mrb[0].mxu0
  %v771 = vadd.f32 %v106, %v770
  %v772 = vpop.f32.mrb[0].mxu0
  %773 = vmatprep.mubr.bf16.mxu0 %v524
  %774 = vmatmul.mubr.bf16.gmra.mrb[0].mxu0 %v346
  %v775 = vpop.f32.mrb[0].mxu0
  %v776 = vadd.f32 %v106, %v775
  %v777 = vpop.f32.mrb[0].mxu0
  %v778 = vpop.f32.mrb[0].mxu0
  %v779 = vadd.f32 %v106, %v778
  %v780 = vpop.f32.mrb[0].mxu0
  %781 = vmatprep.mubr.bf16.mxu0 %v527
  %782 = vmatmul.mubr.bf16.gmra.mrb[0].mxu0 %v348
  %v783 = vpop.f32.mrb[0].mxu0
  %v784 = vadd.f32 %v106, %v783
  %v785 = vpop.f32.mrb[0].mxu0
  %v786 = vpop.f32.mrb[0].mxu0
  %v787 = vadd.f32 %v106, %v786
  %v788 = vpop.f32.mrb[0].mxu0
  %789 = vmatprep.mubr.bf16.mxu0 %v530
  %790 = vmatmul.mubr.bf16.gmra.mrb[0].mxu0 %v350
  %v791 = vpop.f32.mrb[0].mxu0
  %v792 = vadd.f32 %v106, %v791
  %v793 = vpop.f32.mrb[0].mxu0
  %v794 = vpop.f32.mrb[0].mxu0
  %v795 = vadd.f32 %v106, %v794
  %v796 = vpop.f32.mrb[0].mxu0
  %797 = vmatprep.mubr.bf16.mxu0 %v533
  %798 = vmatmul.mubr.bf16.gmra.mrb[0].mxu0 %v352
  %v799 = vpop.f32.mrb[0].mxu0
  %v800 = vadd.f32 %v106, %v799
  %v801 = vpop.f32.mrb[0].mxu0
  %v802 = vpop.f32.mrb[0].mxu0
  %v803 = vadd.f32 %v106, %v802
  %v804 = vpop.f32.mrb[0].mxu0
  %805 = vmatprep.mubr.bf16.mxu0 %v536
  %806 = vmatmul.mubr.bf16.gmra.mrb[0].mxu0 %v354
  %v807 = vpop.f32.mrb[0].mxu0
  %v808 = vadd.f32 %v106, %v807
  %v809 = vpop.f32.mrb[0].mxu0
  %v810 = vpop.f32.mrb[0].mxu0
  %v811 = vadd.f32 %v106, %v810
  %v812 = vpop.f32.mrb[0].mxu0
  %813 = vmatprep.mubr.bf16.mxu0 %v539
  %814 = vmatmul.mubr.bf16.gmra.mrb[0].mxu0 %v356
  %v815 = vpop.f32.mrb[0].mxu0
  %v816 = vadd.f32 %v106, %v815
  %v817 = vpop.f32.mrb[0].mxu0
  %v818 = vpop.f32.mrb[0].mxu0
  %v819 = vadd.f32 %v106, %v818
  %v820 = vpop.f32.mrb[0].mxu0
  %821 = vmatprep.mubr.bf16.mxu0 %v542
  %822 = vmatmul.mubr.bf16.gmra.mrb[0].mxu0 %v358
  %v823 = vpop.f32.mrb[0].mxu0
  %v824 = vadd.f32 %v106, %v823
  %v825 = vpop.f32.mrb[0].mxu0
  %v826 = vpop.f32.mrb[0].mxu0
  %v827 = vadd.f32 %v106, %v826
  %v828 = vpop.f32.mrb[0].mxu0
  %829 = vmatprep.mubr.bf16.mxu0 %v545
  %830 = vmatmul.mubr.bf16.gmra.mrb[0].mxu0 %v360
  %v831 = vpop.f32.mrb[0].mxu0
  %v832 = vadd.f32 %v106, %v831
  %v833 = vpop.f32.mrb[0].mxu0
  %v834 = vpop.f32.mrb[0].mxu0
  %v835 = vadd.f32 %v106, %v834
  %v836 = vpop.f32.mrb[0].mxu0
  %837 = vmatprep.mubr.bf16.mxu0 %v548
  %838 = vmatmul.mubr.bf16.gmra.mrb[0].mxu0 %v362
  %v839 = vpop.f32.mrb[0].mxu0
  %v840 = vadd.f32 %v106, %v839
  %v841 = vpop.f32.mrb[0].mxu0
  %v842 = vpop.f32.mrb[0].mxu0
  %v843 = vadd.f32 %v106, %v842
  %v844 = vpop.f32.mrb[0].mxu0
  %845 = vdwg.mxu0
  %vm846 = vcmask 64512
  %v847 = vsel %vm846, %v592, 0.0
  %v848 = vsel %vm846, %v595, 0.0
  %v849 = vadd.f32 %v847, %v848
  %v850 = vsel %vm846, %v600, 0.0
  %v851 = vadd.f32 %v849, %v850
  %v852 = vsel %vm846, %v603, 0.0
  %v853 = vadd.f32 %v851, %v852
  %v854 = vsel %vm846, %v608, 0.0
  %v855 = vadd.f32 %v853, %v854
  %v856 = vsel %vm846, %v611, 0.0
  %v857 = vadd.f32 %v855, %v856
  %v858 = vsel %vm846, %v616, 0.0
  %v859 = vadd.f32 %v857, %v858
  %v860 = vsel %vm846, %v619, 0.0
  %v861 = vadd.f32 %v859, %v860
  %v862 = vsel %vm846, %v624, 0.0
  %v863 = vadd.f32 %v861, %v862
  %v864 = vsel %vm846, %v627, 0.0
  %v865 = vadd.f32 %v863, %v864
  %v866 = vsel %vm846, %v632, 0.0
  %v867 = vadd.f32 %v865, %v866
  %v868 = vsel %vm846, %v635, 0.0
  %v869 = vadd.f32 %v867, %v868
  %v870 = vsel %vm846, %v640, 0.0
  %v871 = vadd.f32 %v869, %v870
  %v872 = vsel %vm846, %v643, 0.0
  %v873 = vadd.f32 %v871, %v872
  %v874 = vsel %vm846, %v648, 0.0
  %v875 = vadd.f32 %v873, %v874
  %v876 = vsel %vm846, %v651, 0.0
  %v877 = vadd.f32 %v875, %v876
  %v878 = vsel %vm846, %v656, 0.0
  %v879 = vadd.f32 %v877, %v878
  %v880 = vsel %vm846, %v659, 0.0
  %v881 = vadd.f32 %v879, %v880
  %v882 = vsel %vm846, %v664, 0.0
  %v883 = vadd.f32 %v881, %v882
  %v884 = vsel %vm846, %v667, 0.0
  %v885 = vadd.f32 %v883, %v884
  %v886 = vsel %vm846, %v672, 0.0
  %v887 = vadd.f32 %v885, %v886
  %v888 = vsel %vm846, %v675, 0.0
  %v889 = vadd.f32 %v887, %v888
  %v890 = vsel %vm846, %v680, 0.0
  %v891 = vadd.f32 %v889, %v890
  %v892 = vsel %vm846, %v683, 0.0
  %v893 = vadd.f32 %v891, %v892
  %v894 = vsel %vm846, %v688, 0.0
  %v895 = vadd.f32 %v893, %v894
  %v896 = vsel %vm846, %v691, 0.0
  %v897 = vadd.f32 %v895, %v896
  %v898 = vsel %vm846, %v696, 0.0
  %v899 = vadd.f32 %v897, %v898
  %v900 = vsel %vm846, %v699, 0.0
  %v901 = vadd.f32 %v899, %v900
  %v902 = vsel %vm846, %v704, 0.0
  %v903 = vadd.f32 %v901, %v902
  %v904 = vsel %vm846, %v707, 0.0
  %v905 = vadd.f32 %v903, %v904
  %v906 = vsel %vm846, %v712, 0.0
  %v907 = vadd.f32 %v905, %v906
  %v908 = vsel %vm846, %v715, 0.0
  %v909 = vadd.f32 %v907, %v908
  %v910 = vsel %vm846, %v720, 0.0
  %v911 = vadd.f32 %v909, %v910
  %v912 = vsel %vm846, %v723, 0.0
  %v913 = vadd.f32 %v911, %v912
  %v914 = vsel %vm846, %v728, 0.0
  %v915 = vadd.f32 %v913, %v914
  %v916 = vsel %vm846, %v731, 0.0
  %v917 = vadd.f32 %v915, %v916
  %v918 = vsel %vm846, %v736, 0.0
  %v919 = vadd.f32 %v917, %v918
  %v920 = vsel %vm846, %v739, 0.0
  %v921 = vadd.f32 %v919, %v920
  %v922 = vsel %vm846, %v744, 0.0
  %v923 = vadd.f32 %v921, %v922
  %v924 = vsel %vm846, %v747, 0.0
  %v925 = vadd.f32 %v923, %v924
  %v926 = vsel %vm846, %v752, 0.0
  %v927 = vadd.f32 %v925, %v926
  %v928 = vsel %vm846, %v755, 0.0
  %v929 = vadd.f32 %v927, %v928
  %v930 = vsel %vm846, %v760, 0.0
  %v931 = vadd.f32 %v929, %v930
  %v932 = vsel %vm846, %v763, 0.0
  %v933 = vadd.f32 %v931, %v932
  %v934 = vsel %vm846, %v768, 0.0
  %v935 = vadd.f32 %v933, %v934
  %v936 = vsel %vm846, %v771, 0.0
  %v937 = vadd.f32 %v935, %v936
  %v938 = vsel %vm846, %v776, 0.0
  %v939 = vadd.f32 %v937, %v938
  %v940 = vsel %vm846, %v779, 0.0
  %v941 = vadd.f32 %v939, %v940
  %v942 = vsel %vm846, %v784, 0.0
  %v943 = vadd.f32 %v941, %v942
  %v944 = vsel %vm846, %v787, 0.0
  %v945 = vadd.f32 %v943, %v944
  %v946 = vsel %vm846, %v792, 0.0
  %v947 = vadd.f32 %v945, %v946
  %v948 = vsel %vm846, %v795, 0.0
  %v949 = vadd.f32 %v947, %v948
  %v950 = vsel %vm846, %v800, 0.0
  %v951 = vadd.f32 %v949, %v950
  %v952 = vsel %vm846, %v803, 0.0
  %v953 = vadd.f32 %v951, %v952
  %v954 = vsel %vm846, %v808, 0.0
  %v955 = vadd.f32 %v953, %v954
  %v956 = vsel %vm846, %v811, 0.0
  %v957 = vadd.f32 %v955, %v956
  %v958 = vsel %vm846, %v816, 0.0
  %v959 = vadd.f32 %v957, %v958
  %v960 = vsel %vm846, %v819, 0.0
  %v961 = vadd.f32 %v959, %v960
  %v962 = vsel %vm846, %v824, 0.0
  %v963 = vadd.f32 %v961, %v962
  %v964 = vsel %vm846, %v827, 0.0
  %v965 = vadd.f32 %v963, %v964
  %v966 = vsel %vm846, %v832, 0.0
  %v967 = vadd.f32 %v965, %v966
  %v968 = vsel %vm846, %v835, 0.0
  %v969 = vadd.f32 %v967, %v968
  %v970 = vsel %vm846, %v840, 0.0
  %v971 = vadd.f32 %v969, %v970
  %v972 = vsel %vm846, %v843, 0.0
  %v973 = vadd.f32 %v971, %v972
  %v974 = vrot.slane %v973, 4
  %v975 = vadd.f32 %v973, %v974
  %v976 = vrot.slane %v975, 2
  %v977 = vadd.f32 %v975, %v976
  %v978 = vrot.slane %v977, 1
  %v979 = vadd.f32 %v977, %v978
  %vm980 = vcmask 57344
  %981 = vst.msk [vmem:[%s4] sm:$0x1] %vm980, %v979
  %v982 = vmul.f32 %v592, %v592
  %v983 = vmul.f32 %v595, %v595
  %v984 = vmul.f32 %v600, %v600
  %v985 = vmul.f32 %v603, %v603
  %v986 = vmul.f32 %v608, %v608
  %v987 = vmul.f32 %v611, %v611
  %v988 = vmul.f32 %v616, %v616
  %v989 = vmul.f32 %v619, %v619
  %v990 = vmul.f32 %v624, %v624
  %v991 = vmul.f32 %v627, %v627
  %v992 = vmul.f32 %v632, %v632
  %v993 = vmul.f32 %v635, %v635
  %v994 = vmul.f32 %v640, %v640
  %v995 = vmul.f32 %v643, %v643
  %v996 = vmul.f32 %v648, %v648
  %v997 = vmul.f32 %v651, %v651
  %v998 = vmul.f32 %v656, %v656
  %v999 = vmul.f32 %v659, %v659
  %v1000 = vmul.f32 %v664, %v664
  %v1001 = vmul.f32 %v667, %v667
  %v1002 = vmul.f32 %v672, %v672
  %v1003 = vmul.f32 %v675, %v675
  %v1004 = vmul.f32 %v680, %v680
  %v1005 = vmul.f32 %v683, %v683
  %v1006 = vmul.f32 %v688, %v688
  %v1007 = vmul.f32 %v691, %v691
  %v1008 = vmul.f32 %v696, %v696
  %v1009 = vmul.f32 %v699, %v699
  %v1010 = vmul.f32 %v704, %v704
  %v1011 = vmul.f32 %v707, %v707
  %v1012 = vmul.f32 %v712, %v712
  %v1013 = vmul.f32 %v715, %v715
  %v1014 = vmul.f32 %v720, %v720
  %v1015 = vmul.f32 %v723, %v723
  %v1016 = vmul.f32 %v728, %v728
  %v1017 = vmul.f32 %v731, %v731
  %v1018 = vmul.f32 %v736, %v736
  %v1019 = vmul.f32 %v739, %v739
  %v1020 = vmul.f32 %v744, %v744
  %v1021 = vmul.f32 %v747, %v747
  %v1022 = vmul.f32 %v752, %v752
  %v1023 = vmul.f32 %v755, %v755
  %v1024 = vmul.f32 %v760, %v760
  %v1025 = vmul.f32 %v763, %v763
  %v1026 = vmul.f32 %v768, %v768
  %v1027 = vmul.f32 %v771, %v771
  %v1028 = vmul.f32 %v776, %v776
  %v1029 = vmul.f32 %v779, %v779
  %v1030 = vmul.f32 %v784, %v784
  %v1031 = vmul.f32 %v787, %v787
  %v1032 = vmul.f32 %v792, %v792
  %v1033 = vmul.f32 %v795, %v795
  %v1034 = vmul.f32 %v800, %v800
  %v1035 = vmul.f32 %v803, %v803
  %v1036 = vmul.f32 %v808, %v808
  %v1037 = vmul.f32 %v811, %v811
  %v1038 = vmul.f32 %v816, %v816
  %v1039 = vmul.f32 %v819, %v819
  %v1040 = vmul.f32 %v824, %v824
  %v1041 = vmul.f32 %v827, %v827
  %v1042 = vmul.f32 %v832, %v832
  %v1043 = vmul.f32 %v835, %v835
  %v1044 = vmul.f32 %v840, %v840
  %v1045 = vmul.f32 %v843, %v843
  %v1046 = vsel %vm846, %v982, 0.0
  %v1047 = vsel %vm846, %v983, 0.0
  %v1048 = vadd.f32 %v1046, %v1047
  %v1049 = vsel %vm846, %v984, 0.0
  %v1050 = vadd.f32 %v1048, %v1049
  %v1051 = vsel %vm846, %v985, 0.0
  %v1052 = vadd.f32 %v1050, %v1051
  %v1053 = vsel %vm846, %v986, 0.0
  %v1054 = vadd.f32 %v1052, %v1053
  %v1055 = vsel %vm846, %v987, 0.0
  %v1056 = vadd.f32 %v1054, %v1055
  %v1057 = vsel %vm846, %v988, 0.0
  %v1058 = vadd.f32 %v1056, %v1057
  %v1059 = vsel %vm846, %v989, 0.0
  %v1060 = vadd.f32 %v1058, %v1059
  %v1061 = vsel %vm846, %v990, 0.0
  %v1062 = vadd.f32 %v1060, %v1061
  %v1063 = vsel %vm846, %v991, 0.0
  %v1064 = vadd.f32 %v1062, %v1063
  %v1065 = vsel %vm846, %v992, 0.0
  %v1066 = vadd.f32 %v1064, %v1065
  %v1067 = vsel %vm846, %v993, 0.0
  %v1068 = vadd.f32 %v1066, %v1067
  %v1069 = vsel %vm846, %v994, 0.0
  %v1070 = vadd.f32 %v1068, %v1069
  %v1071 = vsel %vm846, %v995, 0.0
  %v1072 = vadd.f32 %v1070, %v1071
  %v1073 = vsel %vm846, %v996, 0.0
  %v1074 = vadd.f32 %v1072, %v1073
  %v1075 = vsel %vm846, %v997, 0.0
  %v1076 = vadd.f32 %v1074, %v1075
  %v1077 = vsel %vm846, %v998, 0.0
  %v1078 = vadd.f32 %v1076, %v1077
  %v1079 = vsel %vm846, %v999, 0.0
  %v1080 = vadd.f32 %v1078, %v1079
  %v1081 = vsel %vm846, %v1000, 0.0
  %v1082 = vadd.f32 %v1080, %v1081
  %v1083 = vsel %vm846, %v1001, 0.0
  %v1084 = vadd.f32 %v1082, %v1083
  %v1085 = vsel %vm846, %v1002, 0.0
  %v1086 = vadd.f32 %v1084, %v1085
  %v1087 = vsel %vm846, %v1003, 0.0
  %v1088 = vadd.f32 %v1086, %v1087
  %v1089 = vsel %vm846, %v1004, 0.0
  %v1090 = vadd.f32 %v1088, %v1089
  %v1091 = vsel %vm846, %v1005, 0.0
  %v1092 = vadd.f32 %v1090, %v1091
  %v1093 = vsel %vm846, %v1006, 0.0
  %v1094 = vadd.f32 %v1092, %v1093
  %v1095 = vsel %vm846, %v1007, 0.0
  %v1096 = vadd.f32 %v1094, %v1095
  %v1097 = vsel %vm846, %v1008, 0.0
  %v1098 = vadd.f32 %v1096, %v1097
  %v1099 = vsel %vm846, %v1009, 0.0
  %v1100 = vadd.f32 %v1098, %v1099
  %v1101 = vsel %vm846, %v1010, 0.0
  %v1102 = vadd.f32 %v1100, %v1101
  %v1103 = vsel %vm846, %v1011, 0.0
  %v1104 = vadd.f32 %v1102, %v1103
  %v1105 = vsel %vm846, %v1012, 0.0
  %v1106 = vadd.f32 %v1104, %v1105
  %v1107 = vsel %vm846, %v1013, 0.0
  %v1108 = vadd.f32 %v1106, %v1107
  %v1109 = vsel %vm846, %v1014, 0.0
  %v1110 = vadd.f32 %v1108, %v1109
  %v1111 = vsel %vm846, %v1015, 0.0
  %v1112 = vadd.f32 %v1110, %v1111
  %v1113 = vsel %vm846, %v1016, 0.0
  %v1114 = vadd.f32 %v1112, %v1113
  %v1115 = vsel %vm846, %v1017, 0.0
  %v1116 = vadd.f32 %v1114, %v1115
  %v1117 = vsel %vm846, %v1018, 0.0
  %v1118 = vadd.f32 %v1116, %v1117
  %v1119 = vsel %vm846, %v1019, 0.0
  %v1120 = vadd.f32 %v1118, %v1119
  %v1121 = vsel %vm846, %v1020, 0.0
  %v1122 = vadd.f32 %v1120, %v1121
  %v1123 = vsel %vm846, %v1021, 0.0
  %v1124 = vadd.f32 %v1122, %v1123
  %v1125 = vsel %vm846, %v1022, 0.0
  %v1126 = vadd.f32 %v1124, %v1125
  %v1127 = vsel %vm846, %v1023, 0.0
  %v1128 = vadd.f32 %v1126, %v1127
  %v1129 = vsel %vm846, %v1024, 0.0
  %v1130 = vadd.f32 %v1128, %v1129
  %v1131 = vsel %vm846, %v1025, 0.0
  %v1132 = vadd.f32 %v1130, %v1131
  %v1133 = vsel %vm846, %v1026, 0.0
  %v1134 = vadd.f32 %v1132, %v1133
  %v1135 = vsel %vm846, %v1027, 0.0
  %v1136 = vadd.f32 %v1134, %v1135
  %v1137 = vsel %vm846, %v1028, 0.0
  %v1138 = vadd.f32 %v1136, %v1137
  %v1139 = vsel %vm846, %v1029, 0.0
  %v1140 = vadd.f32 %v1138, %v1139
  %v1141 = vsel %vm846, %v1030, 0.0
  %v1142 = vadd.f32 %v1140, %v1141
  %v1143 = vsel %vm846, %v1031, 0.0
  %v1144 = vadd.f32 %v1142, %v1143
  %v1145 = vsel %vm846, %v1032, 0.0
  %v1146 = vadd.f32 %v1144, %v1145
  %v1147 = vsel %vm846, %v1033, 0.0
  %v1148 = vadd.f32 %v1146, %v1147
  %v1149 = vsel %vm846, %v1034, 0.0
  %v1150 = vadd.f32 %v1148, %v1149
  %v1151 = vsel %vm846, %v1035, 0.0
  %v1152 = vadd.f32 %v1150, %v1151
  %v1153 = vsel %vm846, %v1036, 0.0
  %v1154 = vadd.f32 %v1152, %v1153
  %v1155 = vsel %vm846, %v1037, 0.0
  %v1156 = vadd.f32 %v1154, %v1155
  %v1157 = vsel %vm846, %v1038, 0.0
  %v1158 = vadd.f32 %v1156, %v1157
  %v1159 = vsel %vm846, %v1039, 0.0
  %v1160 = vadd.f32 %v1158, %v1159
  %v1161 = vsel %vm846, %v1040, 0.0
  %v1162 = vadd.f32 %v1160, %v1161
  %v1163 = vsel %vm846, %v1041, 0.0
  %v1164 = vadd.f32 %v1162, %v1163
  %v1165 = vsel %vm846, %v1042, 0.0
  %v1166 = vadd.f32 %v1164, %v1165
  %v1167 = vsel %vm846, %v1043, 0.0
  %v1168 = vadd.f32 %v1166, %v1167
  %v1169 = vsel %vm846, %v1044, 0.0
  %v1170 = vadd.f32 %v1168, %v1169
  %v1171 = vsel %vm846, %v1045, 0.0
  %v1172 = vadd.f32 %v1170, %v1171
  %v1173 = vrot.slane %v1172, 4
  %v1174 = vadd.f32 %v1172, %v1173
  %v1175 = vrot.slane %v1174, 2
  %v1176 = vadd.f32 %v1174, %v1175
  %v1177 = vrot.slane %v1176, 1
  %v1178 = vadd.f32 %v1176, %v1177
  %1179 = vst.msk [vmem:[%s5] sm:$0x1] %vm980, %v1178
  %v1180 = vpack.c.bf16 %v595, %v592
  %v1181 = vpack.c.bf16 %v603, %v600
  %v1182 = vpack.c.bf16 %v611, %v608
  %v1183 = vpack.c.bf16 %v619, %v616
  %v1184 = vpack.c.bf16 %v627, %v624
  %v1185 = vpack.c.bf16 %v635, %v632
  %v1186 = vpack.c.bf16 %v643, %v640
  %v1187 = vpack.c.bf16 %v651, %v648
  %v1188 = vpack.c.bf16 %v659, %v656
  %v1189 = vpack.c.bf16 %v667, %v664
  %v1190 = vpack.c.bf16 %v675, %v672
  %v1191 = vpack.c.bf16 %v683, %v680
  %v1192 = vpack.c.bf16 %v691, %v688
  %v1193 = vpack.c.bf16 %v699, %v696
  %v1194 = vpack.c.bf16 %v707, %v704
  %v1195 = vpack.c.bf16 %v715, %v712
  %v1196 = vpack.c.bf16 %v723, %v720
  %v1197 = vpack.c.bf16 %v731, %v728
  %v1198 = vpack.c.bf16 %v739, %v736
  %v1199 = vpack.c.bf16 %v747, %v744
  %v1200 = vpack.c.bf16 %v755, %v752
  %v1201 = vpack.c.bf16 %v763, %v760
  %v1202 = vpack.c.bf16 %v771, %v768
  %v1203 = vpack.c.bf16 %v779, %v776
  %v1204 = vpack.c.bf16 %v787, %v784
  %v1205 = vpack.c.bf16 %v795, %v792
  %v1206 = vpack.c.bf16 %v803, %v800
  %v1207 = vpack.c.bf16 %v811, %v808
  %v1208 = vpack.c.bf16 %v819, %v816
  %v1209 = vpack.c.bf16 %v827, %v824
  %v1210 = vpack.c.bf16 %v835, %v832
  %v1211 = vpack.c.bf16 %v843, %v840
  %v1244 = vunpack.c.l.b16 %v1180
  %v1245 = vunpack.c.h.b16 %v1180
  %v1246 = vunpack.c.l.b16 %v1181
  %v1247 = vunpack.c.h.b16 %v1181
  %v1248 = vunpack.c.l.b16 %v1182
  %v1249 = vunpack.c.h.b16 %v1182
  %v1250 = vunpack.c.l.b16 %v1183
  %v1251 = vunpack.c.h.b16 %v1183
  %v1252 = vunpack.c.l.b16 %v1184
  %v1253 = vunpack.c.h.b16 %v1184
  %v1254 = vunpack.c.l.b16 %v1185
  %v1255 = vunpack.c.h.b16 %v1185
  %v1256 = vunpack.c.l.b16 %v1186
  %v1257 = vunpack.c.h.b16 %v1186
  %v1258 = vunpack.c.l.b16 %v1187
  %v1259 = vunpack.c.h.b16 %v1187
  %v1260 = vunpack.c.l.b16 %v1188
  %v1261 = vunpack.c.h.b16 %v1188
  %v1262 = vunpack.c.l.b16 %v1189
  %v1263 = vunpack.c.h.b16 %v1189
  %v1264 = vunpack.c.l.b16 %v1190
  %v1265 = vunpack.c.h.b16 %v1190
  %v1266 = vunpack.c.l.b16 %v1191
  %v1267 = vunpack.c.h.b16 %v1191
  %v1268 = vunpack.c.l.b16 %v1192
  %v1269 = vunpack.c.h.b16 %v1192
  %v1270 = vunpack.c.l.b16 %v1193
  %v1271 = vunpack.c.h.b16 %v1193
  %v1272 = vunpack.c.l.b16 %v1194
  %v1273 = vunpack.c.h.b16 %v1194
  %v1274 = vunpack.c.l.b16 %v1195
  %v1275 = vunpack.c.h.b16 %v1195
  %v1276 = vunpack.c.l.b16 %v1196
  %v1277 = vunpack.c.h.b16 %v1196
  %v1278 = vunpack.c.l.b16 %v1197
  %v1279 = vunpack.c.h.b16 %v1197
  %v1280 = vunpack.c.l.b16 %v1198
  %v1281 = vunpack.c.h.b16 %v1198
  %v1282 = vunpack.c.l.b16 %v1199
  %v1283 = vunpack.c.h.b16 %v1199
  %v1284 = vunpack.c.l.b16 %v1200
  %v1285 = vunpack.c.h.b16 %v1200
  %v1286 = vunpack.c.l.b16 %v1201
  %v1287 = vunpack.c.h.b16 %v1201
  %v1288 = vunpack.c.l.b16 %v1202
  %v1289 = vunpack.c.h.b16 %v1202
  %v1290 = vunpack.c.l.b16 %v1203
  %v1291 = vunpack.c.h.b16 %v1203
  %v1292 = vunpack.c.l.b16 %v1204
  %v1293 = vunpack.c.h.b16 %v1204
  %v1294 = vunpack.c.l.b16 %v1205
  %v1295 = vunpack.c.h.b16 %v1205
  %v1296 = vunpack.c.l.b16 %v1206
  %v1297 = vunpack.c.h.b16 %v1206
  %v1298 = vunpack.c.l.b16 %v1207
  %v1299 = vunpack.c.h.b16 %v1207
  %v1300 = vunpack.c.l.b16 %v1208
  %v1301 = vunpack.c.h.b16 %v1208
  %v1302 = vunpack.c.l.b16 %v1209
  %v1303 = vunpack.c.h.b16 %v1209
  %v1304 = vunpack.c.l.b16 %v1210
  %v1305 = vunpack.c.h.b16 %v1210
  %v1306 = vunpack.c.l.b16 %v1211
  %v1307 = vunpack.c.h.b16 %v1211
  %v1308 = vpack.c.b16 %v1244, %v1244
  %v1309 = vpack.c.b16 %v1245, %v1245
  %v1310 = vpack.c.b16 %v1246, %v1246
  %v1311 = vpack.c.b16 %v1247, %v1247
  %v1312 = vpack.c.b16 %v1248, %v1248
  %v1313 = vpack.c.b16 %v1249, %v1249
  %v1314 = vpack.c.b16 %v1250, %v1250
  %v1315 = vpack.c.b16 %v1251, %v1251
  %v1316 = vpack.c.b16 %v1252, %v1252
  %v1317 = vpack.c.b16 %v1253, %v1253
  %v1318 = vpack.c.b16 %v1254, %v1254
  %v1319 = vpack.c.b16 %v1255, %v1255
  %v1320 = vpack.c.b16 %v1256, %v1256
  %v1321 = vpack.c.b16 %v1257, %v1257
  %v1322 = vpack.c.b16 %v1258, %v1258
  %v1323 = vpack.c.b16 %v1259, %v1259
  %v1324 = vpack.c.b16 %v1260, %v1260
  %v1325 = vpack.c.b16 %v1261, %v1261
  %v1326 = vpack.c.b16 %v1262, %v1262
  %v1327 = vpack.c.b16 %v1263, %v1263
  %v1328 = vpack.c.b16 %v1264, %v1264
  %v1329 = vpack.c.b16 %v1265, %v1265
  %v1330 = vpack.c.b16 %v1266, %v1266
  %v1331 = vpack.c.b16 %v1267, %v1267
  %v1332 = vpack.c.b16 %v1268, %v1268
  %v1333 = vpack.c.b16 %v1269, %v1269
  %v1334 = vpack.c.b16 %v1270, %v1270
  %v1335 = vpack.c.b16 %v1271, %v1271
  %v1336 = vpack.c.b16 %v1272, %v1272
  %v1337 = vpack.c.b16 %v1273, %v1273
  %v1338 = vpack.c.b16 %v1274, %v1274
  %v1339 = vpack.c.b16 %v1275, %v1275
  %v1340 = vpack.c.b16 %v1276, %v1276
  %v1341 = vpack.c.b16 %v1277, %v1277
  %v1342 = vpack.c.b16 %v1278, %v1278
  %v1343 = vpack.c.b16 %v1279, %v1279
  %v1344 = vpack.c.b16 %v1280, %v1280
  %v1345 = vpack.c.b16 %v1281, %v1281
  %v1346 = vpack.c.b16 %v1282, %v1282
  %v1347 = vpack.c.b16 %v1283, %v1283
  %v1348 = vpack.c.b16 %v1284, %v1284
  %v1349 = vpack.c.b16 %v1285, %v1285
  %v1350 = vpack.c.b16 %v1286, %v1286
  %v1351 = vpack.c.b16 %v1287, %v1287
  %v1352 = vpack.c.b16 %v1288, %v1288
  %v1353 = vpack.c.b16 %v1289, %v1289
  %v1354 = vpack.c.b16 %v1290, %v1290
  %v1355 = vpack.c.b16 %v1291, %v1291
  %v1356 = vpack.c.b16 %v1292, %v1292
  %v1357 = vpack.c.b16 %v1293, %v1293
  %v1358 = vpack.c.b16 %v1294, %v1294
  %v1359 = vpack.c.b16 %v1295, %v1295
  %v1360 = vpack.c.b16 %v1296, %v1296
  %v1361 = vpack.c.b16 %v1297, %v1297
  %v1362 = vpack.c.b16 %v1298, %v1298
  %v1363 = vpack.c.b16 %v1299, %v1299
  %v1364 = vpack.c.b16 %v1300, %v1300
  %v1365 = vpack.c.b16 %v1301, %v1301
  %v1366 = vpack.c.b16 %v1302, %v1302
  %v1367 = vpack.c.b16 %v1303, %v1303
  %v1368 = vpack.c.b16 %v1304, %v1304
  %v1369 = vpack.c.b16 %v1305, %v1305
  %v1370 = vpack.c.b16 %v1306, %v1306
  %v1371 = vpack.c.b16 %v1307, %v1307
  %vm1436 = vcmask 60416
  %1437 = vst.msk [vmem:[%s3] sm:$0xf] %vm1436, %v1308
  %1438 = vst.msk [vmem:[%s3 + $0x4] sm:$0xf] %vm1436, %v1309
  %1439 = vst.msk [vmem:[%s3 + $0x8] sm:$0xf] %vm1436, %v1310
  %1440 = vst.msk [vmem:[%s3 + $0xc] sm:$0xf] %vm1436, %v1311
  %1441 = vst.msk [vmem:[%s3 + $0x10] sm:$0xf] %vm1436, %v1312
  %1442 = vst.msk [vmem:[%s3 + $0x14] sm:$0xf] %vm1436, %v1313
  %1443 = vst.msk [vmem:[%s3 + $0x18] sm:$0xf] %vm1436, %v1314
  %1444 = vst.msk [vmem:[%s3 + $0x1c] sm:$0xf] %vm1436, %v1315
  %1445 = vst.msk [vmem:[%s3 + $0x20] sm:$0xf] %vm1436, %v1316
  %1446 = vst.msk [vmem:[%s3 + $0x24] sm:$0xf] %vm1436, %v1317
  %1447 = vst.msk [vmem:[%s3 + $0x28] sm:$0xf] %vm1436, %v1318
  %1448 = vst.msk [vmem:[%s3 + $0x2c] sm:$0xf] %vm1436, %v1319
  %1449 = vst.msk [vmem:[%s3 + $0x30] sm:$0xf] %vm1436, %v1320
  %1450 = vst.msk [vmem:[%s3 + $0x34] sm:$0xf] %vm1436, %v1321
  %1451 = vst.msk [vmem:[%s3 + $0x38] sm:$0xf] %vm1436, %v1322
  %1452 = vst.msk [vmem:[%s3 + $0x3c] sm:$0xf] %vm1436, %v1323
  %1453 = vst.msk [vmem:[%s3 + $0x40] sm:$0xf] %vm1436, %v1324
  %1454 = vst.msk [vmem:[%s3 + $0x44] sm:$0xf] %vm1436, %v1325
  %1455 = vst.msk [vmem:[%s3 + $0x48] sm:$0xf] %vm1436, %v1326
  %1456 = vst.msk [vmem:[%s3 + $0x4c] sm:$0xf] %vm1436, %v1327
  %1457 = vst.msk [vmem:[%s3 + $0x50] sm:$0xf] %vm1436, %v1328
  %1458 = vst.msk [vmem:[%s3 + $0x54] sm:$0xf] %vm1436, %v1329
  %1459 = vst.msk [vmem:[%s3 + $0x58] sm:$0xf] %vm1436, %v1330
  %1460 = vst.msk [vmem:[%s3 + $0x5c] sm:$0xf] %vm1436, %v1331
  %1461 = vst.msk [vmem:[%s3 + $0x60] sm:$0xf] %vm1436, %v1332
  %1462 = vst.msk [vmem:[%s3 + $0x64] sm:$0xf] %vm1436, %v1333
  %1463 = vst.msk [vmem:[%s3 + $0x68] sm:$0xf] %vm1436, %v1334
  %1464 = vst.msk [vmem:[%s3 + $0x6c] sm:$0xf] %vm1436, %v1335
  %1465 = vst.msk [vmem:[%s3 + $0x70] sm:$0xf] %vm1436, %v1336
  %1466 = vst.msk [vmem:[%s3 + $0x74] sm:$0xf] %vm1436, %v1337
  %1467 = vst.msk [vmem:[%s3 + $0x78] sm:$0xf] %vm1436, %v1338
  %1468 = vst.msk [vmem:[%s3 + $0x7c] sm:$0xf] %vm1436, %v1339
  %1469 = vst.msk [vmem:[%s3 + $0x80] sm:$0xf] %vm1436, %v1340
  %1470 = vst.msk [vmem:[%s3 + $0x84] sm:$0xf] %vm1436, %v1341
  %1471 = vst.msk [vmem:[%s3 + $0x88] sm:$0xf] %vm1436, %v1342
  %1472 = vst.msk [vmem:[%s3 + $0x8c] sm:$0xf] %vm1436, %v1343
  %1473 = vst.msk [vmem:[%s3 + $0x90] sm:$0xf] %vm1436, %v1344
  %1474 = vst.msk [vmem:[%s3 + $0x94] sm:$0xf] %vm1436, %v1345
  %1475 = vst.msk [vmem:[%s3 + $0x98] sm:$0xf] %vm1436, %v1346
  %1476 = vst.msk [vmem:[%s3 + $0x9c] sm:$0xf] %vm1436, %v1347
  %1477 = vst.msk [vmem:[%s3 + $0xa0] sm:$0xf] %vm1436, %v1348
  %1478 = vst.msk [vmem:[%s3 + $0xa4] sm:$0xf] %vm1436, %v1349
  %1479 = vst.msk [vmem:[%s3 + $0xa8] sm:$0xf] %vm1436, %v1350
  %1480 = vst.msk [vmem:[%s3 + $0xac] sm:$0xf] %vm1436, %v1351
  %1481 = vst.msk [vmem:[%s3 + $0xb0] sm:$0xf] %vm1436, %v1352
  %1482 = vst.msk [vmem:[%s3 + $0xb4] sm:$0xf] %vm1436, %v1353
  %1483 = vst.msk [vmem:[%s3 + $0xb8] sm:$0xf] %vm1436, %v1354
  %1484 = vst.msk [vmem:[%s3 + $0xbc] sm:$0xf] %vm1436, %v1355
  %1485 = vst.msk [vmem:[%s3 + $0xc0] sm:$0xf] %vm1436, %v1356
  %1486 = vst.msk [vmem:[%s3 + $0xc4] sm:$0xf] %vm1436, %v1357
  %1487 = vst.msk [vmem:[%s3 + $0xc8] sm:$0xf] %vm1436, %v1358
  %1488 = vst.msk [vmem:[%s3 + $0xcc] sm:$0xf] %vm1436, %v1359
  %1489 = vst.msk [vmem:[%s3 + $0xd0] sm:$0xf] %vm1436, %v1360
  %1490 = vst.msk [vmem:[%s3 + $0xd4] sm:$0xf] %vm1436, %v1361
  %1491 = vst.msk [vmem:[%s3 + $0xd8] sm:$0xf] %vm1436, %v1362
  %1492 = vst.msk [vmem:[%s3 + $0xdc] sm:$0xf] %vm1436, %v1363
  %1493 = vst.msk [vmem:[%s3 + $0xe0] sm:$0xf] %vm1436, %v1364
  %1494 = vst.msk [vmem:[%s3 + $0xe4] sm:$0xf] %vm1436, %v1365
  %1495 = vst.msk [vmem:[%s3 + $0xe8] sm:$0xf] %vm1436, %v1366
  %1496 = vst.msk [vmem:[%s3 + $0xec] sm:$0xf] %vm1436, %v1367
  %1497 = vst.msk [vmem:[%s3 + $0xf0] sm:$0xf] %vm1436, %v1368
  %1498 = vst.msk [vmem:[%s3 + $0xf4] sm:$0xf] %vm1436, %v1369
  %1499 = vst.msk [vmem:[%s3 + $0xf8] sm:$0xf] %vm1436, %v1370
  %1500 = vst.msk [vmem:[%s3 + $0xfc] sm:$0xf] %vm1436, %v1371
  // Predicated region
  $region14: #{resnet_generator_forward.19} parent=0 // pred_check
    _
  $region15: #{resnet_generator_forward.19} parent=0 // pred_check_branch
    %1502 = sbr.rel (0) target = $region17
  $region16: #{resnet_generator_forward.19} parent=0 // pred_region
    _
  $region17: #{resnet_generator_forward.19} parent=0 // pred_fallthru
    _
  // Predicated region
  $region18: #{resnet_generator_forward.19} parent=0 // pred_check
    _
  $region19: #{resnet_generator_forward.19} parent=0 // pred_check_branch
    %1504 = sbr.rel (0) target = $region21
  $region20: #{resnet_generator_forward.19} parent=0 // pred_region
    _
  $region21: #{resnet_generator_forward.19} parent=0 // pred_fallthru
    _
  // Predicated region
  $region22: #{resnet_generator_forward.19} parent=0 // pred_check
    _
  $region23: #{resnet_generator_forward.19} parent=0 // pred_check_branch
    %1506 = sbr.rel (0) target = $region25
  $region24: #{resnet_generator_forward.19} parent=0 // pred_region
    _
  $region25: #{resnet_generator_forward.19} parent=0 // pred_fallthru
    _
  // Predicated region
  $region26: #{resnet_generator_forward.19} parent=0 // pred_check
    _
  $region27: #{resnet_generator_forward.19} parent=0 // pred_check_branch
    %1508 = sbr.rel (0) target = $region29
  $region28: #{resnet_generator_forward.19} parent=0 // pred_region
    _
  $region29: #{resnet_generator_forward.19} parent=0 // pred_fallthru
    _
  // Predicated region
  $region30: #{resnet_generator_forward.19} parent=0 // pred_check
    _
  $region31: #{resnet_generator_forward.19} parent=0 // pred_check_branch
    %1510 = sbr.rel (0) target = $region33
  $region32: #{resnet_generator_forward.19} parent=0 // pred_region
    _
  $region33: #{resnet_generator_forward.19} parent=0 // pred_fallthru
    _
  // Predicated region
  $region34: #{resnet_generator_forward.19} parent=0 // pred_check
    _
  $region35: #{resnet_generator_forward.19} parent=0 // pred_check_branch
    %1512 = sbr.rel (0) target = $region37
  $region36: #{resnet_generator_forward.19} parent=0 // pred_region
    _
  $region37: #{resnet_generator_forward.19} parent=0 // pred_fallthru
    _

// kernel: resnet_generator_forward.21
$region0: #{resnet_generator_forward.21}
  #allocation0 [shape = 'u32[]', space=smem, size = 0x4, offset = 0x4, fixed_abs, tag = 'smem constant byte address 0x4 - core index']
  #allocation1 [shape = 'u32[144,128]{1,0:T(1,128)}', space=vmem, size = 0x12000, scoped, tag = 'internal scratch']
  %s0 = inlined_call_operand.vmem [shape: bf16[128,72], index: 0, kind: input, shape index: {}]
  %s1 = inlined_call_operand.vmem [shape: bf16[72,16], index: 1, kind: input, shape index: {}]
  %s2 = inlined_call_operand.vmem [shape: f32[1,16], index: 2, kind: input, shape index: {}]
  %s3 = inlined_call_operand.vmem [shape: bf16[128,16], index: 3, kind: output, shape index: {0}]
  %s4 = inlined_call_operand.vmem [shape: f32[1,1,16], index: 4, kind: output, shape index: {1}]
  %s5 = inlined_call_operand.vmem [shape: f32[1,1,16], index: 5, kind: output, shape index: {2}]
  %6 = xla_tuple %s3, %s4, %s5
  %s7 = sld [smem:[#allocation0]]
  $region38: #{resnet_generator_forward.21} parent=0
    _
  %s9 = ssub.s32 1, %s7
  %s10 = scalar_select 0, %s9, %s7
  // Predicated region
  $region2: #{resnet_generator_forward.21} parent=0 // pred_check
    _
  $region3: #{resnet_generator_forward.21} parent=0 // pred_check_branch
    %12 = sbr.rel (0) target = $region5
  $region4: #{resnet_generator_forward.21} parent=0 // pred_region
    _
  $region5: #{resnet_generator_forward.21} parent=0 // pred_fallthru
    _
  // Predicated region
  $region6: #{resnet_generator_forward.21} parent=0 // pred_check
    _
  $region7: #{resnet_generator_forward.21} parent=0 // pred_check_branch
    %14 = sbr.rel (0) target = $region9
  $region8: #{resnet_generator_forward.21} parent=0 // pred_region
    _
  $region9: #{resnet_generator_forward.21} parent=0 // pred_fallthru
    _
  // Predicated region
  $region10: #{resnet_generator_forward.21} parent=0 // pred_check
    _
  $region11: #{resnet_generator_forward.21} parent=0 // pred_check_branch
    %16 = sbr.rel (0) target = $region13
  $region12: #{resnet_generator_forward.21} parent=0 // pred_region
    _
  $region13: #{resnet_generator_forward.21} parent=0 // pred_fallthru
    _
  %v18 = vld [vmem:[%s0] sm:$0xf]
  %v19 = vld [vmem:[%s0 + $0x4] sm:$0xf]
  %v20 = vld [vmem:[%s0 + $0x8] sm:$0xf]
  %v21 = vld [vmem:[%s0 + $0xc] sm:$0xf]
  %v22 = vld [vmem:[%s0 + $0x10] sm:$0xf]
  %v23 = vld [vmem:[%s0 + $0x14] sm:$0xf]
  %v24 = vld [vmem:[%s0 + $0x18] sm:$0xf]
  %v25 = vld [vmem:[%s0 + $0x1c] sm:$0xf]
  %v26 = vld [vmem:[%s0 + $0x20] sm:$0xf]
  %v27 = vld [vmem:[%s0 + $0x24] sm:$0xf]
  %v28 = vld [vmem:[%s0 + $0x28] sm:$0xf]
  %v29 = vld [vmem:[%s0 + $0x2c] sm:$0xf]
  %v30 = vld [vmem:[%s0 + $0x30] sm:$0xf]
  %v31 = vld [vmem:[%s0 + $0x34] sm:$0xf]
  %v32 = vld [vmem:[%s0 + $0x38] sm:$0xf]
  %v33 = vld [vmem:[%s0 + $0x3c] sm:$0xf]
  %v34 = vld [vmem:[%s1] sm:$0xf]
  %v35 = vld [vmem:[%s1 + $0x4] sm:$0xf]
  %v36 = vld [vmem:[%s1 + $0x8] sm:$0xf]
  %v37 = vld [vmem:[%s1 + $0xc] sm:$0xf]
  %v38 = vld [vmem:[%s1 + $0x10] sm:$0xf]
  %v39 = vld [vmem:[%s1 + $0x14] sm:$0xf]
  %v40 = vld [vmem:[%s1 + $0x18] sm:$0xf]
  %v41 = vld [vmem:[%s1 + $0x1c] sm:$0xf]
  %v42 = vld [vmem:[%s1 + $0x20] sm:$0xf]
  %v43 = vld [vmem:[%s2] sm:$0x1]
  %v45 = vlaneseq
  %v46 = vshrl.u32 %v45, 7
  %v47 = vsub.s32 0, %v46
  %v48 = vrot.slane %v43, %v47
  %v66 = vunpack.c.l.b16 %v18
  %v67 = vunpack.c.l.b16 %v19
  %v68 = vunpack.c.l.b16 %v20
  %v69 = vunpack.c.l.b16 %v21
  %v70 = vunpack.c.l.b16 %v22
  %v71 = vunpack.c.l.b16 %v23
  %v72 = vunpack.c.l.b16 %v24
  %v73 = vunpack.c.l.b16 %v25
  %v74 = vunpack.c.l.b16 %v26
  %v75 = vunpack.c.l.b16 %v27
  %v76 = vunpack.c.l.b16 %v28
  %v77 = vunpack.c.l.b16 %v29
  %v78 = vunpack.c.l.b16 %v30
  %v79 = vunpack.c.l.b16 %v31
  %v80 = vunpack.c.l.b16 %v32
  %v81 = vunpack.c.l.b16 %v33
  %v82 = vpack.c.b16 %v67, %v66
  %v83 = vpack.c.b16 %v69, %v68
  %v84 = vpack.c.b16 %v71, %v70
  %v85 = vpack.c.b16 %v73, %v72
  %v86 = vpack.c.b16 %v75, %v74
  %v87 = vpack.c.b16 %v77, %v76
  %v88 = vpack.c.b16 %v79, %v78
  %v89 = vpack.c.b16 %v81, %v80
  %v99 = vunpack.c.l.b16 %v34
  %v100 = vunpack.c.l.b16 %v35
  %v101 = vunpack.c.l.b16 %v36
  %v102 = vunpack.c.l.b16 %v37
  %v103 = vunpack.c.l.b16 %v38
  %v104 = vunpack.c.l.b16 %v39
  %v105 = vunpack.c.l.b16 %v40
  %v106 = vunpack.c.l.b16 %v41
  %v107 = vunpack.c.l.b16 %v42
  %v108 = vpack.c.b16 %v100, %v99
  %v109 = vpack.c.b16 %v102, %v101
  %v110 = vpack.c.b16 %v104, %v103
  %v111 = vpack.c.b16 %v106, %v105
  %v112 = vpack.c.b16 %v107, %v107
  %vm117 = vcmask 588800
  %v119 = vsel %vm117, %v82, 0
  %v122 = vsel %vm117, %v83, 0
  %v125 = vsel %vm117, %v84, 0
  %v128 = vsel %vm117, %v85, 0
  %v131 = vsel %vm117, %v86, 0
  %v134 = vsel %vm117, %v87, 0
  %v137 = vsel %vm117, %v88, 0
  %v140 = vsel %vm117, %v89, 0
  %vm142 = vcmask 1043456
  %v144 = vsel %vm142, %v112, 0
  %146 = vmatprep.subr.bf16.mxu0 0
  %147 = vmatpush1.bf16.msra.mxu0 %v108
  %148 = vmatprep.subr.bf16.mxu0 0
  %149 = vmatpush1.bf16.msra.mxu0 %v109
  %150 = vmatprep.subr.bf16.mxu0 0
  %151 = vmatpush1.bf16.msra.mxu0 %v110
  %152 = vmatprep.subr.bf16.mxu0 0
  %153 = vmatpush1.bf16.msra.mxu0 %v111
  %154 = vmatprep.subr.bf16.mxu0 0
  %155 = vmatpush1.bf16.msra.mxu0 %v144
  %156 = vmatprep.subr.bf16.mxu0 0
  %157 = vmatpush1.bf16.msra.mxu0 0
  %158 = vmatprep.subr.bf16.mxu0 0
  %159 = vmatpush1.bf16.msra.mxu0 0
  %160 = vmatprep.subr.bf16.mxu0 0
  %161 = vmatpush1.bf16.msra.mxu0 0
  %162 = vmatprep.subr.bf16.mxu0 0
  %163 = vmatpush1.bf16.msra.mxu0 0
  %164 = vmatprep.subr.bf16.mxu0 0
  %165 = vmatpush1.bf16.msra.mxu0 0
  %166 = vmatprep.subr.bf16.mxu0 0
  %167 = vmatpush1.bf16.msra.mxu0 0
  %168 = vmatprep.subr.bf16.mxu0 0
  %169 = vmatpush1.bf16.msra.mxu0 0
  %170 = vmatprep.subr.bf16.mxu0 0
  %171 = vmatpush1.bf16.msra.mxu0 0
  %172 = vmatprep.subr.bf16.mxu0 0
  %173 = vmatpush1.bf16.msra.mxu0 0
  %174 = vmatprep.subr.bf16.mxu0 0
  %175 = vmatpush1.bf16.msra.mxu0 0
  %176 = vmatprep.subr.bf16.mxu0 0
  %177 = vmatpush1.bf16.msra.mxu0 0
  %178 = vmatprep.mubr.bf16.mxu0 0
  %179 = vmatmul.mubr.bf16.gmra.mrb[0].mxu0 %v119
  %v180 = vpop.f32.mrb[0].mxu0
  %v181 = vadd.f32 %v48, %v180
  %v182 = vpop.f32.mrb[0].mxu0
  %v183 = vpop.f32.mrb[0].mxu0
  %v184 = vadd.f32 %v48, %v183
  %v185 = vpop.f32.mrb[0].mxu0
  %186 = vmatprep.mubr.bf16.mxu0 0
  %187 = vmatmul.mubr.bf16.gmra.mrb[0].mxu0 %v122
  %v188 = vpop.f32.mrb[0].mxu0
  %v189 = vadd.f32 %v48, %v188
  %v190 = vpop.f32.mrb[0].mxu0
  %v191 = vpop.f32.mrb[0].mxu0
  %v192 = vadd.f32 %v48, %v191
  %v193 = vpop.f32.mrb[0].mxu0
  %194 = vmatprep.mubr.bf16.mxu0 0
  %195 = vmatmul.mubr.bf16.gmra.mrb[0].mxu0 %v125
  %v196 = vpop.f32.mrb[0].mxu0
  %v197 = vadd.f32 %v48, %v196
  %v198 = vpop.f32.mrb[0].mxu0
  %v199 = vpop.f32.mrb[0].mxu0
  %v200 = vadd.f32 %v48, %v199
  %v201 = vpop.f32.mrb[0].mxu0
  %202 = vmatprep.mubr.bf16.mxu0 0
  %203 = vmatmul.mubr.bf16.gmra.mrb[0].mxu0 %v128
  %v204 = vpop.f32.mrb[0].mxu0
  %v205 = vadd.f32 %v48, %v204
  %v206 = vpop.f32.mrb[0].mxu0
  %v207 = vpop.f32.mrb[0].mxu0
  %v208 = vadd.f32 %v48, %v207
  %v209 = vpop.f32.mrb[0].mxu0
  %210 = vmatprep.mubr.bf16.mxu0 0
  %211 = vmatmul.mubr.bf16.gmra.mrb[0].mxu0 %v131
  %v212 = vpop.f32.mrb[0].mxu0
  %v213 = vadd.f32 %v48, %v212
  %v214 = vpop.f32.mrb[0].mxu0
  %v215 = vpop.f32.mrb[0].mxu0
  %v216 = vadd.f32 %v48, %v215
  %v217 = vpop.f32.mrb[0].mxu0
  %218 = vmatprep.mubr.bf16.mxu0 0
  %219 = vmatmul.mubr.bf16.gmra.mrb[0].mxu0 %v134
  %v220 = vpop.f32.mrb[0].mxu0
  %v221 = vadd.f32 %v48, %v220
  %v222 = vpop.f32.mrb[0].mxu0
  %v223 = vpop.f32.mrb[0].mxu0
  %v224 = vadd.f32 %v48, %v223
  %v225 = vpop.f32.mrb[0].mxu0
  %226 = vmatprep.mubr.bf16.mxu0 0
  %227 = vmatmul.mubr.bf16.gmra.mrb[0].mxu0 %v137
  %v228 = vpop.f32.mrb[0].mxu0
  %v229 = vadd.f32 %v48, %v228
  %v230 = vpop.f32.mrb[0].mxu0
  %v231 = vpop.f32.mrb[0].mxu0
  %v232 = vadd.f32 %v48, %v231
  %v233 = vpop.f32.mrb[0].mxu0
  %234 = vmatprep.mubr.bf16.mxu0 0
  %235 = vmatmul.mubr.bf16.gmra.mrb[0].mxu0 %v140
  %v236 = vpop.f32.mrb[0].mxu0
  %v237 = vadd.f32 %v48, %v236
  %v238 = vpop.f32.mrb[0].mxu0
  %v239 = vpop.f32.mrb[0].mxu0
  %v240 = vadd.f32 %v48, %v239
  %v241 = vpop.f32.mrb[0].mxu0
  %242 = vdwg.mxu0
  %vm243 = vcmask 130048
  %v244 = vsel %vm243, %v181, 0.0
  %v245 = vsel %vm243, %v184, 0.0
  %v246 = vadd.f32 %v244, %v245
  %v247 = vsel %vm243, %v189, 0.0
  %v248 = vadd.f32 %v246, %v247
  %v249 = vsel %vm243, %v192, 0.0
  %v250 = vadd.f32 %v248, %v249
  %v251 = vsel %vm243, %v197, 0.0
  %v252 = vadd.f32 %v250, %v251
  %v253 = vsel %vm243, %v200, 0.0
  %v254 = vadd.f32 %v252, %v253
  %v255 = vsel %vm243, %v205, 0.0
  %v256 = vadd.f32 %v254, %v255
  %v257 = vsel %vm243, %v208, 0.0
  %v258 = vadd.f32 %v256, %v257
  %v259 = vsel %vm243, %v213, 0.0
  %v260 = vadd.f32 %v258, %v259
  %v261 = vsel %vm243, %v216, 0.0
  %v262 = vadd.f32 %v260, %v261
  %v263 = vsel %vm243, %v221, 0.0
  %v264 = vadd.f32 %v262, %v263
  %v265 = vsel %vm243, %v224, 0.0
  %v266 = vadd.f32 %v264, %v265
  %v267 = vsel %vm243, %v229, 0.0
  %v268 = vadd.f32 %v266, %v267
  %v269 = vsel %vm243, %v232, 0.0
  %v270 = vadd.f32 %v268, %v269
  %v271 = vsel %vm243, %v237, 0.0
  %v272 = vadd.f32 %v270, %v271
  %v273 = vsel %vm243, %v240, 0.0
  %v274 = vadd.f32 %v272, %v273
  %v275 = vrot.slane %v274, 4
  %v276 = vadd.f32 %v274, %v275
  %v277 = vrot.slane %v276, 2
  %v278 = vadd.f32 %v276, %v277
  %v279 = vrot.slane %v278, 1
  %v280 = vadd.f32 %v278, %v279
  %vm281 = vcmask 122880
  %282 = vst.msk [vmem:[%s4] sm:$0x1] %vm281, %v280
  %v283 = vmul.f32 %v181, %v181
  %v284 = vmul.f32 %v184, %v184
  %v285 = vmul.f32 %v189, %v189
  %v286 = vmul.f32 %v192, %v192
  %v287 = vmul.f32 %v197, %v197
  %v288 = vmul.f32 %v200, %v200
  %v289 = vmul.f32 %v205, %v205
  %v290 = vmul.f32 %v208, %v208
  %v291 = vmul.f32 %v213, %v213
  %v292 = vmul.f32 %v216, %v216
  %v293 = vmul.f32 %v221, %v221
  %v294 = vmul.f32 %v224, %v224
  %v295 = vmul.f32 %v229, %v229
  %v296 = vmul.f32 %v232, %v232
  %v297 = vmul.f32 %v237, %v237
  %v298 = vmul.f32 %v240, %v240
  %v299 = vsel %vm243, %v283, 0.0
  %v300 = vsel %vm243, %v284, 0.0
  %v301 = vadd.f32 %v299, %v300
  %v302 = vsel %vm243, %v285, 0.0
  %v303 = vadd.f32 %v301, %v302
  %v304 = vsel %vm243, %v286, 0.0
  %v305 = vadd.f32 %v303, %v304
  %v306 = vsel %vm243, %v287, 0.0
  %v307 = vadd.f32 %v305, %v306
  %v308 = vsel %vm243, %v288, 0.0
  %v309 = vadd.f32 %v307, %v308
  %v310 = vsel %vm243, %v289, 0.0
  %v311 = vadd.f32 %v309, %v310
  %v312 = vsel %vm243, %v290, 0.0
  %v313 = vadd.f32 %v311, %v312
  %v314 = vsel %vm243, %v291, 0.0
  %v315 = vadd.f32 %v313, %v314
  %v316 = vsel %vm243, %v292, 0.0
  %v317 = vadd.f32 %v315, %v316
  %v318 = vsel %vm243, %v293, 0.0
  %v319 = vadd.f32 %v317, %v318
  %v320 = vsel %vm243, %v294, 0.0
  %v321 = vadd.f32 %v319, %v320
  %v322 = vsel %vm243, %v295, 0.0
  %v323 = vadd.f32 %v321, %v322
  %v324 = vsel %vm243, %v296, 0.0
  %v325 = vadd.f32 %v323, %v324
  %v326 = vsel %vm243, %v297, 0.0
  %v327 = vadd.f32 %v325, %v326
  %v328 = vsel %vm243, %v298, 0.0
  %v329 = vadd.f32 %v327, %v328
  %v330 = vrot.slane %v329, 4
  %v331 = vadd.f32 %v329, %v330
  %v332 = vrot.slane %v331, 2
  %v333 = vadd.f32 %v331, %v332
  %v334 = vrot.slane %v333, 1
  %v335 = vadd.f32 %v333, %v334
  %336 = vst.msk [vmem:[%s5] sm:$0x1] %vm281, %v335
  %v337 = vpack.c.bf16 %v184, %v181
  %v338 = vpack.c.bf16 %v192, %v189
  %v339 = vpack.c.bf16 %v200, %v197
  %v340 = vpack.c.bf16 %v208, %v205
  %v341 = vpack.c.bf16 %v216, %v213
  %v342 = vpack.c.bf16 %v224, %v221
  %v343 = vpack.c.bf16 %v232, %v229
  %v344 = vpack.c.bf16 %v240, %v237
  %v353 = vunpack.c.l.b16 %v337
  %v354 = vunpack.c.h.b16 %v337
  %v355 = vunpack.c.l.b16 %v338
  %v356 = vunpack.c.h.b16 %v338
  %v357 = vunpack.c.l.b16 %v339
  %v358 = vunpack.c.h.b16 %v339
  %v359 = vunpack.c.l.b16 %v340
  %v360 = vunpack.c.h.b16 %v340
  %v361 = vunpack.c.l.b16 %v341
  %v362 = vunpack.c.h.b16 %v341
  %v363 = vunpack.c.l.b16 %v342
  %v364 = vunpack.c.h.b16 %v342
  %v365 = vunpack.c.l.b16 %v343
  %v366 = vunpack.c.h.b16 %v343
  %v367 = vunpack.c.l.b16 %v344
  %v368 = vunpack.c.h.b16 %v344
  %v369 = vpack.c.b16 %v353, %v353
  %v370 = vpack.c.b16 %v354, %v354
  %v371 = vpack.c.b16 %v355, %v355
  %v372 = vpack.c.b16 %v356, %v356
  %v373 = vpack.c.b16 %v357, %v357
  %v374 = vpack.c.b16 %v358, %v358
  %v375 = vpack.c.b16 %v359, %v359
  %v376 = vpack.c.b16 %v360, %v360
  %v377 = vpack.c.b16 %v361, %v361
  %v378 = vpack.c.b16 %v362, %v362
  %v379 = vpack.c.b16 %v363, %v363
  %v380 = vpack.c.b16 %v364, %v364
  %v381 = vpack.c.b16 %v365, %v365
  %v382 = vpack.c.b16 %v366, %v366
  %v383 = vpack.c.b16 %v367, %v367
  %v384 = vpack.c.b16 %v368, %v368
  %vm401 = vcmask 125952
  %402 = vst.msk [vmem:[%s3] sm:$0xf] %vm401, %v369
  %403 = vst.msk [vmem:[%s3 + $0x4] sm:$0xf] %vm401, %v370
  %404 = vst.msk [vmem:[%s3 + $0x8] sm:$0xf] %vm401, %v371
  %405 = vst.msk [vmem:[%s3 + $0xc] sm:$0xf] %vm401, %v372
  %406 = vst.msk [vmem:[%s3 + $0x10] sm:$0xf] %vm401, %v373
  %407 = vst.msk [vmem:[%s3 + $0x14] sm:$0xf] %vm401, %v374
  %408 = vst.msk [vmem:[%s3 + $0x18] sm:$0xf] %vm401, %v375
  %409 = vst.msk [vmem:[%s3 + $0x1c] sm:$0xf] %vm401, %v376
  %410 = vst.msk [vmem:[%s3 + $0x20] sm:$0xf] %vm401, %v377
  %411 = vst.msk [vmem:[%s3 + $0x24] sm:$0xf] %vm401, %v378
  %412 = vst.msk [vmem:[%s3 + $0x28] sm:$0xf] %vm401, %v379
  %413 = vst.msk [vmem:[%s3 + $0x2c] sm:$0xf] %vm401, %v380
  %414 = vst.msk [vmem:[%s3 + $0x30] sm:$0xf] %vm401, %v381
  %415 = vst.msk [vmem:[%s3 + $0x34] sm:$0xf] %vm401, %v382
  %416 = vst.msk [vmem:[%s3 + $0x38] sm:$0xf] %vm401, %v383
  %417 = vst.msk [vmem:[%s3 + $0x3c] sm:$0xf] %vm401, %v384
  // Predicated region
  $region14: #{resnet_generator_forward.21} parent=0 // pred_check
    _
  $region15: #{resnet_generator_forward.21} parent=0 // pred_check_branch
    %419 = sbr.rel (0) target = $region17
  $region16: #{resnet_generator_forward.21} parent=0 // pred_region
    _
  $region17: #{resnet_generator_forward.21} parent=0 // pred_fallthru
    _
  // Predicated region
  $region18: #{resnet_generator_forward.21} parent=0 // pred_check
    _
  $region19: #{resnet_generator_forward.21} parent=0 // pred_check_branch
    %421 = sbr.rel (0) target = $region21
  $region20: #{resnet_generator_forward.21} parent=0 // pred_region
    _
  $region21: #{resnet_generator_forward.21} parent=0 // pred_fallthru
    _
  // Predicated region
  $region22: #{resnet_generator_forward.21} parent=0 // pred_check
    _
  $region23: #{resnet_generator_forward.21} parent=0 // pred_check_branch
    %423 = sbr.rel (0) target = $region25
  $region24: #{resnet_generator_forward.21} parent=0 // pred_region
    _
  $region25: #{resnet_generator_forward.21} parent=0 // pred_fallthru
    _
  // Predicated region
  $region26: #{resnet_generator_forward.21} parent=0 // pred_check
    _
  $region27: #{resnet_generator_forward.21} parent=0 // pred_check_branch
    %425 = sbr.rel (0) target = $region29
  $region28: #{resnet_generator_forward.21} parent=0 // pred_region
    _
  $region29: #{resnet_generator_forward.21} parent=0 // pred_fallthru
    _
  // Predicated region
  $region30: #{resnet_generator_forward.21} parent=0 // pred_check
    _
  $region31: #{resnet_generator_forward.21} parent=0 // pred_check_branch
    %427 = sbr.rel (0) target = $region33
  $region32: #{resnet_generator_forward.21} parent=0 // pred_region
    _
  $region33: #{resnet_generator_forward.21} parent=0 // pred_fallthru
    _
  // Predicated region
  $region34: #{resnet_generator_forward.21} parent=0 // pred_check
    _
  $region35: #{resnet_generator_forward.21} parent=0 // pred_check_branch
    %429 = sbr.rel (0) target = $region37
  $region36: #{resnet_generator_forward.21} parent=0 // pred_region
    _
  $region37: #{resnet_generator_forward.21} parent=0 // pred_fallthru
    _

// kernel: resnet_generator_forward.22
$region0: #{resnet_generator_forward.22}
  #allocation0 [shape = 'u32[]', space=smem, size = 0x4, offset = 0x4, fixed_abs, tag = 'smem constant byte address 0x4 - core index']
  #allocation1 [shape = 'u32[144,128]{1,0:T(1,128)}', space=vmem, size = 0x12000, scoped, tag = 'internal scratch']
  %s0 = inlined_call_operand.vmem [shape: bf16[8,256], index: 0, kind: input, shape index: {}]
  %s1 = inlined_call_operand.vmem [shape: f32[1,256], index: 1, kind: input, shape index: {}]
  %s2 = inlined_call_operand.vmem [shape: f32[1,256], index: 2, kind: input, shape index: {}]
  %s3 = inlined_call_operand.vmem [shape: bf16[8,256], index: 3, kind: output, shape index: {}]
  %s4 = sld [smem:[#allocation0]]
  $region22: #{resnet_generator_forward.22} parent=0
    _
  %s6 = ssub.s32 1, %s4
  %s7 = scalar_select 0, %s6, %s4
  // Predicated region
  $region2: #{resnet_generator_forward.22} parent=0 // pred_check
    _
  $region3: #{resnet_generator_forward.22} parent=0 // pred_check_branch
    %9 = sbr.rel (0) target = $region5
  $region4: #{resnet_generator_forward.22} parent=0 // pred_region
    _
  $region5: #{resnet_generator_forward.22} parent=0 // pred_fallthru
    _
  // Predicated region
  $region6: #{resnet_generator_forward.22} parent=0 // pred_check
    _
  $region7: #{resnet_generator_forward.22} parent=0 // pred_check_branch
    %11 = sbr.rel (0) target = $region9
  $region8: #{resnet_generator_forward.22} parent=0 // pred_region
    _
  $region9: #{resnet_generator_forward.22} parent=0 // pred_fallthru
    _
  // Predicated region
  $region10: #{resnet_generator_forward.22} parent=0 // pred_check
    _
  $region11: #{resnet_generator_forward.22} parent=0 // pred_check_branch
    %13 = sbr.rel (0) target = $region13
  $region12: #{resnet_generator_forward.22} parent=0 // pred_region
    _
  $region13: #{resnet_generator_forward.22} parent=0 // pred_fallthru
    _
  %v14 = vld [vmem:[%s0] sm:$0xff]
  %v15 = vunpack.c.l.bf16 %v14
  %v16 = vunpack.c.h.bf16 %v14
  %v17 = vld [vmem:[%s1] sm:$0x3]
  %v19 = vlaneseq
  %v20 = vshrl.u32 %v19, 7
  %v21 = vsub.s32 0, %v20
  %v22 = vrot.slane %v17, %v21
  %v23 = vlaneseq
  %v24 = vshrl.u32 %v23, 7
  %v25 = vsub.s32 1, %v24
  %v26 = vrot.slane %v17, %v25
  %v29 = vmul.f32 %v15, %v22
  %v30 = vmul.f32 %v16, %v26
  %v31 = vld [vmem:[%s2] sm:$0x3]
  %v33 = vlaneseq
  %v34 = vshrl.u32 %v33, 7
  %v35 = vsub.s32 0, %v34
  %v36 = vrot.slane %v31, %v35
  %v37 = vlaneseq
  %v38 = vshrl.u32 %v37, 7
  %v39 = vsub.s32 1, %v38
  %v40 = vrot.slane %v31, %v39
  %v43 = vadd.f32 %v29, %v36
  %v44 = vadd.f32 %v30, %v40
  %v45 = vmax.f32 %v43, 0.0
  %v46 = vmax.f32 %v44, 0.0
  %v47 = vpack.c.bf16 %v45, %v45
  %v48 = vpack.c.bf16 %v46, %v46
  %v51 = vunpack.c.l.b16 %v47
  %v52 = vunpack.c.l.b16 %v48
  %v53 = vpack.c.b16 %v52, %v51
  %55 = vst [vmem:[%s3] sm:$0xff] %v53
  // Predicated region
  $region14: #{resnet_generator_forward.22} parent=0 // pred_check
    _
  $region15: #{resnet_generator_forward.22} parent=0 // pred_check_branch
    %57 = sbr.rel (0) target = $region17
  $region16: #{resnet_generator_forward.22} parent=0 // pred_region
    _
  $region17: #{resnet_generator_forward.22} parent=0 // pred_fallthru
    _
  // Predicated region
  $region18: #{resnet_generator_forward.22} parent=0 // pred_check
    _
  $region19: #{resnet_generator_forward.22} parent=0 // pred_check_branch
    %59 = sbr.rel (0) target = $region21
  $region20: #{resnet_generator_forward.22} parent=0 // pred_region
    _
  $region21: #{resnet_generator_forward.22} parent=0 // pred_fallthru
    _

// kernel: resnet_generator_forward.24
$region0: #{resnet_generator_forward.24}
  #allocation0 [shape = 'u32[]', space=smem, size = 0x4, offset = 0x4, fixed_abs, tag = 'smem constant byte address 0x4 - core index']
  #allocation1 [shape = 'u32[144,128]{1,0:T(1,128)}', space=vmem, size = 0x12000, scoped, tag = 'internal scratch']
  %s0 = inlined_call_operand.vmem [shape: bf16[4,256], index: 0, kind: input, shape index: {}]
  %s1 = inlined_call_operand.vmem [shape: f32[1,256], index: 1, kind: input, shape index: {}]
  %s2 = inlined_call_operand.vmem [shape: f32[1,256], index: 2, kind: input, shape index: {}]
  %s3 = inlined_call_operand.vmem [shape: bf16[4,256], index: 3, kind: output, shape index: {}]
  %s4 = sld [smem:[#allocation0]]
  $region22: #{resnet_generator_forward.24} parent=0
    _
  %s6 = ssub.s32 1, %s4
  %s7 = scalar_select 0, %s6, %s4
  // Predicated region
  $region2: #{resnet_generator_forward.24} parent=0 // pred_check
    _
  $region3: #{resnet_generator_forward.24} parent=0 // pred_check_branch
    %9 = sbr.rel (0) target = $region5
  $region4: #{resnet_generator_forward.24} parent=0 // pred_region
    _
  $region5: #{resnet_generator_forward.24} parent=0 // pred_fallthru
    _
  // Predicated region
  $region6: #{resnet_generator_forward.24} parent=0 // pred_check
    _
  $region7: #{resnet_generator_forward.24} parent=0 // pred_check_branch
    %11 = sbr.rel (0) target = $region9
  $region8: #{resnet_generator_forward.24} parent=0 // pred_region
    _
  $region9: #{resnet_generator_forward.24} parent=0 // pred_fallthru
    _
  // Predicated region
  $region10: #{resnet_generator_forward.24} parent=0 // pred_check
    _
  $region11: #{resnet_generator_forward.24} parent=0 // pred_check_branch
    %13 = sbr.rel (0) target = $region13
  $region12: #{resnet_generator_forward.24} parent=0 // pred_region
    _
  $region13: #{resnet_generator_forward.24} parent=0 // pred_fallthru
    _
  %v14 = vld [vmem:[%s0] sm:$0xf]
  %v15 = vunpack.c.l.bf16 %v14
  %v16 = vld [vmem:[%s1] sm:$0x3]
  %v18 = vlaneseq
  %v19 = vshrl.u32 %v18, 7
  %v20 = vsub.s32 0, %v19
  %v21 = vrot.slane %v16, %v20
  %v22 = vlaneseq
  %v23 = vshrl.u32 %v22, 7
  %v24 = vsub.s32 1, %v23
  %v25 = vrot.slane %v16, %v24
  %v26 = vcombine.low %v21, %v25
  %v28 = vmul.f32 %v15, %v26
  %v29 = vld [vmem:[%s2] sm:$0x3]
  %v31 = vlaneseq
  %v32 = vshrl.u32 %v31, 7
  %v33 = vsub.s32 0, %v32
  %v34 = vrot.slane %v29, %v33
  %v35 = vlaneseq
  %v36 = vshrl.u32 %v35, 7
  %v37 = vsub.s32 1, %v36
  %v38 = vrot.slane %v29, %v37
  %v39 = vcombine.low %v34, %v38
  %v41 = vadd.f32 %v28, %v39
  %v42 = vmax.f32 %v41, 0.0
  %v44 = vcombine.high %v42, %v42
  %v46 = vpack.c.bf16 %v42, %v42
  %v47 = vpack.c.bf16 %v44, %v44
  %v50 = vcombine.low %v46, %v47
  %v52 = vunpack.c.l.s4 1983009808
  %v53 = vunpack.c.0.s8 %v52
  %v54 = vlaneseq
  %v55 = vshrl.u32 %v54, 7
  %v56 = vsub.s32 %v53, %v55
  %v57 = vrot.slane %v50, %v56
  %59 = vst [vmem:[%s3] sm:$0xf] %v57
  // Predicated region
  $region14: #{resnet_generator_forward.24} parent=0 // pred_check
    _
  $region15: #{resnet_generator_forward.24} parent=0 // pred_check_branch
    %61 = sbr.rel (0) target = $region17
  $region16: #{resnet_generator_forward.24} parent=0 // pred_region
    _
  $region17: #{resnet_generator_forward.24} parent=0 // pred_fallthru
    _
  // Predicated region
  $region18: #{resnet_generator_forward.24} parent=0 // pred_check
    _
  $region19: #{resnet_generator_forward.24} parent=0 // pred_check_branch
    %63 = sbr.rel (0) target = $region21
  $region20: #{resnet_generator_forward.24} parent=0 // pred_region
    _
  $region21: #{resnet_generator_forward.24} parent=0 // pred_fallthru
    _

// kernel: resnet_generator_forward.23
$region0: #{resnet_generator_forward.23}
  #allocation0 [shape = 'u32[]', space=smem, size = 0x4, offset = 0x4, fixed_abs, tag = 'smem constant byte address 0x4 - core index']
  #allocation1 [shape = 'u32[144,128]{1,0:T(1,128)}', space=vmem, size = 0x12000, scoped, tag = 'internal scratch']
  %s0 = inlined_call_operand.vmem [shape: bf16[32,144], index: 0, kind: input, shape index: {}]
  %s1 = inlined_call_operand.vmem [shape: bf16[144,32], index: 1, kind: input, shape index: {}]
  %s2 = inlined_call_operand.vmem [shape: f32[1,32], index: 2, kind: input, shape index: {}]
  %s3 = inlined_call_operand.vmem [shape: bf16[32,32], index: 3, kind: output, shape index: {0}]
  %s4 = inlined_call_operand.vmem [shape: f32[1,1,32], index: 4, kind: output, shape index: {1}]
  %s5 = inlined_call_operand.vmem [shape: f32[1,1,32], index: 5, kind: output, shape index: {2}]
  %6 = xla_tuple %s3, %s4, %s5
  %s7 = sld [smem:[#allocation0]]
  $region38: #{resnet_generator_forward.23} parent=0
    _
  %s9 = ssub.s32 1, %s7
  %s10 = scalar_select 0, %s9, %s7
  // Predicated region
  $region2: #{resnet_generator_forward.23} parent=0 // pred_check
    _
  $region3: #{resnet_generator_forward.23} parent=0 // pred_check_branch
    %12 = sbr.rel (0) target = $region5
  $region4: #{resnet_generator_forward.23} parent=0 // pred_region
    _
  $region5: #{resnet_generator_forward.23} parent=0 // pred_fallthru
    _
  // Predicated region
  $region6: #{resnet_generator_forward.23} parent=0 // pred_check
    _
  $region7: #{resnet_generator_forward.23} parent=0 // pred_check_branch
    %14 = sbr.rel (0) target = $region9
  $region8: #{resnet_generator_forward.23} parent=0 // pred_region
    _
  $region9: #{resnet_generator_forward.23} parent=0 // pred_fallthru
    _
  // Predicated region
  $region10: #{resnet_generator_forward.23} parent=0 // pred_check
    _
  $region11: #{resnet_generator_forward.23} parent=0 // pred_check_branch
    %16 = sbr.rel (0) target = $region13
  $region12: #{resnet_generator_forward.23} parent=0 // pred_region
    _
  $region13: #{resnet_generator_forward.23} parent=0 // pred_fallthru
    _
  %v18 = vld [vmem:[%s0] sm:$0xff]
  %v19 = vld [vmem:[%s0 + $0x8] sm:$0xff]
  %v20 = vld [vmem:[%s0 + $0x10] sm:$0xff]
  %v21 = vld [vmem:[%s0 + $0x18] sm:$0xff]
  %v22 = vld [vmem:[%s1] sm:$0xf]
  %v23 = vld [vmem:[%s1 + $0x4] sm:$0xf]
  %v24 = vld [vmem:[%s1 + $0x8] sm:$0xf]
  %v25 = vld [vmem:[%s1 + $0xc] sm:$0xf]
  %v26 = vld [vmem:[%s1 + $0x10] sm:$0xf]
  %v27 = vld [vmem:[%s1 + $0x14] sm:$0xf]
  %v28 = vld [vmem:[%s1 + $0x18] sm:$0xf]
  %v29 = vld [vmem:[%s1 + $0x1c] sm:$0xf]
  %v30 = vld [vmem:[%s1 + $0x20] sm:$0xf]
  %v31 = vld [vmem:[%s1 + $0x24] sm:$0xf]
  %v32 = vld [vmem:[%s1 + $0x28] sm:$0xf]
  %v33 = vld [vmem:[%s1 + $0x2c] sm:$0xf]
  %v34 = vld [vmem:[%s1 + $0x30] sm:$0xf]
  %v35 = vld [vmem:[%s1 + $0x34] sm:$0xf]
  %v36 = vld [vmem:[%s1 + $0x38] sm:$0xf]
  %v37 = vld [vmem:[%s1 + $0x3c] sm:$0xf]
  %v38 = vld [vmem:[%s1 + $0x40] sm:$0xf]
  %v39 = vld [vmem:[%s1 + $0x44] sm:$0xf]
  %v40 = vld [vmem:[%s2] sm:$0x1]
  %v42 = vlaneseq
  %v43 = vshrl.u32 %v42, 7
  %v44 = vsub.s32 0, %v43
  %v45 = vrot.slane %v40, %v44
  %v51 = vunpack.c.l.b16 %v18
  %v52 = vunpack.c.h.b16 %v18
  %v53 = vunpack.c.l.b16 %v19
  %v54 = vunpack.c.h.b16 %v19
  %v55 = vunpack.c.l.b16 %v20
  %v56 = vunpack.c.h.b16 %v20
  %v57 = vunpack.c.l.b16 %v21
  %v58 = vunpack.c.h.b16 %v21
  %v59 = vpack.c.b16 %v53, %v51
  %v60 = vpack.c.b16 %v54, %v52
  %v61 = vpack.c.b16 %v57, %v55
  %v62 = vpack.c.b16 %v58, %v56
  %v83 = vunpack.c.l.b16 %v22
  %v84 = vunpack.c.l.b16 %v23
  %v85 = vunpack.c.l.b16 %v24
  %v86 = vunpack.c.l.b16 %v25
  %v87 = vunpack.c.l.b16 %v26
  %v88 = vunpack.c.l.b16 %v27
  %v89 = vunpack.c.l.b16 %v28
  %v90 = vunpack.c.l.b16 %v29
  %v91 = vunpack.c.l.b16 %v30
  %v92 = vunpack.c.l.b16 %v31
  %v93 = vunpack.c.l.b16 %v32
  %v94 = vunpack.c.l.b16 %v33
  %v95 = vunpack.c.l.b16 %v34
  %v96 = vunpack.c.l.b16 %v35
  %v97 = vunpack.c.l.b16 %v36
  %v98 = vunpack.c.l.b16 %v37
  %v99 = vunpack.c.l.b16 %v38
  %v100 = vunpack.c.l.b16 %v39
  %v101 = vpack.c.b16 %v84, %v83
  %v102 = vpack.c.b16 %v86, %v85
  %v103 = vpack.c.b16 %v88, %v87
  %v104 = vpack.c.b16 %v90, %v89
  %v105 = vpack.c.b16 %v92, %v91
  %v106 = vpack.c.b16 %v94, %v93
  %v107 = vpack.c.b16 %v96, %v95
  %v108 = vpack.c.b16 %v98, %v97
  %v109 = vpack.c.b16 %v100, %v99
  %vm119 = vcmask 130048
  %v121 = vsel %vm119, %v60, 0
  %v124 = vsel %vm119, %v62, 0
  %126 = vmatprep.subr.bf16.mxu0 0
  %127 = vmatpush1.bf16.msra.mxu0 %v101
  %128 = vmatprep.subr.bf16.mxu0 0
  %129 = vmatpush1.bf16.msra.mxu0 %v102
  %130 = vmatprep.subr.bf16.mxu0 0
  %131 = vmatpush1.bf16.msra.mxu0 %v103
  %132 = vmatprep.subr.bf16.mxu0 0
  %133 = vmatpush1.bf16.msra.mxu0 %v104
  %134 = vmatprep.subr.bf16.mxu0 0
  %135 = vmatpush1.bf16.msra.mxu0 %v105
  %136 = vmatprep.subr.bf16.mxu0 0
  %137 = vmatpush1.bf16.msra.mxu0 %v106
  %138 = vmatprep.subr.bf16.mxu0 0
  %139 = vmatpush1.bf16.msra.mxu0 %v107
  %140 = vmatprep.subr.bf16.mxu0 0
  %141 = vmatpush1.bf16.msra.mxu0 %v108
  %142 = vmatprep.subr.bf16.mxu0 0
  %143 = vmatpush1.bf16.msra.mxu0 %v109
  %144 = vmatprep.subr.bf16.mxu0 0
  %145 = vmatpush1.bf16.msra.mxu0 0
  %146 = vmatprep.subr.bf16.mxu0 0
  %147 = vmatpush1.bf16.msra.mxu0 0
  %148 = vmatprep.subr.bf16.mxu0 0
  %149 = vmatpush1.bf16.msra.mxu0 0
  %150 = vmatprep.subr.bf16.mxu0 0
  %151 = vmatpush1.bf16.msra.mxu0 0
  %152 = vmatprep.subr.bf16.mxu0 0
  %153 = vmatpush1.bf16.msra.mxu0 0
  %154 = vmatprep.subr.bf16.mxu0 0
  %155 = vmatpush1.bf16.msra.mxu0 0
  %156 = vmatprep.subr.bf16.mxu0 0
  %157 = vmatpush1.bf16.msra.mxu0 0
  %158 = vmatprep.mubr.bf16.mxu0 %v121
  %159 = vmatmul.mubr.bf16.gmra.mrb[0].mxu0 %v59
  %v160 = vpop.f32.mrb[0].mxu0
  %v161 = vadd.f32 %v45, %v160
  %v162 = vpop.f32.mrb[0].mxu0
  %v163 = vpop.f32.mrb[0].mxu0
  %v164 = vadd.f32 %v45, %v163
  %v165 = vpop.f32.mrb[0].mxu0
  %166 = vmatprep.mubr.bf16.mxu0 %v124
  %167 = vmatmul.mubr.bf16.gmra.mrb[0].mxu0 %v61
  %v168 = vpop.f32.mrb[0].mxu0
  %v169 = vadd.f32 %v45, %v168
  %v170 = vpop.f32.mrb[0].mxu0
  %v171 = vpop.f32.mrb[0].mxu0
  %v172 = vadd.f32 %v45, %v171
  %v173 = vpop.f32.mrb[0].mxu0
  %174 = vdwg.mxu0
  %vm175 = vcmask 261120
  %v176 = vsel %vm175, %v161, 0.0
  %v177 = vsel %vm175, %v164, 0.0
  %v178 = vadd.f32 %v176, %v177
  %v179 = vsel %vm175, %v169, 0.0
  %v180 = vadd.f32 %v178, %v179
  %v181 = vsel %vm175, %v172, 0.0
  %v182 = vadd.f32 %v180, %v181
  %v183 = vrot.slane %v182, 4
  %v184 = vadd.f32 %v182, %v183
  %v185 = vrot.slane %v184, 2
  %v186 = vadd.f32 %v184, %v185
  %v187 = vrot.slane %v186, 1
  %v188 = vadd.f32 %v186, %v187
  %vm189 = vcmask 253952
  %190 = vst.msk [vmem:[%s4] sm:$0x1] %vm189, %v188
  %v191 = vmul.f32 %v161, %v161
  %v192 = vmul.f32 %v164, %v164
  %v193 = vmul.f32 %v169, %v169
  %v194 = vmul.f32 %v172, %v172
  %v195 = vsel %vm175, %v191, 0.0
  %v196 = vsel %vm175, %v192, 0.0
  %v197 = vadd.f32 %v195, %v196
  %v198 = vsel %vm175, %v193, 0.0
  %v199 = vadd.f32 %v197, %v198
  %v200 = vsel %vm175, %v194, 0.0
  %v201 = vadd.f32 %v199, %v200
  %v202 = vrot.slane %v201, 4
  %v203 = vadd.f32 %v201, %v202
  %v204 = vrot.slane %v203, 2
  %v205 = vadd.f32 %v203, %v204
  %v206 = vrot.slane %v205, 1
  %v207 = vadd.f32 %v205, %v206
  %208 = vst.msk [vmem:[%s5] sm:$0x1] %vm189, %v207
  %v209 = vpack.c.bf16 %v164, %v161
  %v210 = vpack.c.bf16 %v172, %v169
  %v213 = vunpack.c.l.b16 %v209
  %v214 = vunpack.c.h.b16 %v209
  %v215 = vunpack.c.l.b16 %v210
  %v216 = vunpack.c.h.b16 %v210
  %v217 = vpack.c.b16 %v213, %v213
  %v218 = vpack.c.b16 %v214, %v214
  %v219 = vpack.c.b16 %v215, %v215
  %v220 = vpack.c.b16 %v216, %v216
  %vm225 = vcmask 257024
  %226 = vst.msk [vmem:[%s3] sm:$0xf] %vm225, %v217
  %227 = vst.msk [vmem:[%s3 + $0x4] sm:$0xf] %vm225, %v218
  %228 = vst.msk [vmem:[%s3 + $0x8] sm:$0xf] %vm225, %v219
  %229 = vst.msk [vmem:[%s3 + $0xc] sm:$0xf] %vm225, %v220
  // Predicated region
  $region14: #{resnet_generator_forward.23} parent=0 // pred_check
    _
  $region15: #{resnet_generator_forward.23} parent=0 // pred_check_branch
    %231 = sbr.rel (0) target = $region17
  $region16: #{resnet_generator_forward.23} parent=0 // pred_region
    _
  $region17: #{resnet_generator_forward.23} parent=0 // pred_fallthru
    _
  // Predicated region
  $region18: #{resnet_generator_forward.23} parent=0 // pred_check
    _
  $region19: #{resnet_generator_forward.23} parent=0 // pred_check_branch
    %233 = sbr.rel (0) target = $region21
  $region20: #{resnet_generator_forward.23} parent=0 // pred_region
    _
  $region21: #{resnet_generator_forward.23} parent=0 // pred_fallthru
    _
  // Predicated region
  $region22: #{resnet_generator_forward.23} parent=0 // pred_check
    _
  $region23: #{resnet_generator_forward.23} parent=0 // pred_check_branch
    %235 = sbr.rel (0) target = $region25
  $region24: #{resnet_generator_forward.23} parent=0 // pred_region
    _
  $region25: #{resnet_generator_forward.23} parent=0 // pred_fallthru
    _
  // Predicated region
  $region26: #{resnet_generator_forward.23} parent=0 // pred_check
    _
  $region27: #{resnet_generator_forward.23} parent=0 // pred_check_branch
    %237 = sbr.rel (0) target = $region29
  $region28: #{resnet_generator_forward.23} parent=0 // pred_region
    _
  $region29: #{resnet_generator_forward.23} parent=0 // pred_fallthru
    _
  // Predicated region
  $region30: #{resnet_generator_forward.23} parent=0 // pred_check
    _
  $region31: #{resnet_generator_forward.23} parent=0 // pred_check_branch
    %239 = sbr.rel (0) target = $region33
  $region32: #{resnet_generator_forward.23} parent=0 // pred_region
    _
  $region33: #{resnet_generator_forward.23} parent=0 // pred_fallthru
    _
  // Predicated region
  $region34: #{resnet_generator_forward.23} parent=0 // pred_check
    _
  $region35: #{resnet_generator_forward.23} parent=0 // pred_check_branch
    %241 = sbr.rel (0) target = $region37
  $region36: #{resnet_generator_forward.23} parent=0 // pred_region
    _
  $region37: #{resnet_generator_forward.23} parent=0 // pred_fallthru
    _

// kernel: resnet_generator_forward.28
$region0: #{resnet_generator_forward.28}
  #allocation0 [shape = 'u32[]', space=smem, size = 0x4, offset = 0x4, fixed_abs, tag = 'smem constant byte address 0x4 - core index']
  #allocation1 [shape = 'u32[144,128]{1,0:T(1,128)}', space=vmem, size = 0x12000, scoped, tag = 'internal scratch']
  %s0 = inlined_call_operand.vmem [shape: bf16[4,256], index: 0, kind: input, shape index: {}]
  %s1 = inlined_call_operand.vmem [shape: bf16[4,256], index: 1, kind: input, shape index: {}]
  %s2 = inlined_call_operand.vmem [shape: f32[1,256], index: 2, kind: input, shape index: {}]
  %s3 = inlined_call_operand.vmem [shape: f32[1,256], index: 3, kind: input, shape index: {}]
  %s4 = inlined_call_operand.vmem [shape: bf16[4,256], index: 4, kind: output, shape index: {}]
  %s5 = sld [smem:[#allocation0]]
  $region26: #{resnet_generator_forward.28} parent=0
    _
  %s7 = ssub.s32 1, %s5
  %s8 = scalar_select 0, %s7, %s5
  // Predicated region
  $region2: #{resnet_generator_forward.28} parent=0 // pred_check
    _
  $region3: #{resnet_generator_forward.28} parent=0 // pred_check_branch
    %10 = sbr.rel (0) target = $region5
  $region4: #{resnet_generator_forward.28} parent=0 // pred_region
    _
  $region5: #{resnet_generator_forward.28} parent=0 // pred_fallthru
    _
  // Predicated region
  $region6: #{resnet_generator_forward.28} parent=0 // pred_check
    _
  $region7: #{resnet_generator_forward.28} parent=0 // pred_check_branch
    %12 = sbr.rel (0) target = $region9
  $region8: #{resnet_generator_forward.28} parent=0 // pred_region
    _
  $region9: #{resnet_generator_forward.28} parent=0 // pred_fallthru
    _
  // Predicated region
  $region10: #{resnet_generator_forward.28} parent=0 // pred_check
    _
  $region11: #{resnet_generator_forward.28} parent=0 // pred_check_branch
    %14 = sbr.rel (0) target = $region13
  $region12: #{resnet_generator_forward.28} parent=0 // pred_region
    _
  $region13: #{resnet_generator_forward.28} parent=0 // pred_fallthru
    _
  // Predicated region
  $region14: #{resnet_generator_forward.28} parent=0 // pred_check
    _
  $region15: #{resnet_generator_forward.28} parent=0 // pred_check_branch
    %16 = sbr.rel (0) target = $region17
  $region16: #{resnet_generator_forward.28} parent=0 // pred_region
    _
  $region17: #{resnet_generator_forward.28} parent=0 // pred_fallthru
    _
  %v17 = vld [vmem:[%s0] sm:$0xf]
  %v18 = vunpack.c.l.bf16 %v17
  %v19 = vld [vmem:[%s2] sm:$0x3]
  %v21 = vlaneseq
  %v22 = vshrl.u32 %v21, 7
  %v23 = vsub.s32 0, %v22
  %v24 = vrot.slane %v19, %v23
  %v25 = vlaneseq
  %v26 = vshrl.u32 %v25, 7
  %v27 = vsub.s32 1, %v26
  %v28 = vrot.slane %v19, %v27
  %v29 = vcombine.low %v24, %v28
  %v31 = vmul.f32 %v18, %v29
  %v32 = vld [vmem:[%s3] sm:$0x3]
  %v34 = vlaneseq
  %v35 = vshrl.u32 %v34, 7
  %v36 = vsub.s32 0, %v35
  %v37 = vrot.slane %v32, %v36
  %v38 = vlaneseq
  %v39 = vshrl.u32 %v38, 7
  %v40 = vsub.s32 1, %v39
  %v41 = vrot.slane %v32, %v40
  %v42 = vcombine.low %v37, %v41
  %v44 = vadd.f32 %v31, %v42
  %v45 = vld [vmem:[%s1] sm:$0xf]
  %v46 = vunpack.c.l.bf16 %v45
  %v47 = vadd.f32 %v44, %v46
  %v49 = vcombine.high %v47, %v47
  %v51 = vpack.c.bf16 %v47, %v47
  %v52 = vpack.c.bf16 %v49, %v49
  %v55 = vcombine.low %v51, %v52
  %v57 = vunpack.c.l.s4 1983009808
  %v58 = vunpack.c.0.s8 %v57
  %v59 = vlaneseq
  %v60 = vshrl.u32 %v59, 7
  %v61 = vsub.s32 %v58, %v60
  %v62 = vrot.slane %v55, %v61
  %64 = vst [vmem:[%s4] sm:$0xf] %v62
  // Predicated region
  $region18: #{resnet_generator_forward.28} parent=0 // pred_check
    _
  $region19: #{resnet_generator_forward.28} parent=0 // pred_check_branch
    %66 = sbr.rel (0) target = $region21
  $region20: #{resnet_generator_forward.28} parent=0 // pred_region
    _
  $region21: #{resnet_generator_forward.28} parent=0 // pred_fallthru
    _
  // Predicated region
  $region22: #{resnet_generator_forward.28} parent=0 // pred_check
    _
  $region23: #{resnet_generator_forward.28} parent=0 // pred_check_branch
    %68 = sbr.rel (0) target = $region25
  $region24: #{resnet_generator_forward.28} parent=0 // pred_region
    _
  $region25: #{resnet_generator_forward.28} parent=0 // pred_fallthru
    _

// kernel: resnet_generator_forward.25
$region0: #{resnet_generator_forward.25}
  #allocation0 [shape = 'u32[]', space=smem, size = 0x4, offset = 0x4, fixed_abs, tag = 'smem constant byte address 0x4 - core index']
  #allocation1 [shape = 'u32[144,128]{1,0:T(1,128)}', space=vmem, size = 0x12000, scoped, tag = 'internal scratch']
  %s0 = inlined_call_operand.vmem [shape: bf16[32,288], index: 0, kind: input, shape index: {}]
  %s1 = inlined_call_operand.vmem [shape: bf16[288,32], index: 1, kind: input, shape index: {}]
  %s2 = inlined_call_operand.vmem [shape: f32[1,32], index: 2, kind: input, shape index: {}]
  %s3 = inlined_call_operand.vmem [shape: bf16[32,32], index: 3, kind: output, shape index: {0}]
  %s4 = inlined_call_operand.vmem [shape: f32[1,1,32], index: 4, kind: output, shape index: {1}]
  %s5 = inlined_call_operand.vmem [shape: f32[1,1,32], index: 5, kind: output, shape index: {2}]
  %6 = xla_tuple %s3, %s4, %s5
  %s7 = sld [smem:[#allocation0]]
  $region38: #{resnet_generator_forward.25} parent=0
    _
  %s9 = ssub.s32 1, %s7
  %s10 = scalar_select 0, %s9, %s7
  // Predicated region
  $region2: #{resnet_generator_forward.25} parent=0 // pred_check
    _
  $region3: #{resnet_generator_forward.25} parent=0 // pred_check_branch
    %12 = sbr.rel (0) target = $region5
  $region4: #{resnet_generator_forward.25} parent=0 // pred_region
    _
  $region5: #{resnet_generator_forward.25} parent=0 // pred_fallthru
    _
  // Predicated region
  $region6: #{resnet_generator_forward.25} parent=0 // pred_check
    _
  $region7: #{resnet_generator_forward.25} parent=0 // pred_check_branch
    %14 = sbr.rel (0) target = $region9
  $region8: #{resnet_generator_forward.25} parent=0 // pred_region
    _
  $region9: #{resnet_generator_forward.25} parent=0 // pred_fallthru
    _
  // Predicated region
  $region10: #{resnet_generator_forward.25} parent=0 // pred_check
    _
  $region11: #{resnet_generator_forward.25} parent=0 // pred_check_branch
    %16 = sbr.rel (0) target = $region13
  $region12: #{resnet_generator_forward.25} parent=0 // pred_region
    _
  $region13: #{resnet_generator_forward.25} parent=0 // pred_fallthru
    _
  %v18 = vld [vmem:[%s0] sm:$0xff]
  %v19 = vld [vmem:[%s0 + $0x8] sm:$0xf]
  %v20 = vld [vmem:[%s0 + $0xc] sm:$0xff]
  %v21 = vld [vmem:[%s0 + $0x14] sm:$0xf]
  %v22 = vld [vmem:[%s0 + $0x18] sm:$0xff]
  %v23 = vld [vmem:[%s0 + $0x20] sm:$0xf]
  %v24 = vld [vmem:[%s0 + $0x24] sm:$0xff]
  %v25 = vld [vmem:[%s0 + $0x2c] sm:$0xf]
  %v26 = vld [vmem:[%s1] sm:$0xf]
  %v27 = vld [vmem:[%s1 + $0x4] sm:$0xf]
  %v28 = vld [vmem:[%s1 + $0x8] sm:$0xf]
  %v29 = vld [vmem:[%s1 + $0xc] sm:$0xf]
  %v30 = vld [vmem:[%s1 + $0x10] sm:$0xf]
  %v31 = vld [vmem:[%s1 + $0x14] sm:$0xf]
  %v32 = vld [vmem:[%s1 + $0x18] sm:$0xf]
  %v33 = vld [vmem:[%s1 + $0x1c] sm:$0xf]
  %v34 = vld [vmem:[%s1 + $0x20] sm:$0xf]
  %v35 = vld [vmem:[%s1 + $0x24] sm:$0xf]
  %v36 = vld [vmem:[%s1 + $0x28] sm:$0xf]
  %v37 = vld [vmem:[%s1 + $0x2c] sm:$0xf]
  %v38 = vld [vmem:[%s1 + $0x30] sm:$0xf]
  %v39 = vld [vmem:[%s1 + $0x34] sm:$0xf]
  %v40 = vld [vmem:[%s1 + $0x38] sm:$0xf]
  %v41 = vld [vmem:[%s1 + $0x3c] sm:$0xf]
  %v42 = vld [vmem:[%s1 + $0x40] sm:$0xf]
  %v43 = vld [vmem:[%s1 + $0x44] sm:$0xf]
  %v44 = vld [vmem:[%s1 + $0x48] sm:$0xf]
  %v45 = vld [vmem:[%s1 + $0x4c] sm:$0xf]
  %v46 = vld [vmem:[%s1 + $0x50] sm:$0xf]
  %v47 = vld [vmem:[%s1 + $0x54] sm:$0xf]
  %v48 = vld [vmem:[%s1 + $0x58] sm:$0xf]
  %v49 = vld [vmem:[%s1 + $0x5c] sm:$0xf]
  %v50 = vld [vmem:[%s1 + $0x60] sm:$0xf]
  %v51 = vld [vmem:[%s1 + $0x64] sm:$0xf]
  %v52 = vld [vmem:[%s1 + $0x68] sm:$0xf]
  %v53 = vld [vmem:[%s1 + $0x6c] sm:$0xf]
  %v54 = vld [vmem:[%s1 + $0x70] sm:$0xf]
  %v55 = vld [vmem:[%s1 + $0x74] sm:$0xf]
  %v56 = vld [vmem:[%s1 + $0x78] sm:$0xf]
  %v57 = vld [vmem:[%s1 + $0x7c] sm:$0xf]
  %v58 = vld [vmem:[%s1 + $0x80] sm:$0xf]
  %v59 = vld [vmem:[%s1 + $0x84] sm:$0xf]
  %v60 = vld [vmem:[%s1 + $0x88] sm:$0xf]
  %v61 = vld [vmem:[%s1 + $0x8c] sm:$0xf]
  %v62 = vld [vmem:[%s2] sm:$0x1]
  %v64 = vlaneseq
  %v65 = vshrl.u32 %v64, 7
  %v66 = vsub.s32 0, %v65
  %v67 = vrot.slane %v62, %v66
  %v77 = vunpack.c.l.b16 %v18
  %v78 = vunpack.c.h.b16 %v18
  %v79 = vunpack.c.l.b16 %v19
  %v80 = vunpack.c.l.b16 %v20
  %v81 = vunpack.c.h.b16 %v20
  %v82 = vunpack.c.l.b16 %v21
  %v83 = vunpack.c.l.b16 %v22
  %v84 = vunpack.c.h.b16 %v22
  %v85 = vunpack.c.l.b16 %v23
  %v86 = vunpack.c.l.b16 %v24
  %v87 = vunpack.c.h.b16 %v24
  %v88 = vunpack.c.l.b16 %v25
  %v89 = vpack.c.b16 %v80, %v77
  %v90 = vpack.c.b16 %v81, %v78
  %v91 = vpack.c.b16 %v82, %v79
  %v92 = vpack.c.b16 %v86, %v83
  %v93 = vpack.c.b16 %v87, %v84
  %v94 = vpack.c.b16 %v88, %v85
  %v135 = vunpack.c.l.b16 %v26
  %v136 = vunpack.c.l.b16 %v27
  %v137 = vunpack.c.l.b16 %v28
  %v138 = vunpack.c.l.b16 %v29
  %v139 = vunpack.c.l.b16 %v30
  %v140 = vunpack.c.l.b16 %v31
  %v141 = vunpack.c.l.b16 %v32
  %v142 = vunpack.c.l.b16 %v33
  %v143 = vunpack.c.l.b16 %v34
  %v144 = vunpack.c.l.b16 %v35
  %v145 = vunpack.c.l.b16 %v36
  %v146 = vunpack.c.l.b16 %v37
  %v147 = vunpack.c.l.b16 %v38
  %v148 = vunpack.c.l.b16 %v39
  %v149 = vunpack.c.l.b16 %v40
  %v150 = vunpack.c.l.b16 %v41
  %v151 = vunpack.c.l.b16 %v42
  %v152 = vunpack.c.l.b16 %v43
  %v153 = vunpack.c.l.b16 %v44
  %v154 = vunpack.c.l.b16 %v45
  %v155 = vunpack.c.l.b16 %v46
  %v156 = vunpack.c.l.b16 %v47
  %v157 = vunpack.c.l.b16 %v48
  %v158 = vunpack.c.l.b16 %v49
  %v159 = vunpack.c.l.b16 %v50
  %v160 = vunpack.c.l.b16 %v51
  %v161 = vunpack.c.l.b16 %v52
  %v162 = vunpack.c.l.b16 %v53
  %v163 = vunpack.c.l.b16 %v54
  %v164 = vunpack.c.l.b16 %v55
  %v165 = vunpack.c.l.b16 %v56
  %v166 = vunpack.c.l.b16 %v57
  %v167 = vunpack.c.l.b16 %v58
  %v168 = vunpack.c.l.b16 %v59
  %v169 = vunpack.c.l.b16 %v60
  %v170 = vunpack.c.l.b16 %v61
  %v171 = vpack.c.b16 %v136, %v135
  %v172 = vpack.c.b16 %v138, %v137
  %v173 = vpack.c.b16 %v140, %v139
  %v174 = vpack.c.b16 %v142, %v141
  %v175 = vpack.c.b16 %v144, %v143
  %v176 = vpack.c.b16 %v146, %v145
  %v177 = vpack.c.b16 %v148, %v147
  %v178 = vpack.c.b16 %v150, %v149
  %v179 = vpack.c.b16 %v152, %v151
  %v180 = vpack.c.b16 %v154, %v153
  %v181 = vpack.c.b16 %v156, %v155
  %v182 = vpack.c.b16 %v158, %v157
  %v183 = vpack.c.b16 %v160, %v159
  %v184 = vpack.c.b16 %v162, %v161
  %v185 = vpack.c.b16 %v164, %v163
  %v186 = vpack.c.b16 %v166, %v165
  %v187 = vpack.c.b16 %v168, %v167
  %v188 = vpack.c.b16 %v170, %v169
  %vm207 = vcmask 261120
  %v209 = vsel %vm207, %v91, 0
  %v212 = vsel %vm207, %v94, 0
  %214 = vmatprep.subr.bf16.mxu0 0
  %215 = vmatpush1.bf16.msra.mxu0 %v171
  %216 = vmatprep.subr.bf16.mxu0 0
  %217 = vmatpush1.bf16.msra.mxu0 %v172
  %218 = vmatprep.subr.bf16.mxu0 0
  %219 = vmatpush1.bf16.msra.mxu0 %v173
  %220 = vmatprep.subr.bf16.mxu0 0
  %221 = vmatpush1.bf16.msra.mxu0 %v174
  %222 = vmatprep.subr.bf16.mxu0 0
  %223 = vmatpush1.bf16.msra.mxu0 %v175
  %224 = vmatprep.subr.bf16.mxu0 0
  %225 = vmatpush1.bf16.msra.mxu0 %v176
  %226 = vmatprep.subr.bf16.mxu0 0
  %227 = vmatpush1.bf16.msra.mxu0 %v177
  %228 = vmatprep.subr.bf16.mxu0 0
  %229 = vmatpush1.bf16.msra.mxu0 %v178
  %230 = vmatprep.subr.bf16.mxu0 0
  %231 = vmatpush1.bf16.msra.mxu0 %v179
  %232 = vmatprep.subr.bf16.mxu0 0
  %233 = vmatpush1.bf16.msra.mxu0 %v180
  %234 = vmatprep.subr.bf16.mxu0 0
  %235 = vmatpush1.bf16.msra.mxu0 %v181
  %236 = vmatprep.subr.bf16.mxu0 0
  %237 = vmatpush1.bf16.msra.mxu0 %v182
  %238 = vmatprep.subr.bf16.mxu0 0
  %239 = vmatpush1.bf16.msra.mxu0 %v183
  %240 = vmatprep.subr.bf16.mxu0 0
  %241 = vmatpush1.bf16.msra.mxu0 %v184
  %242 = vmatprep.subr.bf16.mxu0 0
  %243 = vmatpush1.bf16.msra.mxu0 %v185
  %244 = vmatprep.subr.bf16.mxu0 0
  %245 = vmatpush1.bf16.msra.mxu0 %v186
  %246 = vmatprep.mubr.bf16.mxu0 %v90
  %247 = vmatmul.mubr.bf16.gmra.mrb[0].mxu0 %v89
  %v248 = vpop.f32.mrb[0].mxu0
  %v249 = vadd.f32 %v67, %v248
  %v250 = vpop.f32.mrb[0].mxu0
  %v251 = vpop.f32.mrb[0].mxu0
  %v252 = vadd.f32 %v67, %v251
  %v253 = vpop.f32.mrb[0].mxu0
  %254 = vmatprep.mubr.bf16.mxu0 %v93
  %255 = vmatmul.mubr.bf16.gmra.mrb[0].mxu0 %v92
  %v256 = vpop.f32.mrb[0].mxu0
  %v257 = vadd.f32 %v67, %v256
  %v258 = vpop.f32.mrb[0].mxu0
  %v259 = vpop.f32.mrb[0].mxu0
  %v260 = vadd.f32 %v67, %v259
  %v261 = vpop.f32.mrb[0].mxu0
  %262 = vdwg.mxu0
  %263 = vmatprep.subr.bf16.mxu0 0
  %264 = vmatpush1.bf16.msra.mxu0 %v187
  %265 = vmatprep.subr.bf16.mxu0 0
  %266 = vmatpush1.bf16.msra.mxu0 %v188
  %267 = vmatprep.subr.bf16.mxu0 0
  %268 = vmatpush1.bf16.msra.mxu0 0
  %269 = vmatprep.subr.bf16.mxu0 0
  %270 = vmatpush1.bf16.msra.mxu0 0
  %271 = vmatprep.subr.bf16.mxu0 0
  %272 = vmatpush1.bf16.msra.mxu0 0
  %273 = vmatprep.subr.bf16.mxu0 0
  %274 = vmatpush1.bf16.msra.mxu0 0
  %275 = vmatprep.subr.bf16.mxu0 0
  %276 = vmatpush1.bf16.msra.mxu0 0
  %277 = vmatprep.subr.bf16.mxu0 0
  %278 = vmatpush1.bf16.msra.mxu0 0
  %279 = vmatprep.subr.bf16.mxu0 0
  %280 = vmatpush1.bf16.msra.mxu0 0
  %281 = vmatprep.subr.bf16.mxu0 0
  %282 = vmatpush1.bf16.msra.mxu0 0
  %283 = vmatprep.subr.bf16.mxu0 0
  %284 = vmatpush1.bf16.msra.mxu0 0
  %285 = vmatprep.subr.bf16.mxu0 0
  %286 = vmatpush1.bf16.msra.mxu0 0
  %287 = vmatprep.subr.bf16.mxu0 0
  %288 = vmatpush1.bf16.msra.mxu0 0
  %289 = vmatprep.subr.bf16.mxu0 0
  %290 = vmatpush1.bf16.msra.mxu0 0
  %291 = vmatprep.subr.bf16.mxu0 0
  %292 = vmatpush1.bf16.msra.mxu0 0
  %293 = vmatprep.subr.bf16.mxu0 0
  %294 = vmatpush1.bf16.msra.mxu0 0
  %295 = vmatprep.mubr.bf16.mxu0 0
  %296 = vmatmul.mubr.bf16.gmra.mrb[0].mxu0 %v209
  %v297 = vpop.f32.mrb[0].mxu0
  %v298 = vadd.f32 %v249, %v297
  %v299 = vpop.f32.mrb[0].mxu0
  %v300 = vpop.f32.mrb[0].mxu0
  %v301 = vadd.f32 %v252, %v300
  %v302 = vpop.f32.mrb[0].mxu0
  %303 = vmatprep.mubr.bf16.mxu0 0
  %304 = vmatmul.mubr.bf16.gmra.mrb[0].mxu0 %v212
  %v305 = vpop.f32.mrb[0].mxu0
  %v306 = vadd.f32 %v257, %v305
  %v307 = vpop.f32.mrb[0].mxu0
  %v308 = vpop.f32.mrb[0].mxu0
  %v309 = vadd.f32 %v260, %v308
  %v310 = vpop.f32.mrb[0].mxu0
  %311 = vdwg.mxu0
  %v312 = vsel %vm207, %v298, 0.0
  %v313 = vsel %vm207, %v301, 0.0
  %v314 = vadd.f32 %v312, %v313
  %v315 = vsel %vm207, %v306, 0.0
  %v316 = vadd.f32 %v314, %v315
  %v317 = vsel %vm207, %v309, 0.0
  %v318 = vadd.f32 %v316, %v317
  %v319 = vrot.slane %v318, 4
  %v320 = vadd.f32 %v318, %v319
  %v321 = vrot.slane %v320, 2
  %v322 = vadd.f32 %v320, %v321
  %v323 = vrot.slane %v322, 1
  %v324 = vadd.f32 %v322, %v323
  %vm325 = vcmask 253952
  %326 = vst.msk [vmem:[%s4] sm:$0x1] %vm325, %v324
  %v327 = vmul.f32 %v298, %v298
  %v328 = vmul.f32 %v301, %v301
  %v329 = vmul.f32 %v306, %v306
  %v330 = vmul.f32 %v309, %v309
  %v331 = vsel %vm207, %v327, 0.0
  %v332 = vsel %vm207, %v328, 0.0
  %v333 = vadd.f32 %v331, %v332
  %v334 = vsel %vm207, %v329, 0.0
  %v335 = vadd.f32 %v333, %v334
  %v336 = vsel %vm207, %v330, 0.0
  %v337 = vadd.f32 %v335, %v336
  %v338 = vrot.slane %v337, 4
  %v339 = vadd.f32 %v337, %v338
  %v340 = vrot.slane %v339, 2
  %v341 = vadd.f32 %v339, %v340
  %v342 = vrot.slane %v341, 1
  %v343 = vadd.f32 %v341, %v342
  %344 = vst.msk [vmem:[%s5] sm:$0x1] %vm325, %v343
  %v345 = vpack.c.bf16 %v301, %v298
  %v346 = vpack.c.bf16 %v309, %v306
  %v349 = vunpack.c.l.b16 %v345
  %v350 = vunpack.c.h.b16 %v345
  %v351 = vunpack.c.l.b16 %v346
  %v352 = vunpack.c.h.b16 %v346
  %v353 = vpack.c.b16 %v349, %v349
  %v354 = vpack.c.b16 %v350, %v350
  %v355 = vpack.c.b16 %v351, %v351
  %v356 = vpack.c.b16 %v352, %v352
  %vm361 = vcmask 257024
  %362 = vst.msk [vmem:[%s3] sm:$0xf] %vm361, %v353
  %363 = vst.msk [vmem:[%s3 + $0x4] sm:$0xf] %vm361, %v354
  %364 = vst.msk [vmem:[%s3 + $0x8] sm:$0xf] %vm361, %v355
  %365 = vst.msk [vmem:[%s3 + $0xc] sm:$0xf] %vm361, %v356
  // Predicated region
  $region14: #{resnet_generator_forward.25} parent=0 // pred_check
    _
  $region15: #{resnet_generator_forward.25} parent=0 // pred_check_branch
    %367 = sbr.rel (0) target = $region17
  $region16: #{resnet_generator_forward.25} parent=0 // pred_region
    _
  $region17: #{resnet_generator_forward.25} parent=0 // pred_fallthru
    _
  // Predicated region
  $region18: #{resnet_generator_forward.25} parent=0 // pred_check
    _
  $region19: #{resnet_generator_forward.25} parent=0 // pred_check_branch
    %369 = sbr.rel (0) target = $region21
  $region20: #{resnet_generator_forward.25} parent=0 // pred_region
    _
  $region21: #{resnet_generator_forward.25} parent=0 // pred_fallthru
    _
  // Predicated region
  $region22: #{resnet_generator_forward.25} parent=0 // pred_check
    _
  $region23: #{resnet_generator_forward.25} parent=0 // pred_check_branch
    %371 = sbr.rel (0) target = $region25
  $region24: #{resnet_generator_forward.25} parent=0 // pred_region
    _
  $region25: #{resnet_generator_forward.25} parent=0 // pred_fallthru
    _
  // Predicated region
  $region26: #{resnet_generator_forward.25} parent=0 // pred_check
    _
  $region27: #{resnet_generator_forward.25} parent=0 // pred_check_branch
    %373 = sbr.rel (0) target = $region29
  $region28: #{resnet_generator_forward.25} parent=0 // pred_region
    _
  $region29: #{resnet_generator_forward.25} parent=0 // pred_fallthru
    _
  // Predicated region
  $region30: #{resnet_generator_forward.25} parent=0 // pred_check
    _
  $region31: #{resnet_generator_forward.25} parent=0 // pred_check_branch
    %375 = sbr.rel (0) target = $region33
  $region32: #{resnet_generator_forward.25} parent=0 // pred_region
    _
  $region33: #{resnet_generator_forward.25} parent=0 // pred_fallthru
    _
  // Predicated region
  $region34: #{resnet_generator_forward.25} parent=0 // pred_check
    _
  $region35: #{resnet_generator_forward.25} parent=0 // pred_check_branch
    %377 = sbr.rel (0) target = $region37
  $region36: #{resnet_generator_forward.25} parent=0 // pred_region
    _
  $region37: #{resnet_generator_forward.25} parent=0 // pred_fallthru
    _

// kernel: resnet_generator_forward.33
$region0: #{resnet_generator_forward.33}
  #allocation0 [shape = 'u32[]', space=smem, size = 0x4, offset = 0x4, fixed_abs, tag = 'smem constant byte address 0x4 - core index']
  #allocation1 [shape = 'u32[144,128]{1,0:T(1,128)}', space=vmem, size = 0x12000, scoped, tag = 'internal scratch']
  %s0 = inlined_call_operand.vmem [shape: bf16[32,32], index: 0, kind: input, shape index: {}]
  %s1 = inlined_call_operand.vmem [shape: bf16[32,32], index: 1, kind: input, shape index: {}]
  %s2 = inlined_call_operand.vmem [shape: bf16[32,32], index: 2, kind: input, shape index: {}]
  %s3 = inlined_call_operand.vmem [shape: bf16[32,32], index: 3, kind: input, shape index: {}]
  %s4 = inlined_call_operand.vmem [shape: bf16[32,64], index: 4, kind: input, shape index: {}]
  %s5 = inlined_call_operand.vmem [shape: bf16[32,64], index: 5, kind: input, shape index: {}]
  %s6 = inlined_call_operand.vmem [shape: bf16[32,64], index: 6, kind: input, shape index: {}]
  %s7 = inlined_call_operand.vmem [shape: bf16[32,64], index: 7, kind: input, shape index: {}]
  %s8 = inlined_call_operand.vmem [shape: f32[1,64], index: 8, kind: input, shape index: {}]
  %s9 = inlined_call_operand.vmem [shape: bf16[32,64], index: 9, kind: output, shape index: {0}]
  %s10 = inlined_call_operand.vmem [shape: f32[1,1,64], index: 10, kind: output, shape index: {1}]
  %s11 = inlined_call_operand.vmem [shape: f32[1,1,64], index: 11, kind: output, shape index: {2}]
  %12 = xla_tuple %s9, %s10, %s11
  %s13 = sld [smem:[#allocation0]]
  $region62: #{resnet_generator_forward.33} parent=0
    _
  %s15 = ssub.s32 1, %s13
  %s16 = scalar_select 0, %s15, %s13
  // Predicated region
  $region2: #{resnet_generator_forward.33} parent=0 // pred_check
    _
  $region3: #{resnet_generator_forward.33} parent=0 // pred_check_branch
    %18 = sbr.rel (0) target = $region5
  $region4: #{resnet_generator_forward.33} parent=0 // pred_region
    _
  $region5: #{resnet_generator_forward.33} parent=0 // pred_fallthru
    _
  // Predicated region
  $region6: #{resnet_generator_forward.33} parent=0 // pred_check
    _
  $region7: #{resnet_generator_forward.33} parent=0 // pred_check_branch
    %20 = sbr.rel (0) target = $region9
  $region8: #{resnet_generator_forward.33} parent=0 // pred_region
    _
  $region9: #{resnet_generator_forward.33} parent=0 // pred_fallthru
    _
  // Predicated region
  $region10: #{resnet_generator_forward.33} parent=0 // pred_check
    _
  $region11: #{resnet_generator_forward.33} parent=0 // pred_check_branch
    %22 = sbr.rel (0) target = $region13
  $region12: #{resnet_generator_forward.33} parent=0 // pred_region
    _
  $region13: #{resnet_generator_forward.33} parent=0 // pred_fallthru
    _
  // Predicated region
  $region14: #{resnet_generator_forward.33} parent=0 // pred_check
    _
  $region15: #{resnet_generator_forward.33} parent=0 // pred_check_branch
    %24 = sbr.rel (0) target = $region17
  $region16: #{resnet_generator_forward.33} parent=0 // pred_region
    _
  $region17: #{resnet_generator_forward.33} parent=0 // pred_fallthru
    _
  // Predicated region
  $region18: #{resnet_generator_forward.33} parent=0 // pred_check
    _
  $region19: #{resnet_generator_forward.33} parent=0 // pred_check_branch
    %26 = sbr.rel (0) target = $region21
  $region20: #{resnet_generator_forward.33} parent=0 // pred_region
    _
  $region21: #{resnet_generator_forward.33} parent=0 // pred_fallthru
    _
  // Predicated region
  $region22: #{resnet_generator_forward.33} parent=0 // pred_check
    _
  $region23: #{resnet_generator_forward.33} parent=0 // pred_check_branch
    %28 = sbr.rel (0) target = $region25
  $region24: #{resnet_generator_forward.33} parent=0 // pred_region
    _
  $region25: #{resnet_generator_forward.33} parent=0 // pred_fallthru
    _
  // Predicated region
  $region26: #{resnet_generator_forward.33} parent=0 // pred_check
    _
  $region27: #{resnet_generator_forward.33} parent=0 // pred_check_branch
    %30 = sbr.rel (0) target = $region29
  $region28: #{resnet_generator_forward.33} parent=0 // pred_region
    _
  $region29: #{resnet_generator_forward.33} parent=0 // pred_fallthru
    _
  // Predicated region
  $region30: #{resnet_generator_forward.33} parent=0 // pred_check
    _
  $region31: #{resnet_generator_forward.33} parent=0 // pred_check_branch
    %32 = sbr.rel (0) target = $region33
  $region32: #{resnet_generator_forward.33} parent=0 // pred_region
    _
  $region33: #{resnet_generator_forward.33} parent=0 // pred_fallthru
    _
  // Predicated region
  $region34: #{resnet_generator_forward.33} parent=0 // pred_check
    _
  $region35: #{resnet_generator_forward.33} parent=0 // pred_check_branch
    %34 = sbr.rel (0) target = $region37
  $region36: #{resnet_generator_forward.33} parent=0 // pred_region
    _
  $region37: #{resnet_generator_forward.33} parent=0 // pred_fallthru
    _
  %v36 = vld [vmem:[%s0] sm:$0xf]
  %v37 = vld [vmem:[%s0 + $0x4] sm:$0xf]
  %v38 = vld [vmem:[%s0 + $0x8] sm:$0xf]
  %v39 = vld [vmem:[%s0 + $0xc] sm:$0xf]
  %v40 = vld [vmem:[%s4] sm:$0xf]
  %v41 = vld [vmem:[%s4 + $0x4] sm:$0xf]
  %v42 = vld [vmem:[%s4 + $0x8] sm:$0xf]
  %v43 = vld [vmem:[%s4 + $0xc] sm:$0xf]
  %v44 = vld [vmem:[%s1] sm:$0xf]
  %v45 = vld [vmem:[%s1 + $0x4] sm:$0xf]
  %v46 = vld [vmem:[%s1 + $0x8] sm:$0xf]
  %v47 = vld [vmem:[%s1 + $0xc] sm:$0xf]
  %v48 = vld [vmem:[%s5] sm:$0xf]
  %v49 = vld [vmem:[%s5 + $0x4] sm:$0xf]
  %v50 = vld [vmem:[%s5 + $0x8] sm:$0xf]
  %v51 = vld [vmem:[%s5 + $0xc] sm:$0xf]
  %v56 = vunpack.c.l.b16 %v44
  %v57 = vunpack.c.l.b16 %v45
  %v58 = vunpack.c.l.b16 %v46
  %v59 = vunpack.c.l.b16 %v47
  %v60 = vpack.c.b16 %v57, %v56
  %v61 = vpack.c.b16 %v59, %v58
  %v66 = vunpack.c.l.b16 %v48
  %v67 = vunpack.c.l.b16 %v49
  %v68 = vunpack.c.l.b16 %v50
  %v69 = vunpack.c.l.b16 %v51
  %v70 = vpack.c.b16 %v67, %v66
  %v71 = vpack.c.b16 %v69, %v68
  %vm74 = vcmask 261120
  %v76 = vsel %vm74, %v60, 0
  %v79 = vsel %vm74, %v61, 0
  %81 = vmatprep.subr.bf16.mxu0 0
  %82 = vmatpush1.bf16.msra.mxu0 %v70
  %83 = vmatprep.subr.bf16.mxu0 0
  %84 = vmatpush1.bf16.msra.mxu0 %v71
  %85 = vmatprep.subr.bf16.mxu0 0
  %86 = vmatpush1.bf16.msra.mxu0 0
  %87 = vmatprep.subr.bf16.mxu0 0
  %88 = vmatpush1.bf16.msra.mxu0 0
  %89 = vmatprep.subr.bf16.mxu0 0
  %90 = vmatpush1.bf16.msra.mxu0 0
  %91 = vmatprep.subr.bf16.mxu0 0
  %92 = vmatpush1.bf16.msra.mxu0 0
  %93 = vmatprep.subr.bf16.mxu0 0
  %94 = vmatpush1.bf16.msra.mxu0 0
  %95 = vmatprep.subr.bf16.mxu0 0
  %96 = vmatpush1.bf16.msra.mxu0 0
  %97 = vmatprep.subr.bf16.mxu0 0
  %98 = vmatpush1.bf16.msra.mxu0 0
  %99 = vmatprep.subr.bf16.mxu0 0
  %100 = vmatpush1.bf16.msra.mxu0 0
  %101 = vmatprep.subr.bf16.mxu0 0
  %102 = vmatpush1.bf16.msra.mxu0 0
  %103 = vmatprep.subr.bf16.mxu0 0
  %104 = vmatpush1.bf16.msra.mxu0 0
  %105 = vmatprep.subr.bf16.mxu0 0
  %106 = vmatpush1.bf16.msra.mxu0 0
  %107 = vmatprep.subr.bf16.mxu0 0
  %108 = vmatpush1.bf16.msra.mxu0 0
  %109 = vmatprep.subr.bf16.mxu0 0
  %110 = vmatpush1.bf16.msra.mxu0 0
  %111 = vmatprep.subr.bf16.mxu0 0
  %112 = vmatpush1.bf16.msra.mxu0 0
  %113 = vmatprep.mubr.bf16.mxu0 0
  %114 = vmatmul.mubr.bf16.gmra.mrb[0].mxu0 %v76
  %v115 = vpop.f32.mrb[0].mxu0
  %v116 = vadd.f32 0.0, %v115
  %v117 = vpop.f32.mrb[0].mxu0
  %v118 = vpop.f32.mrb[0].mxu0
  %v119 = vadd.f32 0.0, %v118
  %v120 = vpop.f32.mrb[0].mxu0
  %121 = vmatprep.mubr.bf16.mxu0 0
  %122 = vmatmul.mubr.bf16.gmra.mrb[0].mxu0 %v79
  %v123 = vpop.f32.mrb[0].mxu0
  %v124 = vadd.f32 0.0, %v123
  %v125 = vpop.f32.mrb[0].mxu0
  %v126 = vpop.f32.mrb[0].mxu0
  %v127 = vadd.f32 0.0, %v126
  %v128 = vpop.f32.mrb[0].mxu0
  %129 = vdwg.mxu0
  %v134 = vunpack.c.l.b16 %v36
  %v135 = vunpack.c.l.b16 %v37
  %v136 = vunpack.c.l.b16 %v38
  %v137 = vunpack.c.l.b16 %v39
  %v138 = vpack.c.b16 %v135, %v134
  %v139 = vpack.c.b16 %v137, %v136
  %v144 = vunpack.c.l.b16 %v40
  %v145 = vunpack.c.l.b16 %v41
  %v146 = vunpack.c.l.b16 %v42
  %v147 = vunpack.c.l.b16 %v43
  %v148 = vpack.c.b16 %v145, %v144
  %v149 = vpack.c.b16 %v147, %v146
  %v153 = vsel %vm74, %v138, 0
  %v156 = vsel %vm74, %v139, 0
  %158 = vmatprep.subr.bf16.mxu0 0
  %159 = vmatpush1.bf16.msra.mxu0 %v148
  %160 = vmatprep.subr.bf16.mxu0 0
  %161 = vmatpush1.bf16.msra.mxu0 %v149
  %162 = vmatprep.subr.bf16.mxu0 0
  %163 = vmatpush1.bf16.msra.mxu0 0
  %164 = vmatprep.subr.bf16.mxu0 0
  %165 = vmatpush1.bf16.msra.mxu0 0
  %166 = vmatprep.subr.bf16.mxu0 0
  %167 = vmatpush1.bf16.msra.mxu0 0
  %168 = vmatprep.subr.bf16.mxu0 0
  %169 = vmatpush1.bf16.msra.mxu0 0
  %170 = vmatprep.subr.bf16.mxu0 0
  %171 = vmatpush1.bf16.msra.mxu0 0
  %172 = vmatprep.subr.bf16.mxu0 0
  %173 = vmatpush1.bf16.msra.mxu0 0
  %174 = vmatprep.subr.bf16.mxu0 0
  %175 = vmatpush1.bf16.msra.mxu0 0
  %176 = vmatprep.subr.bf16.mxu0 0
  %177 = vmatpush1.bf16.msra.mxu0 0
  %178 = vmatprep.subr.bf16.mxu0 0
  %179 = vmatpush1.bf16.msra.mxu0 0
  %180 = vmatprep.subr.bf16.mxu0 0
  %181 = vmatpush1.bf16.msra.mxu0 0
  %182 = vmatprep.subr.bf16.mxu0 0
  %183 = vmatpush1.bf16.msra.mxu0 0
  %184 = vmatprep.subr.bf16.mxu0 0
  %185 = vmatpush1.bf16.msra.mxu0 0
  %186 = vmatprep.subr.bf16.mxu0 0
  %187 = vmatpush1.bf16.msra.mxu0 0
  %188 = vmatprep.subr.bf16.mxu0 0
  %189 = vmatpush1.bf16.msra.mxu0 0
  %190 = vmatprep.mubr.bf16.mxu0 0
  %191 = vmatmul.mubr.bf16.gmra.mrb[0].mxu0 %v153
  %v192 = vpop.f32.mrb[0].mxu0
  %v193 = vadd.f32 %v116, %v192
  %v194 = vpop.f32.mrb[0].mxu0
  %v195 = vpop.f32.mrb[0].mxu0
  %v196 = vadd.f32 %v119, %v195
  %v197 = vpop.f32.mrb[0].mxu0
  %198 = vmatprep.mubr.bf16.mxu0 0
  %199 = vmatmul.mubr.bf16.gmra.mrb[0].mxu0 %v156
  %v200 = vpop.f32.mrb[0].mxu0
  %v201 = vadd.f32 %v124, %v200
  %v202 = vpop.f32.mrb[0].mxu0
  %v203 = vpop.f32.mrb[0].mxu0
  %v204 = vadd.f32 %v127, %v203
  %v205 = vpop.f32.mrb[0].mxu0
  %206 = vdwg.mxu0
  %v207 = vld [vmem:[%s2] sm:$0xf]
  %v208 = vld [vmem:[%s2 + $0x4] sm:$0xf]
  %v209 = vld [vmem:[%s2 + $0x8] sm:$0xf]
  %v210 = vld [vmem:[%s2 + $0xc] sm:$0xf]
  %v211 = vld [vmem:[%s6] sm:$0xf]
  %v212 = vld [vmem:[%s6 + $0x4] sm:$0xf]
  %v213 = vld [vmem:[%s6 + $0x8] sm:$0xf]
  %v214 = vld [vmem:[%s6 + $0xc] sm:$0xf]
  %v219 = vunpack.c.l.b16 %v207
  %v220 = vunpack.c.l.b16 %v208
  %v221 = vunpack.c.l.b16 %v209
  %v222 = vunpack.c.l.b16 %v210
  %v223 = vpack.c.b16 %v220, %v219
  %v224 = vpack.c.b16 %v222, %v221
  %v229 = vunpack.c.l.b16 %v211
  %v230 = vunpack.c.l.b16 %v212
  %v231 = vunpack.c.l.b16 %v213
  %v232 = vunpack.c.l.b16 %v214
  %v233 = vpack.c.b16 %v230, %v229
  %v234 = vpack.c.b16 %v232, %v231
  %v238 = vsel %vm74, %v223, 0
  %v241 = vsel %vm74, %v224, 0
  %243 = vmatprep.subr.bf16.mxu0 0
  %244 = vmatpush1.bf16.msra.mxu0 %v233
  %245 = vmatprep.subr.bf16.mxu0 0
  %246 = vmatpush1.bf16.msra.mxu0 %v234
  %247 = vmatprep.subr.bf16.mxu0 0
  %248 = vmatpush1.bf16.msra.mxu0 0
  %249 = vmatprep.subr.bf16.mxu0 0
  %250 = vmatpush1.bf16.msra.mxu0 0
  %251 = vmatprep.subr.bf16.mxu0 0
  %252 = vmatpush1.bf16.msra.mxu0 0
  %253 = vmatprep.subr.bf16.mxu0 0
  %254 = vmatpush1.bf16.msra.mxu0 0
  %255 = vmatprep.subr.bf16.mxu0 0
  %256 = vmatpush1.bf16.msra.mxu0 0
  %257 = vmatprep.subr.bf16.mxu0 0
  %258 = vmatpush1.bf16.msra.mxu0 0
  %259 = vmatprep.subr.bf16.mxu0 0
  %260 = vmatpush1.bf16.msra.mxu0 0
  %261 = vmatprep.subr.bf16.mxu0 0
  %262 = vmatpush1.bf16.msra.mxu0 0
  %263 = vmatprep.subr.bf16.mxu0 0
  %264 = vmatpush1.bf16.msra.mxu0 0
  %265 = vmatprep.subr.bf16.mxu0 0
  %266 = vmatpush1.bf16.msra.mxu0 0
  %267 = vmatprep.subr.bf16.mxu0 0
  %268 = vmatpush1.bf16.msra.mxu0 0
  %269 = vmatprep.subr.bf16.mxu0 0
  %270 = vmatpush1.bf16.msra.mxu0 0
  %271 = vmatprep.subr.bf16.mxu0 0
  %272 = vmatpush1.bf16.msra.mxu0 0
  %273 = vmatprep.subr.bf16.mxu0 0
  %274 = vmatpush1.bf16.msra.mxu0 0
  %275 = vmatprep.mubr.bf16.mxu0 0
  %276 = vmatmul.mubr.bf16.gmra.mrb[0].mxu0 %v238
  %v277 = vpop.f32.mrb[0].mxu0
  %v278 = vadd.f32 0.0, %v277
  %v279 = vpop.f32.mrb[0].mxu0
  %v280 = vpop.f32.mrb[0].mxu0
  %v281 = vadd.f32 0.0, %v280
  %v282 = vpop.f32.mrb[0].mxu0
  %283 = vmatprep.mubr.bf16.mxu0 0
  %284 = vmatmul.mubr.bf16.gmra.mrb[0].mxu0 %v241
  %v285 = vpop.f32.mrb[0].mxu0
  %v286 = vadd.f32 0.0, %v285
  %v287 = vpop.f32.mrb[0].mxu0
  %v288 = vpop.f32.mrb[0].mxu0
  %v289 = vadd.f32 0.0, %v288
  %v290 = vpop.f32.mrb[0].mxu0
  %291 = vdwg.mxu0
  %v292 = vadd.f32 %v193, %v278
  %v293 = vadd.f32 %v196, %v281
  %v294 = vadd.f32 %v201, %v286
  %v295 = vadd.f32 %v204, %v289
  %v296 = vld [vmem:[%s3] sm:$0xf]
  %v297 = vld [vmem:[%s3 + $0x4] sm:$0xf]
  %v298 = vld [vmem:[%s3 + $0x8] sm:$0xf]
  %v299 = vld [vmem:[%s3 + $0xc] sm:$0xf]
  %v300 = vld [vmem:[%s7] sm:$0xf]
  %v301 = vld [vmem:[%s7 + $0x4] sm:$0xf]
  %v302 = vld [vmem:[%s7 + $0x8] sm:$0xf]
  %v303 = vld [vmem:[%s7 + $0xc] sm:$0xf]
  %v308 = vunpack.c.l.b16 %v296
  %v309 = vunpack.c.l.b16 %v297
  %v310 = vunpack.c.l.b16 %v298
  %v311 = vunpack.c.l.b16 %v299
  %v312 = vpack.c.b16 %v309, %v308
  %v313 = vpack.c.b16 %v311, %v310
  %v318 = vunpack.c.l.b16 %v300
  %v319 = vunpack.c.l.b16 %v301
  %v320 = vunpack.c.l.b16 %v302
  %v321 = vunpack.c.l.b16 %v303
  %v322 = vpack.c.b16 %v319, %v318
  %v323 = vpack.c.b16 %v321, %v320
  %v327 = vsel %vm74, %v312, 0
  %v330 = vsel %vm74, %v313, 0
  %332 = vmatprep.subr.bf16.mxu0 0
  %333 = vmatpush1.bf16.msra.mxu0 %v322
  %334 = vmatprep.subr.bf16.mxu0 0
  %335 = vmatpush1.bf16.msra.mxu0 %v323
  %336 = vmatprep.subr.bf16.mxu0 0
  %337 = vmatpush1.bf16.msra.mxu0 0
  %338 = vmatprep.subr.bf16.mxu0 0
  %339 = vmatpush1.bf16.msra.mxu0 0
  %340 = vmatprep.subr.bf16.mxu0 0
  %341 = vmatpush1.bf16.msra.mxu0 0
  %342 = vmatprep.subr.bf16.mxu0 0
  %343 = vmatpush1.bf16.msra.mxu0 0
  %344 = vmatprep.subr.bf16.mxu0 0
  %345 = vmatpush1.bf16.msra.mxu0 0
  %346 = vmatprep.subr.bf16.mxu0 0
  %347 = vmatpush1.bf16.msra.mxu0 0
  %348 = vmatprep.subr.bf16.mxu0 0
  %349 = vmatpush1.bf16.msra.mxu0 0
  %350 = vmatprep.subr.bf16.mxu0 0
  %351 = vmatpush1.bf16.msra.mxu0 0
  %352 = vmatprep.subr.bf16.mxu0 0
  %353 = vmatpush1.bf16.msra.mxu0 0
  %354 = vmatprep.subr.bf16.mxu0 0
  %355 = vmatpush1.bf16.msra.mxu0 0
  %356 = vmatprep.subr.bf16.mxu0 0
  %357 = vmatpush1.bf16.msra.mxu0 0
  %358 = vmatprep.subr.bf16.mxu0 0
  %359 = vmatpush1.bf16.msra.mxu0 0
  %360 = vmatprep.subr.bf16.mxu0 0
  %361 = vmatpush1.bf16.msra.mxu0 0
  %362 = vmatprep.subr.bf16.mxu0 0
  %363 = vmatpush1.bf16.msra.mxu0 0
  %364 = vmatprep.mubr.bf16.mxu0 0
  %365 = vmatmul.mubr.bf16.gmra.mrb[0].mxu0 %v327
  %v366 = vpop.f32.mrb[0].mxu0
  %v367 = vadd.f32 0.0, %v366
  %v368 = vpop.f32.mrb[0].mxu0
  %v369 = vpop.f32.mrb[0].mxu0
  %v370 = vadd.f32 0.0, %v369
  %v371 = vpop.f32.mrb[0].mxu0
  %372 = vmatprep.mubr.bf16.mxu0 0
  %373 = vmatmul.mubr.bf16.gmra.mrb[0].mxu0 %v330
  %v374 = vpop.f32.mrb[0].mxu0
  %v375 = vadd.f32 0.0, %v374
  %v376 = vpop.f32.mrb[0].mxu0
  %v377 = vpop.f32.mrb[0].mxu0
  %v378 = vadd.f32 0.0, %v377
  %v379 = vpop.f32.mrb[0].mxu0
  %380 = vdwg.mxu0
  %v381 = vadd.f32 %v292, %v367
  %v382 = vadd.f32 %v293, %v370
  %v383 = vadd.f32 %v294, %v375
  %v384 = vadd.f32 %v295, %v378
  %v385 = vld [vmem:[%s8] sm:$0x1]
  %v387 = vlaneseq
  %v388 = vshrl.u32 %v387, 7
  %v389 = vsub.s32 0, %v388
  %v390 = vrot.slane %v385, %v389
  %v392 = vadd.f32 %v381, %v390
  %v393 = vadd.f32 %v382, %v390
  %v394 = vadd.f32 %v383, %v390
  %v395 = vadd.f32 %v384, %v390
  %vm396 = vcmask 523264
  %v397 = vsel %vm396, %v392, 0.0
  %v398 = vsel %vm396, %v393, 0.0
  %v399 = vadd.f32 %v397, %v398
  %v400 = vsel %vm396, %v394, 0.0
  %v401 = vadd.f32 %v399, %v400
  %v402 = vsel %vm396, %v395, 0.0
  %v403 = vadd.f32 %v401, %v402
  %v404 = vrot.slane %v403, 4
  %v405 = vadd.f32 %v403, %v404
  %v406 = vrot.slane %v405, 2
  %v407 = vadd.f32 %v405, %v406
  %v408 = vrot.slane %v407, 1
  %v409 = vadd.f32 %v407, %v408
  %vm410 = vcmask 516096
  %411 = vst.msk [vmem:[%s10] sm:$0x1] %vm410, %v409
  %v412 = vmul.f32 %v392, %v392
  %v413 = vmul.f32 %v393, %v393
  %v414 = vmul.f32 %v394, %v394
  %v415 = vmul.f32 %v395, %v395
  %v416 = vsel %vm396, %v412, 0.0
  %v417 = vsel %vm396, %v413, 0.0
  %v418 = vadd.f32 %v416, %v417
  %v419 = vsel %vm396, %v414, 0.0
  %v420 = vadd.f32 %v418, %v419
  %v421 = vsel %vm396, %v415, 0.0
  %v422 = vadd.f32 %v420, %v421
  %v423 = vrot.slane %v422, 4
  %v424 = vadd.f32 %v422, %v423
  %v425 = vrot.slane %v424, 2
  %v426 = vadd.f32 %v424, %v425
  %v427 = vrot.slane %v426, 1
  %v428 = vadd.f32 %v426, %v427
  %429 = vst.msk [vmem:[%s11] sm:$0x1] %vm410, %v428
  %v430 = vpack.c.bf16 %v393, %v392
  %v431 = vpack.c.bf16 %v395, %v394
  %v434 = vunpack.c.l.b16 %v430
  %v435 = vunpack.c.h.b16 %v430
  %v436 = vunpack.c.l.b16 %v431
  %v437 = vunpack.c.h.b16 %v431
  %v438 = vpack.c.b16 %v434, %v434
  %v439 = vpack.c.b16 %v435, %v435
  %v440 = vpack.c.b16 %v436, %v436
  %v441 = vpack.c.b16 %v437, %v437
  %vm446 = vcmask 519168
  %447 = vst.msk [vmem:[%s9] sm:$0xf] %vm446, %v438
  %448 = vst.msk [vmem:[%s9 + $0x4] sm:$0xf] %vm446, %v439
  %449 = vst.msk [vmem:[%s9 + $0x8] sm:$0xf] %vm446, %v440
  %450 = vst.msk [vmem:[%s9 + $0xc] sm:$0xf] %vm446, %v441
  // Predicated region
  $region38: #{resnet_generator_forward.33} parent=0 // pred_check
    _
  $region39: #{resnet_generator_forward.33} parent=0 // pred_check_branch
    %452 = sbr.rel (0) target = $region41
  $region40: #{resnet_generator_forward.33} parent=0 // pred_region
    _
  $region41: #{resnet_generator_forward.33} parent=0 // pred_fallthru
    _
  // Predicated region
  $region42: #{resnet_generator_forward.33} parent=0 // pred_check
    _
  $region43: #{resnet_generator_forward.33} parent=0 // pred_check_branch
    %454 = sbr.rel (0) target = $region45
  $region44: #{resnet_generator_forward.33} parent=0 // pred_region
    _
  $region45: #{resnet_generator_forward.33} parent=0 // pred_fallthru
    _
  // Predicated region
  $region46: #{resnet_generator_forward.33} parent=0 // pred_check
    _
  $region47: #{resnet_generator_forward.33} parent=0 // pred_check_branch
    %456 = sbr.rel (0) target = $region49
  $region48: #{resnet_generator_forward.33} parent=0 // pred_region
    _
  $region49: #{resnet_generator_forward.33} parent=0 // pred_fallthru
    _
  // Predicated region
  $region50: #{resnet_generator_forward.33} parent=0 // pred_check
    _
  $region51: #{resnet_generator_forward.33} parent=0 // pred_check_branch
    %458 = sbr.rel (0) target = $region53
  $region52: #{resnet_generator_forward.33} parent=0 // pred_region
    _
  $region53: #{resnet_generator_forward.33} parent=0 // pred_fallthru
    _
  // Predicated region
  $region54: #{resnet_generator_forward.33} parent=0 // pred_check
    _
  $region55: #{resnet_generator_forward.33} parent=0 // pred_check_branch
    %460 = sbr.rel (0) target = $region57
  $region56: #{resnet_generator_forward.33} parent=0 // pred_region
    _
  $region57: #{resnet_generator_forward.33} parent=0 // pred_fallthru
    _
  // Predicated region
  $region58: #{resnet_generator_forward.33} parent=0 // pred_check
    _
  $region59: #{resnet_generator_forward.33} parent=0 // pred_check_branch
    %462 = sbr.rel (0) target = $region61
  $region60: #{resnet_generator_forward.33} parent=0 // pred_region
    _
  $region61: #{resnet_generator_forward.33} parent=0 // pred_fallthru
    _

// kernel: resnet_generator_forward.35
$region0: #{resnet_generator_forward.35}
  #allocation0 [shape = 'u32[]', space=smem, size = 0x4, offset = 0x4, fixed_abs, tag = 'smem constant byte address 0x4 - core index']
  #allocation1 [shape = 'u32[144,128]{1,0:T(1,128)}', space=vmem, size = 0x12000, scoped, tag = 'internal scratch']
  %s0 = inlined_call_operand.vmem [shape: bf16[128,16], index: 0, kind: input, shape index: {}]
  %s1 = inlined_call_operand.vmem [shape: bf16[128,16], index: 1, kind: input, shape index: {}]
  %s2 = inlined_call_operand.vmem [shape: bf16[128,16], index: 2, kind: input, shape index: {}]
  %s3 = inlined_call_operand.vmem [shape: bf16[128,16], index: 3, kind: input, shape index: {}]
  %s4 = inlined_call_operand.vmem [shape: bf16[16,32], index: 4, kind: input, shape index: {}]
  %s5 = inlined_call_operand.vmem [shape: bf16[16,32], index: 5, kind: input, shape index: {}]
  %s6 = inlined_call_operand.vmem [shape: bf16[16,32], index: 6, kind: input, shape index: {}]
  %s7 = inlined_call_operand.vmem [shape: bf16[16,32], index: 7, kind: input, shape index: {}]
  %s8 = inlined_call_operand.vmem [shape: f32[1,32], index: 8, kind: input, shape index: {}]
  %s9 = inlined_call_operand.vmem [shape: bf16[128,32], index: 9, kind: output, shape index: {0}]
  %s10 = inlined_call_operand.vmem [shape: f32[1,1,32], index: 10, kind: output, shape index: {1}]
  %s11 = inlined_call_operand.vmem [shape: f32[1,1,32], index: 11, kind: output, shape index: {2}]
  %12 = xla_tuple %s9, %s10, %s11
  %s13 = sld [smem:[#allocation0]]
  $region62: #{resnet_generator_forward.35} parent=0
    _
  %s15 = ssub.s32 1, %s13
  %s16 = scalar_select 0, %s15, %s13
  // Predicated region
  $region2: #{resnet_generator_forward.35} parent=0 // pred_check
    _
  $region3: #{resnet_generator_forward.35} parent=0 // pred_check_branch
    %18 = sbr.rel (0) target = $region5
  $region4: #{resnet_generator_forward.35} parent=0 // pred_region
    _
  $region5: #{resnet_generator_forward.35} parent=0 // pred_fallthru
    _
  // Predicated region
  $region6: #{resnet_generator_forward.35} parent=0 // pred_check
    _
  $region7: #{resnet_generator_forward.35} parent=0 // pred_check_branch
    %20 = sbr.rel (0) target = $region9
  $region8: #{resnet_generator_forward.35} parent=0 // pred_region
    _
  $region9: #{resnet_generator_forward.35} parent=0 // pred_fallthru
    _
  // Predicated region
  $region10: #{resnet_generator_forward.35} parent=0 // pred_check
    _
  $region11: #{resnet_generator_forward.35} parent=0 // pred_check_branch
    %22 = sbr.rel (0) target = $region13
  $region12: #{resnet_generator_forward.35} parent=0 // pred_region
    _
  $region13: #{resnet_generator_forward.35} parent=0 // pred_fallthru
    _
  // Predicated region
  $region14: #{resnet_generator_forward.35} parent=0 // pred_check
    _
  $region15: #{resnet_generator_forward.35} parent=0 // pred_check_branch
    %24 = sbr.rel (0) target = $region17
  $region16: #{resnet_generator_forward.35} parent=0 // pred_region
    _
  $region17: #{resnet_generator_forward.35} parent=0 // pred_fallthru
    _
  // Predicated region
  $region18: #{resnet_generator_forward.35} parent=0 // pred_check
    _
  $region19: #{resnet_generator_forward.35} parent=0 // pred_check_branch
    %26 = sbr.rel (0) target = $region21
  $region20: #{resnet_generator_forward.35} parent=0 // pred_region
    _
  $region21: #{resnet_generator_forward.35} parent=0 // pred_fallthru
    _
  // Predicated region
  $region22: #{resnet_generator_forward.35} parent=0 // pred_check
    _
  $region23: #{resnet_generator_forward.35} parent=0 // pred_check_branch
    %28 = sbr.rel (0) target = $region25
  $region24: #{resnet_generator_forward.35} parent=0 // pred_region
    _
  $region25: #{resnet_generator_forward.35} parent=0 // pred_fallthru
    _
  // Predicated region
  $region26: #{resnet_generator_forward.35} parent=0 // pred_check
    _
  $region27: #{resnet_generator_forward.35} parent=0 // pred_check_branch
    %30 = sbr.rel (0) target = $region29
  $region28: #{resnet_generator_forward.35} parent=0 // pred_region
    _
  $region29: #{resnet_generator_forward.35} parent=0 // pred_fallthru
    _
  // Predicated region
  $region30: #{resnet_generator_forward.35} parent=0 // pred_check
    _
  $region31: #{resnet_generator_forward.35} parent=0 // pred_check_branch
    %32 = sbr.rel (0) target = $region33
  $region32: #{resnet_generator_forward.35} parent=0 // pred_region
    _
  $region33: #{resnet_generator_forward.35} parent=0 // pred_fallthru
    _
  // Predicated region
  $region34: #{resnet_generator_forward.35} parent=0 // pred_check
    _
  $region35: #{resnet_generator_forward.35} parent=0 // pred_check_branch
    %34 = sbr.rel (0) target = $region37
  $region36: #{resnet_generator_forward.35} parent=0 // pred_region
    _
  $region37: #{resnet_generator_forward.35} parent=0 // pred_fallthru
    _
  %v36 = vld [vmem:[%s0] sm:$0xf]
  %v37 = vld [vmem:[%s0 + $0x4] sm:$0xf]
  %v38 = vld [vmem:[%s0 + $0x8] sm:$0xf]
  %v39 = vld [vmem:[%s0 + $0xc] sm:$0xf]
  %v40 = vld [vmem:[%s0 + $0x10] sm:$0xf]
  %v41 = vld [vmem:[%s0 + $0x14] sm:$0xf]
  %v42 = vld [vmem:[%s0 + $0x18] sm:$0xf]
  %v43 = vld [vmem:[%s0 + $0x1c] sm:$0xf]
  %v44 = vld [vmem:[%s0 + $0x20] sm:$0xf]
  %v45 = vld [vmem:[%s0 + $0x24] sm:$0xf]
  %v46 = vld [vmem:[%s0 + $0x28] sm:$0xf]
  %v47 = vld [vmem:[%s0 + $0x2c] sm:$0xf]
  %v48 = vld [vmem:[%s0 + $0x30] sm:$0xf]
  %v49 = vld [vmem:[%s0 + $0x34] sm:$0xf]
  %v50 = vld [vmem:[%s0 + $0x38] sm:$0xf]
  %v51 = vld [vmem:[%s0 + $0x3c] sm:$0xf]
  %v52 = vld [vmem:[%s4] sm:$0xf]
  %v53 = vld [vmem:[%s4 + $0x4] sm:$0xf]
  %v54 = vld [vmem:[%s1] sm:$0xf]
  %v55 = vld [vmem:[%s1 + $0x4] sm:$0xf]
  %v56 = vld [vmem:[%s1 + $0x8] sm:$0xf]
  %v57 = vld [vmem:[%s1 + $0xc] sm:$0xf]
  %v58 = vld [vmem:[%s1 + $0x10] sm:$0xf]
  %v59 = vld [vmem:[%s1 + $0x14] sm:$0xf]
  %v60 = vld [vmem:[%s1 + $0x18] sm:$0xf]
  %v61 = vld [vmem:[%s1 + $0x1c] sm:$0xf]
  %v62 = vld [vmem:[%s1 + $0x20] sm:$0xf]
  %v63 = vld [vmem:[%s1 + $0x24] sm:$0xf]
  %v64 = vld [vmem:[%s1 + $0x28] sm:$0xf]
  %v65 = vld [vmem:[%s1 + $0x2c] sm:$0xf]
  %v66 = vld [vmem:[%s1 + $0x30] sm:$0xf]
  %v67 = vld [vmem:[%s1 + $0x34] sm:$0xf]
  %v68 = vld [vmem:[%s1 + $0x38] sm:$0xf]
  %v69 = vld [vmem:[%s1 + $0x3c] sm:$0xf]
  %v70 = vld [vmem:[%s5] sm:$0xf]
  %v71 = vld [vmem:[%s5 + $0x4] sm:$0xf]
  %v88 = vunpack.c.l.b16 %v54
  %v89 = vunpack.c.l.b16 %v55
  %v90 = vunpack.c.l.b16 %v56
  %v91 = vunpack.c.l.b16 %v57
  %v92 = vunpack.c.l.b16 %v58
  %v93 = vunpack.c.l.b16 %v59
  %v94 = vunpack.c.l.b16 %v60
  %v95 = vunpack.c.l.b16 %v61
  %v96 = vunpack.c.l.b16 %v62
  %v97 = vunpack.c.l.b16 %v63
  %v98 = vunpack.c.l.b16 %v64
  %v99 = vunpack.c.l.b16 %v65
  %v100 = vunpack.c.l.b16 %v66
  %v101 = vunpack.c.l.b16 %v67
  %v102 = vunpack.c.l.b16 %v68
  %v103 = vunpack.c.l.b16 %v69
  %v104 = vpack.c.b16 %v89, %v88
  %v105 = vpack.c.b16 %v91, %v90
  %v106 = vpack.c.b16 %v93, %v92
  %v107 = vpack.c.b16 %v95, %v94
  %v108 = vpack.c.b16 %v97, %v96
  %v109 = vpack.c.b16 %v99, %v98
  %v110 = vpack.c.b16 %v101, %v100
  %v111 = vpack.c.b16 %v103, %v102
  %v114 = vunpack.c.l.b16 %v70
  %v115 = vunpack.c.l.b16 %v71
  %v116 = vpack.c.b16 %v115, %v114
  %vm118 = vcmask 130048
  %v120 = vsel %vm118, %v104, 0
  %v123 = vsel %vm118, %v105, 0
  %v126 = vsel %vm118, %v106, 0
  %v129 = vsel %vm118, %v107, 0
  %v132 = vsel %vm118, %v108, 0
  %v135 = vsel %vm118, %v109, 0
  %v138 = vsel %vm118, %v110, 0
  %v141 = vsel %vm118, %v111, 0
  %143 = vmatprep.subr.bf16.mxu0 0
  %144 = vmatpush1.bf16.msra.mxu0 %v116
  %145 = vmatprep.subr.bf16.mxu0 0
  %146 = vmatpush1.bf16.msra.mxu0 0
  %147 = vmatprep.subr.bf16.mxu0 0
  %148 = vmatpush1.bf16.msra.mxu0 0
  %149 = vmatprep.subr.bf16.mxu0 0
  %150 = vmatpush1.bf16.msra.mxu0 0
  %151 = vmatprep.subr.bf16.mxu0 0
  %152 = vmatpush1.bf16.msra.mxu0 0
  %153 = vmatprep.subr.bf16.mxu0 0
  %154 = vmatpush1.bf16.msra.mxu0 0
  %155 = vmatprep.subr.bf16.mxu0 0
  %156 = vmatpush1.bf16.msra.mxu0 0
  %157 = vmatprep.subr.bf16.mxu0 0
  %158 = vmatpush1.bf16.msra.mxu0 0
  %159 = vmatprep.subr.bf16.mxu0 0
  %160 = vmatpush1.bf16.msra.mxu0 0
  %161 = vmatprep.subr.bf16.mxu0 0
  %162 = vmatpush1.bf16.msra.mxu0 0
  %163 = vmatprep.subr.bf16.mxu0 0
  %164 = vmatpush1.bf16.msra.mxu0 0
  %165 = vmatprep.subr.bf16.mxu0 0
  %166 = vmatpush1.bf16.msra.mxu0 0
  %167 = vmatprep.subr.bf16.mxu0 0
  %168 = vmatpush1.bf16.msra.mxu0 0
  %169 = vmatprep.subr.bf16.mxu0 0
  %170 = vmatpush1.bf16.msra.mxu0 0
  %171 = vmatprep.subr.bf16.mxu0 0
  %172 = vmatpush1.bf16.msra.mxu0 0
  %173 = vmatprep.subr.bf16.mxu0 0
  %174 = vmatpush1.bf16.msra.mxu0 0
  %175 = vmatprep.mubr.bf16.mxu0 0
  %176 = vmatmul.mubr.bf16.gmra.mrb[0].mxu0 %v120
  %v177 = vpop.f32.mrb[0].mxu0
  %v178 = vadd.f32 0.0, %v177
  %v179 = vpop.f32.mrb[0].mxu0
  %v180 = vpop.f32.mrb[0].mxu0
  %v181 = vadd.f32 0.0, %v180
  %v182 = vpop.f32.mrb[0].mxu0
  %183 = vmatprep.mubr.bf16.mxu0 0
  %184 = vmatmul.mubr.bf16.gmra.mrb[0].mxu0 %v123
  %v185 = vpop.f32.mrb[0].mxu0
  %v186 = vadd.f32 0.0, %v185
  %v187 = vpop.f32.mrb[0].mxu0
  %v188 = vpop.f32.mrb[0].mxu0
  %v189 = vadd.f32 0.0, %v188
  %v190 = vpop.f32.mrb[0].mxu0
  %191 = vmatprep.mubr.bf16.mxu0 0
  %192 = vmatmul.mubr.bf16.gmra.mrb[0].mxu0 %v126
  %v193 = vpop.f32.mrb[0].mxu0
  %v194 = vadd.f32 0.0, %v193
  %v195 = vpop.f32.mrb[0].mxu0
  %v196 = vpop.f32.mrb[0].mxu0
  %v197 = vadd.f32 0.0, %v196
  %v198 = vpop.f32.mrb[0].mxu0
  %199 = vmatprep.mubr.bf16.mxu0 0
  %200 = vmatmul.mubr.bf16.gmra.mrb[0].mxu0 %v129
  %v201 = vpop.f32.mrb[0].mxu0
  %v202 = vadd.f32 0.0, %v201
  %v203 = vpop.f32.mrb[0].mxu0
  %v204 = vpop.f32.mrb[0].mxu0
  %v205 = vadd.f32 0.0, %v204
  %v206 = vpop.f32.mrb[0].mxu0
  %207 = vmatprep.mubr.bf16.mxu0 0
  %208 = vmatmul.mubr.bf16.gmra.mrb[0].mxu0 %v132
  %v209 = vpop.f32.mrb[0].mxu0
  %v210 = vadd.f32 0.0, %v209
  %v211 = vpop.f32.mrb[0].mxu0
  %v212 = vpop.f32.mrb[0].mxu0
  %v213 = vadd.f32 0.0, %v212
  %v214 = vpop.f32.mrb[0].mxu0
  %215 = vmatprep.mubr.bf16.mxu0 0
  %216 = vmatmul.mubr.bf16.gmra.mrb[0].mxu0 %v135
  %v217 = vpop.f32.mrb[0].mxu0
  %v218 = vadd.f32 0.0, %v217
  %v219 = vpop.f32.mrb[0].mxu0
  %v220 = vpop.f32.mrb[0].mxu0
  %v221 = vadd.f32 0.0, %v220
  %v222 = vpop.f32.mrb[0].mxu0
  %223 = vmatprep.mubr.bf16.mxu0 0
  %224 = vmatmul.mubr.bf16.gmra.mrb[0].mxu0 %v138
  %v225 = vpop.f32.mrb[0].mxu0
  %v226 = vadd.f32 0.0, %v225
  %v227 = vpop.f32.mrb[0].mxu0
  %v228 = vpop.f32.mrb[0].mxu0
  %v229 = vadd.f32 0.0, %v228
  %v230 = vpop.f32.mrb[0].mxu0
  %231 = vmatprep.mubr.bf16.mxu0 0
  %232 = vmatmul.mubr.bf16.gmra.mrb[0].mxu0 %v141
  %v233 = vpop.f32.mrb[0].mxu0
  %v234 = vadd.f32 0.0, %v233
  %v235 = vpop.f32.mrb[0].mxu0
  %v236 = vpop.f32.mrb[0].mxu0
  %v237 = vadd.f32 0.0, %v236
  %v238 = vpop.f32.mrb[0].mxu0
  %239 = vdwg.mxu0
  %v256 = vunpack.c.l.b16 %v36
  %v257 = vunpack.c.l.b16 %v37
  %v258 = vunpack.c.l.b16 %v38
  %v259 = vunpack.c.l.b16 %v39
  %v260 = vunpack.c.l.b16 %v40
  %v261 = vunpack.c.l.b16 %v41
  %v262 = vunpack.c.l.b16 %v42
  %v263 = vunpack.c.l.b16 %v43
  %v264 = vunpack.c.l.b16 %v44
  %v265 = vunpack.c.l.b16 %v45
  %v266 = vunpack.c.l.b16 %v46
  %v267 = vunpack.c.l.b16 %v47
  %v268 = vunpack.c.l.b16 %v48
  %v269 = vunpack.c.l.b16 %v49
  %v270 = vunpack.c.l.b16 %v50
  %v271 = vunpack.c.l.b16 %v51
  %v272 = vpack.c.b16 %v257, %v256
  %v273 = vpack.c.b16 %v259, %v258
  %v274 = vpack.c.b16 %v261, %v260
  %v275 = vpack.c.b16 %v263, %v262
  %v276 = vpack.c.b16 %v265, %v264
  %v277 = vpack.c.b16 %v267, %v266
  %v278 = vpack.c.b16 %v269, %v268
  %v279 = vpack.c.b16 %v271, %v270
  %v282 = vunpack.c.l.b16 %v52
  %v283 = vunpack.c.l.b16 %v53
  %v284 = vpack.c.b16 %v283, %v282
  %v287 = vsel %vm118, %v272, 0
  %v290 = vsel %vm118, %v273, 0
  %v293 = vsel %vm118, %v274, 0
  %v296 = vsel %vm118, %v275, 0
  %v299 = vsel %vm118, %v276, 0
  %v302 = vsel %vm118, %v277, 0
  %v305 = vsel %vm118, %v278, 0
  %v308 = vsel %vm118, %v279, 0
  %310 = vmatprep.subr.bf16.mxu0 0
  %311 = vmatpush1.bf16.msra.mxu0 %v284
  %312 = vmatprep.subr.bf16.mxu0 0
  %313 = vmatpush1.bf16.msra.mxu0 0
  %314 = vmatprep.subr.bf16.mxu0 0
  %315 = vmatpush1.bf16.msra.mxu0 0
  %316 = vmatprep.subr.bf16.mxu0 0
  %317 = vmatpush1.bf16.msra.mxu0 0
  %318 = vmatprep.subr.bf16.mxu0 0
  %319 = vmatpush1.bf16.msra.mxu0 0
  %320 = vmatprep.subr.bf16.mxu0 0
  %321 = vmatpush1.bf16.msra.mxu0 0
  %322 = vmatprep.subr.bf16.mxu0 0
  %323 = vmatpush1.bf16.msra.mxu0 0
  %324 = vmatprep.subr.bf16.mxu0 0
  %325 = vmatpush1.bf16.msra.mxu0 0
  %326 = vmatprep.subr.bf16.mxu0 0
  %327 = vmatpush1.bf16.msra.mxu0 0
  %328 = vmatprep.subr.bf16.mxu0 0
  %329 = vmatpush1.bf16.msra.mxu0 0
  %330 = vmatprep.subr.bf16.mxu0 0
  %331 = vmatpush1.bf16.msra.mxu0 0
  %332 = vmatprep.subr.bf16.mxu0 0
  %333 = vmatpush1.bf16.msra.mxu0 0
  %334 = vmatprep.subr.bf16.mxu0 0
  %335 = vmatpush1.bf16.msra.mxu0 0
  %336 = vmatprep.subr.bf16.mxu0 0
  %337 = vmatpush1.bf16.msra.mxu0 0
  %338 = vmatprep.subr.bf16.mxu0 0
  %339 = vmatpush1.bf16.msra.mxu0 0
  %340 = vmatprep.subr.bf16.mxu0 0
  %341 = vmatpush1.bf16.msra.mxu0 0
  %342 = vmatprep.mubr.bf16.mxu0 0
  %343 = vmatmul.mubr.bf16.gmra.mrb[0].mxu0 %v287
  %v344 = vpop.f32.mrb[0].mxu0
  %v345 = vadd.f32 %v178, %v344
  %v346 = vpop.f32.mrb[0].mxu0
  %v347 = vpop.f32.mrb[0].mxu0
  %v348 = vadd.f32 %v181, %v347
  %v349 = vpop.f32.mrb[0].mxu0
  %350 = vmatprep.mubr.bf16.mxu0 0
  %351 = vmatmul.mubr.bf16.gmra.mrb[0].mxu0 %v290
  %v352 = vpop.f32.mrb[0].mxu0
  %v353 = vadd.f32 %v186, %v352
  %v354 = vpop.f32.mrb[0].mxu0
  %v355 = vpop.f32.mrb[0].mxu0
  %v356 = vadd.f32 %v189, %v355
  %v357 = vpop.f32.mrb[0].mxu0
  %358 = vmatprep.mubr.bf16.mxu0 0
  %359 = vmatmul.mubr.bf16.gmra.mrb[0].mxu0 %v293
  %v360 = vpop.f32.mrb[0].mxu0
  %v361 = vadd.f32 %v194, %v360
  %v362 = vpop.f32.mrb[0].mxu0
  %v363 = vpop.f32.mrb[0].mxu0
  %v364 = vadd.f32 %v197, %v363
  %v365 = vpop.f32.mrb[0].mxu0
  %366 = vmatprep.mubr.bf16.mxu0 0
  %367 = vmatmul.mubr.bf16.gmra.mrb[0].mxu0 %v296
  %v368 = vpop.f32.mrb[0].mxu0
  %v369 = vadd.f32 %v202, %v368
  %v370 = vpop.f32.mrb[0].mxu0
  %v371 = vpop.f32.mrb[0].mxu0
  %v372 = vadd.f32 %v205, %v371
  %v373 = vpop.f32.mrb[0].mxu0
  %374 = vmatprep.mubr.bf16.mxu0 0
  %375 = vmatmul.mubr.bf16.gmra.mrb[0].mxu0 %v299
  %v376 = vpop.f32.mrb[0].mxu0
  %v377 = vadd.f32 %v210, %v376
  %v378 = vpop.f32.mrb[0].mxu0
  %v379 = vpop.f32.mrb[0].mxu0
  %v380 = vadd.f32 %v213, %v379
  %v381 = vpop.f32.mrb[0].mxu0
  %382 = vmatprep.mubr.bf16.mxu0 0
  %383 = vmatmul.mubr.bf16.gmra.mrb[0].mxu0 %v302
  %v384 = vpop.f32.mrb[0].mxu0
  %v385 = vadd.f32 %v218, %v384
  %v386 = vpop.f32.mrb[0].mxu0
  %v387 = vpop.f32.mrb[0].mxu0
  %v388 = vadd.f32 %v221, %v387
  %v389 = vpop.f32.mrb[0].mxu0
  %390 = vmatprep.mubr.bf16.mxu0 0
  %391 = vmatmul.mubr.bf16.gmra.mrb[0].mxu0 %v305
  %v392 = vpop.f32.mrb[0].mxu0
  %v393 = vadd.f32 %v226, %v392
  %v394 = vpop.f32.mrb[0].mxu0
  %v395 = vpop.f32.mrb[0].mxu0
  %v396 = vadd.f32 %v229, %v395
  %v397 = vpop.f32.mrb[0].mxu0
  %398 = vmatprep.mubr.bf16.mxu0 0
  %399 = vmatmul.mubr.bf16.gmra.mrb[0].mxu0 %v308
  %v400 = vpop.f32.mrb[0].mxu0
  %v401 = vadd.f32 %v234, %v400
  %v402 = vpop.f32.mrb[0].mxu0
  %v403 = vpop.f32.mrb[0].mxu0
  %v404 = vadd.f32 %v237, %v403
  %v405 = vpop.f32.mrb[0].mxu0
  %406 = vdwg.mxu0
  %v407 = vld [vmem:[%s2] sm:$0xf]
  %v408 = vld [vmem:[%s2 + $0x4] sm:$0xf]
  %v409 = vld [vmem:[%s2 + $0x8] sm:$0xf]
  %v410 = vld [vmem:[%s2 + $0xc] sm:$0xf]
  %v411 = vld [vmem:[%s2 + $0x10] sm:$0xf]
  %v412 = vld [vmem:[%s2 + $0x14] sm:$0xf]
  %v413 = vld [vmem:[%s2 + $0x18] sm:$0xf]
  %v414 = vld [vmem:[%s2 + $0x1c] sm:$0xf]
  %v415 = vld [vmem:[%s2 + $0x20] sm:$0xf]
  %v416 = vld [vmem:[%s2 + $0x24] sm:$0xf]
  %v417 = vld [vmem:[%s2 + $0x28] sm:$0xf]
  %v418 = vld [vmem:[%s2 + $0x2c] sm:$0xf]
  %v419 = vld [vmem:[%s2 + $0x30] sm:$0xf]
  %v420 = vld [vmem:[%s2 + $0x34] sm:$0xf]
  %v421 = vld [vmem:[%s2 + $0x38] sm:$0xf]
  %v422 = vld [vmem:[%s2 + $0x3c] sm:$0xf]
  %v423 = vld [vmem:[%s6] sm:$0xf]
  %v424 = vld [vmem:[%s6 + $0x4] sm:$0xf]
  %v441 = vunpack.c.l.b16 %v407
  %v442 = vunpack.c.l.b16 %v408
  %v443 = vunpack.c.l.b16 %v409
  %v444 = vunpack.c.l.b16 %v410
  %v445 = vunpack.c.l.b16 %v411
  %v446 = vunpack.c.l.b16 %v412
  %v447 = vunpack.c.l.b16 %v413
  %v448 = vunpack.c.l.b16 %v414
  %v449 = vunpack.c.l.b16 %v415
  %v450 = vunpack.c.l.b16 %v416
  %v451 = vunpack.c.l.b16 %v417
  %v452 = vunpack.c.l.b16 %v418
  %v453 = vunpack.c.l.b16 %v419
  %v454 = vunpack.c.l.b16 %v420
  %v455 = vunpack.c.l.b16 %v421
  %v456 = vunpack.c.l.b16 %v422
  %v457 = vpack.c.b16 %v442, %v441
  %v458 = vpack.c.b16 %v444, %v443
  %v459 = vpack.c.b16 %v446, %v445
  %v460 = vpack.c.b16 %v448, %v447
  %v461 = vpack.c.b16 %v450, %v449
  %v462 = vpack.c.b16 %v452, %v451
  %v463 = vpack.c.b16 %v454, %v453
  %v464 = vpack.c.b16 %v456, %v455
  %v467 = vunpack.c.l.b16 %v423
  %v468 = vunpack.c.l.b16 %v424
  %v469 = vpack.c.b16 %v468, %v467
  %v472 = vsel %vm118, %v457, 0
  %v475 = vsel %vm118, %v458, 0
  %v478 = vsel %vm118, %v459, 0
  %v481 = vsel %vm118, %v460, 0
  %v484 = vsel %vm118, %v461, 0
  %v487 = vsel %vm118, %v462, 0
  %v490 = vsel %vm118, %v463, 0
  %v493 = vsel %vm118, %v464, 0
  %495 = vmatprep.subr.bf16.mxu0 0
  %496 = vmatpush1.bf16.msra.mxu0 %v469
  %497 = vmatprep.subr.bf16.mxu0 0
  %498 = vmatpush1.bf16.msra.mxu0 0
  %499 = vmatprep.subr.bf16.mxu0 0
  %500 = vmatpush1.bf16.msra.mxu0 0
  %501 = vmatprep.subr.bf16.mxu0 0
  %502 = vmatpush1.bf16.msra.mxu0 0
  %503 = vmatprep.subr.bf16.mxu0 0
  %504 = vmatpush1.bf16.msra.mxu0 0
  %505 = vmatprep.subr.bf16.mxu0 0
  %506 = vmatpush1.bf16.msra.mxu0 0
  %507 = vmatprep.subr.bf16.mxu0 0
  %508 = vmatpush1.bf16.msra.mxu0 0
  %509 = vmatprep.subr.bf16.mxu0 0
  %510 = vmatpush1.bf16.msra.mxu0 0
  %511 = vmatprep.subr.bf16.mxu0 0
  %512 = vmatpush1.bf16.msra.mxu0 0
  %513 = vmatprep.subr.bf16.mxu0 0
  %514 = vmatpush1.bf16.msra.mxu0 0
  %515 = vmatprep.subr.bf16.mxu0 0
  %516 = vmatpush1.bf16.msra.mxu0 0
  %517 = vmatprep.subr.bf16.mxu0 0
  %518 = vmatpush1.bf16.msra.mxu0 0
  %519 = vmatprep.subr.bf16.mxu0 0
  %520 = vmatpush1.bf16.msra.mxu0 0
  %521 = vmatprep.subr.bf16.mxu0 0
  %522 = vmatpush1.bf16.msra.mxu0 0
  %523 = vmatprep.subr.bf16.mxu0 0
  %524 = vmatpush1.bf16.msra.mxu0 0
  %525 = vmatprep.subr.bf16.mxu0 0
  %526 = vmatpush1.bf16.msra.mxu0 0
  %527 = vmatprep.mubr.bf16.mxu0 0
  %528 = vmatmul.mubr.bf16.gmra.mrb[0].mxu0 %v472
  %v529 = vpop.f32.mrb[0].mxu0
  %v530 = vadd.f32 0.0, %v529
  %v531 = vpop.f32.mrb[0].mxu0
  %v532 = vpop.f32.mrb[0].mxu0
  %v533 = vadd.f32 0.0, %v532
  %v534 = vpop.f32.mrb[0].mxu0
  %535 = vmatprep.mubr.bf16.mxu0 0
  %536 = vmatmul.mubr.bf16.gmra.mrb[0].mxu0 %v475
  %v537 = vpop.f32.mrb[0].mxu0
  %v538 = vadd.f32 0.0, %v537
  %v539 = vpop.f32.mrb[0].mxu0
  %v540 = vpop.f32.mrb[0].mxu0
  %v541 = vadd.f32 0.0, %v540
  %v542 = vpop.f32.mrb[0].mxu0
  %543 = vmatprep.mubr.bf16.mxu0 0
  %544 = vmatmul.mubr.bf16.gmra.mrb[0].mxu0 %v478
  %v545 = vpop.f32.mrb[0].mxu0
  %v546 = vadd.f32 0.0, %v545
  %v547 = vpop.f32.mrb[0].mxu0
  %v548 = vpop.f32.mrb[0].mxu0
  %v549 = vadd.f32 0.0, %v548
  %v550 = vpop.f32.mrb[0].mxu0
  %551 = vmatprep.mubr.bf16.mxu0 0
  %552 = vmatmul.mubr.bf16.gmra.mrb[0].mxu0 %v481
  %v553 = vpop.f32.mrb[0].mxu0
  %v554 = vadd.f32 0.0, %v553
  %v555 = vpop.f32.mrb[0].mxu0
  %v556 = vpop.f32.mrb[0].mxu0
  %v557 = vadd.f32 0.0, %v556
  %v558 = vpop.f32.mrb[0].mxu0
  %559 = vmatprep.mubr.bf16.mxu0 0
  %560 = vmatmul.mubr.bf16.gmra.mrb[0].mxu0 %v484
  %v561 = vpop.f32.mrb[0].mxu0
  %v562 = vadd.f32 0.0, %v561
  %v563 = vpop.f32.mrb[0].mxu0
  %v564 = vpop.f32.mrb[0].mxu0
  %v565 = vadd.f32 0.0, %v564
  %v566 = vpop.f32.mrb[0].mxu0
  %567 = vmatprep.mubr.bf16.mxu0 0
  %568 = vmatmul.mubr.bf16.gmra.mrb[0].mxu0 %v487
  %v569 = vpop.f32.mrb[0].mxu0
  %v570 = vadd.f32 0.0, %v569
  %v571 = vpop.f32.mrb[0].mxu0
  %v572 = vpop.f32.mrb[0].mxu0
  %v573 = vadd.f32 0.0, %v572
  %v574 = vpop.f32.mrb[0].mxu0
  %575 = vmatprep.mubr.bf16.mxu0 0
  %576 = vmatmul.mubr.bf16.gmra.mrb[0].mxu0 %v490
  %v577 = vpop.f32.mrb[0].mxu0
  %v578 = vadd.f32 0.0, %v577
  %v579 = vpop.f32.mrb[0].mxu0
  %v580 = vpop.f32.mrb[0].mxu0
  %v581 = vadd.f32 0.0, %v580
  %v582 = vpop.f32.mrb[0].mxu0
  %583 = vmatprep.mubr.bf16.mxu0 0
  %584 = vmatmul.mubr.bf16.gmra.mrb[0].mxu0 %v493
  %v585 = vpop.f32.mrb[0].mxu0
  %v586 = vadd.f32 0.0, %v585
  %v587 = vpop.f32.mrb[0].mxu0
  %v588 = vpop.f32.mrb[0].mxu0
  %v589 = vadd.f32 0.0, %v588
  %v590 = vpop.f32.mrb[0].mxu0
  %591 = vdwg.mxu0
  %v592 = vadd.f32 %v345, %v530
  %v593 = vadd.f32 %v348, %v533
  %v594 = vadd.f32 %v353, %v538
  %v595 = vadd.f32 %v356, %v541
  %v596 = vadd.f32 %v361, %v546
  %v597 = vadd.f32 %v364, %v549
  %v598 = vadd.f32 %v369, %v554
  %v599 = vadd.f32 %v372, %v557
  %v600 = vadd.f32 %v377, %v562
  %v601 = vadd.f32 %v380, %v565
  %v602 = vadd.f32 %v385, %v570
  %v603 = vadd.f32 %v388, %v573
  %v604 = vadd.f32 %v393, %v578
  %v605 = vadd.f32 %v396, %v581
  %v606 = vadd.f32 %v401, %v586
  %v607 = vadd.f32 %v404, %v589
  %v608 = vld [vmem:[%s3] sm:$0xf]
  %v609 = vld [vmem:[%s3 + $0x4] sm:$0xf]
  %v610 = vld [vmem:[%s3 + $0x8] sm:$0xf]
  %v611 = vld [vmem:[%s3 + $0xc] sm:$0xf]
  %v612 = vld [vmem:[%s3 + $0x10] sm:$0xf]
  %v613 = vld [vmem:[%s3 + $0x14] sm:$0xf]
  %v614 = vld [vmem:[%s3 + $0x18] sm:$0xf]
  %v615 = vld [vmem:[%s3 + $0x1c] sm:$0xf]
  %v616 = vld [vmem:[%s3 + $0x20] sm:$0xf]
  %v617 = vld [vmem:[%s3 + $0x24] sm:$0xf]
  %v618 = vld [vmem:[%s3 + $0x28] sm:$0xf]
  %v619 = vld [vmem:[%s3 + $0x2c] sm:$0xf]
  %v620 = vld [vmem:[%s3 + $0x30] sm:$0xf]
  %v621 = vld [vmem:[%s3 + $0x34] sm:$0xf]
  %v622 = vld [vmem:[%s3 + $0x38] sm:$0xf]
  %v623 = vld [vmem:[%s3 + $0x3c] sm:$0xf]
  %v624 = vld [vmem:[%s7] sm:$0xf]
  %v625 = vld [vmem:[%s7 + $0x4] sm:$0xf]
  %v642 = vunpack.c.l.b16 %v608
  %v643 = vunpack.c.l.b16 %v609
  %v644 = vunpack.c.l.b16 %v610
  %v645 = vunpack.c.l.b16 %v611
  %v646 = vunpack.c.l.b16 %v612
  %v647 = vunpack.c.l.b16 %v613
  %v648 = vunpack.c.l.b16 %v614
  %v649 = vunpack.c.l.b16 %v615
  %v650 = vunpack.c.l.b16 %v616
  %v651 = vunpack.c.l.b16 %v617
  %v652 = vunpack.c.l.b16 %v618
  %v653 = vunpack.c.l.b16 %v619
  %v654 = vunpack.c.l.b16 %v620
  %v655 = vunpack.c.l.b16 %v621
  %v656 = vunpack.c.l.b16 %v622
  %v657 = vunpack.c.l.b16 %v623
  %v658 = vpack.c.b16 %v643, %v642
  %v659 = vpack.c.b16 %v645, %v644
  %v660 = vpack.c.b16 %v647, %v646
  %v661 = vpack.c.b16 %v649, %v648
  %v662 = vpack.c.b16 %v651, %v650
  %v663 = vpack.c.b16 %v653, %v652
  %v664 = vpack.c.b16 %v655, %v654
  %v665 = vpack.c.b16 %v657, %v656
  %v668 = vunpack.c.l.b16 %v624
  %v669 = vunpack.c.l.b16 %v625
  %v670 = vpack.c.b16 %v669, %v668
  %v673 = vsel %vm118, %v658, 0
  %v676 = vsel %vm118, %v659, 0
  %v679 = vsel %vm118, %v660, 0
  %v682 = vsel %vm118, %v661, 0
  %v685 = vsel %vm118, %v662, 0
  %v688 = vsel %vm118, %v663, 0
  %v691 = vsel %vm118, %v664, 0
  %v694 = vsel %vm118, %v665, 0
  %696 = vmatprep.subr.bf16.mxu0 0
  %697 = vmatpush1.bf16.msra.mxu0 %v670
  %698 = vmatprep.subr.bf16.mxu0 0
  %699 = vmatpush1.bf16.msra.mxu0 0
  %700 = vmatprep.subr.bf16.mxu0 0
  %701 = vmatpush1.bf16.msra.mxu0 0
  %702 = vmatprep.subr.bf16.mxu0 0
  %703 = vmatpush1.bf16.msra.mxu0 0
  %704 = vmatprep.subr.bf16.mxu0 0
  %705 = vmatpush1.bf16.msra.mxu0 0
  %706 = vmatprep.subr.bf16.mxu0 0
  %707 = vmatpush1.bf16.msra.mxu0 0
  %708 = vmatprep.subr.bf16.mxu0 0
  %709 = vmatpush1.bf16.msra.mxu0 0
  %710 = vmatprep.subr.bf16.mxu0 0
  %711 = vmatpush1.bf16.msra.mxu0 0
  %712 = vmatprep.subr.bf16.mxu0 0
  %713 = vmatpush1.bf16.msra.mxu0 0
  %714 = vmatprep.subr.bf16.mxu0 0
  %715 = vmatpush1.bf16.msra.mxu0 0
  %716 = vmatprep.subr.bf16.mxu0 0
  %717 = vmatpush1.bf16.msra.mxu0 0
  %718 = vmatprep.subr.bf16.mxu0 0
  %719 = vmatpush1.bf16.msra.mxu0 0
  %720 = vmatprep.subr.bf16.mxu0 0
  %721 = vmatpush1.bf16.msra.mxu0 0
  %722 = vmatprep.subr.bf16.mxu0 0
  %723 = vmatpush1.bf16.msra.mxu0 0
  %724 = vmatprep.subr.bf16.mxu0 0
  %725 = vmatpush1.bf16.msra.mxu0 0
  %726 = vmatprep.subr.bf16.mxu0 0
  %727 = vmatpush1.bf16.msra.mxu0 0
  %728 = vmatprep.mubr.bf16.mxu0 0
  %729 = vmatmul.mubr.bf16.gmra.mrb[0].mxu0 %v673
  %v730 = vpop.f32.mrb[0].mxu0
  %v731 = vadd.f32 0.0, %v730
  %v732 = vpop.f32.mrb[0].mxu0
  %v733 = vpop.f32.mrb[0].mxu0
  %v734 = vadd.f32 0.0, %v733
  %v735 = vpop.f32.mrb[0].mxu0
  %736 = vmatprep.mubr.bf16.mxu0 0
  %737 = vmatmul.mubr.bf16.gmra.mrb[0].mxu0 %v676
  %v738 = vpop.f32.mrb[0].mxu0
  %v739 = vadd.f32 0.0, %v738
  %v740 = vpop.f32.mrb[0].mxu0
  %v741 = vpop.f32.mrb[0].mxu0
  %v742 = vadd.f32 0.0, %v741
  %v743 = vpop.f32.mrb[0].mxu0
  %744 = vmatprep.mubr.bf16.mxu0 0
  %745 = vmatmul.mubr.bf16.gmra.mrb[0].mxu0 %v679
  %v746 = vpop.f32.mrb[0].mxu0
  %v747 = vadd.f32 0.0, %v746
  %v748 = vpop.f32.mrb[0].mxu0
  %v749 = vpop.f32.mrb[0].mxu0
  %v750 = vadd.f32 0.0, %v749
  %v751 = vpop.f32.mrb[0].mxu0
  %752 = vmatprep.mubr.bf16.mxu0 0
  %753 = vmatmul.mubr.bf16.gmra.mrb[0].mxu0 %v682
  %v754 = vpop.f32.mrb[0].mxu0
  %v755 = vadd.f32 0.0, %v754
  %v756 = vpop.f32.mrb[0].mxu0
  %v757 = vpop.f32.mrb[0].mxu0
  %v758 = vadd.f32 0.0, %v757
  %v759 = vpop.f32.mrb[0].mxu0
  %760 = vmatprep.mubr.bf16.mxu0 0
  %761 = vmatmul.mubr.bf16.gmra.mrb[0].mxu0 %v685
  %v762 = vpop.f32.mrb[0].mxu0
  %v763 = vadd.f32 0.0, %v762
  %v764 = vpop.f32.mrb[0].mxu0
  %v765 = vpop.f32.mrb[0].mxu0
  %v766 = vadd.f32 0.0, %v765
  %v767 = vpop.f32.mrb[0].mxu0
  %768 = vmatprep.mubr.bf16.mxu0 0
  %769 = vmatmul.mubr.bf16.gmra.mrb[0].mxu0 %v688
  %v770 = vpop.f32.mrb[0].mxu0
  %v771 = vadd.f32 0.0, %v770
  %v772 = vpop.f32.mrb[0].mxu0
  %v773 = vpop.f32.mrb[0].mxu0
  %v774 = vadd.f32 0.0, %v773
  %v775 = vpop.f32.mrb[0].mxu0
  %776 = vmatprep.mubr.bf16.mxu0 0
  %777 = vmatmul.mubr.bf16.gmra.mrb[0].mxu0 %v691
  %v778 = vpop.f32.mrb[0].mxu0
  %v779 = vadd.f32 0.0, %v778
  %v780 = vpop.f32.mrb[0].mxu0
  %v781 = vpop.f32.mrb[0].mxu0
  %v782 = vadd.f32 0.0, %v781
  %v783 = vpop.f32.mrb[0].mxu0
  %784 = vmatprep.mubr.bf16.mxu0 0
  %785 = vmatmul.mubr.bf16.gmra.mrb[0].mxu0 %v694
  %v786 = vpop.f32.mrb[0].mxu0
  %v787 = vadd.f32 0.0, %v786
  %v788 = vpop.f32.mrb[0].mxu0
  %v789 = vpop.f32.mrb[0].mxu0
  %v790 = vadd.f32 0.0, %v789
  %v791 = vpop.f32.mrb[0].mxu0
  %792 = vdwg.mxu0
  %v793 = vadd.f32 %v592, %v731
  %v794 = vadd.f32 %v593, %v734
  %v795 = vadd.f32 %v594, %v739
  %v796 = vadd.f32 %v595, %v742
  %v797 = vadd.f32 %v596, %v747
  %v798 = vadd.f32 %v597, %v750
  %v799 = vadd.f32 %v598, %v755
  %v800 = vadd.f32 %v599, %v758
  %v801 = vadd.f32 %v600, %v763
  %v802 = vadd.f32 %v601, %v766
  %v803 = vadd.f32 %v602, %v771
  %v804 = vadd.f32 %v603, %v774
  %v805 = vadd.f32 %v604, %v779
  %v806 = vadd.f32 %v605, %v782
  %v807 = vadd.f32 %v606, %v787
  %v808 = vadd.f32 %v607, %v790
  %v809 = vld [vmem:[%s8] sm:$0x1]
  %v811 = vlaneseq
  %v812 = vshrl.u32 %v811, 7
  %v813 = vsub.s32 0, %v812
  %v814 = vrot.slane %v809, %v813
  %v816 = vadd.f32 %v793, %v814
  %v817 = vadd.f32 %v794, %v814
  %v818 = vadd.f32 %v795, %v814
  %v819 = vadd.f32 %v796, %v814
  %v820 = vadd.f32 %v797, %v814
  %v821 = vadd.f32 %v798, %v814
  %v822 = vadd.f32 %v799, %v814
  %v823 = vadd.f32 %v800, %v814
  %v824 = vadd.f32 %v801, %v814
  %v825 = vadd.f32 %v802, %v814
  %v826 = vadd.f32 %v803, %v814
  %v827 = vadd.f32 %v804, %v814
  %v828 = vadd.f32 %v805, %v814
  %v829 = vadd.f32 %v806, %v814
  %v830 = vadd.f32 %v807, %v814
  %v831 = vadd.f32 %v808, %v814
  %vm832 = vcmask 261120
  %v833 = vsel %vm832, %v816, 0.0
  %v834 = vsel %vm832, %v817, 0.0
  %v835 = vadd.f32 %v833, %v834
  %v836 = vsel %vm832, %v818, 0.0
  %v837 = vadd.f32 %v835, %v836
  %v838 = vsel %vm832, %v819, 0.0
  %v839 = vadd.f32 %v837, %v838
  %v840 = vsel %vm832, %v820, 0.0
  %v841 = vadd.f32 %v839, %v840
  %v842 = vsel %vm832, %v821, 0.0
  %v843 = vadd.f32 %v841, %v842
  %v844 = vsel %vm832, %v822, 0.0
  %v845 = vadd.f32 %v843, %v844
  %v846 = vsel %vm832, %v823, 0.0
  %v847 = vadd.f32 %v845, %v846
  %v848 = vsel %vm832, %v824, 0.0
  %v849 = vadd.f32 %v847, %v848
  %v850 = vsel %vm832, %v825, 0.0
  %v851 = vadd.f32 %v849, %v850
  %v852 = vsel %vm832, %v826, 0.0
  %v853 = vadd.f32 %v851, %v852
  %v854 = vsel %vm832, %v827, 0.0
  %v855 = vadd.f32 %v853, %v854
  %v856 = vsel %vm832, %v828, 0.0
  %v857 = vadd.f32 %v855, %v856
  %v858 = vsel %vm832, %v829, 0.0
  %v859 = vadd.f32 %v857, %v858
  %v860 = vsel %vm832, %v830, 0.0
  %v861 = vadd.f32 %v859, %v860
  %v862 = vsel %vm832, %v831, 0.0
  %v863 = vadd.f32 %v861, %v862
  %v864 = vrot.slane %v863, 4
  %v865 = vadd.f32 %v863, %v864
  %v866 = vrot.slane %v865, 2
  %v867 = vadd.f32 %v865, %v866
  %v868 = vrot.slane %v867, 1
  %v869 = vadd.f32 %v867, %v868
  %vm870 = vcmask 253952
  %871 = vst.msk [vmem:[%s10] sm:$0x1] %vm870, %v869
  %v872 = vmul.f32 %v816, %v816
  %v873 = vmul.f32 %v817, %v817
  %v874 = vmul.f32 %v818, %v818
  %v875 = vmul.f32 %v819, %v819
  %v876 = vmul.f32 %v820, %v820
  %v877 = vmul.f32 %v821, %v821
  %v878 = vmul.f32 %v822, %v822
  %v879 = vmul.f32 %v823, %v823
  %v880 = vmul.f32 %v824, %v824
  %v881 = vmul.f32 %v825, %v825
  %v882 = vmul.f32 %v826, %v826
  %v883 = vmul.f32 %v827, %v827
  %v884 = vmul.f32 %v828, %v828
  %v885 = vmul.f32 %v829, %v829
  %v886 = vmul.f32 %v830, %v830
  %v887 = vmul.f32 %v831, %v831
  %v888 = vsel %vm832, %v872, 0.0
  %v889 = vsel %vm832, %v873, 0.0
  %v890 = vadd.f32 %v888, %v889
  %v891 = vsel %vm832, %v874, 0.0
  %v892 = vadd.f32 %v890, %v891
  %v893 = vsel %vm832, %v875, 0.0
  %v894 = vadd.f32 %v892, %v893
  %v895 = vsel %vm832, %v876, 0.0
  %v896 = vadd.f32 %v894, %v895
  %v897 = vsel %vm832, %v877, 0.0
  %v898 = vadd.f32 %v896, %v897
  %v899 = vsel %vm832, %v878, 0.0
  %v900 = vadd.f32 %v898, %v899
  %v901 = vsel %vm832, %v879, 0.0
  %v902 = vadd.f32 %v900, %v901
  %v903 = vsel %vm832, %v880, 0.0
  %v904 = vadd.f32 %v902, %v903
  %v905 = vsel %vm832, %v881, 0.0
  %v906 = vadd.f32 %v904, %v905
  %v907 = vsel %vm832, %v882, 0.0
  %v908 = vadd.f32 %v906, %v907
  %v909 = vsel %vm832, %v883, 0.0
  %v910 = vadd.f32 %v908, %v909
  %v911 = vsel %vm832, %v884, 0.0
  %v912 = vadd.f32 %v910, %v911
  %v913 = vsel %vm832, %v885, 0.0
  %v914 = vadd.f32 %v912, %v913
  %v915 = vsel %vm832, %v886, 0.0
  %v916 = vadd.f32 %v914, %v915
  %v917 = vsel %vm832, %v887, 0.0
  %v918 = vadd.f32 %v916, %v917
  %v919 = vrot.slane %v918, 4
  %v920 = vadd.f32 %v918, %v919
  %v921 = vrot.slane %v920, 2
  %v922 = vadd.f32 %v920, %v921
  %v923 = vrot.slane %v922, 1
  %v924 = vadd.f32 %v922, %v923
  %925 = vst.msk [vmem:[%s11] sm:$0x1] %vm870, %v924
  %v926 = vpack.c.bf16 %v817, %v816
  %v927 = vpack.c.bf16 %v819, %v818
  %v928 = vpack.c.bf16 %v821, %v820
  %v929 = vpack.c.bf16 %v823, %v822
  %v930 = vpack.c.bf16 %v825, %v824
  %v931 = vpack.c.bf16 %v827, %v826
  %v932 = vpack.c.bf16 %v829, %v828
  %v933 = vpack.c.bf16 %v831, %v830
  %v942 = vunpack.c.l.b16 %v926
  %v943 = vunpack.c.h.b16 %v926
  %v944 = vunpack.c.l.b16 %v927
  %v945 = vunpack.c.h.b16 %v927
  %v946 = vunpack.c.l.b16 %v928
  %v947 = vunpack.c.h.b16 %v928
  %v948 = vunpack.c.l.b16 %v929
  %v949 = vunpack.c.h.b16 %v929
  %v950 = vunpack.c.l.b16 %v930
  %v951 = vunpack.c.h.b16 %v930
  %v952 = vunpack.c.l.b16 %v931
  %v953 = vunpack.c.h.b16 %v931
  %v954 = vunpack.c.l.b16 %v932
  %v955 = vunpack.c.h.b16 %v932
  %v956 = vunpack.c.l.b16 %v933
  %v957 = vunpack.c.h.b16 %v933
  %v958 = vpack.c.b16 %v942, %v942
  %v959 = vpack.c.b16 %v943, %v943
  %v960 = vpack.c.b16 %v944, %v944
  %v961 = vpack.c.b16 %v945, %v945
  %v962 = vpack.c.b16 %v946, %v946
  %v963 = vpack.c.b16 %v947, %v947
  %v964 = vpack.c.b16 %v948, %v948
  %v965 = vpack.c.b16 %v949, %v949
  %v966 = vpack.c.b16 %v950, %v950
  %v967 = vpack.c.b16 %v951, %v951
  %v968 = vpack.c.b16 %v952, %v952
  %v969 = vpack.c.b16 %v953, %v953
  %v970 = vpack.c.b16 %v954, %v954
  %v971 = vpack.c.b16 %v955, %v955
  %v972 = vpack.c.b16 %v956, %v956
  %v973 = vpack.c.b16 %v957, %v957
  %vm990 = vcmask 257024
  %991 = vst.msk [vmem:[%s9] sm:$0xf] %vm990, %v958
  %992 = vst.msk [vmem:[%s9 + $0x4] sm:$0xf] %vm990, %v959
  %993 = vst.msk [vmem:[%s9 + $0x8] sm:$0xf] %vm990, %v960
  %994 = vst.msk [vmem:[%s9 + $0xc] sm:$0xf] %vm990, %v961
  %995 = vst.msk [vmem:[%s9 + $0x10] sm:$0xf] %vm990, %v962
  %996 = vst.msk [vmem:[%s9 + $0x14] sm:$0xf] %vm990, %v963
  %997 = vst.msk [vmem:[%s9 + $0x18] sm:$0xf] %vm990, %v964
  %998 = vst.msk [vmem:[%s9 + $0x1c] sm:$0xf] %vm990, %v965
  %999 = vst.msk [vmem:[%s9 + $0x20] sm:$0xf] %vm990, %v966
  %1000 = vst.msk [vmem:[%s9 + $0x24] sm:$0xf] %vm990, %v967
  %1001 = vst.msk [vmem:[%s9 + $0x28] sm:$0xf] %vm990, %v968
  %1002 = vst.msk [vmem:[%s9 + $0x2c] sm:$0xf] %vm990, %v969
  %1003 = vst.msk [vmem:[%s9 + $0x30] sm:$0xf] %vm990, %v970
  %1004 = vst.msk [vmem:[%s9 + $0x34] sm:$0xf] %vm990, %v971
  %1005 = vst.msk [vmem:[%s9 + $0x38] sm:$0xf] %vm990, %v972
  %1006 = vst.msk [vmem:[%s9 + $0x3c] sm:$0xf] %vm990, %v973
  // Predicated region
  $region38: #{resnet_generator_forward.35} parent=0 // pred_check
    _
  $region39: #{resnet_generator_forward.35} parent=0 // pred_check_branch
    %1008 = sbr.rel (0) target = $region41
  $region40: #{resnet_generator_forward.35} parent=0 // pred_region
    _
  $region41: #{resnet_generator_forward.35} parent=0 // pred_fallthru
    _
  // Predicated region
  $region42: #{resnet_generator_forward.35} parent=0 // pred_check
    _
  $region43: #{resnet_generator_forward.35} parent=0 // pred_check_branch
    %1010 = sbr.rel (0) target = $region45
  $region44: #{resnet_generator_forward.35} parent=0 // pred_region
    _
  $region45: #{resnet_generator_forward.35} parent=0 // pred_fallthru
    _
  // Predicated region
  $region46: #{resnet_generator_forward.35} parent=0 // pred_check
    _
  $region47: #{resnet_generator_forward.35} parent=0 // pred_check_branch
    %1012 = sbr.rel (0) target = $region49
  $region48: #{resnet_generator_forward.35} parent=0 // pred_region
    _
  $region49: #{resnet_generator_forward.35} parent=0 // pred_fallthru
    _
  // Predicated region
  $region50: #{resnet_generator_forward.35} parent=0 // pred_check
    _
  $region51: #{resnet_generator_forward.35} parent=0 // pred_check_branch
    %1014 = sbr.rel (0) target = $region53
  $region52: #{resnet_generator_forward.35} parent=0 // pred_region
    _
  $region53: #{resnet_generator_forward.35} parent=0 // pred_fallthru
    _
  // Predicated region
  $region54: #{resnet_generator_forward.35} parent=0 // pred_check
    _
  $region55: #{resnet_generator_forward.35} parent=0 // pred_check_branch
    %1016 = sbr.rel (0) target = $region57
  $region56: #{resnet_generator_forward.35} parent=0 // pred_region
    _
  $region57: #{resnet_generator_forward.35} parent=0 // pred_fallthru
    _
  // Predicated region
  $region58: #{resnet_generator_forward.35} parent=0 // pred_check
    _
  $region59: #{resnet_generator_forward.35} parent=0 // pred_check_branch
    %1018 = sbr.rel (0) target = $region61
  $region60: #{resnet_generator_forward.35} parent=0 // pred_region
    _
  $region61: #{resnet_generator_forward.35} parent=0 // pred_fallthru
    _

// kernel: resnet_generator_forward.37
$region0: #{resnet_generator_forward.37}
  #allocation0 [shape = 'u32[]', space=smem, size = 0x4, offset = 0x4, fixed_abs, tag = 'smem constant byte address 0x4 - core index']
  #allocation1 [shape = 'u32[144,128]{1,0:T(1,128)}', space=vmem, size = 0x12000, scoped, tag = 'internal scratch']
  %s0 = inlined_call_operand.vmem [shape: bf16[512,392], index: 0, kind: input, shape index: {}]
  %s1 = inlined_call_operand.vmem [shape: bf16[392,3], index: 1, kind: input, shape index: {}]
  %s2 = inlined_call_operand.vmem [shape: f32[1,3], index: 2, kind: input, shape index: {}]
  %s3 = inlined_call_operand.vmem [shape: f32[512,3], index: 3, kind: output, shape index: {}]
  %s4 = sld [smem:[#allocation0]]
  $region22: #{resnet_generator_forward.37} parent=0
    _
  %s6 = ssub.s32 1, %s4
  %s7 = scalar_select 0, %s6, %s4
  // Predicated region
  $region2: #{resnet_generator_forward.37} parent=0 // pred_check
    _
  $region3: #{resnet_generator_forward.37} parent=0 // pred_check_branch
    %9 = sbr.rel (0) target = $region5
  $region4: #{resnet_generator_forward.37} parent=0 // pred_region
    _
  $region5: #{resnet_generator_forward.37} parent=0 // pred_fallthru
    _
  // Predicated region
  $region6: #{resnet_generator_forward.37} parent=0 // pred_check
    _
  $region7: #{resnet_generator_forward.37} parent=0 // pred_check_branch
    %11 = sbr.rel (0) target = $region9
  $region8: #{resnet_generator_forward.37} parent=0 // pred_region
    _
  $region9: #{resnet_generator_forward.37} parent=0 // pred_fallthru
    _
  // Predicated region
  $region10: #{resnet_generator_forward.37} parent=0 // pred_check
    _
  $region11: #{resnet_generator_forward.37} parent=0 // pred_check_branch
    %13 = sbr.rel (0) target = $region13
  $region12: #{resnet_generator_forward.37} parent=0 // pred_region
    _
  $region13: #{resnet_generator_forward.37} parent=0 // pred_fallthru
    _
  %v15 = vld [vmem:[%s0] sm:$0xff]
  %v16 = vld [vmem:[%s0 + $0x8] sm:$0xff]
  %v17 = vld [vmem:[%s0 + $0x10] sm:$0xff]
  %v18 = vld [vmem:[%s0 + $0x18] sm:$0xff]
  %v19 = vld [vmem:[%s0 + $0x20] sm:$0xff]
  %v20 = vld [vmem:[%s0 + $0x28] sm:$0xff]
  %v21 = vld [vmem:[%s0 + $0x30] sm:$0xff]
  %v22 = vld [vmem:[%s0 + $0x38] sm:$0xff]
  %v23 = vld [vmem:[%s0 + $0x40] sm:$0xff]
  %v24 = vld [vmem:[%s0 + $0x48] sm:$0xff]
  %v25 = vld [vmem:[%s0 + $0x50] sm:$0xff]
  %v26 = vld [vmem:[%s0 + $0x58] sm:$0xff]
  %v27 = vld [vmem:[%s0 + $0x60] sm:$0xff]
  %v28 = vld [vmem:[%s0 + $0x68] sm:$0xff]
  %v29 = vld [vmem:[%s0 + $0x70] sm:$0xff]
  %v30 = vld [vmem:[%s0 + $0x78] sm:$0xff]
  %v31 = vld [vmem:[%s0 + $0x80] sm:$0xff]
  %v32 = vld [vmem:[%s0 + $0x88] sm:$0xff]
  %v33 = vld [vmem:[%s0 + $0x90] sm:$0xff]
  %v34 = vld [vmem:[%s0 + $0x98] sm:$0xff]
  %v35 = vld [vmem:[%s0 + $0xa0] sm:$0xff]
  %v36 = vld [vmem:[%s0 + $0xa8] sm:$0xff]
  %v37 = vld [vmem:[%s0 + $0xb0] sm:$0xff]
  %v38 = vld [vmem:[%s0 + $0xb8] sm:$0xff]
  %v39 = vld [vmem:[%s0 + $0xc0] sm:$0xff]
  %v40 = vld [vmem:[%s0 + $0xc8] sm:$0xff]
  %v41 = vld [vmem:[%s0 + $0xd0] sm:$0xff]
  %v42 = vld [vmem:[%s0 + $0xd8] sm:$0xff]
  %v43 = vld [vmem:[%s0 + $0xe0] sm:$0xff]
  %v44 = vld [vmem:[%s0 + $0xe8] sm:$0xff]
  %v45 = vld [vmem:[%s0 + $0xf0] sm:$0xff]
  %v46 = vld [vmem:[%s0 + $0xf8] sm:$0xff]
  %v47 = vld [vmem:[%s0 + $0x100] sm:$0xff]
  %v48 = vld [vmem:[%s0 + $0x108] sm:$0xff]
  %v49 = vld [vmem:[%s0 + $0x110] sm:$0xff]
  %v50 = vld [vmem:[%s0 + $0x118] sm:$0xff]
  %v51 = vld [vmem:[%s0 + $0x120] sm:$0xff]
  %v52 = vld [vmem:[%s0 + $0x128] sm:$0xff]
  %v53 = vld [vmem:[%s0 + $0x130] sm:$0xff]
  %v54 = vld [vmem:[%s0 + $0x138] sm:$0xff]
  %v55 = vld [vmem:[%s0 + $0x140] sm:$0xff]
  %v56 = vld [vmem:[%s0 + $0x148] sm:$0xff]
  %v57 = vld [vmem:[%s0 + $0x150] sm:$0xff]
  %v58 = vld [vmem:[%s0 + $0x158] sm:$0xff]
  %v59 = vld [vmem:[%s0 + $0x160] sm:$0xff]
  %v60 = vld [vmem:[%s0 + $0x168] sm:$0xff]
  %v61 = vld [vmem:[%s0 + $0x170] sm:$0xff]
  %v62 = vld [vmem:[%s0 + $0x178] sm:$0xff]
  %v63 = vld [vmem:[%s0 + $0x180] sm:$0xff]
  %v64 = vld [vmem:[%s0 + $0x188] sm:$0xff]
  %v65 = vld [vmem:[%s0 + $0x190] sm:$0xff]
  %v66 = vld [vmem:[%s0 + $0x198] sm:$0xff]
  %v67 = vld [vmem:[%s0 + $0x1a0] sm:$0xff]
  %v68 = vld [vmem:[%s0 + $0x1a8] sm:$0xff]
  %v69 = vld [vmem:[%s0 + $0x1b0] sm:$0xff]
  %v70 = vld [vmem:[%s0 + $0x1b8] sm:$0xff]
  %v71 = vld [vmem:[%s0 + $0x1c0] sm:$0xff]
  %v72 = vld [vmem:[%s0 + $0x1c8] sm:$0xff]
  %v73 = vld [vmem:[%s0 + $0x1d0] sm:$0xff]
  %v74 = vld [vmem:[%s0 + $0x1d8] sm:$0xff]
  %v75 = vld [vmem:[%s0 + $0x1e0] sm:$0xff]
  %v76 = vld [vmem:[%s0 + $0x1e8] sm:$0xff]
  %v77 = vld [vmem:[%s0 + $0x1f0] sm:$0xff]
  %v78 = vld [vmem:[%s0 + $0x1f8] sm:$0xff]
  %v79 = vld [vmem:[%s0 + $0x200] sm:$0xff]
  %v80 = vld [vmem:[%s0 + $0x208] sm:$0xff]
  %v81 = vld [vmem:[%s0 + $0x210] sm:$0xff]
  %v82 = vld [vmem:[%s0 + $0x218] sm:$0xff]
  %v83 = vld [vmem:[%s0 + $0x220] sm:$0xff]
  %v84 = vld [vmem:[%s0 + $0x228] sm:$0xff]
  %v85 = vld [vmem:[%s0 + $0x230] sm:$0xff]
  %v86 = vld [vmem:[%s0 + $0x238] sm:$0xff]
  %v87 = vld [vmem:[%s0 + $0x240] sm:$0xff]
  %v88 = vld [vmem:[%s0 + $0x248] sm:$0xff]
  %v89 = vld [vmem:[%s0 + $0x250] sm:$0xff]
  %v90 = vld [vmem:[%s0 + $0x258] sm:$0xff]
  %v91 = vld [vmem:[%s0 + $0x260] sm:$0xff]
  %v92 = vld [vmem:[%s0 + $0x268] sm:$0xff]
  %v93 = vld [vmem:[%s0 + $0x270] sm:$0xff]
  %v94 = vld [vmem:[%s0 + $0x278] sm:$0xff]
  %v95 = vld [vmem:[%s0 + $0x280] sm:$0xff]
  %v96 = vld [vmem:[%s0 + $0x288] sm:$0xff]
  %v97 = vld [vmem:[%s0 + $0x290] sm:$0xff]
  %v98 = vld [vmem:[%s0 + $0x298] sm:$0xff]
  %v99 = vld [vmem:[%s0 + $0x2a0] sm:$0xff]
  %v100 = vld [vmem:[%s0 + $0x2a8] sm:$0xff]
  %v101 = vld [vmem:[%s0 + $0x2b0] sm:$0xff]
  %v102 = vld [vmem:[%s0 + $0x2b8] sm:$0xff]
  %v103 = vld [vmem:[%s0 + $0x2c0] sm:$0xff]
  %v104 = vld [vmem:[%s0 + $0x2c8] sm:$0xff]
  %v105 = vld [vmem:[%s0 + $0x2d0] sm:$0xff]
  %v106 = vld [vmem:[%s0 + $0x2d8] sm:$0xff]
  %v107 = vld [vmem:[%s0 + $0x2e0] sm:$0xff]
  %v108 = vld [vmem:[%s0 + $0x2e8] sm:$0xff]
  %v109 = vld [vmem:[%s0 + $0x2f0] sm:$0xff]
  %v110 = vld [vmem:[%s0 + $0x2f8] sm:$0xff]
  %v111 = vld [vmem:[%s0 + $0x300] sm:$0xff]
  %v112 = vld [vmem:[%s0 + $0x308] sm:$0xff]
  %v113 = vld [vmem:[%s0 + $0x310] sm:$0xff]
  %v114 = vld [vmem:[%s0 + $0x318] sm:$0xff]
  %v115 = vld [vmem:[%s0 + $0x320] sm:$0xff]
  %v116 = vld [vmem:[%s0 + $0x328] sm:$0xff]
  %v117 = vld [vmem:[%s0 + $0x330] sm:$0xff]
  %v118 = vld [vmem:[%s0 + $0x338] sm:$0xff]
  %v119 = vld [vmem:[%s0 + $0x340] sm:$0xff]
  %v120 = vld [vmem:[%s0 + $0x348] sm:$0xff]
  %v121 = vld [vmem:[%s0 + $0x350] sm:$0xff]
  %v122 = vld [vmem:[%s0 + $0x358] sm:$0xff]
  %v123 = vld [vmem:[%s0 + $0x360] sm:$0xff]
  %v124 = vld [vmem:[%s0 + $0x368] sm:$0xff]
  %v125 = vld [vmem:[%s0 + $0x370] sm:$0xff]
  %v126 = vld [vmem:[%s0 + $0x378] sm:$0xff]
  %v127 = vld [vmem:[%s0 + $0x380] sm:$0xff]
  %v128 = vld [vmem:[%s0 + $0x388] sm:$0xff]
  %v129 = vld [vmem:[%s0 + $0x390] sm:$0xff]
  %v130 = vld [vmem:[%s0 + $0x398] sm:$0xff]
  %v131 = vld [vmem:[%s0 + $0x3a0] sm:$0xff]
  %v132 = vld [vmem:[%s0 + $0x3a8] sm:$0xff]
  %v133 = vld [vmem:[%s0 + $0x3b0] sm:$0xff]
  %v134 = vld [vmem:[%s0 + $0x3b8] sm:$0xff]
  %v135 = vld [vmem:[%s0 + $0x3c0] sm:$0xff]
  %v136 = vld [vmem:[%s0 + $0x3c8] sm:$0xff]
  %v137 = vld [vmem:[%s0 + $0x3d0] sm:$0xff]
  %v138 = vld [vmem:[%s0 + $0x3d8] sm:$0xff]
  %v139 = vld [vmem:[%s0 + $0x3e0] sm:$0xff]
  %v140 = vld [vmem:[%s0 + $0x3e8] sm:$0xff]
  %v141 = vld [vmem:[%s0 + $0x3f0] sm:$0xff]
  %v142 = vld [vmem:[%s0 + $0x3f8] sm:$0xff]
  %v143 = vld [vmem:[%s1] sm:$0xf]
  %v144 = vld [vmem:[%s1 + $0x4] sm:$0xf]
  %v145 = vld [vmem:[%s1 + $0x8] sm:$0xf]
  %v146 = vld [vmem:[%s1 + $0xc] sm:$0xf]
  %v147 = vld [vmem:[%s1 + $0x10] sm:$0xf]
  %v148 = vld [vmem:[%s1 + $0x14] sm:$0xf]
  %v149 = vld [vmem:[%s1 + $0x18] sm:$0xf]
  %v150 = vld [vmem:[%s1 + $0x1c] sm:$0xf]
  %v151 = vld [vmem:[%s1 + $0x20] sm:$0xf]
  %v152 = vld [vmem:[%s1 + $0x24] sm:$0xf]
  %v153 = vld [vmem:[%s1 + $0x28] sm:$0xf]
  %v154 = vld [vmem:[%s1 + $0x2c] sm:$0xf]
  %v155 = vld [vmem:[%s1 + $0x30] sm:$0xf]
  %v156 = vld [vmem:[%s1 + $0x34] sm:$0xf]
  %v157 = vld [vmem:[%s1 + $0x38] sm:$0xf]
  %v158 = vld [vmem:[%s1 + $0x3c] sm:$0xf]
  %v159 = vld [vmem:[%s1 + $0x40] sm:$0xf]
  %v160 = vld [vmem:[%s1 + $0x44] sm:$0xf]
  %v161 = vld [vmem:[%s1 + $0x48] sm:$0xf]
  %v162 = vld [vmem:[%s1 + $0x4c] sm:$0xf]
  %v163 = vld [vmem:[%s1 + $0x50] sm:$0xf]
  %v164 = vld [vmem:[%s1 + $0x54] sm:$0xf]
  %v165 = vld [vmem:[%s1 + $0x58] sm:$0xf]
  %v166 = vld [vmem:[%s1 + $0x5c] sm:$0xf]
  %v167 = vld [vmem:[%s1 + $0x60] sm:$0xf]
  %v168 = vld [vmem:[%s1 + $0x64] sm:$0xf]
  %v169 = vld [vmem:[%s1 + $0x68] sm:$0xf]
  %v170 = vld [vmem:[%s1 + $0x6c] sm:$0xf]
  %v171 = vld [vmem:[%s1 + $0x70] sm:$0xf]
  %v172 = vld [vmem:[%s1 + $0x74] sm:$0xf]
  %v173 = vld [vmem:[%s1 + $0x78] sm:$0xf]
  %v174 = vld [vmem:[%s1 + $0x7c] sm:$0xf]
  %v175 = vld [vmem:[%s1 + $0x80] sm:$0xf]
  %v176 = vld [vmem:[%s1 + $0x84] sm:$0xf]
  %v177 = vld [vmem:[%s1 + $0x88] sm:$0xf]
  %v178 = vld [vmem:[%s1 + $0x8c] sm:$0xf]
  %v179 = vld [vmem:[%s1 + $0x90] sm:$0xf]
  %v180 = vld [vmem:[%s1 + $0x94] sm:$0xf]
  %v181 = vld [vmem:[%s1 + $0x98] sm:$0xf]
  %v182 = vld [vmem:[%s1 + $0x9c] sm:$0xf]
  %v183 = vld [vmem:[%s1 + $0xa0] sm:$0xf]
  %v184 = vld [vmem:[%s1 + $0xa4] sm:$0xf]
  %v185 = vld [vmem:[%s1 + $0xa8] sm:$0xf]
  %v186 = vld [vmem:[%s1 + $0xac] sm:$0xf]
  %v187 = vld [vmem:[%s1 + $0xb0] sm:$0xf]
  %v188 = vld [vmem:[%s1 + $0xb4] sm:$0xf]
  %v189 = vld [vmem:[%s1 + $0xb8] sm:$0xf]
  %v190 = vld [vmem:[%s1 + $0xbc] sm:$0xf]
  %v191 = vld [vmem:[%s1 + $0xc0] sm:$0xf]
  %v192 = vld [vmem:[%s2] sm:$0x1]
  %v194 = vlaneseq
  %v195 = vshrl.u32 %v194, 7
  %v196 = vsub.s32 0, %v195
  %v197 = vrot.slane %v192, %v196
  %v327 = vunpack.c.l.b16 %v15
  %v328 = vunpack.c.h.b16 %v15
  %v329 = vunpack.c.l.b16 %v16
  %v330 = vunpack.c.h.b16 %v16
  %v331 = vunpack.c.l.b16 %v17
  %v332 = vunpack.c.h.b16 %v17
  %v333 = vunpack.c.l.b16 %v18
  %v334 = vunpack.c.h.b16 %v18
  %v335 = vunpack.c.l.b16 %v19
  %v336 = vunpack.c.h.b16 %v19
  %v337 = vunpack.c.l.b16 %v20
  %v338 = vunpack.c.h.b16 %v20
  %v339 = vunpack.c.l.b16 %v21
  %v340 = vunpack.c.h.b16 %v21
  %v341 = vunpack.c.l.b16 %v22
  %v342 = vunpack.c.h.b16 %v22
  %v343 = vunpack.c.l.b16 %v23
  %v344 = vunpack.c.h.b16 %v23
  %v345 = vunpack.c.l.b16 %v24
  %v346 = vunpack.c.h.b16 %v24
  %v347 = vunpack.c.l.b16 %v25
  %v348 = vunpack.c.h.b16 %v25
  %v349 = vunpack.c.l.b16 %v26
  %v350 = vunpack.c.h.b16 %v26
  %v351 = vunpack.c.l.b16 %v27
  %v352 = vunpack.c.h.b16 %v27
  %v353 = vunpack.c.l.b16 %v28
  %v354 = vunpack.c.h.b16 %v28
  %v355 = vunpack.c.l.b16 %v29
  %v356 = vunpack.c.h.b16 %v29
  %v357 = vunpack.c.l.b16 %v30
  %v358 = vunpack.c.h.b16 %v30
  %v359 = vunpack.c.l.b16 %v31
  %v360 = vunpack.c.h.b16 %v31
  %v361 = vunpack.c.l.b16 %v32
  %v362 = vunpack.c.h.b16 %v32
  %v363 = vunpack.c.l.b16 %v33
  %v364 = vunpack.c.h.b16 %v33
  %v365 = vunpack.c.l.b16 %v34
  %v366 = vunpack.c.h.b16 %v34
  %v367 = vunpack.c.l.b16 %v35
  %v368 = vunpack.c.h.b16 %v35
  %v369 = vunpack.c.l.b16 %v36
  %v370 = vunpack.c.h.b16 %v36
  %v371 = vunpack.c.l.b16 %v37
  %v372 = vunpack.c.h.b16 %v37
  %v373 = vunpack.c.l.b16 %v38
  %v374 = vunpack.c.h.b16 %v38
  %v375 = vunpack.c.l.b16 %v39
  %v376 = vunpack.c.h.b16 %v39
  %v377 = vunpack.c.l.b16 %v40
  %v378 = vunpack.c.h.b16 %v40
  %v379 = vunpack.c.l.b16 %v41
  %v380 = vunpack.c.h.b16 %v41
  %v381 = vunpack.c.l.b16 %v42
  %v382 = vunpack.c.h.b16 %v42
  %v383 = vunpack.c.l.b16 %v43
  %v384 = vunpack.c.h.b16 %v43
  %v385 = vunpack.c.l.b16 %v44
  %v386 = vunpack.c.h.b16 %v44
  %v387 = vunpack.c.l.b16 %v45
  %v388 = vunpack.c.h.b16 %v45
  %v389 = vunpack.c.l.b16 %v46
  %v390 = vunpack.c.h.b16 %v46
  %v391 = vunpack.c.l.b16 %v47
  %v392 = vunpack.c.h.b16 %v47
  %v393 = vunpack.c.l.b16 %v48
  %v394 = vunpack.c.h.b16 %v48
  %v395 = vunpack.c.l.b16 %v49
  %v396 = vunpack.c.h.b16 %v49
  %v397 = vunpack.c.l.b16 %v50
  %v398 = vunpack.c.h.b16 %v50
  %v399 = vunpack.c.l.b16 %v51
  %v400 = vunpack.c.h.b16 %v51
  %v401 = vunpack.c.l.b16 %v52
  %v402 = vunpack.c.h.b16 %v52
  %v403 = vunpack.c.l.b16 %v53
  %v404 = vunpack.c.h.b16 %v53
  %v405 = vunpack.c.l.b16 %v54
  %v406 = vunpack.c.h.b16 %v54
  %v407 = vunpack.c.l.b16 %v55
  %v408 = vunpack.c.h.b16 %v55
  %v409 = vunpack.c.l.b16 %v56
  %v410 = vunpack.c.h.b16 %v56
  %v411 = vunpack.c.l.b16 %v57
  %v412 = vunpack.c.h.b16 %v57
  %v413 = vunpack.c.l.b16 %v58
  %v414 = vunpack.c.h.b16 %v58
  %v415 = vunpack.c.l.b16 %v59
  %v416 = vunpack.c.h.b16 %v59
  %v417 = vunpack.c.l.b16 %v60
  %v418 = vunpack.c.h.b16 %v60
  %v419 = vunpack.c.l.b16 %v61
  %v420 = vunpack.c.h.b16 %v61
  %v421 = vunpack.c.l.b16 %v62
  %v422 = vunpack.c.h.b16 %v62
  %v423 = vunpack.c.l.b16 %v63
  %v424 = vunpack.c.h.b16 %v63
  %v425 = vunpack.c.l.b16 %v64
  %v426 = vunpack.c.h.b16 %v64
  %v427 = vunpack.c.l.b16 %v65
  %v428 = vunpack.c.h.b16 %v65
  %v429 = vunpack.c.l.b16 %v66
  %v430 = vunpack.c.h.b16 %v66
  %v431 = vunpack.c.l.b16 %v67
  %v432 = vunpack.c.h.b16 %v67
  %v433 = vunpack.c.l.b16 %v68
  %v434 = vunpack.c.h.b16 %v68
  %v435 = vunpack.c.l.b16 %v69
  %v436 = vunpack.c.h.b16 %v69
  %v437 = vunpack.c.l.b16 %v70
  %v438 = vunpack.c.h.b16 %v70
  %v439 = vunpack.c.l.b16 %v71
  %v440 = vunpack.c.h.b16 %v71
  %v441 = vunpack.c.l.b16 %v72
  %v442 = vunpack.c.h.b16 %v72
  %v443 = vunpack.c.l.b16 %v73
  %v444 = vunpack.c.h.b16 %v73
  %v445 = vunpack.c.l.b16 %v74
  %v446 = vunpack.c.h.b16 %v74
  %v447 = vunpack.c.l.b16 %v75
  %v448 = vunpack.c.h.b16 %v75
  %v449 = vunpack.c.l.b16 %v76
  %v450 = vunpack.c.h.b16 %v76
  %v451 = vunpack.c.l.b16 %v77
  %v452 = vunpack.c.h.b16 %v77
  %v453 = vunpack.c.l.b16 %v78
  %v454 = vunpack.c.h.b16 %v78
  %v455 = vunpack.c.l.b16 %v79
  %v456 = vunpack.c.h.b16 %v79
  %v457 = vunpack.c.l.b16 %v80
  %v458 = vunpack.c.h.b16 %v80
  %v459 = vunpack.c.l.b16 %v81
  %v460 = vunpack.c.h.b16 %v81
  %v461 = vunpack.c.l.b16 %v82
  %v462 = vunpack.c.h.b16 %v82
  %v463 = vunpack.c.l.b16 %v83
  %v464 = vunpack.c.h.b16 %v83
  %v465 = vunpack.c.l.b16 %v84
  %v466 = vunpack.c.h.b16 %v84
  %v467 = vunpack.c.l.b16 %v85
  %v468 = vunpack.c.h.b16 %v85
  %v469 = vunpack.c.l.b16 %v86
  %v470 = vunpack.c.h.b16 %v86
  %v471 = vunpack.c.l.b16 %v87
  %v472 = vunpack.c.h.b16 %v87
  %v473 = vunpack.c.l.b16 %v88
  %v474 = vunpack.c.h.b16 %v88
  %v475 = vunpack.c.l.b16 %v89
  %v476 = vunpack.c.h.b16 %v89
  %v477 = vunpack.c.l.b16 %v90
  %v478 = vunpack.c.h.b16 %v90
  %v479 = vunpack.c.l.b16 %v91
  %v480 = vunpack.c.h.b16 %v91
  %v481 = vunpack.c.l.b16 %v92
  %v482 = vunpack.c.h.b16 %v92
  %v483 = vunpack.c.l.b16 %v93
  %v484 = vunpack.c.h.b16 %v93
  %v485 = vunpack.c.l.b16 %v94
  %v486 = vunpack.c.h.b16 %v94
  %v487 = vunpack.c.l.b16 %v95
  %v488 = vunpack.c.h.b16 %v95
  %v489 = vunpack.c.l.b16 %v96
  %v490 = vunpack.c.h.b16 %v96
  %v491 = vunpack.c.l.b16 %v97
  %v492 = vunpack.c.h.b16 %v97
  %v493 = vunpack.c.l.b16 %v98
  %v494 = vunpack.c.h.b16 %v98
  %v495 = vunpack.c.l.b16 %v99
  %v496 = vunpack.c.h.b16 %v99
  %v497 = vunpack.c.l.b16 %v100
  %v498 = vunpack.c.h.b16 %v100
  %v499 = vunpack.c.l.b16 %v101
  %v500 = vunpack.c.h.b16 %v101
  %v501 = vunpack.c.l.b16 %v102
  %v502 = vunpack.c.h.b16 %v102
  %v503 = vunpack.c.l.b16 %v103
  %v504 = vunpack.c.h.b16 %v103
  %v505 = vunpack.c.l.b16 %v104
  %v506 = vunpack.c.h.b16 %v104
  %v507 = vunpack.c.l.b16 %v105
  %v508 = vunpack.c.h.b16 %v105
  %v509 = vunpack.c.l.b16 %v106
  %v510 = vunpack.c.h.b16 %v106
  %v511 = vunpack.c.l.b16 %v107
  %v512 = vunpack.c.h.b16 %v107
  %v513 = vunpack.c.l.b16 %v108
  %v514 = vunpack.c.h.b16 %v108
  %v515 = vunpack.c.l.b16 %v109
  %v516 = vunpack.c.h.b16 %v109
  %v517 = vunpack.c.l.b16 %v110
  %v518 = vunpack.c.h.b16 %v110
  %v519 = vunpack.c.l.b16 %v111
  %v520 = vunpack.c.h.b16 %v111
  %v521 = vunpack.c.l.b16 %v112
  %v522 = vunpack.c.h.b16 %v112
  %v523 = vunpack.c.l.b16 %v113
  %v524 = vunpack.c.h.b16 %v113
  %v525 = vunpack.c.l.b16 %v114
  %v526 = vunpack.c.h.b16 %v114
  %v527 = vunpack.c.l.b16 %v115
  %v528 = vunpack.c.h.b16 %v115
  %v529 = vunpack.c.l.b16 %v116
  %v530 = vunpack.c.h.b16 %v116
  %v531 = vunpack.c.l.b16 %v117
  %v532 = vunpack.c.h.b16 %v117
  %v533 = vunpack.c.l.b16 %v118
  %v534 = vunpack.c.h.b16 %v118
  %v535 = vunpack.c.l.b16 %v119
  %v536 = vunpack.c.h.b16 %v119
  %v537 = vunpack.c.l.b16 %v120
  %v538 = vunpack.c.h.b16 %v120
  %v539 = vunpack.c.l.b16 %v121
  %v540 = vunpack.c.h.b16 %v121
  %v541 = vunpack.c.l.b16 %v122
  %v542 = vunpack.c.h.b16 %v122
  %v543 = vunpack.c.l.b16 %v123
  %v544 = vunpack.c.h.b16 %v123
  %v545 = vunpack.c.l.b16 %v124
  %v546 = vunpack.c.h.b16 %v124
  %v547 = vunpack.c.l.b16 %v125
  %v548 = vunpack.c.h.b16 %v125
  %v549 = vunpack.c.l.b16 %v126
  %v550 = vunpack.c.h.b16 %v126
  %v551 = vunpack.c.l.b16 %v127
  %v552 = vunpack.c.h.b16 %v127
  %v553 = vunpack.c.l.b16 %v128
  %v554 = vunpack.c.h.b16 %v128
  %v555 = vunpack.c.l.b16 %v129
  %v556 = vunpack.c.h.b16 %v129
  %v557 = vunpack.c.l.b16 %v130
  %v558 = vunpack.c.h.b16 %v130
  %v559 = vunpack.c.l.b16 %v131
  %v560 = vunpack.c.h.b16 %v131
  %v561 = vunpack.c.l.b16 %v132
  %v562 = vunpack.c.h.b16 %v132
  %v563 = vunpack.c.l.b16 %v133
  %v564 = vunpack.c.h.b16 %v133
  %v565 = vunpack.c.l.b16 %v134
  %v566 = vunpack.c.h.b16 %v134
  %v567 = vunpack.c.l.b16 %v135
  %v568 = vunpack.c.h.b16 %v135
  %v569 = vunpack.c.l.b16 %v136
  %v570 = vunpack.c.h.b16 %v136
  %v571 = vunpack.c.l.b16 %v137
  %v572 = vunpack.c.h.b16 %v137
  %v573 = vunpack.c.l.b16 %v138
  %v574 = vunpack.c.h.b16 %v138
  %v575 = vunpack.c.l.b16 %v139
  %v576 = vunpack.c.h.b16 %v139
  %v577 = vunpack.c.l.b16 %v140
  %v578 = vunpack.c.h.b16 %v140
  %v579 = vunpack.c.l.b16 %v141
  %v580 = vunpack.c.h.b16 %v141
  %v581 = vunpack.c.l.b16 %v142
  %v582 = vunpack.c.h.b16 %v142
  %v583 = vpack.c.b16 %v331, %v327
  %v584 = vpack.c.b16 %v332, %v328
  %v585 = vpack.c.b16 %v333, %v329
  %v586 = vpack.c.b16 %v334, %v330
  %v587 = vpack.c.b16 %v339, %v335
  %v588 = vpack.c.b16 %v340, %v336
  %v589 = vpack.c.b16 %v341, %v337
  %v590 = vpack.c.b16 %v342, %v338
  %v591 = vpack.c.b16 %v347, %v343
  %v592 = vpack.c.b16 %v348, %v344
  %v593 = vpack.c.b16 %v349, %v345
  %v594 = vpack.c.b16 %v350, %v346
  %v595 = vpack.c.b16 %v355, %v351
  %v596 = vpack.c.b16 %v356, %v352
  %v597 = vpack.c.b16 %v357, %v353
  %v598 = vpack.c.b16 %v358, %v354
  %v599 = vpack.c.b16 %v363, %v359
  %v600 = vpack.c.b16 %v364, %v360
  %v601 = vpack.c.b16 %v365, %v361
  %v602 = vpack.c.b16 %v366, %v362
  %v603 = vpack.c.b16 %v371, %v367
  %v604 = vpack.c.b16 %v372, %v368
  %v605 = vpack.c.b16 %v373, %v369
  %v606 = vpack.c.b16 %v374, %v370
  %v607 = vpack.c.b16 %v379, %v375
  %v608 = vpack.c.b16 %v380, %v376
  %v609 = vpack.c.b16 %v381, %v377
  %v610 = vpack.c.b16 %v382, %v378
  %v611 = vpack.c.b16 %v387, %v383
  %v612 = vpack.c.b16 %v388, %v384
  %v613 = vpack.c.b16 %v389, %v385
  %v614 = vpack.c.b16 %v390, %v386
  %v615 = vpack.c.b16 %v395, %v391
  %v616 = vpack.c.b16 %v396, %v392
  %v617 = vpack.c.b16 %v397, %v393
  %v618 = vpack.c.b16 %v398, %v394
  %v619 = vpack.c.b16 %v403, %v399
  %v620 = vpack.c.b16 %v404, %v400
  %v621 = vpack.c.b16 %v405, %v401
  %v622 = vpack.c.b16 %v406, %v402
  %v623 = vpack.c.b16 %v411, %v407
  %v624 = vpack.c.b16 %v412, %v408
  %v625 = vpack.c.b16 %v413, %v409
  %v626 = vpack.c.b16 %v414, %v410
  %v627 = vpack.c.b16 %v419, %v415
  %v628 = vpack.c.b16 %v420, %v416
  %v629 = vpack.c.b16 %v421, %v417
  %v630 = vpack.c.b16 %v422, %v418
  %v631 = vpack.c.b16 %v427, %v423
  %v632 = vpack.c.b16 %v428, %v424
  %v633 = vpack.c.b16 %v429, %v425
  %v634 = vpack.c.b16 %v430, %v426
  %v635 = vpack.c.b16 %v435, %v431
  %v636 = vpack.c.b16 %v436, %v432
  %v637 = vpack.c.b16 %v437, %v433
  %v638 = vpack.c.b16 %v438, %v434
  %v639 = vpack.c.b16 %v443, %v439
  %v640 = vpack.c.b16 %v444, %v440
  %v641 = vpack.c.b16 %v445, %v441
  %v642 = vpack.c.b16 %v446, %v442
  %v643 = vpack.c.b16 %v451, %v447
  %v644 = vpack.c.b16 %v452, %v448
  %v645 = vpack.c.b16 %v453, %v449
  %v646 = vpack.c.b16 %v454, %v450
  %v647 = vpack.c.b16 %v459, %v455
  %v648 = vpack.c.b16 %v460, %v456
  %v649 = vpack.c.b16 %v461, %v457
  %v650 = vpack.c.b16 %v462, %v458
  %v651 = vpack.c.b16 %v467, %v463
  %v652 = vpack.c.b16 %v468, %v464
  %v653 = vpack.c.b16 %v469, %v465
  %v654 = vpack.c.b16 %v470, %v466
  %v655 = vpack.c.b16 %v475, %v471
  %v656 = vpack.c.b16 %v476, %v472
  %v657 = vpack.c.b16 %v477, %v473
  %v658 = vpack.c.b16 %v478, %v474
  %v659 = vpack.c.b16 %v483, %v479
  %v660 = vpack.c.b16 %v484, %v480
  %v661 = vpack.c.b16 %v485, %v481
  %v662 = vpack.c.b16 %v486, %v482
  %v663 = vpack.c.b16 %v491, %v487
  %v664 = vpack.c.b16 %v492, %v488
  %v665 = vpack.c.b16 %v493, %v489
  %v666 = vpack.c.b16 %v494, %v490
  %v667 = vpack.c.b16 %v499, %v495
  %v668 = vpack.c.b16 %v500, %v496
  %v669 = vpack.c.b16 %v501, %v497
  %v670 = vpack.c.b16 %v502, %v498
  %v671 = vpack.c.b16 %v507, %v503
  %v672 = vpack.c.b16 %v508, %v504
  %v673 = vpack.c.b16 %v509, %v505
  %v674 = vpack.c.b16 %v510, %v506
  %v675 = vpack.c.b16 %v515, %v511
  %v676 = vpack.c.b16 %v516, %v512
  %v677 = vpack.c.b16 %v517, %v513
  %v678 = vpack.c.b16 %v518, %v514
  %v679 = vpack.c.b16 %v523, %v519
  %v680 = vpack.c.b16 %v524, %v520
  %v681 = vpack.c.b16 %v525, %v521
  %v682 = vpack.c.b16 %v526, %v522
  %v683 = vpack.c.b16 %v531, %v527
  %v684 = vpack.c.b16 %v532, %v528
  %v685 = vpack.c.b16 %v533, %v529
  %v686 = vpack.c.b16 %v534, %v530
  %v687 = vpack.c.b16 %v539, %v535
  %v688 = vpack.c.b16 %v540, %v536
  %v689 = vpack.c.b16 %v541, %v537
  %v690 = vpack.c.b16 %v542, %v538
  %v691 = vpack.c.b16 %v547, %v543
  %v692 = vpack.c.b16 %v548, %v544
  %v693 = vpack.c.b16 %v549, %v545
  %v694 = vpack.c.b16 %v550, %v546
  %v695 = vpack.c.b16 %v555, %v551
  %v696 = vpack.c.b16 %v556, %v552
  %v697 = vpack.c.b16 %v557, %v553
  %v698 = vpack.c.b16 %v558, %v554
  %v699 = vpack.c.b16 %v563, %v559
  %v700 = vpack.c.b16 %v564, %v560
  %v701 = vpack.c.b16 %v565, %v561
  %v702 = vpack.c.b16 %v566, %v562
  %v703 = vpack.c.b16 %v571, %v567
  %v704 = vpack.c.b16 %v572, %v568
  %v705 = vpack.c.b16 %v573, %v569
  %v706 = vpack.c.b16 %v574, %v570
  %v707 = vpack.c.b16 %v579, %v575
  %v708 = vpack.c.b16 %v580, %v576
  %v709 = vpack.c.b16 %v581, %v577
  %v710 = vpack.c.b16 %v582, %v578
  %v856 = vunpack.c.l.b16 %v143
  %v857 = vunpack.c.l.b16 %v144
  %v858 = vunpack.c.l.b16 %v145
  %v859 = vunpack.c.l.b16 %v146
  %v860 = vunpack.c.l.b16 %v147
  %v861 = vunpack.c.l.b16 %v148
  %v862 = vunpack.c.l.b16 %v149
  %v863 = vunpack.c.l.b16 %v150
  %v864 = vunpack.c.l.b16 %v151
  %v865 = vunpack.c.l.b16 %v152
  %v866 = vunpack.c.l.b16 %v153
  %v867 = vunpack.c.l.b16 %v154
  %v868 = vunpack.c.l.b16 %v155
  %v869 = vunpack.c.l.b16 %v156
  %v870 = vunpack.c.l.b16 %v157
  %v871 = vunpack.c.l.b16 %v158
  %v872 = vunpack.c.l.b16 %v159
  %v873 = vunpack.c.l.b16 %v160
  %v874 = vunpack.c.l.b16 %v161
  %v875 = vunpack.c.l.b16 %v162
  %v876 = vunpack.c.l.b16 %v163
  %v877 = vunpack.c.l.b16 %v164
  %v878 = vunpack.c.l.b16 %v165
  %v879 = vunpack.c.l.b16 %v166
  %v880 = vunpack.c.l.b16 %v167
  %v881 = vunpack.c.l.b16 %v168
  %v882 = vunpack.c.l.b16 %v169
  %v883 = vunpack.c.l.b16 %v170
  %v884 = vunpack.c.l.b16 %v171
  %v885 = vunpack.c.l.b16 %v172
  %v886 = vunpack.c.l.b16 %v173
  %v887 = vunpack.c.l.b16 %v174
  %v888 = vunpack.c.l.b16 %v175
  %v889 = vunpack.c.l.b16 %v176
  %v890 = vunpack.c.l.b16 %v177
  %v891 = vunpack.c.l.b16 %v178
  %v892 = vunpack.c.l.b16 %v179
  %v893 = vunpack.c.l.b16 %v180
  %v894 = vunpack.c.l.b16 %v181
  %v895 = vunpack.c.l.b16 %v182
  %v896 = vunpack.c.l.b16 %v183
  %v897 = vunpack.c.l.b16 %v184
  %v898 = vunpack.c.l.b16 %v185
  %v899 = vunpack.c.l.b16 %v186
  %v900 = vunpack.c.l.b16 %v187
  %v901 = vunpack.c.l.b16 %v188
  %v902 = vunpack.c.l.b16 %v189
  %v903 = vunpack.c.l.b16 %v190
  %v904 = vunpack.c.l.b16 %v191
  %v905 = vpack.c.b16 %v857, %v856
  %v906 = vpack.c.b16 %v859, %v858
  %v907 = vpack.c.b16 %v861, %v860
  %v908 = vpack.c.b16 %v863, %v862
  %v909 = vpack.c.b16 %v865, %v864
  %v910 = vpack.c.b16 %v867, %v866
  %v911 = vpack.c.b16 %v869, %v868
  %v912 = vpack.c.b16 %v871, %v870
  %v913 = vpack.c.b16 %v873, %v872
  %v914 = vpack.c.b16 %v875, %v874
  %v915 = vpack.c.b16 %v877, %v876
  %v916 = vpack.c.b16 %v879, %v878
  %v917 = vpack.c.b16 %v881, %v880
  %v918 = vpack.c.b16 %v883, %v882
  %v919 = vpack.c.b16 %v885, %v884
  %v920 = vpack.c.b16 %v887, %v886
  %v921 = vpack.c.b16 %v889, %v888
  %v922 = vpack.c.b16 %v891, %v890
  %v923 = vpack.c.b16 %v893, %v892
  %v924 = vpack.c.b16 %v895, %v894
  %v925 = vpack.c.b16 %v897, %v896
  %v926 = vpack.c.b16 %v899, %v898
  %v927 = vpack.c.b16 %v901, %v900
  %v928 = vpack.c.b16 %v903, %v902
  %v929 = vpack.c.b16 %v904, %v904
  %vm954 = vcmask 64512
  %v956 = vsel %vm954, %v586, 0
  %v959 = vsel %vm954, %v590, 0
  %v962 = vsel %vm954, %v594, 0
  %v965 = vsel %vm954, %v598, 0
  %v968 = vsel %vm954, %v602, 0
  %v971 = vsel %vm954, %v606, 0
  %v974 = vsel %vm954, %v610, 0
  %v977 = vsel %vm954, %v614, 0
  %v980 = vsel %vm954, %v618, 0
  %v983 = vsel %vm954, %v622, 0
  %v986 = vsel %vm954, %v626, 0
  %v989 = vsel %vm954, %v630, 0
  %v992 = vsel %vm954, %v634, 0
  %v995 = vsel %vm954, %v638, 0
  %v998 = vsel %vm954, %v642, 0
  %v1001 = vsel %vm954, %v646, 0
  %v1004 = vsel %vm954, %v650, 0
  %v1007 = vsel %vm954, %v654, 0
  %v1010 = vsel %vm954, %v658, 0
  %v1013 = vsel %vm954, %v662, 0
  %v1016 = vsel %vm954, %v666, 0
  %v1019 = vsel %vm954, %v670, 0
  %v1022 = vsel %vm954, %v674, 0
  %v1025 = vsel %vm954, %v678, 0
  %v1028 = vsel %vm954, %v682, 0
  %v1031 = vsel %vm954, %v686, 0
  %v1034 = vsel %vm954, %v690, 0
  %v1037 = vsel %vm954, %v694, 0
  %v1040 = vsel %vm954, %v698, 0
  %v1043 = vsel %vm954, %v702, 0
  %v1046 = vsel %vm954, %v706, 0
  %v1049 = vsel %vm954, %v710, 0
  %vm1051 = vcmask 1043456
  %v1053 = vsel %vm1051, %v929, 0
  %1055 = vmatprep.subr.bf16.mxu0 0
  %1056 = vmatpush1.bf16.msra.mxu0 %v905
  %1057 = vmatprep.subr.bf16.mxu0 0
  %1058 = vmatpush1.bf16.msra.mxu0 %v906
  %1059 = vmatprep.subr.bf16.mxu0 0
  %1060 = vmatpush1.bf16.msra.mxu0 %v907
  %1061 = vmatprep.subr.bf16.mxu0 0
  %1062 = vmatpush1.bf16.msra.mxu0 %v908
  %1063 = vmatprep.subr.bf16.mxu0 0
  %1064 = vmatpush1.bf16.msra.mxu0 %v909
  %1065 = vmatprep.subr.bf16.mxu0 0
  %1066 = vmatpush1.bf16.msra.mxu0 %v910
  %1067 = vmatprep.subr.bf16.mxu0 0
  %1068 = vmatpush1.bf16.msra.mxu0 %v911
  %1069 = vmatprep.subr.bf16.mxu0 0
  %1070 = vmatpush1.bf16.msra.mxu0 %v912
  %1071 = vmatprep.subr.bf16.mxu0 0
  %1072 = vmatpush1.bf16.msra.mxu0 %v913
  %1073 = vmatprep.subr.bf16.mxu0 0
  %1074 = vmatpush1.bf16.msra.mxu0 %v914
  %1075 = vmatprep.subr.bf16.mxu0 0
  %1076 = vmatpush1.bf16.msra.mxu0 %v915
  %1077 = vmatprep.subr.bf16.mxu0 0
  %1078 = vmatpush1.bf16.msra.mxu0 %v916
  %1079 = vmatprep.subr.bf16.mxu0 0
  %1080 = vmatpush1.bf16.msra.mxu0 %v917
  %1081 = vmatprep.subr.bf16.mxu0 0
  %1082 = vmatpush1.bf16.msra.mxu0 %v918
  %1083 = vmatprep.subr.bf16.mxu0 0
  %1084 = vmatpush1.bf16.msra.mxu0 %v919
  %1085 = vmatprep.subr.bf16.mxu0 0
  %1086 = vmatpush1.bf16.msra.mxu0 %v920
  %1087 = vmatprep.mubr.bf16.mxu0 %v584
  %1088 = vmatmul.mubr.bf16.gmra.mrb[0].mxu0 %v583
  %v1089 = vpop.f32.mrb[0].mxu0
  %v1090 = vadd.f32 %v197, %v1089
  %v1091 = vpop.f32.mrb[0].mxu0
  %v1092 = vpop.f32.mrb[0].mxu0
  %v1093 = vadd.f32 %v197, %v1092
  %v1094 = vpop.f32.mrb[0].mxu0
  %1095 = vmatprep.mubr.bf16.mxu0 %v588
  %1096 = vmatmul.mubr.bf16.gmra.mrb[0].mxu0 %v587
  %v1097 = vpop.f32.mrb[0].mxu0
  %v1098 = vadd.f32 %v197, %v1097
  %v1099 = vpop.f32.mrb[0].mxu0
  %v1100 = vpop.f32.mrb[0].mxu0
  %v1101 = vadd.f32 %v197, %v1100
  %v1102 = vpop.f32.mrb[0].mxu0
  %1103 = vmatprep.mubr.bf16.mxu0 %v592
  %1104 = vmatmul.mubr.bf16.gmra.mrb[0].mxu0 %v591
  %v1105 = vpop.f32.mrb[0].mxu0
  %v1106 = vadd.f32 %v197, %v1105
  %v1107 = vpop.f32.mrb[0].mxu0
  %v1108 = vpop.f32.mrb[0].mxu0
  %v1109 = vadd.f32 %v197, %v1108
  %v1110 = vpop.f32.mrb[0].mxu0
  %1111 = vmatprep.mubr.bf16.mxu0 %v596
  %1112 = vmatmul.mubr.bf16.gmra.mrb[0].mxu0 %v595
  %v1113 = vpop.f32.mrb[0].mxu0
  %v1114 = vadd.f32 %v197, %v1113
  %v1115 = vpop.f32.mrb[0].mxu0
  %v1116 = vpop.f32.mrb[0].mxu0
  %v1117 = vadd.f32 %v197, %v1116
  %v1118 = vpop.f32.mrb[0].mxu0
  %1119 = vmatprep.mubr.bf16.mxu0 %v600
  %1120 = vmatmul.mubr.bf16.gmra.mrb[0].mxu0 %v599
  %v1121 = vpop.f32.mrb[0].mxu0
  %v1122 = vadd.f32 %v197, %v1121
  %v1123 = vpop.f32.mrb[0].mxu0
  %v1124 = vpop.f32.mrb[0].mxu0
  %v1125 = vadd.f32 %v197, %v1124
  %v1126 = vpop.f32.mrb[0].mxu0
  %1127 = vmatprep.mubr.bf16.mxu0 %v604
  %1128 = vmatmul.mubr.bf16.gmra.mrb[0].mxu0 %v603
  %v1129 = vpop.f32.mrb[0].mxu0
  %v1130 = vadd.f32 %v197, %v1129
  %v1131 = vpop.f32.mrb[0].mxu0
  %v1132 = vpop.f32.mrb[0].mxu0
  %v1133 = vadd.f32 %v197, %v1132
  %v1134 = vpop.f32.mrb[0].mxu0
  %1135 = vmatprep.mubr.bf16.mxu0 %v608
  %1136 = vmatmul.mubr.bf16.gmra.mrb[0].mxu0 %v607
  %v1137 = vpop.f32.mrb[0].mxu0
  %v1138 = vadd.f32 %v197, %v1137
  %v1139 = vpop.f32.mrb[0].mxu0
  %v1140 = vpop.f32.mrb[0].mxu0
  %v1141 = vadd.f32 %v197, %v1140
  %v1142 = vpop.f32.mrb[0].mxu0
  %1143 = vmatprep.mubr.bf16.mxu0 %v612
  %1144 = vmatmul.mubr.bf16.gmra.mrb[0].mxu0 %v611
  %v1145 = vpop.f32.mrb[0].mxu0
  %v1146 = vadd.f32 %v197, %v1145
  %v1147 = vpop.f32.mrb[0].mxu0
  %v1148 = vpop.f32.mrb[0].mxu0
  %v1149 = vadd.f32 %v197, %v1148
  %v1150 = vpop.f32.mrb[0].mxu0
  %1151 = vmatprep.mubr.bf16.mxu0 %v616
  %1152 = vmatmul.mubr.bf16.gmra.mrb[0].mxu0 %v615
  %v1153 = vpop.f32.mrb[0].mxu0
  %v1154 = vadd.f32 %v197, %v1153
  %v1155 = vpop.f32.mrb[0].mxu0
  %v1156 = vpop.f32.mrb[0].mxu0
  %v1157 = vadd.f32 %v197, %v1156
  %v1158 = vpop.f32.mrb[0].mxu0
  %1159 = vmatprep.mubr.bf16.mxu0 %v620
  %1160 = vmatmul.mubr.bf16.gmra.mrb[0].mxu0 %v619
  %v1161 = vpop.f32.mrb[0].mxu0
  %v1162 = vadd.f32 %v197, %v1161
  %v1163 = vpop.f32.mrb[0].mxu0
  %v1164 = vpop.f32.mrb[0].mxu0
  %v1165 = vadd.f32 %v197, %v1164
  %v1166 = vpop.f32.mrb[0].mxu0
  %1167 = vmatprep.mubr.bf16.mxu0 %v624
  %1168 = vmatmul.mubr.bf16.gmra.mrb[0].mxu0 %v623
  %v1169 = vpop.f32.mrb[0].mxu0
  %v1170 = vadd.f32 %v197, %v1169
  %v1171 = vpop.f32.mrb[0].mxu0
  %v1172 = vpop.f32.mrb[0].mxu0
  %v1173 = vadd.f32 %v197, %v1172
  %v1174 = vpop.f32.mrb[0].mxu0
  %1175 = vmatprep.mubr.bf16.mxu0 %v628
  %1176 = vmatmul.mubr.bf16.gmra.mrb[0].mxu0 %v627
  %v1177 = vpop.f32.mrb[0].mxu0
  %v1178 = vadd.f32 %v197, %v1177
  %v1179 = vpop.f32.mrb[0].mxu0
  %v1180 = vpop.f32.mrb[0].mxu0
  %v1181 = vadd.f32 %v197, %v1180
  %v1182 = vpop.f32.mrb[0].mxu0
  %1183 = vmatprep.mubr.bf16.mxu0 %v632
  %1184 = vmatmul.mubr.bf16.gmra.mrb[0].mxu0 %v631
  %v1185 = vpop.f32.mrb[0].mxu0
  %v1186 = vadd.f32 %v197, %v1185
  %v1187 = vpop.f32.mrb[0].mxu0
  %v1188 = vpop.f32.mrb[0].mxu0
  %v1189 = vadd.f32 %v197, %v1188
  %v1190 = vpop.f32.mrb[0].mxu0
  %1191 = vmatprep.mubr.bf16.mxu0 %v636
  %1192 = vmatmul.mubr.bf16.gmra.mrb[0].mxu0 %v635
  %v1193 = vpop.f32.mrb[0].mxu0
  %v1194 = vadd.f32 %v197, %v1193
  %v1195 = vpop.f32.mrb[0].mxu0
  %v1196 = vpop.f32.mrb[0].mxu0
  %v1197 = vadd.f32 %v197, %v1196
  %v1198 = vpop.f32.mrb[0].mxu0
  %1199 = vmatprep.mubr.bf16.mxu0 %v640
  %1200 = vmatmul.mubr.bf16.gmra.mrb[0].mxu0 %v639
  %v1201 = vpop.f32.mrb[0].mxu0
  %v1202 = vadd.f32 %v197, %v1201
  %v1203 = vpop.f32.mrb[0].mxu0
  %v1204 = vpop.f32.mrb[0].mxu0
  %v1205 = vadd.f32 %v197, %v1204
  %v1206 = vpop.f32.mrb[0].mxu0
  %1207 = vmatprep.mubr.bf16.mxu0 %v644
  %1208 = vmatmul.mubr.bf16.gmra.mrb[0].mxu0 %v643
  %v1209 = vpop.f32.mrb[0].mxu0
  %v1210 = vadd.f32 %v197, %v1209
  %v1211 = vpop.f32.mrb[0].mxu0
  %v1212 = vpop.f32.mrb[0].mxu0
  %v1213 = vadd.f32 %v197, %v1212
  %v1214 = vpop.f32.mrb[0].mxu0
  %1215 = vmatprep.mubr.bf16.mxu0 %v648
  %1216 = vmatmul.mubr.bf16.gmra.mrb[0].mxu0 %v647
  %v1217 = vpop.f32.mrb[0].mxu0
  %v1218 = vadd.f32 %v197, %v1217
  %v1219 = vpop.f32.mrb[0].mxu0
  %v1220 = vpop.f32.mrb[0].mxu0
  %v1221 = vadd.f32 %v197, %v1220
  %v1222 = vpop.f32.mrb[0].mxu0
  %1223 = vmatprep.mubr.bf16.mxu0 %v652
  %1224 = vmatmul.mubr.bf16.gmra.mrb[0].mxu0 %v651
  %v1225 = vpop.f32.mrb[0].mxu0
  %v1226 = vadd.f32 %v197, %v1225
  %v1227 = vpop.f32.mrb[0].mxu0
  %v1228 = vpop.f32.mrb[0].mxu0
  %v1229 = vadd.f32 %v197, %v1228
  %v1230 = vpop.f32.mrb[0].mxu0
  %1231 = vmatprep.mubr.bf16.mxu0 %v656
  %1232 = vmatmul.mubr.bf16.gmra.mrb[0].mxu0 %v655
  %v1233 = vpop.f32.mrb[0].mxu0
  %v1234 = vadd.f32 %v197, %v1233
  %v1235 = vpop.f32.mrb[0].mxu0
  %v1236 = vpop.f32.mrb[0].mxu0
  %v1237 = vadd.f32 %v197, %v1236
  %v1238 = vpop.f32.mrb[0].mxu0
  %1239 = vmatprep.mubr.bf16.mxu0 %v660
  %1240 = vmatmul.mubr.bf16.gmra.mrb[0].mxu0 %v659
  %v1241 = vpop.f32.mrb[0].mxu0
  %v1242 = vadd.f32 %v197, %v1241
  %v1243 = vpop.f32.mrb[0].mxu0
  %v1244 = vpop.f32.mrb[0].mxu0
  %v1245 = vadd.f32 %v197, %v1244
  %v1246 = vpop.f32.mrb[0].mxu0
  %1247 = vmatprep.mubr.bf16.mxu0 %v664
  %1248 = vmatmul.mubr.bf16.gmra.mrb[0].mxu0 %v663
  %v1249 = vpop.f32.mrb[0].mxu0
  %v1250 = vadd.f32 %v197, %v1249
  %v1251 = vpop.f32.mrb[0].mxu0
  %v1252 = vpop.f32.mrb[0].mxu0
  %v1253 = vadd.f32 %v197, %v1252
  %v1254 = vpop.f32.mrb[0].mxu0
  %1255 = vmatprep.mubr.bf16.mxu0 %v668
  %1256 = vmatmul.mubr.bf16.gmra.mrb[0].mxu0 %v667
  %v1257 = vpop.f32.mrb[0].mxu0
  %v1258 = vadd.f32 %v197, %v1257
  %v1259 = vpop.f32.mrb[0].mxu0
  %v1260 = vpop.f32.mrb[0].mxu0
  %v1261 = vadd.f32 %v197, %v1260
  %v1262 = vpop.f32.mrb[0].mxu0
  %1263 = vmatprep.mubr.bf16.mxu0 %v672
  %1264 = vmatmul.mubr.bf16.gmra.mrb[0].mxu0 %v671
  %v1265 = vpop.f32.mrb[0].mxu0
  %v1266 = vadd.f32 %v197, %v1265
  %v1267 = vpop.f32.mrb[0].mxu0
  %v1268 = vpop.f32.mrb[0].mxu0
  %v1269 = vadd.f32 %v197, %v1268
  %v1270 = vpop.f32.mrb[0].mxu0
  %1271 = vmatprep.mubr.bf16.mxu0 %v676
  %1272 = vmatmul.mubr.bf16.gmra.mrb[0].mxu0 %v675
  %v1273 = vpop.f32.mrb[0].mxu0
  %v1274 = vadd.f32 %v197, %v1273
  %v1275 = vpop.f32.mrb[0].mxu0
  %v1276 = vpop.f32.mrb[0].mxu0
  %v1277 = vadd.f32 %v197, %v1276
  %v1278 = vpop.f32.mrb[0].mxu0
  %1279 = vmatprep.mubr.bf16.mxu0 %v680
  %1280 = vmatmul.mubr.bf16.gmra.mrb[0].mxu0 %v679
  %v1281 = vpop.f32.mrb[0].mxu0
  %v1282 = vadd.f32 %v197, %v1281
  %v1283 = vpop.f32.mrb[0].mxu0
  %v1284 = vpop.f32.mrb[0].mxu0
  %v1285 = vadd.f32 %v197, %v1284
  %v1286 = vpop.f32.mrb[0].mxu0
  %1287 = vmatprep.mubr.bf16.mxu0 %v684
  %1288 = vmatmul.mubr.bf16.gmra.mrb[0].mxu0 %v683
  %v1289 = vpop.f32.mrb[0].mxu0
  %v1290 = vadd.f32 %v197, %v1289
  %v1291 = vpop.f32.mrb[0].mxu0
  %v1292 = vpop.f32.mrb[0].mxu0
  %v1293 = vadd.f32 %v197, %v1292
  %v1294 = vpop.f32.mrb[0].mxu0
  %1295 = vmatprep.mubr.bf16.mxu0 %v688
  %1296 = vmatmul.mubr.bf16.gmra.mrb[0].mxu0 %v687
  %v1297 = vpop.f32.mrb[0].mxu0
  %v1298 = vadd.f32 %v197, %v1297
  %v1299 = vpop.f32.mrb[0].mxu0
  %v1300 = vpop.f32.mrb[0].mxu0
  %v1301 = vadd.f32 %v197, %v1300
  %v1302 = vpop.f32.mrb[0].mxu0
  %1303 = vmatprep.mubr.bf16.mxu0 %v692
  %1304 = vmatmul.mubr.bf16.gmra.mrb[0].mxu0 %v691
  %v1305 = vpop.f32.mrb[0].mxu0
  %v1306 = vadd.f32 %v197, %v1305
  %v1307 = vpop.f32.mrb[0].mxu0
  %v1308 = vpop.f32.mrb[0].mxu0
  %v1309 = vadd.f32 %v197, %v1308
  %v1310 = vpop.f32.mrb[0].mxu0
  %1311 = vmatprep.mubr.bf16.mxu0 %v696
  %1312 = vmatmul.mubr.bf16.gmra.mrb[0].mxu0 %v695
  %v1313 = vpop.f32.mrb[0].mxu0
  %v1314 = vadd.f32 %v197, %v1313
  %v1315 = vpop.f32.mrb[0].mxu0
  %v1316 = vpop.f32.mrb[0].mxu0
  %v1317 = vadd.f32 %v197, %v1316
  %v1318 = vpop.f32.mrb[0].mxu0
  %1319 = vmatprep.mubr.bf16.mxu0 %v700
  %1320 = vmatmul.mubr.bf16.gmra.mrb[0].mxu0 %v699
  %v1321 = vpop.f32.mrb[0].mxu0
  %v1322 = vadd.f32 %v197, %v1321
  %v1323 = vpop.f32.mrb[0].mxu0
  %v1324 = vpop.f32.mrb[0].mxu0
  %v1325 = vadd.f32 %v197, %v1324
  %v1326 = vpop.f32.mrb[0].mxu0
  %1327 = vmatprep.mubr.bf16.mxu0 %v704
  %1328 = vmatmul.mubr.bf16.gmra.mrb[0].mxu0 %v703
  %v1329 = vpop.f32.mrb[0].mxu0
  %v1330 = vadd.f32 %v197, %v1329
  %v1331 = vpop.f32.mrb[0].mxu0
  %v1332 = vpop.f32.mrb[0].mxu0
  %v1333 = vadd.f32 %v197, %v1332
  %v1334 = vpop.f32.mrb[0].mxu0
  %1335 = vmatprep.mubr.bf16.mxu0 %v708
  %1336 = vmatmul.mubr.bf16.gmra.mrb[0].mxu0 %v707
  %v1337 = vpop.f32.mrb[0].mxu0
  %v1338 = vadd.f32 %v197, %v1337
  %v1339 = vpop.f32.mrb[0].mxu0
  %v1340 = vpop.f32.mrb[0].mxu0
  %v1341 = vadd.f32 %v197, %v1340
  %v1342 = vpop.f32.mrb[0].mxu0
  %1343 = vdwg.mxu0
  %1344 = vmatprep.subr.bf16.mxu0 0
  %1345 = vmatpush1.bf16.msra.mxu0 %v921
  %1346 = vmatprep.subr.bf16.mxu0 0
  %1347 = vmatpush1.bf16.msra.mxu0 %v922
  %1348 = vmatprep.subr.bf16.mxu0 0
  %1349 = vmatpush1.bf16.msra.mxu0 %v923
  %1350 = vmatprep.subr.bf16.mxu0 0
  %1351 = vmatpush1.bf16.msra.mxu0 %v924
  %1352 = vmatprep.subr.bf16.mxu0 0
  %1353 = vmatpush1.bf16.msra.mxu0 %v925
  %1354 = vmatprep.subr.bf16.mxu0 0
  %1355 = vmatpush1.bf16.msra.mxu0 %v926
  %1356 = vmatprep.subr.bf16.mxu0 0
  %1357 = vmatpush1.bf16.msra.mxu0 %v927
  %1358 = vmatprep.subr.bf16.mxu0 0
  %1359 = vmatpush1.bf16.msra.mxu0 %v928
  %1360 = vmatprep.subr.bf16.mxu0 0
  %1361 = vmatpush1.bf16.msra.mxu0 %v1053
  %1362 = vmatprep.subr.bf16.mxu0 0
  %1363 = vmatpush1.bf16.msra.mxu0 0
  %1364 = vmatprep.subr.bf16.mxu0 0
  %1365 = vmatpush1.bf16.msra.mxu0 0
  %1366 = vmatprep.subr.bf16.mxu0 0
  %1367 = vmatpush1.bf16.msra.mxu0 0
  %1368 = vmatprep.subr.bf16.mxu0 0
  %1369 = vmatpush1.bf16.msra.mxu0 0
  %1370 = vmatprep.subr.bf16.mxu0 0
  %1371 = vmatpush1.bf16.msra.mxu0 0
  %1372 = vmatprep.subr.bf16.mxu0 0
  %1373 = vmatpush1.bf16.msra.mxu0 0
  %1374 = vmatprep.subr.bf16.mxu0 0
  %1375 = vmatpush1.bf16.msra.mxu0 0
  %1376 = vmatprep.mubr.bf16.mxu0 %v956
  %1377 = vmatmul.mubr.bf16.gmra.mrb[0].mxu0 %v585
  %v1378 = vpop.f32.mrb[0].mxu0
  %v1379 = vadd.f32 %v1090, %v1378
  %v1380 = vpop.f32.mrb[0].mxu0
  %v1381 = vpop.f32.mrb[0].mxu0
  %v1382 = vadd.f32 %v1093, %v1381
  %v1383 = vpop.f32.mrb[0].mxu0
  %1384 = vmatprep.mubr.bf16.mxu0 %v959
  %1385 = vmatmul.mubr.bf16.gmra.mrb[0].mxu0 %v589
  %v1386 = vpop.f32.mrb[0].mxu0
  %v1387 = vadd.f32 %v1098, %v1386
  %v1388 = vpop.f32.mrb[0].mxu0
  %v1389 = vpop.f32.mrb[0].mxu0
  %v1390 = vadd.f32 %v1101, %v1389
  %v1391 = vpop.f32.mrb[0].mxu0
  %1392 = vmatprep.mubr.bf16.mxu0 %v962
  %1393 = vmatmul.mubr.bf16.gmra.mrb[0].mxu0 %v593
  %v1394 = vpop.f32.mrb[0].mxu0
  %v1395 = vadd.f32 %v1106, %v1394
  %v1396 = vpop.f32.mrb[0].mxu0
  %v1397 = vpop.f32.mrb[0].mxu0
  %v1398 = vadd.f32 %v1109, %v1397
  %v1399 = vpop.f32.mrb[0].mxu0
  %1400 = vmatprep.mubr.bf16.mxu0 %v965
  %1401 = vmatmul.mubr.bf16.gmra.mrb[0].mxu0 %v597
  %v1402 = vpop.f32.mrb[0].mxu0
  %v1403 = vadd.f32 %v1114, %v1402
  %v1404 = vpop.f32.mrb[0].mxu0
  %v1405 = vpop.f32.mrb[0].mxu0
  %v1406 = vadd.f32 %v1117, %v1405
  %v1407 = vpop.f32.mrb[0].mxu0
  %1408 = vmatprep.mubr.bf16.mxu0 %v968
  %1409 = vmatmul.mubr.bf16.gmra.mrb[0].mxu0 %v601
  %v1410 = vpop.f32.mrb[0].mxu0
  %v1411 = vadd.f32 %v1122, %v1410
  %v1412 = vpop.f32.mrb[0].mxu0
  %v1413 = vpop.f32.mrb[0].mxu0
  %v1414 = vadd.f32 %v1125, %v1413
  %v1415 = vpop.f32.mrb[0].mxu0
  %1416 = vmatprep.mubr.bf16.mxu0 %v971
  %1417 = vmatmul.mubr.bf16.gmra.mrb[0].mxu0 %v605
  %v1418 = vpop.f32.mrb[0].mxu0
  %v1419 = vadd.f32 %v1130, %v1418
  %v1420 = vpop.f32.mrb[0].mxu0
  %v1421 = vpop.f32.mrb[0].mxu0
  %v1422 = vadd.f32 %v1133, %v1421
  %v1423 = vpop.f32.mrb[0].mxu0
  %1424 = vmatprep.mubr.bf16.mxu0 %v974
  %1425 = vmatmul.mubr.bf16.gmra.mrb[0].mxu0 %v609
  %v1426 = vpop.f32.mrb[0].mxu0
  %v1427 = vadd.f32 %v1138, %v1426
  %v1428 = vpop.f32.mrb[0].mxu0
  %v1429 = vpop.f32.mrb[0].mxu0
  %v1430 = vadd.f32 %v1141, %v1429
  %v1431 = vpop.f32.mrb[0].mxu0
  %1432 = vmatprep.mubr.bf16.mxu0 %v977
  %1433 = vmatmul.mubr.bf16.gmra.mrb[0].mxu0 %v613
  %v1434 = vpop.f32.mrb[0].mxu0
  %v1435 = vadd.f32 %v1146, %v1434
  %v1436 = vpop.f32.mrb[0].mxu0
  %v1437 = vpop.f32.mrb[0].mxu0
  %v1438 = vadd.f32 %v1149, %v1437
  %v1439 = vpop.f32.mrb[0].mxu0
  %1440 = vmatprep.mubr.bf16.mxu0 %v980
  %1441 = vmatmul.mubr.bf16.gmra.mrb[0].mxu0 %v617
  %v1442 = vpop.f32.mrb[0].mxu0
  %v1443 = vadd.f32 %v1154, %v1442
  %v1444 = vpop.f32.mrb[0].mxu0
  %v1445 = vpop.f32.mrb[0].mxu0
  %v1446 = vadd.f32 %v1157, %v1445
  %v1447 = vpop.f32.mrb[0].mxu0
  %1448 = vmatprep.mubr.bf16.mxu0 %v983
  %1449 = vmatmul.mubr.bf16.gmra.mrb[0].mxu0 %v621
  %v1450 = vpop.f32.mrb[0].mxu0
  %v1451 = vadd.f32 %v1162, %v1450
  %v1452 = vpop.f32.mrb[0].mxu0
  %v1453 = vpop.f32.mrb[0].mxu0
  %v1454 = vadd.f32 %v1165, %v1453
  %v1455 = vpop.f32.mrb[0].mxu0
  %1456 = vmatprep.mubr.bf16.mxu0 %v986
  %1457 = vmatmul.mubr.bf16.gmra.mrb[0].mxu0 %v625
  %v1458 = vpop.f32.mrb[0].mxu0
  %v1459 = vadd.f32 %v1170, %v1458
  %v1460 = vpop.f32.mrb[0].mxu0
  %v1461 = vpop.f32.mrb[0].mxu0
  %v1462 = vadd.f32 %v1173, %v1461
  %v1463 = vpop.f32.mrb[0].mxu0
  %1464 = vmatprep.mubr.bf16.mxu0 %v989
  %1465 = vmatmul.mubr.bf16.gmra.mrb[0].mxu0 %v629
  %v1466 = vpop.f32.mrb[0].mxu0
  %v1467 = vadd.f32 %v1178, %v1466
  %v1468 = vpop.f32.mrb[0].mxu0
  %v1469 = vpop.f32.mrb[0].mxu0
  %v1470 = vadd.f32 %v1181, %v1469
  %v1471 = vpop.f32.mrb[0].mxu0
  %1472 = vmatprep.mubr.bf16.mxu0 %v992
  %1473 = vmatmul.mubr.bf16.gmra.mrb[0].mxu0 %v633
  %v1474 = vpop.f32.mrb[0].mxu0
  %v1475 = vadd.f32 %v1186, %v1474
  %v1476 = vpop.f32.mrb[0].mxu0
  %v1477 = vpop.f32.mrb[0].mxu0
  %v1478 = vadd.f32 %v1189, %v1477
  %v1479 = vpop.f32.mrb[0].mxu0
  %1480 = vmatprep.mubr.bf16.mxu0 %v995
  %1481 = vmatmul.mubr.bf16.gmra.mrb[0].mxu0 %v637
  %v1482 = vpop.f32.mrb[0].mxu0
  %v1483 = vadd.f32 %v1194, %v1482
  %v1484 = vpop.f32.mrb[0].mxu0
  %v1485 = vpop.f32.mrb[0].mxu0
  %v1486 = vadd.f32 %v1197, %v1485
  %v1487 = vpop.f32.mrb[0].mxu0
  %1488 = vmatprep.mubr.bf16.mxu0 %v998
  %1489 = vmatmul.mubr.bf16.gmra.mrb[0].mxu0 %v641
  %v1490 = vpop.f32.mrb[0].mxu0
  %v1491 = vadd.f32 %v1202, %v1490
  %v1492 = vpop.f32.mrb[0].mxu0
  %v1493 = vpop.f32.mrb[0].mxu0
  %v1494 = vadd.f32 %v1205, %v1493
  %v1495 = vpop.f32.mrb[0].mxu0
  %1496 = vmatprep.mubr.bf16.mxu0 %v1001
  %1497 = vmatmul.mubr.bf16.gmra.mrb[0].mxu0 %v645
  %v1498 = vpop.f32.mrb[0].mxu0
  %v1499 = vadd.f32 %v1210, %v1498
  %v1500 = vpop.f32.mrb[0].mxu0
  %v1501 = vpop.f32.mrb[0].mxu0
  %v1502 = vadd.f32 %v1213, %v1501
  %v1503 = vpop.f32.mrb[0].mxu0
  %1504 = vmatprep.mubr.bf16.mxu0 %v1004
  %1505 = vmatmul.mubr.bf16.gmra.mrb[0].mxu0 %v649
  %v1506 = vpop.f32.mrb[0].mxu0
  %v1507 = vadd.f32 %v1218, %v1506
  %v1508 = vpop.f32.mrb[0].mxu0
  %v1509 = vpop.f32.mrb[0].mxu0
  %v1510 = vadd.f32 %v1221, %v1509
  %v1511 = vpop.f32.mrb[0].mxu0
  %1512 = vmatprep.mubr.bf16.mxu0 %v1007
  %1513 = vmatmul.mubr.bf16.gmra.mrb[0].mxu0 %v653
  %v1514 = vpop.f32.mrb[0].mxu0
  %v1515 = vadd.f32 %v1226, %v1514
  %v1516 = vpop.f32.mrb[0].mxu0
  %v1517 = vpop.f32.mrb[0].mxu0
  %v1518 = vadd.f32 %v1229, %v1517
  %v1519 = vpop.f32.mrb[0].mxu0
  %1520 = vmatprep.mubr.bf16.mxu0 %v1010
  %1521 = vmatmul.mubr.bf16.gmra.mrb[0].mxu0 %v657
  %v1522 = vpop.f32.mrb[0].mxu0
  %v1523 = vadd.f32 %v1234, %v1522
  %v1524 = vpop.f32.mrb[0].mxu0
  %v1525 = vpop.f32.mrb[0].mxu0
  %v1526 = vadd.f32 %v1237, %v1525
  %v1527 = vpop.f32.mrb[0].mxu0
  %1528 = vmatprep.mubr.bf16.mxu0 %v1013
  %1529 = vmatmul.mubr.bf16.gmra.mrb[0].mxu0 %v661
  %v1530 = vpop.f32.mrb[0].mxu0
  %v1531 = vadd.f32 %v1242, %v1530
  %v1532 = vpop.f32.mrb[0].mxu0
  %v1533 = vpop.f32.mrb[0].mxu0
  %v1534 = vadd.f32 %v1245, %v1533
  %v1535 = vpop.f32.mrb[0].mxu0
  %1536 = vmatprep.mubr.bf16.mxu0 %v1016
  %1537 = vmatmul.mubr.bf16.gmra.mrb[0].mxu0 %v665
  %v1538 = vpop.f32.mrb[0].mxu0
  %v1539 = vadd.f32 %v1250, %v1538
  %v1540 = vpop.f32.mrb[0].mxu0
  %v1541 = vpop.f32.mrb[0].mxu0
  %v1542 = vadd.f32 %v1253, %v1541
  %v1543 = vpop.f32.mrb[0].mxu0
  %1544 = vmatprep.mubr.bf16.mxu0 %v1019
  %1545 = vmatmul.mubr.bf16.gmra.mrb[0].mxu0 %v669
  %v1546 = vpop.f32.mrb[0].mxu0
  %v1547 = vadd.f32 %v1258, %v1546
  %v1548 = vpop.f32.mrb[0].mxu0
  %v1549 = vpop.f32.mrb[0].mxu0
  %v1550 = vadd.f32 %v1261, %v1549
  %v1551 = vpop.f32.mrb[0].mxu0
  %1552 = vmatprep.mubr.bf16.mxu0 %v1022
  %1553 = vmatmul.mubr.bf16.gmra.mrb[0].mxu0 %v673
  %v1554 = vpop.f32.mrb[0].mxu0
  %v1555 = vadd.f32 %v1266, %v1554
  %v1556 = vpop.f32.mrb[0].mxu0
  %v1557 = vpop.f32.mrb[0].mxu0
  %v1558 = vadd.f32 %v1269, %v1557
  %v1559 = vpop.f32.mrb[0].mxu0
  %1560 = vmatprep.mubr.bf16.mxu0 %v1025
  %1561 = vmatmul.mubr.bf16.gmra.mrb[0].mxu0 %v677
  %v1562 = vpop.f32.mrb[0].mxu0
  %v1563 = vadd.f32 %v1274, %v1562
  %v1564 = vpop.f32.mrb[0].mxu0
  %v1565 = vpop.f32.mrb[0].mxu0
  %v1566 = vadd.f32 %v1277, %v1565
  %v1567 = vpop.f32.mrb[0].mxu0
  %1568 = vmatprep.mubr.bf16.mxu0 %v1028
  %1569 = vmatmul.mubr.bf16.gmra.mrb[0].mxu0 %v681
  %v1570 = vpop.f32.mrb[0].mxu0
  %v1571 = vadd.f32 %v1282, %v1570
  %v1572 = vpop.f32.mrb[0].mxu0
  %v1573 = vpop.f32.mrb[0].mxu0
  %v1574 = vadd.f32 %v1285, %v1573
  %v1575 = vpop.f32.mrb[0].mxu0
  %1576 = vmatprep.mubr.bf16.mxu0 %v1031
  %1577 = vmatmul.mubr.bf16.gmra.mrb[0].mxu0 %v685
  %v1578 = vpop.f32.mrb[0].mxu0
  %v1579 = vadd.f32 %v1290, %v1578
  %v1580 = vpop.f32.mrb[0].mxu0
  %v1581 = vpop.f32.mrb[0].mxu0
  %v1582 = vadd.f32 %v1293, %v1581
  %v1583 = vpop.f32.mrb[0].mxu0
  %1584 = vmatprep.mubr.bf16.mxu0 %v1034
  %1585 = vmatmul.mubr.bf16.gmra.mrb[0].mxu0 %v689
  %v1586 = vpop.f32.mrb[0].mxu0
  %v1587 = vadd.f32 %v1298, %v1586
  %v1588 = vpop.f32.mrb[0].mxu0
  %v1589 = vpop.f32.mrb[0].mxu0
  %v1590 = vadd.f32 %v1301, %v1589
  %v1591 = vpop.f32.mrb[0].mxu0
  %1592 = vmatprep.mubr.bf16.mxu0 %v1037
  %1593 = vmatmul.mubr.bf16.gmra.mrb[0].mxu0 %v693
  %v1594 = vpop.f32.mrb[0].mxu0
  %v1595 = vadd.f32 %v1306, %v1594
  %v1596 = vpop.f32.mrb[0].mxu0
  %v1597 = vpop.f32.mrb[0].mxu0
  %v1598 = vadd.f32 %v1309, %v1597
  %v1599 = vpop.f32.mrb[0].mxu0
  %1600 = vmatprep.mubr.bf16.mxu0 %v1040
  %1601 = vmatmul.mubr.bf16.gmra.mrb[0].mxu0 %v697
  %v1602 = vpop.f32.mrb[0].mxu0
  %v1603 = vadd.f32 %v1314, %v1602
  %v1604 = vpop.f32.mrb[0].mxu0
  %v1605 = vpop.f32.mrb[0].mxu0
  %v1606 = vadd.f32 %v1317, %v1605
  %v1607 = vpop.f32.mrb[0].mxu0
  %1608 = vmatprep.mubr.bf16.mxu0 %v1043
  %1609 = vmatmul.mubr.bf16.gmra.mrb[0].mxu0 %v701
  %v1610 = vpop.f32.mrb[0].mxu0
  %v1611 = vadd.f32 %v1322, %v1610
  %v1612 = vpop.f32.mrb[0].mxu0
  %v1613 = vpop.f32.mrb[0].mxu0
  %v1614 = vadd.f32 %v1325, %v1613
  %v1615 = vpop.f32.mrb[0].mxu0
  %1616 = vmatprep.mubr.bf16.mxu0 %v1046
  %1617 = vmatmul.mubr.bf16.gmra.mrb[0].mxu0 %v705
  %v1618 = vpop.f32.mrb[0].mxu0
  %v1619 = vadd.f32 %v1330, %v1618
  %v1620 = vpop.f32.mrb[0].mxu0
  %v1621 = vpop.f32.mrb[0].mxu0
  %v1622 = vadd.f32 %v1333, %v1621
  %v1623 = vpop.f32.mrb[0].mxu0
  %1624 = vmatprep.mubr.bf16.mxu0 %v1049
  %1625 = vmatmul.mubr.bf16.gmra.mrb[0].mxu0 %v709
  %v1626 = vpop.f32.mrb[0].mxu0
  %v1627 = vadd.f32 %v1338, %v1626
  %v1628 = vpop.f32.mrb[0].mxu0
  %v1629 = vpop.f32.mrb[0].mxu0
  %v1630 = vadd.f32 %v1341, %v1629
  %v1631 = vpop.f32.mrb[0].mxu0
  %1632 = vdwg.mxu0
  %v1633 = vtanh.pop %v1379
  %v1634 = vtanh.pop %v1382
  %v1635 = vtanh.pop %v1387
  %v1636 = vtanh.pop %v1390
  %v1637 = vtanh.pop %v1395
  %v1638 = vtanh.pop %v1398
  %v1639 = vtanh.pop %v1403
  %v1640 = vtanh.pop %v1406
  %v1641 = vtanh.pop %v1411
  %v1642 = vtanh.pop %v1414
  %v1643 = vtanh.pop %v1419
  %v1644 = vtanh.pop %v1422
  %v1645 = vtanh.pop %v1427
  %v1646 = vtanh.pop %v1430
  %v1647 = vtanh.pop %v1435
  %v1648 = vtanh.pop %v1438
  %v1649 = vtanh.pop %v1443
  %v1650 = vtanh.pop %v1446
  %v1651 = vtanh.pop %v1451
  %v1652 = vtanh.pop %v1454
  %v1653 = vtanh.pop %v1459
  %v1654 = vtanh.pop %v1462
  %v1655 = vtanh.pop %v1467
  %v1656 = vtanh.pop %v1470
  %v1657 = vtanh.pop %v1475
  %v1658 = vtanh.pop %v1478
  %v1659 = vtanh.pop %v1483
  %v1660 = vtanh.pop %v1486
  %v1661 = vtanh.pop %v1491
  %v1662 = vtanh.pop %v1494
  %v1663 = vtanh.pop %v1499
  %v1664 = vtanh.pop %v1502
  %v1665 = vtanh.pop %v1507
  %v1666 = vtanh.pop %v1510
  %v1667 = vtanh.pop %v1515
  %v1668 = vtanh.pop %v1518
  %v1669 = vtanh.pop %v1523
  %v1670 = vtanh.pop %v1526
  %v1671 = vtanh.pop %v1531
  %v1672 = vtanh.pop %v1534
  %v1673 = vtanh.pop %v1539
  %v1674 = vtanh.pop %v1542
  %v1675 = vtanh.pop %v1547
  %v1676 = vtanh.pop %v1550
  %v1677 = vtanh.pop %v1555
  %v1678 = vtanh.pop %v1558
  %v1679 = vtanh.pop %v1563
  %v1680 = vtanh.pop %v1566
  %v1681 = vtanh.pop %v1571
  %v1682 = vtanh.pop %v1574
  %v1683 = vtanh.pop %v1579
  %v1684 = vtanh.pop %v1582
  %v1685 = vtanh.pop %v1587
  %v1686 = vtanh.pop %v1590
  %v1687 = vtanh.pop %v1595
  %v1688 = vtanh.pop %v1598
  %v1689 = vtanh.pop %v1603
  %v1690 = vtanh.pop %v1606
  %v1691 = vtanh.pop %v1611
  %v1692 = vtanh.pop %v1614
  %v1693 = vtanh.pop %v1619
  %v1694 = vtanh.pop %v1622
  %v1695 = vtanh.pop %v1627
  %v1696 = vtanh.pop %v1630
  %vm1697 = vcmask 23552
  %1698 = vst.msk [vmem:[%s3] sm:$0xff] %vm1697, %v1633
  %1699 = vst.msk [vmem:[%s3 + $0x8] sm:$0xff] %vm1697, %v1634
  %1700 = vst.msk [vmem:[%s3 + $0x10] sm:$0xff] %vm1697, %v1635
  %1701 = vst.msk [vmem:[%s3 + $0x18] sm:$0xff] %vm1697, %v1636
  %1702 = vst.msk [vmem:[%s3 + $0x20] sm:$0xff] %vm1697, %v1637
  %1703 = vst.msk [vmem:[%s3 + $0x28] sm:$0xff] %vm1697, %v1638
  %1704 = vst.msk [vmem:[%s3 + $0x30] sm:$0xff] %vm1697, %v1639
  %1705 = vst.msk [vmem:[%s3 + $0x38] sm:$0xff] %vm1697, %v1640
  %1706 = vst.msk [vmem:[%s3 + $0x40] sm:$0xff] %vm1697, %v1641
  %1707 = vst.msk [vmem:[%s3 + $0x48] sm:$0xff] %vm1697, %v1642
  %1708 = vst.msk [vmem:[%s3 + $0x50] sm:$0xff] %vm1697, %v1643
  %1709 = vst.msk [vmem:[%s3 + $0x58] sm:$0xff] %vm1697, %v1644
  %1710 = vst.msk [vmem:[%s3 + $0x60] sm:$0xff] %vm1697, %v1645
  %1711 = vst.msk [vmem:[%s3 + $0x68] sm:$0xff] %vm1697, %v1646
  %1712 = vst.msk [vmem:[%s3 + $0x70] sm:$0xff] %vm1697, %v1647
  %1713 = vst.msk [vmem:[%s3 + $0x78] sm:$0xff] %vm1697, %v1648
  %1714 = vst.msk [vmem:[%s3 + $0x80] sm:$0xff] %vm1697, %v1649
  %1715 = vst.msk [vmem:[%s3 + $0x88] sm:$0xff] %vm1697, %v1650
  %1716 = vst.msk [vmem:[%s3 + $0x90] sm:$0xff] %vm1697, %v1651
  %1717 = vst.msk [vmem:[%s3 + $0x98] sm:$0xff] %vm1697, %v1652
  %1718 = vst.msk [vmem:[%s3 + $0xa0] sm:$0xff] %vm1697, %v1653
  %1719 = vst.msk [vmem:[%s3 + $0xa8] sm:$0xff] %vm1697, %v1654
  %1720 = vst.msk [vmem:[%s3 + $0xb0] sm:$0xff] %vm1697, %v1655
  %1721 = vst.msk [vmem:[%s3 + $0xb8] sm:$0xff] %vm1697, %v1656
  %1722 = vst.msk [vmem:[%s3 + $0xc0] sm:$0xff] %vm1697, %v1657
  %1723 = vst.msk [vmem:[%s3 + $0xc8] sm:$0xff] %vm1697, %v1658
  %1724 = vst.msk [vmem:[%s3 + $0xd0] sm:$0xff] %vm1697, %v1659
  %1725 = vst.msk [vmem:[%s3 + $0xd8] sm:$0xff] %vm1697, %v1660
  %1726 = vst.msk [vmem:[%s3 + $0xe0] sm:$0xff] %vm1697, %v1661
  %1727 = vst.msk [vmem:[%s3 + $0xe8] sm:$0xff] %vm1697, %v1662
  %1728 = vst.msk [vmem:[%s3 + $0xf0] sm:$0xff] %vm1697, %v1663
  %1729 = vst.msk [vmem:[%s3 + $0xf8] sm:$0xff] %vm1697, %v1664
  %1730 = vst.msk [vmem:[%s3 + $0x100] sm:$0xff] %vm1697, %v1665
  %1731 = vst.msk [vmem:[%s3 + $0x108] sm:$0xff] %vm1697, %v1666
  %1732 = vst.msk [vmem:[%s3 + $0x110] sm:$0xff] %vm1697, %v1667
  %1733 = vst.msk [vmem:[%s3 + $0x118] sm:$0xff] %vm1697, %v1668
  %1734 = vst.msk [vmem:[%s3 + $0x120] sm:$0xff] %vm1697, %v1669
  %1735 = vst.msk [vmem:[%s3 + $0x128] sm:$0xff] %vm1697, %v1670
  %1736 = vst.msk [vmem:[%s3 + $0x130] sm:$0xff] %vm1697, %v1671
  %1737 = vst.msk [vmem:[%s3 + $0x138] sm:$0xff] %vm1697, %v1672
  %1738 = vst.msk [vmem:[%s3 + $0x140] sm:$0xff] %vm1697, %v1673
  %1739 = vst.msk [vmem:[%s3 + $0x148] sm:$0xff] %vm1697, %v1674
  %1740 = vst.msk [vmem:[%s3 + $0x150] sm:$0xff] %vm1697, %v1675
  %1741 = vst.msk [vmem:[%s3 + $0x158] sm:$0xff] %vm1697, %v1676
  %1742 = vst.msk [vmem:[%s3 + $0x160] sm:$0xff] %vm1697, %v1677
  %1743 = vst.msk [vmem:[%s3 + $0x168] sm:$0xff] %vm1697, %v1678
  %1744 = vst.msk [vmem:[%s3 + $0x170] sm:$0xff] %vm1697, %v1679
  %1745 = vst.msk [vmem:[%s3 + $0x178] sm:$0xff] %vm1697, %v1680
  %1746 = vst.msk [vmem:[%s3 + $0x180] sm:$0xff] %vm1697, %v1681
  %1747 = vst.msk [vmem:[%s3 + $0x188] sm:$0xff] %vm1697, %v1682
  %1748 = vst.msk [vmem:[%s3 + $0x190] sm:$0xff] %vm1697, %v1683
  %1749 = vst.msk [vmem:[%s3 + $0x198] sm:$0xff] %vm1697, %v1684
  %1750 = vst.msk [vmem:[%s3 + $0x1a0] sm:$0xff] %vm1697, %v1685
  %1751 = vst.msk [vmem:[%s3 + $0x1a8] sm:$0xff] %vm1697, %v1686
  %1752 = vst.msk [vmem:[%s3 + $0x1b0] sm:$0xff] %vm1697, %v1687
  %1753 = vst.msk [vmem:[%s3 + $0x1b8] sm:$0xff] %vm1697, %v1688
  %1754 = vst.msk [vmem:[%s3 + $0x1c0] sm:$0xff] %vm1697, %v1689
  %1755 = vst.msk [vmem:[%s3 + $0x1c8] sm:$0xff] %vm1697, %v1690
  %1756 = vst.msk [vmem:[%s3 + $0x1d0] sm:$0xff] %vm1697, %v1691
  %1757 = vst.msk [vmem:[%s3 + $0x1d8] sm:$0xff] %vm1697, %v1692
  %1758 = vst.msk [vmem:[%s3 + $0x1e0] sm:$0xff] %vm1697, %v1693
  %1759 = vst.msk [vmem:[%s3 + $0x1e8] sm:$0xff] %vm1697, %v1694
  %1760 = vst.msk [vmem:[%s3 + $0x1f0] sm:$0xff] %vm1697, %v1695
  %1761 = vst.msk [vmem:[%s3 + $0x1f8] sm:$0xff] %vm1697, %v1696
  // Predicated region
  $region14: #{resnet_generator_forward.37} parent=0 // pred_check
    _
  $region15: #{resnet_generator_forward.37} parent=0 // pred_check_branch
    %1763 = sbr.rel (0) target = $region17
  $region16: #{resnet_generator_forward.37} parent=0 // pred_region
    _
  $region17: #{resnet_generator_forward.37} parent=0 // pred_fallthru
    _
  // Predicated region
  $region18: #{resnet_generator_forward.37} parent=0 // pred_check
    _
  $region19: #{resnet_generator_forward.37} parent=0 // pred_check_branch
    %1765 = sbr.rel (0) target = $region21
  $region20: #{resnet_generator_forward.37} parent=0 // pred_region
    _
  $region21: #{resnet_generator_forward.37} parent=0 // pred_fallthru
    _

</llo_original>
